<compile_context>
chip_gen: v6e
topology: v6e:2x2x1
jax: 0.10.0
libtpu: 0.0.40
codegen_flags: <defaults>
</compile_context>

<pallas_src>
import jax
import jax.numpy as jnp
from jax.experimental import pallas as pl
from jax.experimental.pallas import tpu as pltpu

NEG_SLOPE = 0.01  # default negative slope of nn.LeakyReLU / F.leaky_relu

PC_FEAT_DIM = 64
FEAT_DIM = PC_FEAT_DIM * 2          # cVAE feat_dim = 128
DIR_FEAT_DIM = 32
ROT_FEAT_DIM = 32
TRAN_FEAT_DIM = 32
Z_DIM = 32
G3 = 2 * FEAT_DIM * 3               # 768 (flattened global equivariant feature)

_VMEM = pl.BlockSpec(memory_space=pltpu.MemorySpace.VMEM)


# ----------------------------------------------------------------------------
# In-kernel helpers
# ----------------------------------------------------------------------------
def _mm(x, w):
    return jnp.dot(x, w, preferred_element_type=jnp.float32)


def _lrelu(x):
    return jnp.where(x >= 0.0, x, NEG_SLOPE * x)


# ----------------------------------------------------------------------------
# Kernel 1: PointNet2 forward_global surrogate head (fully fused)
# ----------------------------------------------------------------------------
def _pointnet_head_kernel(pts_ref, pool_ref, w3_ref, b3_ref,
                          g1w_ref, g1b_ref, g2w_ref, g2b_ref,
                          gamma_ref, beta_ref, out_ref):
    # per-point projection + ReLU : (B*N, 512), stays in VMEM
    pt = jnp.maximum(_mm(pts_ref[...], w3_ref[...]) + b3_ref[...], 0.0)
    # mean pool per batch element via a (B, B*N) pooling matmul (no reshapes)
    pooled = _mm(pool_ref[...], pt)                                    # (B, 512)
    h = jnp.maximum(_mm(pooled, g1w_ref[...]) + g1b_ref[...], 0.0)     # (B, 256)
    h = _mm(h, g2w_ref[...]) + g2b_ref[...]                            # (B, 128)
    # BatchNorm1d (training-mode batch statistics, biased variance) + ReLU
    mean = jnp.mean(h, axis=0, keepdims=True)
    var = jnp.mean((h - mean) ** 2, axis=0, keepdims=True)
    y = (h - mean) * jax.lax.rsqrt(var + 1e-5) * gamma_ref[...] + beta_ref[...]
    out_ref[...] = jnp.maximum(y, 0.0)


def pointnet2_head(pts, pool_mat, w3, b3, gfc1, gfc2, gamma, beta):
    B = pool_mat.shape[0]
    g1w, g1b = gfc1
    g2w, g2b = gfc2
    args = (pts, pool_mat, w3, b3.reshape(1, -1),
            g1w, g1b.reshape(1, -1), g2w, g2b.reshape(1, -1),
            gamma.reshape(1, -1), beta.reshape(1, -1))
    return pl.pallas_call(
        _pointnet_head_kernel,
        out_shape=jax.ShapeDtypeStruct((B, FEAT_DIM), jnp.float32),
        in_specs=[_VMEM] * len(args),
        out_specs=_VMEM,
    )(*args)


# ----------------------------------------------------------------------------
# Kernel 2: fused cVAE (mlp_dir, mlp_transformation, both encoders, both
# decoders, dir-cosine loss and KL losses) — concat replaced by partial matmuls
# ----------------------------------------------------------------------------
def _cvae_kernel(
    geq_ref, dir_ref, init_ref, tt_ref, ndir_ref, nt_ref,
    mdir_w, mdir_b, mtr_w, mtr_b,
    de1_w, de1_b, de2_w, de2_b, de3_w, de3_b, demu_w, demu_b, delv_w, delv_b,
    dd1_w, dd1_b, dd2_w, dd2_b,
    te1_w, te1_b, te2_w, te2_b, te3_w, te3_b, temu_w, temu_b, telv_w, telv_b,
    td1_w, td1_b, td2_w, td2_b,
    recon_ref, dirloss_ref, kldir_ref, klt_ref):

    geq = geq_ref[...]            # (B, 768)
    ddir = dir_ref[...]           # (B, 3)
    init_f = init_ref[...]        # (B, 128)
    tt = tt_ref[...]              # (B, 9)

    # small feature linears (no activation, as in the PyTorch module)
    dir_feats = _mm(ddir, mdir_w[...]) + mdir_b[...]                   # (B, 32)
    tt_feats = _mm(tt, mtr_w[...]) + mtr_b[...]                        # (B, 64)

    # ---- disassembly encoder : cat([geq, dir_feats]) via row-block partial matmuls
    h = _mm(geq, de1_w[0:G3, :]) + _mm(dir_feats, de1_w[G3:G3 + DIR_FEAT_DIM, :]) + de1_b[...]
    h = _lrelu(h)
    h = _lrelu(_mm(h, de2_w[...]) + de2_b[...])
    h = _mm(h, de3_w[...]) + de3_b[...]
    mu_d = _mm(h, demu_w[...]) + demu_b[...]
    lv_d = _mm(h, delv_w[...]) + delv_b[...]
    z_d = mu_d + jnp.exp(lv_d * 0.5) * ndir_ref[...]

    # ---- disassembly decoder : cat([geq, z])
    g = _lrelu(_mm(geq, dd1_w[0:G3, :]) + _mm(z_d, dd1_w[G3:G3 + Z_DIM, :]) + dd1_b[...])
    recon_dir = _mm(g, dd2_w[...]) + dd2_b[...]                        # (B, 3)

    # ---- transformation encoder : cat([geq, dir_feats, init_feats, tt_feats])
    o1, o2, o3 = G3, G3 + DIR_FEAT_DIM, G3 + DIR_FEAT_DIM + FEAT_DIM   # 768, 800, 928
    h = (_mm(geq, te1_w[0:o1, :]) + _mm(dir_feats, te1_w[o1:o2, :])
         + _mm(init_f, te1_w[o2:o3, :])
         + _mm(tt_feats, te1_w[o3:o3 + ROT_FEAT_DIM + TRAN_FEAT_DIM, :]) + te1_b[...])
    h = _lrelu(h)
    h = _lrelu(_mm(h, te2_w[...]) + te2_b[...])
    h = _mm(h, te3_w[...]) + te3_b[...]
    mu_t = _mm(h, temu_w[...]) + temu_b[...]
    lv_t = _mm(h, telv_w[...]) + telv_b[...]
    z_t = mu_t + jnp.exp(lv_t * 0.5) * nt_ref[...]

    # ---- transformation decoder : cat([geq, dir_feats, init_feats, z])
    g = (_mm(geq, td1_w[0:o1, :]) + _mm(dir_feats, td1_w[o1:o2, :])
         + _mm(init_f, td1_w[o2:o3, :]) + _mm(z_t, td1_w[o3:o3 + Z_DIM, :]) + td1_b[...])
    g = _lrelu(g)
    # td2 weight/bias are zero-padded to 128 output lanes -> lane-dense unmasked store
    recon_ref[...] = _mm(g, td2_w[...]) + td2_b[...]                   # (B, 128), cols 0..8 valid

    # ---- in-kernel losses (2-D reductions kept, lane-dense scalar slabs)
    def _kl(mu, lv):
        per = 0.5 * jnp.sum(mu * mu + jnp.exp(lv) - 1.0 - lv, axis=1, keepdims=True)
        return jnp.mean(per, axis=0, keepdims=True)                    # (1, 1)

    kldir_ref[...] = jnp.broadcast_to(_kl(mu_d, lv_d), kldir_ref.shape)
    klt_ref[...] = jnp.broadcast_to(_kl(mu_t, lv_t), klt_ref.shape)

    # CosineEmbeddingLoss(recon_dir, dir, target=1) = 1 - cos_sim (eps=1e-8)
    dotp = jnp.sum(recon_dir * ddir, axis=1, keepdims=True)
    n1 = jnp.sqrt(jnp.sum(recon_dir * recon_dir, axis=1, keepdims=True))
    n2 = jnp.sqrt(jnp.sum(ddir * ddir, axis=1, keepdims=True))
    cos = dotp / jnp.maximum(n1 * n2, 1e-8)
    dir_loss = jnp.mean(1.0 - cos, axis=0, keepdims=True)              # (1, 1)
    dirloss_ref[...] = jnp.broadcast_to(dir_loss, dirloss_ref.shape)


def cvae_fused(params, geq, ddir, init_feats, target_trans, noise_dir, noise_t):
    B = geq.shape[0]

    def wb(pp):
        w, b = pp
        return w, b.reshape(1, -1)

    de, dd = params["dis_enc"], params["dis_dec"]
    te, td = params["trans_enc"], params["trans_dec"]

    td2_w, td2_b = td["l2"]
    pad = FEAT_DIM - td2_w.shape[1]                 # pad 9 -> 128 output lanes
    td2_w_pad = jnp.pad(td2_w, ((0, 0), (0, pad)))
    td2_b_pad = jnp.pad(td2_b, ((0, pad),)).reshape(1, FEAT_DIM)

    args = (geq, ddir, init_feats, target_trans, noise_dir, noise_t,
            *wb(params["mlp_dir"]), *wb(params["mlp_trans"]),
            *wb(de["mlp1"]), *wb(de["mlp2"]), *wb(de["mlp3"]), *wb(de["mu"]), *wb(de["logvar"]),
            *wb(dd["l1"]), *wb(dd["l2"]),
            *wb(te["mlp1"]), *wb(te["mlp2"]), *wb(te["mlp3"]), *wb(te["mu"]), *wb(te["logvar"]),
            *wb(td["l1"]), td2_w_pad, td2_b_pad)

    out_shape = (jax.ShapeDtypeStruct((B, FEAT_DIM), jnp.float32),   # recon_trans (padded)
                 jax.ShapeDtypeStruct((1, FEAT_DIM), jnp.float32),   # dir_loss
                 jax.ShapeDtypeStruct((1, FEAT_DIM), jnp.float32),   # kl_dir
                 jax.ShapeDtypeStruct((1, FEAT_DIM), jnp.float32))   # kl_trans
    recon_pad, dl, kd, kt = pl.pallas_call(
        _cvae_kernel,
        out_shape=out_shape,
        in_specs=[_VMEM] * len(args),
        out_specs=(_VMEM, _VMEM, _VMEM, _VMEM),
    )(*args)
    return recon_pad[:, :9], dl[0, 0], kd[0, 0], kt[0, 0]


# ----------------------------------------------------------------------------
# Deterministic parameter initialization (PyTorch-default-like uniform)
# ----------------------------------------------------------------------------
def init_linear_params(key, din, dout):
    k1, k2 = jax.random.split(key)
    bound = 1.0 / (din ** 0.5)
    w = jax.random.uniform(k1, (din, dout), jnp.float32, -bound, bound)
    b = jax.random.uniform(k2, (dout,), jnp.float32, -bound, bound)
    return w, b


def init_params(key):
    keys = jax.random.split(key, 24)
    p = {}
    # surrogate VN_DGCNN equivariant projection (source not provided)
    p["enc_weq"] = 0.1 * jax.random.normal(keys[0], (3, 2 * PC_FEAT_DIM), jnp.float32)
    p["enc_weq_b"] = jnp.zeros((2 * PC_FEAT_DIM,), jnp.float32)
    # cVAE linears
    p["mlp_dir"] = init_linear_params(keys[1], 3, DIR_FEAT_DIM)
    p["mlp_trans"] = init_linear_params(keys[2], 9, ROT_FEAT_DIM + TRAN_FEAT_DIM)
    p["dis_enc"] = {
        "mlp1": init_linear_params(keys[3], G3 + DIR_FEAT_DIM, 128),
        "mlp2": init_linear_params(keys[4], 128, Z_DIM),
        "mlp3": init_linear_params(keys[5], Z_DIM, Z_DIM),
        "mu": init_linear_params(keys[6], Z_DIM, Z_DIM),
        "logvar": init_linear_params(keys[7], Z_DIM, Z_DIM),
    }
    p["dis_dec"] = {
        "l1": init_linear_params(keys[8], G3 + Z_DIM, 128),
        "l2": init_linear_params(keys[9], 128, 3),
    }
    te_in = G3 + DIR_FEAT_DIM + FEAT_DIM + ROT_FEAT_DIM + TRAN_FEAT_DIM  # 992
    p["trans_enc"] = {
        "mlp1": init_linear_params(keys[10], te_in, 128),
        "mlp2": init_linear_params(keys[11], 128, Z_DIM),
        "mlp3": init_linear_params(keys[12], Z_DIM, Z_DIM),
        "mu": init_linear_params(keys[13], Z_DIM, Z_DIM),
        "logvar": init_linear_params(keys[14], Z_DIM, Z_DIM),
    }
    td_in = G3 + DIR_FEAT_DIM + FEAT_DIM + Z_DIM  # 960
    p["trans_dec"] = {
        "l1": init_linear_params(keys[15], td_in, 128),
        "l2": init_linear_params(keys[16], 128, 9),
    }
    # PointNet2 forward_global: surrogate per-point stage + faithful global_fc head
    p["pn2_proj"] = init_linear_params(keys[17], 6, 512)
    p["gfc1"] = init_linear_params(keys[18], 512, 256)
    p["gfc2"] = init_linear_params(keys[19], 256, 128)
    p["bn_gamma"] = jnp.ones((128,), jnp.float32)
    p["bn_beta"] = jnp.zeros((128,), jnp.float32)
    return p


# ----------------------------------------------------------------------------
# Loss helpers (tiny 3x3 math; kept in plain JAX — arccos/cross on (B,3,3))
# ----------------------------------------------------------------------------
def _normalize(v, axis=1, eps=1e-12):
    n = jnp.linalg.norm(v, axis=axis, keepdims=True)
    return v / jnp.maximum(n, eps)


def bgs(d6s):  # d6s: (bsz, 3, 2)
    b1 = _normalize(d6s[:, :, 0], axis=1)
    a2 = d6s[:, :, 1]
    dot = jnp.sum(b1 * a2, axis=1, keepdims=True)
    b2 = _normalize(a2 - dot * b1, axis=1)
    b3 = jnp.cross(b1, b2, axis=1)
    return jnp.stack([b1, b2, b3], axis=1).transpose(0, 2, 1)


def bgdR(Rgts, Rps):
    Rds = jnp.matmul(jnp.transpose(Rgts, (0, 2, 1)), Rps)
    Rt = jnp.trace(Rds, axis1=1, axis2=2)
    theta = jnp.clip(0.5 * (Rt - 1.0), -1.0 + 1e-6, 1.0 - 1e-6)
    return jnp.arccos(theta)


def rot6d_loss(pred6, gt6):
    pred_Rs = bgs(pred6.reshape(-1, 2, 3).transpose(0, 2, 1))
    gt_Rs = bgs(gt6.reshape(-1, 2, 3).transpose(0, 2, 1))
    return bgdR(gt_Rs, pred_Rs)


# ----------------------------------------------------------------------------
# Network.forward
# ----------------------------------------------------------------------------
def network_forward(params, gt_pcs, disassembly_dir, init_pcs, target_trans, rng,
                    lbd_kl=1.0, lbd_dir=1.0, lbd_rot=1.0, lbd_tran=1.0):
    B, P, N, _ = gt_pcs.shape
    f32 = jnp.float32

    # ---- VN_DGCNN surrogate global equivariant feature (tiny; plain JAX glue) ----
    # TODO(synk): VN_DGCNN source not provided; equivariant part features are a
    # deterministic surrogate (per-part second-moment matrix -> linear projection).
    pc = jnp.transpose(gt_pcs, (0, 1, 3, 2))                           # (B, P, 3, N)
    cov = jnp.einsum("bpin,bpjn->bpij", pc, pc) / N                    # (B, P, 3, 3)
    proj = cov.reshape(B * P * 3, 3) @ params["enc_weq"] + params["enc_weq_b"]
    equiv = proj.reshape(B, P, 3, 2 * PC_FEAT_DIM).transpose(0, 1, 3, 2)  # (B,P,128,3)
    global_equ = jnp.sum(equiv, axis=1)                                # sum over parts
    geq = jnp.tile(global_equ[:, None], (1, P, 1, 1)).reshape(B, G3)   # (B, 768); needs P == 2

    # ---- PointNet2 forward_global surrogate head (one fused Pallas kernel) ----
    # TODO(synk): PointnetSAModule set-abstraction source not provided; replaced by a
    # per-point linear + mean pool; the global_fc head is implemented faithfully.
    Np = init_pcs.shape[1]
    pn_w, pn_b = params["pn2_proj"]
    w3 = pn_w[:3] + pn_w[3:]            # fold init_pcs.repeat(1, 1, 2) into the weight rows
    pool_mat = jnp.repeat(jnp.eye(B, dtype=f32), Np, axis=1) / Np      # (B, B*Np)
    init_feats = pointnet2_head(init_pcs.reshape(B * Np, 3), pool_mat, w3, pn_b,
                                params["gfc1"], params["gfc2"],
                                params["bn_gamma"], params["bn_beta"])  # (B, 128)

    k1, k2 = jax.random.split(rng)
    noise_dir = jax.random.normal(k1, (B, Z_DIM), f32)
    noise_t = jax.random.normal(k2, (B, Z_DIM), f32)

    recon_trans, dir_loss, kl_dir, kl_t = cvae_fused(
        params, geq, disassembly_dir, init_feats, target_trans, noise_dir, noise_t)

    rot_loss = jnp.mean(rot6d_loss(recon_trans[:, :6], target_trans[:, :6]))
    tran_loss = jnp.mean(jnp.abs(recon_trans[:, 6:] - target_trans[:, 6:]))

    losses = {
        "disassembly": dir_loss,
        "kl_disassembly": kl_dir,
        "transformation_rot": rot_loss,
        "transformation_tran": tran_loss,
        "kl_transformation": kl_t,
    }
    losses["tot"] = (lbd_kl * (kl_dir + kl_t) + lbd_dir * dir_loss
                     + lbd_rot * rot_loss + lbd_tran * tran_loss)
    return losses


# ----------------------------------------------------------------------------
if __name__ == "__main__":
    key = jax.random.PRNGKey(0)
    kp, kg, kd, ki, kt, kn = jax.random.split(key, 6)

    B, P, N = 2, 2, 64  # P must be 2 (get_loss reshapes (B,P,128,3) -> (B,768))
    params = init_params(kp)

    gt_pcs = jax.random.normal(kg, (B, P, N, 3), jnp.float32)
    disassembly_dir = jax.random.normal(kd, (B, 3), jnp.float32)
    disassembly_dir = disassembly_dir / jnp.linalg.norm(disassembly_dir, axis=1, keepdims=True)
    init_pcs = jax.random.normal(ki, (B, N, 3), jnp.float32)
    target_trans = jax.random.normal(kt, (B, 9), jnp.float32)

    fwd = jax.jit(network_forward)
    losses = fwd(params, gt_pcs, disassembly_dir, init_pcs, target_trans, kn)
    losses = jax.tree_util.tree_map(jax.block_until_ready, losses)
    assert all(bool(jnp.isfinite(v)) for v in losses.values())
    print("KERNEL_OK")
</pallas_src>

<mosaic_0001>
module attributes {stable_mosaic.version = 11 : i64} {
  func.func @_pointnet_head_kernel(%arg0: memref<128x3xf32, #tpu.memory_space<vmem>>, %arg1: memref<2x128xf32, #tpu.memory_space<vmem>>, %arg2: memref<3x512xf32, #tpu.memory_space<vmem>>, %arg3: memref<1x512xf32, #tpu.memory_space<vmem>>, %arg4: memref<512x256xf32, #tpu.memory_space<vmem>>, %arg5: memref<1x256xf32, #tpu.memory_space<vmem>>, %arg6: memref<256x128xf32, #tpu.memory_space<vmem>>, %arg7: memref<1x128xf32, #tpu.memory_space<vmem>>, %arg8: memref<1x128xf32, #tpu.memory_space<vmem>>, %arg9: memref<1x128xf32, #tpu.memory_space<vmem>>, %arg10: memref<2x128xf32, #tpu.memory_space<vmem>>) attributes {dimension_semantics = [], scalar_prefetch = 0 : i64, scratch_operands = 0 : i64, tpu.core_type = #tpu.core_type<tc>} {
    %c0 = arith.constant 0 : index
    %c0_0 = arith.constant 0 : index
    %0 = vector.load %arg0[%c0, %c0_0] : memref<128x3xf32, #tpu.memory_space<vmem>>, vector<128x3xf32>
    %c0_1 = arith.constant 0 : index
    %c0_2 = arith.constant 0 : index
    %1 = vector.load %arg2[%c0_1, %c0_2] : memref<3x512xf32, #tpu.memory_space<vmem>>, vector<3x512xf32>
    %cst = arith.constant dense<0.000000e+00> : vector<128x512xf32>
    %2 = tpu.matmul %0, %1, %cst {dimension_numbers = #tpu.dot_dimension_numbers<[1], [0], [0], [1], [0, 0, 1, 1], [], []>} : vector<128x3xf32>, vector<3x512xf32>, vector<128x512xf32> -> vector<128x512xf32>
    %c0_3 = arith.constant 0 : index
    %c0_4 = arith.constant 0 : index
    %3 = vector.load %arg3[%c0_3, %c0_4] : memref<1x512xf32, #tpu.memory_space<vmem>>, vector<1x512xf32>
    %4 = vector.broadcast %3 : vector<1x512xf32> to vector<128x512xf32>
    %5 = arith.addf %2, %4 : vector<128x512xf32>
    %cst_5 = arith.constant 0.000000e+00 : f32
    %6 = vector.broadcast %cst_5 : f32 to vector<128x512xf32>
    %7 = arith.maximumf %5, %6 : vector<128x512xf32>
    %c0_6 = arith.constant 0 : index
    %c0_7 = arith.constant 0 : index
    %8 = vector.load %arg1[%c0_6, %c0_7] : memref<2x128xf32, #tpu.memory_space<vmem>>, vector<2x128xf32>
    %cst_8 = arith.constant dense<0.000000e+00> : vector<2x512xf32>
    %9 = tpu.matmul %8, %7, %cst_8 {dimension_numbers = #tpu.dot_dimension_numbers<[1], [0], [0], [1], [0, 0, 1, 1], [], []>} : vector<2x128xf32>, vector<128x512xf32>, vector<2x512xf32> -> vector<2x512xf32>
    %c0_9 = arith.constant 0 : index
    %c0_10 = arith.constant 0 : index
    %10 = vector.load %arg4[%c0_9, %c0_10] : memref<512x256xf32, #tpu.memory_space<vmem>>, vector<512x256xf32>
    %cst_11 = arith.constant dense<0.000000e+00> : vector<2x256xf32>
    %11 = tpu.matmul %9, %10, %cst_11 {dimension_numbers = #tpu.dot_dimension_numbers<[1], [0], [0], [1], [0, 0, 1, 1], [], []>} : vector<2x512xf32>, vector<512x256xf32>, vector<2x256xf32> -> vector<2x256xf32>
    %c0_12 = arith.constant 0 : index
    %c0_13 = arith.constant 0 : index
    %12 = vector.load %arg5[%c0_12, %c0_13] : memref<1x256xf32, #tpu.memory_space<vmem>>, vector<1x256xf32>
    %13 = vector.broadcast %12 : vector<1x256xf32> to vector<2x256xf32>
    %14 = arith.addf %11, %13 : vector<2x256xf32>
    %cst_14 = arith.constant 0.000000e+00 : f32
    %15 = vector.broadcast %cst_14 : f32 to vector<2x256xf32>
    %16 = arith.maximumf %14, %15 : vector<2x256xf32>
    %c0_15 = arith.constant 0 : index
    %c0_16 = arith.constant 0 : index
    %17 = vector.load %arg6[%c0_15, %c0_16] : memref<256x128xf32, #tpu.memory_space<vmem>>, vector<256x128xf32>
    %cst_17 = arith.constant dense<0.000000e+00> : vector<2x128xf32>
    %18 = tpu.matmul %16, %17, %cst_17 {dimension_numbers = #tpu.dot_dimension_numbers<[1], [0], [0], [1], [0, 0, 1, 1], [], []>} : vector<2x256xf32>, vector<256x128xf32>, vector<2x128xf32> -> vector<2x128xf32>
    %c0_18 = arith.constant 0 : index
    %c0_19 = arith.constant 0 : index
    %19 = vector.load %arg7[%c0_18, %c0_19] : memref<1x128xf32, #tpu.memory_space<vmem>>, vector<1x128xf32>
    %20 = vector.broadcast %19 : vector<1x128xf32> to vector<2x128xf32>
    %21 = arith.addf %18, %20 : vector<2x128xf32>
    %cst_20 = arith.constant dense<0.000000e+00> : vector<128xf32>
    %22 = vector.multi_reduction <add>, %21, %cst_20 [0] : vector<2x128xf32> to vector<128xf32>
    %23 = vector.shape_cast %22 : vector<128xf32> to vector<1x128xf32>
    %cst_21 = arith.constant 2.000000e+00 : f32
    %24 = vector.broadcast %cst_21 : f32 to vector<1x128xf32>
    %25 = arith.divf %23, %24 : vector<1x128xf32>
    %26 = vector.broadcast %25 : vector<1x128xf32> to vector<2x128xf32>
    %27 = arith.subf %21, %26 : vector<2x128xf32>
    %28 = arith.mulf %27, %27 : vector<2x128xf32>
    %cst_22 = arith.constant dense<0.000000e+00> : vector<128xf32>
    %29 = vector.multi_reduction <add>, %28, %cst_22 [0] : vector<2x128xf32> to vector<128xf32>
    %30 = vector.shape_cast %29 : vector<128xf32> to vector<1x128xf32>
    %cst_23 = arith.constant 2.000000e+00 : f32
    %31 = vector.broadcast %cst_23 : f32 to vector<1x128xf32>
    %32 = arith.divf %30, %31 : vector<1x128xf32>
    %33 = vector.broadcast %25 : vector<1x128xf32> to vector<2x128xf32>
    %34 = arith.subf %21, %33 : vector<2x128xf32>
    %cst_24 = arith.constant 9.99999974E-6 : f32
    %35 = vector.broadcast %cst_24 : f32 to vector<1x128xf32>
    %36 = arith.addf %32, %35 : vector<1x128xf32>
    %37 = math.rsqrt %36 : vector<1x128xf32>
    %38 = vector.broadcast %37 : vector<1x128xf32> to vector<2x128xf32>
    %39 = arith.mulf %34, %38 : vector<2x128xf32>
    %c0_25 = arith.constant 0 : index
    %c0_26 = arith.constant 0 : index
    %40 = vector.load %arg8[%c0_25, %c0_26] : memref<1x128xf32, #tpu.memory_space<vmem>>, vector<1x128xf32>
    %41 = vector.broadcast %40 : vector<1x128xf32> to vector<2x128xf32>
    %42 = arith.mulf %39, %41 : vector<2x128xf32>
    %c0_27 = arith.constant 0 : index
    %c0_28 = arith.constant 0 : index
    %43 = vector.load %arg9[%c0_27, %c0_28] : memref<1x128xf32, #tpu.memory_space<vmem>>, vector<1x128xf32>
    %44 = vector.broadcast %43 : vector<1x128xf32> to vector<2x128xf32>
    %45 = arith.addf %42, %44 : vector<2x128xf32>
    %cst_29 = arith.constant 0.000000e+00 : f32
    %46 = vector.broadcast %cst_29 : f32 to vector<2x128xf32>
    %47 = arith.maximumf %45, %46 : vector<2x128xf32>
    %c0_30 = arith.constant 0 : index
    %c0_31 = arith.constant 0 : index
    %48 = vector.load %arg10[%c0_30, %c0_31] : memref<2x128xf32, #tpu.memory_space<vmem>>, vector<2x128xf32>
    tpu.vector_store %arg10[%c0_30, %c0_31], %47 {strides = array<i32>} : memref<2x128xf32, #tpu.memory_space<vmem>>, vector<2x128xf32>,
    return
  }
}

module attributes {stable_mosaic.version = 11 : i64} {
  func.func @_cvae_kernel(%arg0: memref<2x768xf32, #tpu.memory_space<vmem>>, %arg1: memref<2x3xf32, #tpu.memory_space<vmem>>, %arg2: memref<2x128xf32, #tpu.memory_space<vmem>>, %arg3: memref<2x9xf32, #tpu.memory_space<vmem>>, %arg4: memref<2x32xf32, #tpu.memory_space<vmem>>, %arg5: memref<2x32xf32, #tpu.memory_space<vmem>>, %arg6: memref<3x32xf32, #tpu.memory_space<vmem>>, %arg7: memref<1x32xf32, #tpu.memory_space<vmem>>, %arg8: memref<9x64xf32, #tpu.memory_space<vmem>>, %arg9: memref<1x64xf32, #tpu.memory_space<vmem>>, %arg10: memref<800x128xf32, #tpu.memory_space<vmem>>, %arg11: memref<1x128xf32, #tpu.memory_space<vmem>>, %arg12: memref<128x32xf32, #tpu.memory_space<vmem>>, %arg13: memref<1x32xf32, #tpu.memory_space<vmem>>, %arg14: memref<32x32xf32, #tpu.memory_space<vmem>>, %arg15: memref<1x32xf32, #tpu.memory_space<vmem>>, %arg16: memref<32x32xf32, #tpu.memory_space<vmem>>, %arg17: memref<1x32xf32, #tpu.memory_space<vmem>>, %arg18: memref<32x32xf32, #tpu.memory_space<vmem>>, %arg19: memref<1x32xf32, #tpu.memory_space<vmem>>, %arg20: memref<800x128xf32, #tpu.memory_space<vmem>>, %arg21: memref<1x128xf32, #tpu.memory_space<vmem>>, %arg22: memref<128x3xf32, #tpu.memory_space<vmem>>, %arg23: memref<1x3xf32, #tpu.memory_space<vmem>>, %arg24: memref<992x128xf32, #tpu.memory_space<vmem>>, %arg25: memref<1x128xf32, #tpu.memory_space<vmem>>, %arg26: memref<128x32xf32, #tpu.memory_space<vmem>>, %arg27: memref<1x32xf32, #tpu.memory_space<vmem>>, %arg28: memref<32x32xf32, #tpu.memory_space<vmem>>, %arg29: memref<1x32xf32, #tpu.memory_space<vmem>>, %arg30: memref<32x32xf32, #tpu.memory_space<vmem>>, %arg31: memref<1x32xf32, #tpu.memory_space<vmem>>, %arg32: memref<32x32xf32, #tpu.memory_space<vmem>>, %arg33: memref<1x32xf32, #tpu.memory_space<vmem>>, %arg34: memref<960x128xf32, #tpu.memory_space<vmem>>, %arg35: memref<1x128xf32, #tpu.memory_space<vmem>>, %arg36: memref<128x128xf32, #tpu.memory_space<vmem>>, %arg37: memref<1x128xf32, #tpu.memory_space<vmem>>, %arg38: memref<2x128xf32, #tpu.memory_space<vmem>>, %arg39: memref<1x128xf32, #tpu.memory_space<vmem>>, %arg40: memref<1x128xf32, #tpu.memory_space<vmem>>, %arg41: memref<1x128xf32, #tpu.memory_space<vmem>>) attributes {dimension_semantics = [], scalar_prefetch = 0 : i64, scratch_operands = 0 : i64, tpu.core_type = #tpu.core_type<tc>} {
    %c0 = arith.constant 0 : index
    %c0_0 = arith.constant 0 : index
    %0 = vector.load %arg0[%c0, %c0_0] : memref<2x768xf32, #tpu.memory_space<vmem>>, vector<2x768xf32>
    %c0_1 = arith.constant 0 : index
    %c0_2 = arith.constant 0 : index
    %1 = vector.load %arg1[%c0_1, %c0_2] : memref<2x3xf32, #tpu.memory_space<vmem>>, vector<2x3xf32>
    %c0_3 = arith.constant 0 : index
    %c0_4 = arith.constant 0 : index
    %2 = vector.load %arg2[%c0_3, %c0_4] : memref<2x128xf32, #tpu.memory_space<vmem>>, vector<2x128xf32>
    %c0_5 = arith.constant 0 : index
    %c0_6 = arith.constant 0 : index
    %3 = vector.load %arg3[%c0_5, %c0_6] : memref<2x9xf32, #tpu.memory_space<vmem>>, vector<2x9xf32>
    %c0_7 = arith.constant 0 : index
    %c0_8 = arith.constant 0 : index
    %4 = vector.load %arg6[%c0_7, %c0_8] : memref<3x32xf32, #tpu.memory_space<vmem>>, vector<3x32xf32>
    %cst = arith.constant dense<0.000000e+00> : vector<2x32xf32>
    %5 = tpu.matmul %1, %4, %cst {dimension_numbers = #tpu.dot_dimension_numbers<[1], [0], [0], [1], [0, 0, 1, 1], [], []>} : vector<2x3xf32>, vector<3x32xf32>, vector<2x32xf32> -> vector<2x32xf32>
    %c0_9 = arith.constant 0 : index
    %c0_10 = arith.constant 0 : index
    %6 = vector.load %arg7[%c0_9, %c0_10] : memref<1x32xf32, #tpu.memory_space<vmem>>, vector<1x32xf32>
    %7 = vector.broadcast %6 : vector<1x32xf32> to vector<2x32xf32>
    %8 = arith.addf %5, %7 : vector<2x32xf32>
    %c0_11 = arith.constant 0 : index
    %c0_12 = arith.constant 0 : index
    %9 = vector.load %arg8[%c0_11, %c0_12] : memref<9x64xf32, #tpu.memory_space<vmem>>, vector<9x64xf32>
    %cst_13 = arith.constant dense<0.000000e+00> : vector<2x64xf32>
    %10 = tpu.matmul %3, %9, %cst_13 {dimension_numbers = #tpu.dot_dimension_numbers<[1], [0], [0], [1], [0, 0, 1, 1], [], []>} : vector<2x9xf32>, vector<9x64xf32>, vector<2x64xf32> -> vector<2x64xf32>
    %c0_14 = arith.constant 0 : index
    %c0_15 = arith.constant 0 : index
    %11 = vector.load %arg9[%c0_14, %c0_15] : memref<1x64xf32, #tpu.memory_space<vmem>>, vector<1x64xf32>
    %12 = vector.broadcast %11 : vector<1x64xf32> to vector<2x64xf32>
    %13 = arith.addf %10, %12 : vector<2x64xf32>
    %c0_16 = arith.constant 0 : index
    %c0_17 = arith.constant 0 : index
    %14 = vector.load %arg10[%c0_16, %c0_17] : memref<800x128xf32, #tpu.memory_space<vmem>>, vector<768x128xf32>
    %cst_18 = arith.constant dense<0.000000e+00> : vector<2x128xf32>
    %15 = tpu.matmul %0, %14, %cst_18 {dimension_numbers = #tpu.dot_dimension_numbers<[1], [0], [0], [1], [0, 0, 1, 1], [], []>} : vector<2x768xf32>, vector<768x128xf32>, vector<2x128xf32> -> vector<2x128xf32>
    %c768 = arith.constant 768 : index
    %c0_19 = arith.constant 0 : index
    %16 = vector.load %arg10[%c768, %c0_19] : memref<800x128xf32, #tpu.memory_space<vmem>>, vector<32x128xf32>
    %cst_20 = arith.constant dense<0.000000e+00> : vector<2x128xf32>
    %17 = tpu.matmul %8, %16, %cst_20 {dimension_numbers = #tpu.dot_dimension_numbers<[1], [0], [0], [1], [0, 0, 1, 1], [], []>} : vector<2x32xf32>, vector<32x128xf32>, vector<2x128xf32> -> vector<2x128xf32>
    %18 = arith.addf %15, %17 : vector<2x128xf32>
    %c0_21 = arith.constant 0 : index
    %c0_22 = arith.constant 0 : index
    %19 = vector.load %arg11[%c0_21, %c0_22] : memref<1x128xf32, #tpu.memory_space<vmem>>, vector<1x128xf32>
    %20 = vector.broadcast %19 : vector<1x128xf32> to vector<2x128xf32>
    %21 = arith.addf %18, %20 : vector<2x128xf32>
    %cst_23 = arith.constant 0.000000e+00 : f32
    %22 = vector.broadcast %cst_23 : f32 to vector<2x128xf32>
    %23 = arith.cmpf oge, %21, %22 : vector<2x128xf32>
    %cst_24 = arith.constant 0.00999999977 : f32
    %24 = vector.broadcast %cst_24 : f32 to vector<2x128xf32>
    %25 = arith.mulf %24, %21 : vector<2x128xf32>
    %26 = arith.select %23, %21, %25 : vector<2x128xi1>, vector<2x128xf32>
    %c0_25 = arith.constant 0 : index
    %c0_26 = arith.constant 0 : index
    %27 = vector.load %arg12[%c0_25, %c0_26] : memref<128x32xf32, #tpu.memory_space<vmem>>, vector<128x32xf32>
    %cst_27 = arith.constant dense<0.000000e+00> : vector<2x32xf32>
    %28 = tpu.matmul %26, %27, %cst_27 {dimension_numbers = #tpu.dot_dimension_numbers<[1], [0], [0], [1], [0, 0, 1, 1], [], []>} : vector<2x128xf32>, vector<128x32xf32>, vector<2x32xf32> -> vector<2x32xf32>
    %c0_28 = arith.constant 0 : index
    %c0_29 = arith.constant 0 : index
    %29 = vector.load %arg13[%c0_28, %c0_29] : memref<1x32xf32, #tpu.memory_space<vmem>>, vector<1x32xf32>
    %30 = vector.broadcast %29 : vector<1x32xf32> to vector<2x32xf32>
    %31 = arith.addf %28, %30 : vector<2x32xf32>
    %cst_30 = arith.constant 0.000000e+00 : f32
    %32 = vector.broadcast %cst_30 : f32 to vector<2x32xf32>
    %33 = arith.cmpf oge, %31, %32 : vector<2x32xf32>
    %cst_31 = arith.constant 0.00999999977 : f32
    %34 = vector.broadcast %cst_31 : f32 to vector<2x32xf32>
    %35 = arith.mulf %34, %31 : vector<2x32xf32>
    %36 = arith.select %33, %31, %35 : vector<2x32xi1>, vector<2x32xf32>
    %c0_32 = arith.constant 0 : index
    %c0_33 = arith.constant 0 : index
    %37 = vector.load %arg14[%c0_32, %c0_33] : memref<32x32xf32, #tpu.memory_space<vmem>>, vector<32x32xf32>
    %cst_34 = arith.constant dense<0.000000e+00> : vector<2x32xf32>
    %38 = tpu.matmul %36, %37, %cst_34 {dimension_numbers = #tpu.dot_dimension_numbers<[1], [0], [0], [1], [0, 0, 1, 1], [], []>} : vector<2x32xf32>, vector<32x32xf32>, vector<2x32xf32> -> vector<2x32xf32>
    %c0_35 = arith.constant 0 : index
    %c0_36 = arith.constant 0 : index
    %39 = vector.load %arg15[%c0_35, %c0_36] : memref<1x32xf32, #tpu.memory_space<vmem>>, vector<1x32xf32>
    %40 = vector.broadcast %39 : vector<1x32xf32> to vector<2x32xf32>
    %41 = arith.addf %38, %40 : vector<2x32xf32>
    %c0_37 = arith.constant 0 : index
    %c0_38 = arith.constant 0 : index
    %42 = vector.load %arg16[%c0_37, %c0_38] : memref<32x32xf32, #tpu.memory_space<vmem>>, vector<32x32xf32>
    %cst_39 = arith.constant dense<0.000000e+00> : vector<2x32xf32>
    %43 = tpu.matmul %41, %42, %cst_39 {dimension_numbers = #tpu.dot_dimension_numbers<[1], [0], [0], [1], [0, 0, 1, 1], [], []>} : vector<2x32xf32>, vector<32x32xf32>, vector<2x32xf32> -> vector<2x32xf32>
    %c0_40 = arith.constant 0 : index
    %c0_41 = arith.constant 0 : index
    %44 = vector.load %arg17[%c0_40, %c0_41] : memref<1x32xf32, #tpu.memory_space<vmem>>, vector<1x32xf32>
    %45 = vector.broadcast %44 : vector<1x32xf32> to vector<2x32xf32>
    %46 = arith.addf %43, %45 : vector<2x32xf32>
    %c0_42 = arith.constant 0 : index
    %c0_43 = arith.constant 0 : index
    %47 = vector.load %arg18[%c0_42, %c0_43] : memref<32x32xf32, #tpu.memory_space<vmem>>, vector<32x32xf32>
    %cst_44 = arith.constant dense<0.000000e+00> : vector<2x32xf32>
    %48 = tpu.matmul %41, %47, %cst_44 {dimension_numbers = #tpu.dot_dimension_numbers<[1], [0], [0], [1], [0, 0, 1, 1], [], []>} : vector<2x32xf32>, vector<32x32xf32>, vector<2x32xf32> -> vector<2x32xf32>
    %c0_45 = arith.constant 0 : index
    %c0_46 = arith.constant 0 : index
    %49 = vector.load %arg19[%c0_45, %c0_46] : memref<1x32xf32, #tpu.memory_space<vmem>>, vector<1x32xf32>
    %50 = vector.broadcast %49 : vector<1x32xf32> to vector<2x32xf32>
    %51 = arith.addf %48, %50 : vector<2x32xf32>
    %cst_47 = arith.constant 5.000000e-01 : f32
    %52 = vector.broadcast %cst_47 : f32 to vector<2x32xf32>
    %53 = arith.mulf %51, %52 : vector<2x32xf32>
    %54 = math.exp %53 : vector<2x32xf32>
    %c0_48 = arith.constant 0 : index
    %c0_49 = arith.constant 0 : index
    %55 = vector.load %arg4[%c0_48, %c0_49] : memref<2x32xf32, #tpu.memory_space<vmem>>, vector<2x32xf32>
    %56 = arith.mulf %54, %55 : vector<2x32xf32>
    %57 = arith.addf %46, %56 : vector<2x32xf32>
    %c0_50 = arith.constant 0 : index
    %c0_51 = arith.constant 0 : index
    %58 = vector.load %arg20[%c0_50, %c0_51] : memref<800x128xf32, #tpu.memory_space<vmem>>, vector<768x128xf32>
    %cst_52 = arith.constant dense<0.000000e+00> : vector<2x128xf32>
    %59 = tpu.matmul %0, %58, %cst_52 {dimension_numbers = #tpu.dot_dimension_numbers<[1], [0], [0], [1], [0, 0, 1, 1], [], []>} : vector<2x768xf32>, vector<768x128xf32>, vector<2x128xf32> -> vector<2x128xf32>
    %c768_53 = arith.constant 768 : index
    %c0_54 = arith.constant 0 : index
    %60 = vector.load %arg20[%c768_53, %c0_54] : memref<800x128xf32, #tpu.memory_space<vmem>>, vector<32x128xf32>
    %cst_55 = arith.constant dense<0.000000e+00> : vector<2x128xf32>
    %61 = tpu.matmul %57, %60, %cst_55 {dimension_numbers = #tpu.dot_dimension_numbers<[1], [0], [0], [1], [0, 0, 1, 1], [], []>} : vector<2x32xf32>, vector<32x128xf32>, vector<2x128xf32> -> vector<2x128xf32>
    %62 = arith.addf %59, %61 : vector<2x128xf32>
    %c0_56 = arith.constant 0 : index
    %c0_57 = arith.constant 0 : index
    %63 = vector.load %arg21[%c0_56, %c0_57] : memref<1x128xf32, #tpu.memory_space<vmem>>, vector<1x128xf32>
    %64 = vector.broadcast %63 : vector<1x128xf32> to vector<2x128xf32>
    %65 = arith.addf %62, %64 : vector<2x128xf32>
    %cst_58 = arith.constant 0.000000e+00 : f32
    %66 = vector.broadcast %cst_58 : f32 to vector<2x128xf32>
    %67 = arith.cmpf oge, %65, %66 : vector<2x128xf32>
    %cst_59 = arith.constant 0.00999999977 : f32
    %68 = vector.broadcast %cst_59 : f32 to vector<2x128xf32>
    %69 = arith.mulf %68, %65 : vector<2x128xf32>
    %70 = arith.select %67, %65, %69 : vector<2x128xi1>, vector<2x128xf32>
    %c0_60 = arith.constant 0 : index
    %c0_61 = arith.constant 0 : index
    %71 = vector.load %arg22[%c0_60, %c0_61] : memref<128x3xf32, #tpu.memory_space<vmem>>, vector<128x3xf32>
    %cst_62 = arith.constant dense<0.000000e+00> : vector<2x3xf32>
    %72 = tpu.matmul %70, %71, %cst_62 {dimension_numbers = #tpu.dot_dimension_numbers<[1], [0], [0], [1], [0, 0, 1, 1], [], []>} : vector<2x128xf32>, vector<128x3xf32>, vector<2x3xf32> -> vector<2x3xf32>
    %c0_63 = arith.constant 0 : index
    %c0_64 = arith.constant 0 : index
    %73 = vector.load %arg23[%c0_63, %c0_64] : memref<1x3xf32, #tpu.memory_space<vmem>>, vector<1x3xf32>
    %74 = vector.broadcast %73 : vector<1x3xf32> to vector<2x3xf32>
    %75 = arith.addf %72, %74 : vector<2x3xf32>
    %c0_65 = arith.constant 0 : index
    %c0_66 = arith.constant 0 : index
    %76 = vector.load %arg24[%c0_65, %c0_66] : memref<992x128xf32, #tpu.memory_space<vmem>>, vector<768x128xf32>
    %cst_67 = arith.constant dense<0.000000e+00> : vector<2x128xf32>
    %77 = tpu.matmul %0, %76, %cst_67 {dimension_numbers = #tpu.dot_dimension_numbers<[1], [0], [0], [1], [0, 0, 1, 1], [], []>} : vector<2x768xf32>, vector<768x128xf32>, vector<2x128xf32> -> vector<2x128xf32>
    %c768_68 = arith.constant 768 : index
    %c0_69 = arith.constant 0 : index
    %78 = vector.load %arg24[%c768_68, %c0_69] : memref<992x128xf32, #tpu.memory_space<vmem>>, vector<32x128xf32>
    %cst_70 = arith.constant dense<0.000000e+00> : vector<2x128xf32>
    %79 = tpu.matmul %8, %78, %cst_70 {dimension_numbers = #tpu.dot_dimension_numbers<[1], [0], [0], [1], [0, 0, 1, 1], [], []>} : vector<2x32xf32>, vector<32x128xf32>, vector<2x128xf32> -> vector<2x128xf32>
    %80 = arith.addf %77, %79 : vector<2x128xf32>
    %c800 = arith.constant 800 : index
    %c0_71 = arith.constant 0 : index
    %81 = vector.load %arg24[%c800, %c0_71] : memref<992x128xf32, #tpu.memory_space<vmem>>, vector<128x128xf32>
    %cst_72 = arith.constant dense<0.000000e+00> : vector<2x128xf32>
    %82 = tpu.matmul %2, %81, %cst_72 {dimension_numbers = #tpu.dot_dimension_numbers<[1], [0], [0], [1], [0, 0, 1, 1], [], []>} : vector<2x128xf32>, vector<128x128xf32>, vector<2x128xf32> -> vector<2x128xf32>
    %83 = arith.addf %80, %82 : vector<2x128xf32>
    %c928 = arith.constant 928 : index
    %c0_73 = arith.constant 0 : index
    %84 = vector.load %arg24[%c928, %c0_73] : memref<992x128xf32, #tpu.memory_space<vmem>>, vector<64x128xf32>
    %cst_74 = arith.constant dense<0.000000e+00> : vector<2x128xf32>
    %85 = tpu.matmul %13, %84, %cst_74 {dimension_numbers = #tpu.dot_dimension_numbers<[1], [0], [0], [1], [0, 0, 1, 1], [], []>} : vector<2x64xf32>, vector<64x128xf32>, vector<2x128xf32> -> vector<2x128xf32>
    %86 = arith.addf %83, %85 : vector<2x128xf32>
    %c0_75 = arith.constant 0 : index
    %c0_76 = arith.constant 0 : index
    %87 = vector.load %arg25[%c0_75, %c0_76] : memref<1x128xf32, #tpu.memory_space<vmem>>, vector<1x128xf32>
    %88 = vector.broadcast %87 : vector<1x128xf32> to vector<2x128xf32>
    %89 = arith.addf %86, %88 : vector<2x128xf32>
    %cst_77 = arith.constant 0.000000e+00 : f32
    %90 = vector.broadcast %cst_77 : f32 to vector<2x128xf32>
    %91 = arith.cmpf oge, %89, %90 : vector<2x128xf32>
    %cst_78 = arith.constant 0.00999999977 : f32
    %92 = vector.broadcast %cst_78 : f32 to vector<2x128xf32>
    %93 = arith.mulf %92, %89 : vector<2x128xf32>
    %94 = arith.select %91, %89, %93 : vector<2x128xi1>, vector<2x128xf32>
    %c0_79 = arith.constant 0 : index
    %c0_80 = arith.constant 0 : index
    %95 = vector.load %arg26[%c0_79, %c0_80] : memref<128x32xf32, #tpu.memory_space<vmem>>, vector<128x32xf32>
    %cst_81 = arith.constant dense<0.000000e+00> : vector<2x32xf32>
    %96 = tpu.matmul %94, %95, %cst_81 {dimension_numbers = #tpu.dot_dimension_numbers<[1], [0], [0], [1], [0, 0, 1, 1], [], []>} : vector<2x128xf32>, vector<128x32xf32>, vector<2x32xf32> -> vector<2x32xf32>
    %c0_82 = arith.constant 0 : index
    %c0_83 = arith.constant 0 : index
    %97 = vector.load %arg27[%c0_82, %c0_83] : memref<1x32xf32, #tpu.memory_space<vmem>>, vector<1x32xf32>
    %98 = vector.broadcast %97 : vector<1x32xf32> to vector<2x32xf32>
    %99 = arith.addf %96, %98 : vector<2x32xf32>
    %cst_84 = arith.constant 0.000000e+00 : f32
    %100 = vector.broadcast %cst_84 : f32 to vector<2x32xf32>
    %101 = arith.cmpf oge, %99, %100 : vector<2x32xf32>
    %cst_85 = arith.constant 0.00999999977 : f32
    %102 = vector.broadcast %cst_85 : f32 to vector<2x32xf32>
    %103 = arith.mulf %102, %99 : vector<2x32xf32>
    %104 = arith.select %101, %99, %103 : vector<2x32xi1>, vector<2x32xf32>
    %c0_86 = arith.constant 0 : index
    %c0_87 = arith.constant 0 : index
    %105 = vector.load %arg28[%c0_86, %c0_87] : memref<32x32xf32, #tpu.memory_space<vmem>>, vector<32x32xf32>
    %cst_88 = arith.constant dense<0.000000e+00> : vector<2x32xf32>
    %106 = tpu.matmul %104, %105, %cst_88 {dimension_numbers = #tpu.dot_dimension_numbers<[1], [0], [0], [1], [0, 0, 1, 1], [], []>} : vector<2x32xf32>, vector<32x32xf32>, vector<2x32xf32> -> vector<2x32xf32>
    %c0_89 = arith.constant 0 : index
    %c0_90 = arith.constant 0 : index
    %107 = vector.load %arg29[%c0_89, %c0_90] : memref<1x32xf32, #tpu.memory_space<vmem>>, vector<1x32xf32>
    %108 = vector.broadcast %107 : vector<1x32xf32> to vector<2x32xf32>
    %109 = arith.addf %106, %108 : vector<2x32xf32>
    %c0_91 = arith.constant 0 : index
    %c0_92 = arith.constant 0 : index
    %110 = vector.load %arg30[%c0_91, %c0_92] : memref<32x32xf32, #tpu.memory_space<vmem>>, vector<32x32xf32>
    %cst_93 = arith.constant dense<0.000000e+00> : vector<2x32xf32>
    %111 = tpu.matmul %109, %110, %cst_93 {dimension_numbers = #tpu.dot_dimension_numbers<[1], [0], [0], [1], [0, 0, 1, 1], [], []>} : vector<2x32xf32>, vector<32x32xf32>, vector<2x32xf32> -> vector<2x32xf32>
    %c0_94 = arith.constant 0 : index
    %c0_95 = arith.constant 0 : index
    %112 = vector.load %arg31[%c0_94, %c0_95] : memref<1x32xf32, #tpu.memory_space<vmem>>, vector<1x32xf32>
    %113 = vector.broadcast %112 : vector<1x32xf32> to vector<2x32xf32>
    %114 = arith.addf %111, %113 : vector<2x32xf32>
    %c0_96 = arith.constant 0 : index
    %c0_97 = arith.constant 0 : index
    %115 = vector.load %arg32[%c0_96, %c0_97] : memref<32x32xf32, #tpu.memory_space<vmem>>, vector<32x32xf32>
    %cst_98 = arith.constant dense<0.000000e+00> : vector<2x32xf32>
    %116 = tpu.matmul %109, %115, %cst_98 {dimension_numbers = #tpu.dot_dimension_numbers<[1], [0], [0], [1], [0, 0, 1, 1], [], []>} : vector<2x32xf32>, vector<32x32xf32>, vector<2x32xf32> -> vector<2x32xf32>
    %c0_99 = arith.constant 0 : index
    %c0_100 = arith.constant 0 : index
    %117 = vector.load %arg33[%c0_99, %c0_100] : memref<1x32xf32, #tpu.memory_space<vmem>>, vector<1x32xf32>
    %118 = vector.broadcast %117 : vector<1x32xf32> to vector<2x32xf32>
    %119 = arith.addf %116, %118 : vector<2x32xf32>
    %cst_101 = arith.constant 5.000000e-01 : f32
    %120 = vector.broadcast %cst_101 : f32 to vector<2x32xf32>
    %121 = arith.mulf %119, %120 : vector<2x32xf32>
    %122 = math.exp %121 : vector<2x32xf32>
    %c0_102 = arith.constant 0 : index
    %c0_103 = arith.constant 0 : index
    %123 = vector.load %arg5[%c0_102, %c0_103] : memref<2x32xf32, #tpu.memory_space<vmem>>, vector<2x32xf32>
    %124 = arith.mulf %122, %123 : vector<2x32xf32>
    %125 = arith.addf %114, %124 : vector<2x32xf32>
    %c0_104 = arith.constant 0 : index
    %c0_105 = arith.constant 0 : index
    %126 = vector.load %arg34[%c0_104, %c0_105] : memref<960x128xf32, #tpu.memory_space<vmem>>, vector<768x128xf32>
    %cst_106 = arith.constant dense<0.000000e+00> : vector<2x128xf32>
    %127 = tpu.matmul %0, %126, %cst_106 {dimension_numbers = #tpu.dot_dimension_numbers<[1], [0], [0], [1], [0, 0, 1, 1], [], []>} : vector<2x768xf32>, vector<768x128xf32>, vector<2x128xf32> -> vector<2x128xf32>
    %c768_107 = arith.constant 768 : index
    %c0_108 = arith.constant 0 : index
    %128 = vector.load %arg34[%c768_107, %c0_108] : memref<960x128xf32, #tpu.memory_space<vmem>>, vector<32x128xf32>
    %cst_109 = arith.constant dense<0.000000e+00> : vector<2x128xf32>
    %129 = tpu.matmul %8, %128, %cst_109 {dimension_numbers = #tpu.dot_dimension_numbers<[1], [0], [0], [1], [0, 0, 1, 1], [], []>} : vector<2x32xf32>, vector<32x128xf32>, vector<2x128xf32> -> vector<2x128xf32>
    %130 = arith.addf %127, %129 : vector<2x128xf32>
    %c800_110 = arith.constant 800 : index
    %c0_111 = arith.constant 0 : index
    %131 = vector.load %arg34[%c800_110, %c0_111] : memref<960x128xf32, #tpu.memory_space<vmem>>, vector<128x128xf32>
    %cst_112 = arith.constant dense<0.000000e+00> : vector<2x128xf32>
    %132 = tpu.matmul %2, %131, %cst_112 {dimension_numbers = #tpu.dot_dimension_numbers<[1], [0], [0], [1], [0, 0, 1, 1], [], []>} : vector<2x128xf32>, vector<128x128xf32>, vector<2x128xf32> -> vector<2x128xf32>
    %133 = arith.addf %130, %132 : vector<2x128xf32>
    %c928_113 = arith.constant 928 : index
    %c0_114 = arith.constant 0 : index
    %134 = vector.load %arg34[%c928_113, %c0_114] : memref<960x128xf32, #tpu.memory_space<vmem>>, vector<32x128xf32>
    %cst_115 = arith.constant dense<0.000000e+00> : vector<2x128xf32>
    %135 = tpu.matmul %125, %134, %cst_115 {dimension_numbers = #tpu.dot_dimension_numbers<[1], [0], [0], [1], [0, 0, 1, 1], [], []>} : vector<2x32xf32>, vector<32x128xf32>, vector<2x128xf32> -> vector<2x128xf32>
    %136 = arith.addf %133, %135 : vector<2x128xf32>
    %c0_116 = arith.constant 0 : index
    %c0_117 = arith.constant 0 : index
    %137 = vector.load %arg35[%c0_116, %c0_117] : memref<1x128xf32, #tpu.memory_space<vmem>>, vector<1x128xf32>
    %138 = vector.broadcast %137 : vector<1x128xf32> to vector<2x128xf32>
    %139 = arith.addf %136, %138 : vector<2x128xf32>
    %cst_118 = arith.constant 0.000000e+00 : f32
    %140 = vector.broadcast %cst_118 : f32 to vector<2x128xf32>
    %141 = arith.cmpf oge, %139, %140 : vector<2x128xf32>
    %cst_119 = arith.constant 0.00999999977 : f32
    %142 = vector.broadcast %cst_119 : f32 to vector<2x128xf32>
    %143 = arith.mulf %142, %139 : vector<2x128xf32>
    %144 = arith.select %141, %139, %143 : vector<2x128xi1>, vector<2x128xf32>
    %c0_120 = arith.constant 0 : index
    %c0_121 = arith.constant 0 : index
    %145 = vector.load %arg36[%c0_120, %c0_121] : memref<128x128xf32, #tpu.memory_space<vmem>>, vector<128x128xf32>
    %cst_122 = arith.constant dense<0.000000e+00> : vector<2x128xf32>
    %146 = tpu.matmul %144, %145, %cst_122 {dimension_numbers = #tpu.dot_dimension_numbers<[1], [0], [0], [1], [0, 0, 1, 1], [], []>} : vector<2x128xf32>, vector<128x128xf32>, vector<2x128xf32> -> vector<2x128xf32>
    %c0_123 = arith.constant 0 : index
    %c0_124 = arith.constant 0 : index
    %147 = vector.load %arg37[%c0_123, %c0_124] : memref<1x128xf32, #tpu.memory_space<vmem>>, vector<1x128xf32>
    %148 = vector.broadcast %147 : vector<1x128xf32> to vector<2x128xf32>
    %149 = arith.addf %146, %148 : vector<2x128xf32>
    %c0_125 = arith.constant 0 : index
    %c0_126 = arith.constant 0 : index
    %150 = vector.load %arg38[%c0_125, %c0_126] : memref<2x128xf32, #tpu.memory_space<vmem>>, vector<2x128xf32>
    tpu.vector_store %arg38[%c0_125, %c0_126], %149 {strides = array<i32>} : memref<2x128xf32, #tpu.memory_space<vmem>>, vector<2x128xf32>,
    %151 = arith.mulf %46, %46 : vector<2x32xf32>
    %152 = math.exp %51 : vector<2x32xf32>
    %153 = arith.addf %151, %152 : vector<2x32xf32>
    %cst_127 = arith.constant 1.000000e+00 : f32
    %154 = vector.broadcast %cst_127 : f32 to vector<2x32xf32>
    %155 = arith.subf %153, %154 : vector<2x32xf32>
    %156 = arith.subf %155, %51 : vector<2x32xf32>
    %cst_128 = arith.constant dense<0.000000e+00> : vector<2xf32>
    %157 = vector.multi_reduction <add>, %156, %cst_128 [1] : vector<2x32xf32> to vector<2xf32>
    %158 = vector.shape_cast %157 : vector<2xf32> to vector<2x1xf32>
    %cst_129 = arith.constant 5.000000e-01 : f32
    %159 = vector.broadcast %cst_129 : f32 to vector<2x1xf32>
    %160 = arith.mulf %159, %158 : vector<2x1xf32>
    %cst_130 = arith.constant dense<0.000000e+00> : vector<1xf32>
    %161 = vector.multi_reduction <add>, %160, %cst_130 [0] : vector<2x1xf32> to vector<1xf32>
    %162 = vector.shape_cast %161 : vector<1xf32> to vector<1x1xf32>
    %cst_131 = arith.constant 2.000000e+00 : f32
    %163 = vector.broadcast %cst_131 : f32 to vector<1x1xf32>
    %164 = arith.divf %162, %163 : vector<1x1xf32>
    %165 = vector.shape_cast %164 : vector<1x1xf32> to vector<1x1xf32>
    %166 = vector.broadcast %165 : vector<1x1xf32> to vector<1x128xf32>
    %c0_132 = arith.constant 0 : index
    %c0_133 = arith.constant 0 : index
    %167 = vector.load %arg40[%c0_132, %c0_133] : memref<1x128xf32, #tpu.memory_space<vmem>>, vector<1x128xf32>
    tpu.vector_store %arg40[%c0_132, %c0_133], %166 {strides = array<i32>} : memref<1x128xf32, #tpu.memory_space<vmem>>, vector<1x128xf32>,
    %168 = arith.mulf %114, %114 : vector<2x32xf32>
    %169 = math.exp %119 : vector<2x32xf32>
    %170 = arith.addf %168, %169 : vector<2x32xf32>
    %cst_134 = arith.constant 1.000000e+00 : f32
    %171 = vector.broadcast %cst_134 : f32 to vector<2x32xf32>
    %172 = arith.subf %170, %171 : vector<2x32xf32>
    %173 = arith.subf %172, %119 : vector<2x32xf32>
    %cst_135 = arith.constant dense<0.000000e+00> : vector<2xf32>
    %174 = vector.multi_reduction <add>, %173, %cst_135 [1] : vector<2x32xf32> to vector<2xf32>
    %175 = vector.shape_cast %174 : vector<2xf32> to vector<2x1xf32>
    %cst_136 = arith.constant 5.000000e-01 : f32
    %176 = vector.broadcast %cst_136 : f32 to vector<2x1xf32>
    %177 = arith.mulf %176, %175 : vector<2x1xf32>
    %cst_137 = arith.constant dense<0.000000e+00> : vector<1xf32>
    %178 = vector.multi_reduction <add>, %177, %cst_137 [0] : vector<2x1xf32> to vector<1xf32>
    %179 = vector.shape_cast %178 : vector<1xf32> to vector<1x1xf32>
    %cst_138 = arith.constant 2.000000e+00 : f32
    %180 = vector.broadcast %cst_138 : f32 to vector<1x1xf32>
    %181 = arith.divf %179, %180 : vector<1x1xf32>
    %182 = vector.shape_cast %181 : vector<1x1xf32> to vector<1x1xf32>
    %183 = vector.broadcast %182 : vector<1x1xf32> to vector<1x128xf32>
    %c0_139 = arith.constant 0 : index
    %c0_140 = arith.constant 0 : index
    %184 = vector.load %arg41[%c0_139, %c0_140] : memref<1x128xf32, #tpu.memory_space<vmem>>, vector<1x128xf32>
    tpu.vector_store %arg41[%c0_139, %c0_140], %183 {strides = array<i32>} : memref<1x128xf32, #tpu.memory_space<vmem>>, vector<1x128xf32>,
    %185 = arith.mulf %75, %1 : vector<2x3xf32>
    %cst_141 = arith.constant dense<0.000000e+00> : vector<2xf32>
    %186 = vector.multi_reduction <add>, %185, %cst_141 [1] : vector<2x3xf32> to vector<2xf32>
    %187 = vector.shape_cast %186 : vector<2xf32> to vector<2x1xf32>
    %188 = arith.mulf %75, %75 : vector<2x3xf32>
    %cst_142 = arith.constant dense<0.000000e+00> : vector<2xf32>
    %189 = vector.multi_reduction <add>, %188, %cst_142 [1] : vector<2x3xf32> to vector<2xf32>
    %190 = vector.shape_cast %189 : vector<2xf32> to vector<2x1xf32>
    %191 = math.sqrt %190 : vector<2x1xf32>
    %192 = arith.mulf %1, %1 : vector<2x3xf32>
    %cst_143 = arith.constant dense<0.000000e+00> : vector<2xf32>
    %193 = vector.multi_reduction <add>, %192, %cst_143 [1] : vector<2x3xf32> to vector<2xf32>
    %194 = vector.shape_cast %193 : vector<2xf32> to vector<2x1xf32>
    %195 = math.sqrt %194 : vector<2x1xf32>
    %196 = arith.mulf %191, %195 : vector<2x1xf32>
    %cst_144 = arith.constant 9.99999993E-9 : f32
    %197 = vector.broadcast %cst_144 : f32 to vector<2x1xf32>
    %198 = arith.maximumf %196, %197 : vector<2x1xf32>
    %199 = arith.divf %187, %198 : vector<2x1xf32>
    %cst_145 = arith.constant 1.000000e+00 : f32
    %200 = vector.broadcast %cst_145 : f32 to vector<2x1xf32>
    %201 = arith.subf %200, %199 : vector<2x1xf32>
    %cst_146 = arith.constant dense<0.000000e+00> : vector<1xf32>
    %202 = vector.multi_reduction <add>, %201, %cst_146 [0] : vector<2x1xf32> to vector<1xf32>
    %203 = vector.shape_cast %202 : vector<1xf32> to vector<1x1xf32>
    %cst_147 = arith.constant 2.000000e+00 : f32
    %204 = vector.broadcast %cst_147 : f32 to vector<1x1xf32>
    %205 = arith.divf %203, %204 : vector<1x1xf32>
    %206 = vector.shape_cast %205 : vector<1x1xf32> to vector<1x1xf32>
    %207 = vector.broadcast %206 : vector<1x1xf32> to vector<1x128xf32>
    %c0_148 = arith.constant 0 : index
    %c0_149 = arith.constant 0 : index
    %208 = vector.load %arg39[%c0_148, %c0_149] : memref<1x128xf32, #tpu.memory_space<vmem>>, vector<1x128xf32>
    tpu.vector_store %arg39[%c0_148, %c0_149], %207 {strides = array<i32>} : memref<1x128xf32, #tpu.memory_space<vmem>>, vector<1x128xf32>,
    return
  }
}

</mosaic_0001>

<llo_original>
// kernel: tile.7
$region0: #{tile.7}
  %s0 = inlined_call_operand.vmem [shape: f32[2,2,1,1,128,1,3], index: 0, kind: input, shape index: {}]
  %s1 = inlined_call_operand.vmem [shape: f32[2,768], index: 1, kind: output, shape index: {}]
  $region1: #{tile.7} parent=0
    #allocation0 [shape = 'u8[24576]{0}', space=vmem, size = 0x6000, scoped, tag = 'scoped mem for output reshape']
    %v2 = vld [vmem:[%s0] sm:$0x1]
    %s3 = scalar_lea.vmem %s0, 127
    %v4 = vld [vmem:[%s3] sm:$0x2]
    %vm5 = vcmask 1041409
    %v6 = vsel %vm5, %v4, %v2
    %s7 = scalar_lea.vmem %s0, 254
    %v8 = vld [vmem:[%s7] sm:$0x4]
    %vm9 = vcmask 1042434
    %v10 = vsel %vm9, %v8, %v6
    %s11 = scalar_lea.vmem %s0, 381
    %v12 = vld [vmem:[%s11] sm:$0x8]
    %vm13 = vcmask 1043459
    %v14 = vsel %vm13, %v12, %v10
    %vm15 = vcmask 23552
    %16 = vst.msk [vmem:[#allocation0] ss:$24 sm:$0x3] %vm15, %v14
    %s17 = scalar_lea.vmem [#allocation0], 4294967249
    %18 = vst.msk [vmem:[%s17] ss:$24 sm:$0xc] %vm15, %v14
    %s19 = scalar_lea.vmem %s0, 213
    %v20 = vld [vmem:[%s19] sm:$0x1]
    %s21 = scalar_lea.vmem %s0, 468
    %v22 = vld [vmem:[%s21] sm:$0x2]
    %vm23 = vcmask 1041409
    %v24 = vsel %vm23, %v22, %v20
    %s25 = scalar_lea.vmem %s0, 83
    %v26 = vld [vmem:[%s25] sm:$0x4]
    %vm27 = vcmask 1042434
    %v28 = vsel %vm27, %v26, %v24
    %s29 = scalar_lea.vmem %s0, 338
    %v30 = vld [vmem:[%s29] sm:$0x8]
    %vm31 = vcmask 1043459
    %v32 = vsel %vm31, %v30, %v28
    %s33 = scalar_lea.vmem %s0, 213
    %v34 = vld [vmem:[%s33] sm:$0x1]
    %s35 = scalar_lea.vmem %s0, 468
    %v36 = vld [vmem:[%s35] sm:$0x2]
    %vm37 = vcmask 1041409
    %v38 = vsel %vm37, %v36, %v34
    %s39 = scalar_lea.vmem %s0, 83
    %v40 = vld [vmem:[%s39] sm:$0x4]
    %vm41 = vcmask 1042434
    %v42 = vsel %vm41, %v40, %v38
    %s43 = scalar_lea.vmem %s0, 338
    %v44 = vld [vmem:[%s43] sm:$0x8]
    %vm45 = vcmask 1043459
    %v46 = vsel %vm45, %v44, %v42
    %vm47 = vcmask 7168
    %v48 = vsel %vm47, %v46, %v32
    %49 = vrot.lane.b32.xlu0 %v48, 127
    %v50 = vpop.permute.xlu0 %49
    %vm51 = vcmask 15360
    %s52 = scalar_lea.vmem [#allocation0], 40
    %53 = vst.msk [vmem:[%s52] sm:$0x3] %vm51, %v50
    %s54 = scalar_lea.vmem [#allocation0], 14
    %55 = vst.msk [vmem:[%s54] sm:$0xc] %vm51, %v50
    %vm56 = vcmask 1048568
    %s57 = scalar_lea.vmem [#allocation0], 32
    %58 = vst.msk [vmem:[%s57] sm:$0x3] %vm56, %v50
    %s59 = scalar_lea.vmem [#allocation0], 6
    %60 = vst.msk [vmem:[%s59] sm:$0xc] %vm56, %v50
    %s61 = scalar_lea.vmem %s0, 170
    %v62 = vld [vmem:[%s61] sm:$0x1]
    %s63 = scalar_lea.vmem %s0, 425
    %v64 = vld [vmem:[%s63] sm:$0x2]
    %vm65 = vcmask 1041409
    %v66 = vsel %vm65, %v64, %v62
    %s67 = scalar_lea.vmem %s0, 40
    %v68 = vld [vmem:[%s67] sm:$0x4]
    %vm69 = vcmask 1042434
    %v70 = vsel %vm69, %v68, %v66
    %s71 = scalar_lea.vmem %s0, 295
    %v72 = vld [vmem:[%s71] sm:$0x8]
    %vm73 = vcmask 1043459
    %v74 = vsel %vm73, %v72, %v70
    %s75 = scalar_lea.vmem %s0, 42
    %v76 = vld [vmem:[%s75] sm:$0x1]
    %s77 = scalar_lea.vmem %s0, 297
    %v78 = vld [vmem:[%s77] sm:$0x2]
    %vm79 = vcmask 1041409
    %v80 = vsel %vm79, %v78, %v76
    %s81 = scalar_lea.vmem %s0, 168
    %v82 = vld [vmem:[%s81] sm:$0x4]
    %vm83 = vcmask 1042434
    %v84 = vsel %vm83, %v82, %v80
    %s85 = scalar_lea.vmem %s0, 423
    %v86 = vld [vmem:[%s85] sm:$0x8]
    %vm87 = vcmask 1043459
    %v88 = vsel %vm87, %v86, %v84
    %vm89 = vcmask 15360
    %v90 = vsel %vm89, %v88, %v74
    %91 = vrot.lane.b32.xlu0 %v90, 126
    %v92 = vpop.permute.xlu0 %91
    %vm93 = vcmask 7168
    %s94 = scalar_lea.vmem [#allocation0], 32
    %95 = vst.msk [vmem:[%s94] sm:$0x3] %vm93, %v92
    %s96 = scalar_lea.vmem [#allocation0], 6
    %97 = vst.msk [vmem:[%s96] sm:$0xc] %vm93, %v92
    %vm98 = vcmask 1048560
    %99 = vst.msk [vmem:[#allocation0] sm:$0x3] %vm98, %v92
    %s100 = scalar_lea.vmem [#allocation0], 22
    %101 = vst.msk [vmem:[%s100] sm:$0xc] %vm98, %v92
    %s102 = scalar_lea.vmem %s0, 255
    %v103 = vld [vmem:[%s102] sm:$0x1]
    %s104 = scalar_lea.vmem %s0, 510
    %v105 = vld [vmem:[%s104] sm:$0x2]
    %vm106 = vcmask 1041409
    %v107 = vsel %vm106, %v105, %v103
    %s108 = scalar_lea.vmem %s0, 125
    %v109 = vld [vmem:[%s108] sm:$0x4]
    %vm110 = vcmask 1042434
    %v111 = vsel %vm110, %v109, %v107
    %s112 = scalar_lea.vmem %s0, 380
    %v113 = vld [vmem:[%s112] sm:$0x8]
    %vm114 = vcmask 1043459
    %v115 = vsel %vm114, %v113, %v111
    %116 = vrot.lane.b32.xlu0 %v115, 125
    %v117 = vpop.permute.xlu0 %116
    %vm118 = vcmask 1048552
    %s119 = scalar_lea.vmem [#allocation0], 40
    %120 = vst.msk [vmem:[%s119] sm:$0x3] %vm118, %v117
    %s121 = scalar_lea.vmem [#allocation0], 14
    %122 = vst.msk [vmem:[%s121] sm:$0xc] %vm118, %v117
    %s123 = scalar_lea.vmem %s0, 212
    %v124 = vld [vmem:[%s123] sm:$0x1]
    %s125 = scalar_lea.vmem %s0, 467
    %v126 = vld [vmem:[%s125] sm:$0x2]
    %vm127 = vcmask 1041409
    %v128 = vsel %vm127, %v126, %v124
    %s129 = scalar_lea.vmem %s0, 82
    %v130 = vld [vmem:[%s129] sm:$0x4]
    %vm131 = vcmask 1042434
    %v132 = vsel %vm131, %v130, %v128
    %s133 = scalar_lea.vmem %s0, 337
    %v134 = vld [vmem:[%s133] sm:$0x8]
    %vm135 = vcmask 1043459
    %v136 = vsel %vm135, %v134, %v132
    %137 = vrot.lane.b32.xlu0 %v136, 124
    %v138 = vpop.permute.xlu0 %137
    %vm139 = vcmask 1040352
    %s140 = scalar_lea.vmem [#allocation0], 32
    %141 = vst.msk [vmem:[%s140] sm:$0x3] %vm139, %v138
    %s142 = scalar_lea.vmem [#allocation0], 6
    %143 = vst.msk [vmem:[%s142] sm:$0xc] %vm139, %v138
    %s144 = scalar_lea.vmem %s0, 41
    %v145 = vld [vmem:[%s144] sm:$0x1]
    %s146 = scalar_lea.vmem %s0, 296
    %v147 = vld [vmem:[%s146] sm:$0x2]
    %vm148 = vcmask 1041409
    %v149 = vsel %vm148, %v147, %v145
    %s150 = scalar_lea.vmem %s0, 167
    %v151 = vld [vmem:[%s150] sm:$0x4]
    %vm152 = vcmask 1042434
    %v153 = vsel %vm152, %v151, %v149
    %s154 = scalar_lea.vmem %s0, 422
    %v155 = vld [vmem:[%s154] sm:$0x8]
    %vm156 = vcmask 1043459
    %v157 = vsel %vm156, %v155, %v153
    %158 = vrot.lane.b32.xlu0 %v157, 123
    %v159 = vpop.permute.xlu0 %158
    %vm160 = vcmask 1032152
    %161 = vst.msk [vmem:[#allocation0] sm:$0x3] %vm160, %v159
    %s162 = scalar_lea.vmem [#allocation0], 22
    %163 = vst.msk [vmem:[%s162] sm:$0xc] %vm160, %v159
    %s164 = scalar_lea.vmem %s0, 254
    %v165 = vld [vmem:[%s164] sm:$0x1]
    %s166 = scalar_lea.vmem %s0, 509
    %v167 = vld [vmem:[%s166] sm:$0x2]
    %vm168 = vcmask 1041409
    %v169 = vsel %vm168, %v167, %v165
    %s170 = scalar_lea.vmem %s0, 124
    %v171 = vld [vmem:[%s170] sm:$0x4]
    %vm172 = vcmask 1042434
    %v173 = vsel %vm172, %v171, %v169
    %s174 = scalar_lea.vmem %s0, 379
    %v175 = vld [vmem:[%s174] sm:$0x8]
    %vm176 = vcmask 1043459
    %v177 = vsel %vm176, %v175, %v173
    %178 = vrot.lane.b32.xlu0 %v177, 122
    %v179 = vpop.permute.xlu0 %178
    %vm180 = vcmask 1023952
    %s181 = scalar_lea.vmem [#allocation0], 40
    %182 = vst.msk [vmem:[%s181] sm:$0x3] %vm180, %v179
    %s183 = scalar_lea.vmem [#allocation0], 14
    %184 = vst.msk [vmem:[%s183] sm:$0xc] %vm180, %v179
    %s185 = scalar_lea.vmem %s0, 211
    %v186 = vld [vmem:[%s185] sm:$0x1]
    %s187 = scalar_lea.vmem %s0, 466
    %v188 = vld [vmem:[%s187] sm:$0x2]
    %vm189 = vcmask 1041409
    %v190 = vsel %vm189, %v188, %v186
    %s191 = scalar_lea.vmem %s0, 81
    %v192 = vld [vmem:[%s191] sm:$0x4]
    %vm193 = vcmask 1042434
    %v194 = vsel %vm193, %v192, %v190
    %s195 = scalar_lea.vmem %s0, 336
    %v196 = vld [vmem:[%s195] sm:$0x8]
    %vm197 = vcmask 1043459
    %v198 = vsel %vm197, %v196, %v194
    %199 = vrot.lane.b32.xlu0 %v198, 121
    %v200 = vpop.permute.xlu0 %199
    %vm201 = vcmask 1015752
    %s202 = scalar_lea.vmem [#allocation0], 32
    %203 = vst.msk [vmem:[%s202] sm:$0x3] %vm201, %v200
    %s204 = scalar_lea.vmem [#allocation0], 6
    %205 = vst.msk [vmem:[%s204] sm:$0xc] %vm201, %v200
    %s206 = scalar_lea.vmem %s0, 40
    %v207 = vld [vmem:[%s206] sm:$0x1]
    %s208 = scalar_lea.vmem %s0, 295
    %v209 = vld [vmem:[%s208] sm:$0x2]
    %vm210 = vcmask 1041409
    %v211 = vsel %vm210, %v209, %v207
    %s212 = scalar_lea.vmem %s0, 166
    %v213 = vld [vmem:[%s212] sm:$0x4]
    %vm214 = vcmask 1042434
    %v215 = vsel %vm214, %v213, %v211
    %s216 = scalar_lea.vmem %s0, 421
    %v217 = vld [vmem:[%s216] sm:$0x8]
    %vm218 = vcmask 1043459
    %v219 = vsel %vm218, %v217, %v215
    %220 = vrot.lane.b32.xlu0 %v219, 120
    %v221 = vpop.permute.xlu0 %220
    %vm222 = vcmask 1007552
    %223 = vst.msk [vmem:[#allocation0] sm:$0x3] %vm222, %v221
    %s224 = scalar_lea.vmem [#allocation0], 22
    %225 = vst.msk [vmem:[%s224] sm:$0xc] %vm222, %v221
    %s226 = scalar_lea.vmem %s0, 253
    %v227 = vld [vmem:[%s226] sm:$0x1]
    %s228 = scalar_lea.vmem %s0, 508
    %v229 = vld [vmem:[%s228] sm:$0x2]
    %vm230 = vcmask 1041409
    %v231 = vsel %vm230, %v229, %v227
    %s232 = scalar_lea.vmem %s0, 123
    %v233 = vld [vmem:[%s232] sm:$0x4]
    %vm234 = vcmask 1042434
    %v235 = vsel %vm234, %v233, %v231
    %s236 = scalar_lea.vmem %s0, 378
    %v237 = vld [vmem:[%s236] sm:$0x8]
    %vm238 = vcmask 1043459
    %v239 = vsel %vm238, %v237, %v235
    %240 = vrot.lane.b32.xlu0 %v239, 119
    %v241 = vpop.permute.xlu0 %240
    %vm242 = vcmask 999352
    %s243 = scalar_lea.vmem [#allocation0], 40
    %244 = vst.msk [vmem:[%s243] sm:$0x3] %vm242, %v241
    %s245 = scalar_lea.vmem [#allocation0], 14
    %246 = vst.msk [vmem:[%s245] sm:$0xc] %vm242, %v241
    %s247 = scalar_lea.vmem %s0, 210
    %v248 = vld [vmem:[%s247] sm:$0x1]
    %s249 = scalar_lea.vmem %s0, 465
    %v250 = vld [vmem:[%s249] sm:$0x2]
    %vm251 = vcmask 1041409
    %v252 = vsel %vm251, %v250, %v248
    %s253 = scalar_lea.vmem %s0, 80
    %v254 = vld [vmem:[%s253] sm:$0x4]
    %vm255 = vcmask 1042434
    %v256 = vsel %vm255, %v254, %v252
    %s257 = scalar_lea.vmem %s0, 335
    %v258 = vld [vmem:[%s257] sm:$0x8]
    %vm259 = vcmask 1043459
    %v260 = vsel %vm259, %v258, %v256
    %261 = vrot.lane.b32.xlu0 %v260, 118
    %v262 = vpop.permute.xlu0 %261
    %vm263 = vcmask 991152
    %s264 = scalar_lea.vmem [#allocation0], 32
    %265 = vst.msk [vmem:[%s264] sm:$0x3] %vm263, %v262
    %s266 = scalar_lea.vmem [#allocation0], 6
    %267 = vst.msk [vmem:[%s266] sm:$0xc] %vm263, %v262
    %s268 = scalar_lea.vmem %s0, 39
    %v269 = vld [vmem:[%s268] sm:$0x1]
    %s270 = scalar_lea.vmem %s0, 294
    %v271 = vld [vmem:[%s270] sm:$0x2]
    %vm272 = vcmask 1041409
    %v273 = vsel %vm272, %v271, %v269
    %s274 = scalar_lea.vmem %s0, 165
    %v275 = vld [vmem:[%s274] sm:$0x4]
    %vm276 = vcmask 1042434
    %v277 = vsel %vm276, %v275, %v273
    %s278 = scalar_lea.vmem %s0, 420
    %v279 = vld [vmem:[%s278] sm:$0x8]
    %vm280 = vcmask 1043459
    %v281 = vsel %vm280, %v279, %v277
    %282 = vrot.lane.b32.xlu0 %v281, 117
    %v283 = vpop.permute.xlu0 %282
    %vm284 = vcmask 982952
    %285 = vst.msk [vmem:[#allocation0] sm:$0x3] %vm284, %v283
    %s286 = scalar_lea.vmem [#allocation0], 22
    %287 = vst.msk [vmem:[%s286] sm:$0xc] %vm284, %v283
    %s288 = scalar_lea.vmem %s0, 252
    %v289 = vld [vmem:[%s288] sm:$0x1]
    %s290 = scalar_lea.vmem %s0, 507
    %v291 = vld [vmem:[%s290] sm:$0x2]
    %vm292 = vcmask 1041409
    %v293 = vsel %vm292, %v291, %v289
    %s294 = scalar_lea.vmem %s0, 122
    %v295 = vld [vmem:[%s294] sm:$0x4]
    %vm296 = vcmask 1042434
    %v297 = vsel %vm296, %v295, %v293
    %s298 = scalar_lea.vmem %s0, 377
    %v299 = vld [vmem:[%s298] sm:$0x8]
    %vm300 = vcmask 1043459
    %v301 = vsel %vm300, %v299, %v297
    %302 = vrot.lane.b32.xlu0 %v301, 116
    %v303 = vpop.permute.xlu0 %302
    %vm304 = vcmask 974752
    %s305 = scalar_lea.vmem [#allocation0], 40
    %306 = vst.msk [vmem:[%s305] sm:$0x3] %vm304, %v303
    %s307 = scalar_lea.vmem [#allocation0], 14
    %308 = vst.msk [vmem:[%s307] sm:$0xc] %vm304, %v303
    %s309 = scalar_lea.vmem %s0, 209
    %v310 = vld [vmem:[%s309] sm:$0x1]
    %s311 = scalar_lea.vmem %s0, 464
    %v312 = vld [vmem:[%s311] sm:$0x2]
    %vm313 = vcmask 1041409
    %v314 = vsel %vm313, %v312, %v310
    %s315 = scalar_lea.vmem %s0, 79
    %v316 = vld [vmem:[%s315] sm:$0x4]
    %vm317 = vcmask 1042434
    %v318 = vsel %vm317, %v316, %v314
    %s319 = scalar_lea.vmem %s0, 334
    %v320 = vld [vmem:[%s319] sm:$0x8]
    %vm321 = vcmask 1043459
    %v322 = vsel %vm321, %v320, %v318
    %323 = vrot.lane.b32.xlu0 %v322, 115
    %v324 = vpop.permute.xlu0 %323
    %vm325 = vcmask 966552
    %s326 = scalar_lea.vmem [#allocation0], 32
    %327 = vst.msk [vmem:[%s326] sm:$0x3] %vm325, %v324
    %s328 = scalar_lea.vmem [#allocation0], 6
    %329 = vst.msk [vmem:[%s328] sm:$0xc] %vm325, %v324
    %s330 = scalar_lea.vmem %s0, 38
    %v331 = vld [vmem:[%s330] sm:$0x1]
    %s332 = scalar_lea.vmem %s0, 293
    %v333 = vld [vmem:[%s332] sm:$0x2]
    %vm334 = vcmask 1041409
    %v335 = vsel %vm334, %v333, %v331
    %s336 = scalar_lea.vmem %s0, 164
    %v337 = vld [vmem:[%s336] sm:$0x4]
    %vm338 = vcmask 1042434
    %v339 = vsel %vm338, %v337, %v335
    %s340 = scalar_lea.vmem %s0, 419
    %v341 = vld [vmem:[%s340] sm:$0x8]
    %vm342 = vcmask 1043459
    %v343 = vsel %vm342, %v341, %v339
    %344 = vrot.lane.b32.xlu0 %v343, 114
    %v345 = vpop.permute.xlu0 %344
    %vm346 = vcmask 958352
    %347 = vst.msk [vmem:[#allocation0] sm:$0x3] %vm346, %v345
    %s348 = scalar_lea.vmem [#allocation0], 22
    %349 = vst.msk [vmem:[%s348] sm:$0xc] %vm346, %v345
    %s350 = scalar_lea.vmem %s0, 251
    %v351 = vld [vmem:[%s350] sm:$0x1]
    %s352 = scalar_lea.vmem %s0, 506
    %v353 = vld [vmem:[%s352] sm:$0x2]
    %vm354 = vcmask 1041409
    %v355 = vsel %vm354, %v353, %v351
    %s356 = scalar_lea.vmem %s0, 121
    %v357 = vld [vmem:[%s356] sm:$0x4]
    %vm358 = vcmask 1042434
    %v359 = vsel %vm358, %v357, %v355
    %s360 = scalar_lea.vmem %s0, 376
    %v361 = vld [vmem:[%s360] sm:$0x8]
    %vm362 = vcmask 1043459
    %v363 = vsel %vm362, %v361, %v359
    %364 = vrot.lane.b32.xlu0 %v363, 113
    %v365 = vpop.permute.xlu0 %364
    %vm366 = vcmask 950152
    %s367 = scalar_lea.vmem [#allocation0], 40
    %368 = vst.msk [vmem:[%s367] sm:$0x3] %vm366, %v365
    %s369 = scalar_lea.vmem [#allocation0], 14
    %370 = vst.msk [vmem:[%s369] sm:$0xc] %vm366, %v365
    %s371 = scalar_lea.vmem %s0, 208
    %v372 = vld [vmem:[%s371] sm:$0x1]
    %s373 = scalar_lea.vmem %s0, 463
    %v374 = vld [vmem:[%s373] sm:$0x2]
    %vm375 = vcmask 1041409
    %v376 = vsel %vm375, %v374, %v372
    %s377 = scalar_lea.vmem %s0, 78
    %v378 = vld [vmem:[%s377] sm:$0x4]
    %vm379 = vcmask 1042434
    %v380 = vsel %vm379, %v378, %v376
    %s381 = scalar_lea.vmem %s0, 333
    %v382 = vld [vmem:[%s381] sm:$0x8]
    %vm383 = vcmask 1043459
    %v384 = vsel %vm383, %v382, %v380
    %385 = vrot.lane.b32.xlu0 %v384, 112
    %v386 = vpop.permute.xlu0 %385
    %vm387 = vcmask 941952
    %s388 = scalar_lea.vmem [#allocation0], 32
    %389 = vst.msk [vmem:[%s388] sm:$0x3] %vm387, %v386
    %s390 = scalar_lea.vmem [#allocation0], 6
    %391 = vst.msk [vmem:[%s390] sm:$0xc] %vm387, %v386
    %s392 = scalar_lea.vmem %s0, 37
    %v393 = vld [vmem:[%s392] sm:$0x1]
    %s394 = scalar_lea.vmem %s0, 292
    %v395 = vld [vmem:[%s394] sm:$0x2]
    %vm396 = vcmask 1041409
    %v397 = vsel %vm396, %v395, %v393
    %s398 = scalar_lea.vmem %s0, 163
    %v399 = vld [vmem:[%s398] sm:$0x4]
    %vm400 = vcmask 1042434
    %v401 = vsel %vm400, %v399, %v397
    %s402 = scalar_lea.vmem %s0, 418
    %v403 = vld [vmem:[%s402] sm:$0x8]
    %vm404 = vcmask 1043459
    %v405 = vsel %vm404, %v403, %v401
    %406 = vrot.lane.b32.xlu0 %v405, 111
    %v407 = vpop.permute.xlu0 %406
    %vm408 = vcmask 933752
    %409 = vst.msk [vmem:[#allocation0] sm:$0x3] %vm408, %v407
    %s410 = scalar_lea.vmem [#allocation0], 22
    %411 = vst.msk [vmem:[%s410] sm:$0xc] %vm408, %v407
    %s412 = scalar_lea.vmem %s0, 250
    %v413 = vld [vmem:[%s412] sm:$0x1]
    %s414 = scalar_lea.vmem %s0, 505
    %v415 = vld [vmem:[%s414] sm:$0x2]
    %vm416 = vcmask 1041409
    %v417 = vsel %vm416, %v415, %v413
    %s418 = scalar_lea.vmem %s0, 120
    %v419 = vld [vmem:[%s418] sm:$0x4]
    %vm420 = vcmask 1042434
    %v421 = vsel %vm420, %v419, %v417
    %s422 = scalar_lea.vmem %s0, 375
    %v423 = vld [vmem:[%s422] sm:$0x8]
    %vm424 = vcmask 1043459
    %v425 = vsel %vm424, %v423, %v421
    %426 = vrot.lane.b32.xlu0 %v425, 110
    %v427 = vpop.permute.xlu0 %426
    %vm428 = vcmask 925552
    %s429 = scalar_lea.vmem [#allocation0], 40
    %430 = vst.msk [vmem:[%s429] sm:$0x3] %vm428, %v427
    %s431 = scalar_lea.vmem [#allocation0], 14
    %432 = vst.msk [vmem:[%s431] sm:$0xc] %vm428, %v427
    %s433 = scalar_lea.vmem %s0, 207
    %v434 = vld [vmem:[%s433] sm:$0x1]
    %s435 = scalar_lea.vmem %s0, 462
    %v436 = vld [vmem:[%s435] sm:$0x2]
    %vm437 = vcmask 1041409
    %v438 = vsel %vm437, %v436, %v434
    %s439 = scalar_lea.vmem %s0, 77
    %v440 = vld [vmem:[%s439] sm:$0x4]
    %vm441 = vcmask 1042434
    %v442 = vsel %vm441, %v440, %v438
    %s443 = scalar_lea.vmem %s0, 332
    %v444 = vld [vmem:[%s443] sm:$0x8]
    %vm445 = vcmask 1043459
    %v446 = vsel %vm445, %v444, %v442
    %447 = vrot.lane.b32.xlu0 %v446, 109
    %v448 = vpop.permute.xlu0 %447
    %vm449 = vcmask 917352
    %s450 = scalar_lea.vmem [#allocation0], 32
    %451 = vst.msk [vmem:[%s450] sm:$0x3] %vm449, %v448
    %s452 = scalar_lea.vmem [#allocation0], 6
    %453 = vst.msk [vmem:[%s452] sm:$0xc] %vm449, %v448
    %s454 = scalar_lea.vmem %s0, 36
    %v455 = vld [vmem:[%s454] sm:$0x1]
    %s456 = scalar_lea.vmem %s0, 291
    %v457 = vld [vmem:[%s456] sm:$0x2]
    %vm458 = vcmask 1041409
    %v459 = vsel %vm458, %v457, %v455
    %s460 = scalar_lea.vmem %s0, 162
    %v461 = vld [vmem:[%s460] sm:$0x4]
    %vm462 = vcmask 1042434
    %v463 = vsel %vm462, %v461, %v459
    %s464 = scalar_lea.vmem %s0, 417
    %v465 = vld [vmem:[%s464] sm:$0x8]
    %vm466 = vcmask 1043459
    %v467 = vsel %vm466, %v465, %v463
    %468 = vrot.lane.b32.xlu0 %v467, 108
    %v469 = vpop.permute.xlu0 %468
    %vm470 = vcmask 909152
    %471 = vst.msk [vmem:[#allocation0] sm:$0x3] %vm470, %v469
    %s472 = scalar_lea.vmem [#allocation0], 22
    %473 = vst.msk [vmem:[%s472] sm:$0xc] %vm470, %v469
    %s474 = scalar_lea.vmem %s0, 249
    %v475 = vld [vmem:[%s474] sm:$0x1]
    %s476 = scalar_lea.vmem %s0, 504
    %v477 = vld [vmem:[%s476] sm:$0x2]
    %vm478 = vcmask 1041409
    %v479 = vsel %vm478, %v477, %v475
    %s480 = scalar_lea.vmem %s0, 119
    %v481 = vld [vmem:[%s480] sm:$0x4]
    %vm482 = vcmask 1042434
    %v483 = vsel %vm482, %v481, %v479
    %s484 = scalar_lea.vmem %s0, 374
    %v485 = vld [vmem:[%s484] sm:$0x8]
    %vm486 = vcmask 1043459
    %v487 = vsel %vm486, %v485, %v483
    %488 = vrot.lane.b32.xlu0 %v487, 107
    %v489 = vpop.permute.xlu0 %488
    %vm490 = vcmask 900952
    %s491 = scalar_lea.vmem [#allocation0], 40
    %492 = vst.msk [vmem:[%s491] sm:$0x3] %vm490, %v489
    %s493 = scalar_lea.vmem [#allocation0], 14
    %494 = vst.msk [vmem:[%s493] sm:$0xc] %vm490, %v489
    %s495 = scalar_lea.vmem %s0, 206
    %v496 = vld [vmem:[%s495] sm:$0x1]
    %s497 = scalar_lea.vmem %s0, 461
    %v498 = vld [vmem:[%s497] sm:$0x2]
    %vm499 = vcmask 1041409
    %v500 = vsel %vm499, %v498, %v496
    %s501 = scalar_lea.vmem %s0, 76
    %v502 = vld [vmem:[%s501] sm:$0x4]
    %vm503 = vcmask 1042434
    %v504 = vsel %vm503, %v502, %v500
    %s505 = scalar_lea.vmem %s0, 331
    %v506 = vld [vmem:[%s505] sm:$0x8]
    %vm507 = vcmask 1043459
    %v508 = vsel %vm507, %v506, %v504
    %509 = vrot.lane.b32.xlu0 %v508, 106
    %v510 = vpop.permute.xlu0 %509
    %vm511 = vcmask 892752
    %s512 = scalar_lea.vmem [#allocation0], 32
    %513 = vst.msk [vmem:[%s512] sm:$0x3] %vm511, %v510
    %s514 = scalar_lea.vmem [#allocation0], 6
    %515 = vst.msk [vmem:[%s514] sm:$0xc] %vm511, %v510
    %s516 = scalar_lea.vmem %s0, 35
    %v517 = vld [vmem:[%s516] sm:$0x1]
    %s518 = scalar_lea.vmem %s0, 290
    %v519 = vld [vmem:[%s518] sm:$0x2]
    %vm520 = vcmask 1041409
    %v521 = vsel %vm520, %v519, %v517
    %s522 = scalar_lea.vmem %s0, 161
    %v523 = vld [vmem:[%s522] sm:$0x4]
    %vm524 = vcmask 1042434
    %v525 = vsel %vm524, %v523, %v521
    %s526 = scalar_lea.vmem %s0, 416
    %v527 = vld [vmem:[%s526] sm:$0x8]
    %vm528 = vcmask 1043459
    %v529 = vsel %vm528, %v527, %v525
    %530 = vrot.lane.b32.xlu0 %v529, 105
    %v531 = vpop.permute.xlu0 %530
    %vm532 = vcmask 884552
    %533 = vst.msk [vmem:[#allocation0] sm:$0x3] %vm532, %v531
    %s534 = scalar_lea.vmem [#allocation0], 22
    %535 = vst.msk [vmem:[%s534] sm:$0xc] %vm532, %v531
    %s536 = scalar_lea.vmem %s0, 248
    %v537 = vld [vmem:[%s536] sm:$0x1]
    %s538 = scalar_lea.vmem %s0, 503
    %v539 = vld [vmem:[%s538] sm:$0x2]
    %vm540 = vcmask 1041409
    %v541 = vsel %vm540, %v539, %v537
    %s542 = scalar_lea.vmem %s0, 118
    %v543 = vld [vmem:[%s542] sm:$0x4]
    %vm544 = vcmask 1042434
    %v545 = vsel %vm544, %v543, %v541
    %s546 = scalar_lea.vmem %s0, 373
    %v547 = vld [vmem:[%s546] sm:$0x8]
    %vm548 = vcmask 1043459
    %v549 = vsel %vm548, %v547, %v545
    %550 = vrot.lane.b32.xlu0 %v549, 104
    %v551 = vpop.permute.xlu0 %550
    %vm552 = vcmask 876352
    %s553 = scalar_lea.vmem [#allocation0], 40
    %554 = vst.msk [vmem:[%s553] sm:$0x3] %vm552, %v551
    %s555 = scalar_lea.vmem [#allocation0], 14
    %556 = vst.msk [vmem:[%s555] sm:$0xc] %vm552, %v551
    %s557 = scalar_lea.vmem %s0, 205
    %v558 = vld [vmem:[%s557] sm:$0x1]
    %s559 = scalar_lea.vmem %s0, 460
    %v560 = vld [vmem:[%s559] sm:$0x2]
    %vm561 = vcmask 1041409
    %v562 = vsel %vm561, %v560, %v558
    %s563 = scalar_lea.vmem %s0, 75
    %v564 = vld [vmem:[%s563] sm:$0x4]
    %vm565 = vcmask 1042434
    %v566 = vsel %vm565, %v564, %v562
    %s567 = scalar_lea.vmem %s0, 330
    %v568 = vld [vmem:[%s567] sm:$0x8]
    %vm569 = vcmask 1043459
    %v570 = vsel %vm569, %v568, %v566
    %571 = vrot.lane.b32.xlu0 %v570, 103
    %v572 = vpop.permute.xlu0 %571
    %vm573 = vcmask 868152
    %s574 = scalar_lea.vmem [#allocation0], 32
    %575 = vst.msk [vmem:[%s574] sm:$0x3] %vm573, %v572
    %s576 = scalar_lea.vmem [#allocation0], 6
    %577 = vst.msk [vmem:[%s576] sm:$0xc] %vm573, %v572
    %s578 = scalar_lea.vmem %s0, 34
    %v579 = vld [vmem:[%s578] sm:$0x1]
    %s580 = scalar_lea.vmem %s0, 289
    %v581 = vld [vmem:[%s580] sm:$0x2]
    %vm582 = vcmask 1041409
    %v583 = vsel %vm582, %v581, %v579
    %s584 = scalar_lea.vmem %s0, 160
    %v585 = vld [vmem:[%s584] sm:$0x4]
    %vm586 = vcmask 1042434
    %v587 = vsel %vm586, %v585, %v583
    %s588 = scalar_lea.vmem %s0, 415
    %v589 = vld [vmem:[%s588] sm:$0x8]
    %vm590 = vcmask 1043459
    %v591 = vsel %vm590, %v589, %v587
    %592 = vrot.lane.b32.xlu0 %v591, 102
    %v593 = vpop.permute.xlu0 %592
    %vm594 = vcmask 859952
    %595 = vst.msk [vmem:[#allocation0] sm:$0x3] %vm594, %v593
    %s596 = scalar_lea.vmem [#allocation0], 22
    %597 = vst.msk [vmem:[%s596] sm:$0xc] %vm594, %v593
    %s598 = scalar_lea.vmem %s0, 247
    %v599 = vld [vmem:[%s598] sm:$0x1]
    %s600 = scalar_lea.vmem %s0, 502
    %v601 = vld [vmem:[%s600] sm:$0x2]
    %vm602 = vcmask 1041409
    %v603 = vsel %vm602, %v601, %v599
    %s604 = scalar_lea.vmem %s0, 117
    %v605 = vld [vmem:[%s604] sm:$0x4]
    %vm606 = vcmask 1042434
    %v607 = vsel %vm606, %v605, %v603
    %s608 = scalar_lea.vmem %s0, 372
    %v609 = vld [vmem:[%s608] sm:$0x8]
    %vm610 = vcmask 1043459
    %v611 = vsel %vm610, %v609, %v607
    %612 = vrot.lane.b32.xlu0 %v611, 101
    %v613 = vpop.permute.xlu0 %612
    %vm614 = vcmask 851752
    %s615 = scalar_lea.vmem [#allocation0], 40
    %616 = vst.msk [vmem:[%s615] sm:$0x3] %vm614, %v613
    %s617 = scalar_lea.vmem [#allocation0], 14
    %618 = vst.msk [vmem:[%s617] sm:$0xc] %vm614, %v613
    %s619 = scalar_lea.vmem %s0, 204
    %v620 = vld [vmem:[%s619] sm:$0x1]
    %s621 = scalar_lea.vmem %s0, 459
    %v622 = vld [vmem:[%s621] sm:$0x2]
    %vm623 = vcmask 1041409
    %v624 = vsel %vm623, %v622, %v620
    %s625 = scalar_lea.vmem %s0, 74
    %v626 = vld [vmem:[%s625] sm:$0x4]
    %vm627 = vcmask 1042434
    %v628 = vsel %vm627, %v626, %v624
    %s629 = scalar_lea.vmem %s0, 329
    %v630 = vld [vmem:[%s629] sm:$0x8]
    %vm631 = vcmask 1043459
    %v632 = vsel %vm631, %v630, %v628
    %633 = vrot.lane.b32.xlu0 %v632, 100
    %v634 = vpop.permute.xlu0 %633
    %vm635 = vcmask 843552
    %s636 = scalar_lea.vmem [#allocation0], 32
    %637 = vst.msk [vmem:[%s636] sm:$0x3] %vm635, %v634
    %s638 = scalar_lea.vmem [#allocation0], 6
    %639 = vst.msk [vmem:[%s638] sm:$0xc] %vm635, %v634
    %s640 = scalar_lea.vmem %s0, 33
    %v641 = vld [vmem:[%s640] sm:$0x1]
    %s642 = scalar_lea.vmem %s0, 288
    %v643 = vld [vmem:[%s642] sm:$0x2]
    %vm644 = vcmask 1041409
    %v645 = vsel %vm644, %v643, %v641
    %s646 = scalar_lea.vmem %s0, 159
    %v647 = vld [vmem:[%s646] sm:$0x4]
    %vm648 = vcmask 1042434
    %v649 = vsel %vm648, %v647, %v645
    %s650 = scalar_lea.vmem %s0, 414
    %v651 = vld [vmem:[%s650] sm:$0x8]
    %vm652 = vcmask 1043459
    %v653 = vsel %vm652, %v651, %v649
    %654 = vrot.lane.b32.xlu0 %v653, 99
    %v655 = vpop.permute.xlu0 %654
    %vm656 = vcmask 835352
    %657 = vst.msk [vmem:[#allocation0] sm:$0x3] %vm656, %v655
    %s658 = scalar_lea.vmem [#allocation0], 22
    %659 = vst.msk [vmem:[%s658] sm:$0xc] %vm656, %v655
    %s660 = scalar_lea.vmem %s0, 246
    %v661 = vld [vmem:[%s660] sm:$0x1]
    %s662 = scalar_lea.vmem %s0, 501
    %v663 = vld [vmem:[%s662] sm:$0x2]
    %vm664 = vcmask 1041409
    %v665 = vsel %vm664, %v663, %v661
    %s666 = scalar_lea.vmem %s0, 116
    %v667 = vld [vmem:[%s666] sm:$0x4]
    %vm668 = vcmask 1042434
    %v669 = vsel %vm668, %v667, %v665
    %s670 = scalar_lea.vmem %s0, 371
    %v671 = vld [vmem:[%s670] sm:$0x8]
    %vm672 = vcmask 1043459
    %v673 = vsel %vm672, %v671, %v669
    %674 = vrot.lane.b32.xlu0 %v673, 98
    %v675 = vpop.permute.xlu0 %674
    %vm676 = vcmask 827152
    %s677 = scalar_lea.vmem [#allocation0], 40
    %678 = vst.msk [vmem:[%s677] sm:$0x3] %vm676, %v675
    %s679 = scalar_lea.vmem [#allocation0], 14
    %680 = vst.msk [vmem:[%s679] sm:$0xc] %vm676, %v675
    %s681 = scalar_lea.vmem %s0, 203
    %v682 = vld [vmem:[%s681] sm:$0x1]
    %s683 = scalar_lea.vmem %s0, 458
    %v684 = vld [vmem:[%s683] sm:$0x2]
    %vm685 = vcmask 1041409
    %v686 = vsel %vm685, %v684, %v682
    %s687 = scalar_lea.vmem %s0, 73
    %v688 = vld [vmem:[%s687] sm:$0x4]
    %vm689 = vcmask 1042434
    %v690 = vsel %vm689, %v688, %v686
    %s691 = scalar_lea.vmem %s0, 328
    %v692 = vld [vmem:[%s691] sm:$0x8]
    %vm693 = vcmask 1043459
    %v694 = vsel %vm693, %v692, %v690
    %695 = vrot.lane.b32.xlu0 %v694, 97
    %v696 = vpop.permute.xlu0 %695
    %vm697 = vcmask 818952
    %s698 = scalar_lea.vmem [#allocation0], 32
    %699 = vst.msk [vmem:[%s698] sm:$0x3] %vm697, %v696
    %s700 = scalar_lea.vmem [#allocation0], 6
    %701 = vst.msk [vmem:[%s700] sm:$0xc] %vm697, %v696
    %s702 = scalar_lea.vmem %s0, 32
    %v703 = vld [vmem:[%s702] sm:$0x1]
    %s704 = scalar_lea.vmem %s0, 287
    %v705 = vld [vmem:[%s704] sm:$0x2]
    %vm706 = vcmask 1041409
    %v707 = vsel %vm706, %v705, %v703
    %s708 = scalar_lea.vmem %s0, 158
    %v709 = vld [vmem:[%s708] sm:$0x4]
    %vm710 = vcmask 1042434
    %v711 = vsel %vm710, %v709, %v707
    %s712 = scalar_lea.vmem %s0, 413
    %v713 = vld [vmem:[%s712] sm:$0x8]
    %vm714 = vcmask 1043459
    %v715 = vsel %vm714, %v713, %v711
    %716 = vrot.lane.b32.xlu0 %v715, 96
    %v717 = vpop.permute.xlu0 %716
    %vm718 = vcmask 810752
    %719 = vst.msk [vmem:[#allocation0] sm:$0x3] %vm718, %v717
    %s720 = scalar_lea.vmem [#allocation0], 22
    %721 = vst.msk [vmem:[%s720] sm:$0xc] %vm718, %v717
    %s722 = scalar_lea.vmem %s0, 245
    %v723 = vld [vmem:[%s722] sm:$0x1]
    %s724 = scalar_lea.vmem %s0, 500
    %v725 = vld [vmem:[%s724] sm:$0x2]
    %vm726 = vcmask 1041409
    %v727 = vsel %vm726, %v725, %v723
    %s728 = scalar_lea.vmem %s0, 115
    %v729 = vld [vmem:[%s728] sm:$0x4]
    %vm730 = vcmask 1042434
    %v731 = vsel %vm730, %v729, %v727
    %s732 = scalar_lea.vmem %s0, 370
    %v733 = vld [vmem:[%s732] sm:$0x8]
    %vm734 = vcmask 1043459
    %v735 = vsel %vm734, %v733, %v731
    %736 = vrot.lane.b32.xlu0 %v735, 95
    %v737 = vpop.permute.xlu0 %736
    %vm738 = vcmask 802552
    %s739 = scalar_lea.vmem [#allocation0], 40
    %740 = vst.msk [vmem:[%s739] sm:$0x3] %vm738, %v737
    %s741 = scalar_lea.vmem [#allocation0], 14
    %742 = vst.msk [vmem:[%s741] sm:$0xc] %vm738, %v737
    %s743 = scalar_lea.vmem %s0, 202
    %v744 = vld [vmem:[%s743] sm:$0x1]
    %s745 = scalar_lea.vmem %s0, 457
    %v746 = vld [vmem:[%s745] sm:$0x2]
    %vm747 = vcmask 1041409
    %v748 = vsel %vm747, %v746, %v744
    %s749 = scalar_lea.vmem %s0, 72
    %v750 = vld [vmem:[%s749] sm:$0x4]
    %vm751 = vcmask 1042434
    %v752 = vsel %vm751, %v750, %v748
    %s753 = scalar_lea.vmem %s0, 327
    %v754 = vld [vmem:[%s753] sm:$0x8]
    %vm755 = vcmask 1043459
    %v756 = vsel %vm755, %v754, %v752
    %757 = vrot.lane.b32.xlu0 %v756, 94
    %v758 = vpop.permute.xlu0 %757
    %vm759 = vcmask 794352
    %s760 = scalar_lea.vmem [#allocation0], 32
    %761 = vst.msk [vmem:[%s760] sm:$0x3] %vm759, %v758
    %s762 = scalar_lea.vmem [#allocation0], 6
    %763 = vst.msk [vmem:[%s762] sm:$0xc] %vm759, %v758
    %s764 = scalar_lea.vmem %s0, 31
    %v765 = vld [vmem:[%s764] sm:$0x1]
    %s766 = scalar_lea.vmem %s0, 286
    %v767 = vld [vmem:[%s766] sm:$0x2]
    %vm768 = vcmask 1041409
    %v769 = vsel %vm768, %v767, %v765
    %s770 = scalar_lea.vmem %s0, 157
    %v771 = vld [vmem:[%s770] sm:$0x4]
    %vm772 = vcmask 1042434
    %v773 = vsel %vm772, %v771, %v769
    %s774 = scalar_lea.vmem %s0, 412
    %v775 = vld [vmem:[%s774] sm:$0x8]
    %vm776 = vcmask 1043459
    %v777 = vsel %vm776, %v775, %v773
    %778 = vrot.lane.b32.xlu0 %v777, 93
    %v779 = vpop.permute.xlu0 %778
    %vm780 = vcmask 786152
    %781 = vst.msk [vmem:[#allocation0] sm:$0x3] %vm780, %v779
    %s782 = scalar_lea.vmem [#allocation0], 22
    %783 = vst.msk [vmem:[%s782] sm:$0xc] %vm780, %v779
    %s784 = scalar_lea.vmem %s0, 244
    %v785 = vld [vmem:[%s784] sm:$0x1]
    %s786 = scalar_lea.vmem %s0, 499
    %v787 = vld [vmem:[%s786] sm:$0x2]
    %vm788 = vcmask 1041409
    %v789 = vsel %vm788, %v787, %v785
    %s790 = scalar_lea.vmem %s0, 114
    %v791 = vld [vmem:[%s790] sm:$0x4]
    %vm792 = vcmask 1042434
    %v793 = vsel %vm792, %v791, %v789
    %s794 = scalar_lea.vmem %s0, 369
    %v795 = vld [vmem:[%s794] sm:$0x8]
    %vm796 = vcmask 1043459
    %v797 = vsel %vm796, %v795, %v793
    %798 = vrot.lane.b32.xlu0 %v797, 92
    %v799 = vpop.permute.xlu0 %798
    %vm800 = vcmask 777952
    %s801 = scalar_lea.vmem [#allocation0], 40
    %802 = vst.msk [vmem:[%s801] sm:$0x3] %vm800, %v799
    %s803 = scalar_lea.vmem [#allocation0], 14
    %804 = vst.msk [vmem:[%s803] sm:$0xc] %vm800, %v799
    %s805 = scalar_lea.vmem %s0, 201
    %v806 = vld [vmem:[%s805] sm:$0x1]
    %s807 = scalar_lea.vmem %s0, 456
    %v808 = vld [vmem:[%s807] sm:$0x2]
    %vm809 = vcmask 1041409
    %v810 = vsel %vm809, %v808, %v806
    %s811 = scalar_lea.vmem %s0, 71
    %v812 = vld [vmem:[%s811] sm:$0x4]
    %vm813 = vcmask 1042434
    %v814 = vsel %vm813, %v812, %v810
    %s815 = scalar_lea.vmem %s0, 326
    %v816 = vld [vmem:[%s815] sm:$0x8]
    %vm817 = vcmask 1043459
    %v818 = vsel %vm817, %v816, %v814
    %819 = vrot.lane.b32.xlu0 %v818, 91
    %v820 = vpop.permute.xlu0 %819
    %vm821 = vcmask 769752
    %s822 = scalar_lea.vmem [#allocation0], 32
    %823 = vst.msk [vmem:[%s822] sm:$0x3] %vm821, %v820
    %s824 = scalar_lea.vmem [#allocation0], 6
    %825 = vst.msk [vmem:[%s824] sm:$0xc] %vm821, %v820
    %s826 = scalar_lea.vmem %s0, 30
    %v827 = vld [vmem:[%s826] sm:$0x1]
    %s828 = scalar_lea.vmem %s0, 285
    %v829 = vld [vmem:[%s828] sm:$0x2]
    %vm830 = vcmask 1041409
    %v831 = vsel %vm830, %v829, %v827
    %s832 = scalar_lea.vmem %s0, 156
    %v833 = vld [vmem:[%s832] sm:$0x4]
    %vm834 = vcmask 1042434
    %v835 = vsel %vm834, %v833, %v831
    %s836 = scalar_lea.vmem %s0, 411
    %v837 = vld [vmem:[%s836] sm:$0x8]
    %vm838 = vcmask 1043459
    %v839 = vsel %vm838, %v837, %v835
    %840 = vrot.lane.b32.xlu0 %v839, 90
    %v841 = vpop.permute.xlu0 %840
    %vm842 = vcmask 761552
    %843 = vst.msk [vmem:[#allocation0] sm:$0x3] %vm842, %v841
    %s844 = scalar_lea.vmem [#allocation0], 22
    %845 = vst.msk [vmem:[%s844] sm:$0xc] %vm842, %v841
    %s846 = scalar_lea.vmem %s0, 243
    %v847 = vld [vmem:[%s846] sm:$0x1]
    %s848 = scalar_lea.vmem %s0, 498
    %v849 = vld [vmem:[%s848] sm:$0x2]
    %vm850 = vcmask 1041409
    %v851 = vsel %vm850, %v849, %v847
    %s852 = scalar_lea.vmem %s0, 113
    %v853 = vld [vmem:[%s852] sm:$0x4]
    %vm854 = vcmask 1042434
    %v855 = vsel %vm854, %v853, %v851
    %s856 = scalar_lea.vmem %s0, 368
    %v857 = vld [vmem:[%s856] sm:$0x8]
    %vm858 = vcmask 1043459
    %v859 = vsel %vm858, %v857, %v855
    %860 = vrot.lane.b32.xlu0 %v859, 89
    %v861 = vpop.permute.xlu0 %860
    %vm862 = vcmask 753352
    %s863 = scalar_lea.vmem [#allocation0], 40
    %864 = vst.msk [vmem:[%s863] sm:$0x3] %vm862, %v861
    %s865 = scalar_lea.vmem [#allocation0], 14
    %866 = vst.msk [vmem:[%s865] sm:$0xc] %vm862, %v861
    %s867 = scalar_lea.vmem %s0, 200
    %v868 = vld [vmem:[%s867] sm:$0x1]
    %s869 = scalar_lea.vmem %s0, 455
    %v870 = vld [vmem:[%s869] sm:$0x2]
    %vm871 = vcmask 1041409
    %v872 = vsel %vm871, %v870, %v868
    %s873 = scalar_lea.vmem %s0, 70
    %v874 = vld [vmem:[%s873] sm:$0x4]
    %vm875 = vcmask 1042434
    %v876 = vsel %vm875, %v874, %v872
    %s877 = scalar_lea.vmem %s0, 325
    %v878 = vld [vmem:[%s877] sm:$0x8]
    %vm879 = vcmask 1043459
    %v880 = vsel %vm879, %v878, %v876
    %881 = vrot.lane.b32.xlu0 %v880, 88
    %v882 = vpop.permute.xlu0 %881
    %vm883 = vcmask 745152
    %s884 = scalar_lea.vmem [#allocation0], 32
    %885 = vst.msk [vmem:[%s884] sm:$0x3] %vm883, %v882
    %s886 = scalar_lea.vmem [#allocation0], 6
    %887 = vst.msk [vmem:[%s886] sm:$0xc] %vm883, %v882
    %s888 = scalar_lea.vmem %s0, 29
    %v889 = vld [vmem:[%s888] sm:$0x1]
    %s890 = scalar_lea.vmem %s0, 284
    %v891 = vld [vmem:[%s890] sm:$0x2]
    %vm892 = vcmask 1041409
    %v893 = vsel %vm892, %v891, %v889
    %s894 = scalar_lea.vmem %s0, 155
    %v895 = vld [vmem:[%s894] sm:$0x4]
    %vm896 = vcmask 1042434
    %v897 = vsel %vm896, %v895, %v893
    %s898 = scalar_lea.vmem %s0, 410
    %v899 = vld [vmem:[%s898] sm:$0x8]
    %vm900 = vcmask 1043459
    %v901 = vsel %vm900, %v899, %v897
    %902 = vrot.lane.b32.xlu0 %v901, 87
    %v903 = vpop.permute.xlu0 %902
    %vm904 = vcmask 736952
    %905 = vst.msk [vmem:[#allocation0] sm:$0x3] %vm904, %v903
    %s906 = scalar_lea.vmem [#allocation0], 22
    %907 = vst.msk [vmem:[%s906] sm:$0xc] %vm904, %v903
    %s908 = scalar_lea.vmem %s0, 242
    %v909 = vld [vmem:[%s908] sm:$0x1]
    %s910 = scalar_lea.vmem %s0, 497
    %v911 = vld [vmem:[%s910] sm:$0x2]
    %vm912 = vcmask 1041409
    %v913 = vsel %vm912, %v911, %v909
    %s914 = scalar_lea.vmem %s0, 112
    %v915 = vld [vmem:[%s914] sm:$0x4]
    %vm916 = vcmask 1042434
    %v917 = vsel %vm916, %v915, %v913
    %s918 = scalar_lea.vmem %s0, 367
    %v919 = vld [vmem:[%s918] sm:$0x8]
    %vm920 = vcmask 1043459
    %v921 = vsel %vm920, %v919, %v917
    %922 = vrot.lane.b32.xlu0 %v921, 86
    %v923 = vpop.permute.xlu0 %922
    %vm924 = vcmask 728752
    %s925 = scalar_lea.vmem [#allocation0], 40
    %926 = vst.msk [vmem:[%s925] sm:$0x3] %vm924, %v923
    %s927 = scalar_lea.vmem [#allocation0], 14
    %928 = vst.msk [vmem:[%s927] sm:$0xc] %vm924, %v923
    %s929 = scalar_lea.vmem %s0, 199
    %v930 = vld [vmem:[%s929] sm:$0x1]
    %s931 = scalar_lea.vmem %s0, 454
    %v932 = vld [vmem:[%s931] sm:$0x2]
    %vm933 = vcmask 1041409
    %v934 = vsel %vm933, %v932, %v930
    %s935 = scalar_lea.vmem %s0, 69
    %v936 = vld [vmem:[%s935] sm:$0x4]
    %vm937 = vcmask 1042434
    %v938 = vsel %vm937, %v936, %v934
    %s939 = scalar_lea.vmem %s0, 324
    %v940 = vld [vmem:[%s939] sm:$0x8]
    %vm941 = vcmask 1043459
    %v942 = vsel %vm941, %v940, %v938
    %943 = vrot.lane.b32.xlu0 %v942, 85
    %v944 = vpop.permute.xlu0 %943
    %vm945 = vcmask 720552
    %s946 = scalar_lea.vmem [#allocation0], 32
    %947 = vst.msk [vmem:[%s946] sm:$0x3] %vm945, %v944
    %s948 = scalar_lea.vmem [#allocation0], 6
    %949 = vst.msk [vmem:[%s948] sm:$0xc] %vm945, %v944
    %s950 = scalar_lea.vmem %s0, 28
    %v951 = vld [vmem:[%s950] sm:$0x1]
    %s952 = scalar_lea.vmem %s0, 283
    %v953 = vld [vmem:[%s952] sm:$0x2]
    %vm954 = vcmask 1041409
    %v955 = vsel %vm954, %v953, %v951
    %s956 = scalar_lea.vmem %s0, 154
    %v957 = vld [vmem:[%s956] sm:$0x4]
    %vm958 = vcmask 1042434
    %v959 = vsel %vm958, %v957, %v955
    %s960 = scalar_lea.vmem %s0, 409
    %v961 = vld [vmem:[%s960] sm:$0x8]
    %vm962 = vcmask 1043459
    %v963 = vsel %vm962, %v961, %v959
    %964 = vrot.lane.b32.xlu0 %v963, 84
    %v965 = vpop.permute.xlu0 %964
    %vm966 = vcmask 712352
    %967 = vst.msk [vmem:[#allocation0] sm:$0x3] %vm966, %v965
    %s968 = scalar_lea.vmem [#allocation0], 22
    %969 = vst.msk [vmem:[%s968] sm:$0xc] %vm966, %v965
    %s970 = scalar_lea.vmem %s0, 241
    %v971 = vld [vmem:[%s970] sm:$0x1]
    %s972 = scalar_lea.vmem %s0, 496
    %v973 = vld [vmem:[%s972] sm:$0x2]
    %vm974 = vcmask 1041409
    %v975 = vsel %vm974, %v973, %v971
    %s976 = scalar_lea.vmem %s0, 111
    %v977 = vld [vmem:[%s976] sm:$0x4]
    %vm978 = vcmask 1042434
    %v979 = vsel %vm978, %v977, %v975
    %s980 = scalar_lea.vmem %s0, 366
    %v981 = vld [vmem:[%s980] sm:$0x8]
    %vm982 = vcmask 1043459
    %v983 = vsel %vm982, %v981, %v979
    %984 = vrot.lane.b32.xlu0 %v983, 83
    %v985 = vpop.permute.xlu0 %984
    %vm986 = vcmask 704152
    %s987 = scalar_lea.vmem [#allocation0], 40
    %988 = vst.msk [vmem:[%s987] sm:$0x3] %vm986, %v985
    %s989 = scalar_lea.vmem [#allocation0], 14
    %990 = vst.msk [vmem:[%s989] sm:$0xc] %vm986, %v985
    %s991 = scalar_lea.vmem %s0, 198
    %v992 = vld [vmem:[%s991] sm:$0x1]
    %s993 = scalar_lea.vmem %s0, 453
    %v994 = vld [vmem:[%s993] sm:$0x2]
    %vm995 = vcmask 1041409
    %v996 = vsel %vm995, %v994, %v992
    %s997 = scalar_lea.vmem %s0, 68
    %v998 = vld [vmem:[%s997] sm:$0x4]
    %vm999 = vcmask 1042434
    %v1000 = vsel %vm999, %v998, %v996
    %s1001 = scalar_lea.vmem %s0, 323
    %v1002 = vld [vmem:[%s1001] sm:$0x8]
    %vm1003 = vcmask 1043459
    %v1004 = vsel %vm1003, %v1002, %v1000
    %1005 = vrot.lane.b32.xlu0 %v1004, 82
    %v1006 = vpop.permute.xlu0 %1005
    %vm1007 = vcmask 695952
    %s1008 = scalar_lea.vmem [#allocation0], 32
    %1009 = vst.msk [vmem:[%s1008] sm:$0x3] %vm1007, %v1006
    %s1010 = scalar_lea.vmem [#allocation0], 6
    %1011 = vst.msk [vmem:[%s1010] sm:$0xc] %vm1007, %v1006
    %s1012 = scalar_lea.vmem %s0, 27
    %v1013 = vld [vmem:[%s1012] sm:$0x1]
    %s1014 = scalar_lea.vmem %s0, 282
    %v1015 = vld [vmem:[%s1014] sm:$0x2]
    %vm1016 = vcmask 1041409
    %v1017 = vsel %vm1016, %v1015, %v1013
    %s1018 = scalar_lea.vmem %s0, 153
    %v1019 = vld [vmem:[%s1018] sm:$0x4]
    %vm1020 = vcmask 1042434
    %v1021 = vsel %vm1020, %v1019, %v1017
    %s1022 = scalar_lea.vmem %s0, 408
    %v1023 = vld [vmem:[%s1022] sm:$0x8]
    %vm1024 = vcmask 1043459
    %v1025 = vsel %vm1024, %v1023, %v1021
    %1026 = vrot.lane.b32.xlu0 %v1025, 81
    %v1027 = vpop.permute.xlu0 %1026
    %vm1028 = vcmask 687752
    %1029 = vst.msk [vmem:[#allocation0] sm:$0x3] %vm1028, %v1027
    %s1030 = scalar_lea.vmem [#allocation0], 22
    %1031 = vst.msk [vmem:[%s1030] sm:$0xc] %vm1028, %v1027
    %s1032 = scalar_lea.vmem %s0, 240
    %v1033 = vld [vmem:[%s1032] sm:$0x1]
    %s1034 = scalar_lea.vmem %s0, 495
    %v1035 = vld [vmem:[%s1034] sm:$0x2]
    %vm1036 = vcmask 1041409
    %v1037 = vsel %vm1036, %v1035, %v1033
    %s1038 = scalar_lea.vmem %s0, 110
    %v1039 = vld [vmem:[%s1038] sm:$0x4]
    %vm1040 = vcmask 1042434
    %v1041 = vsel %vm1040, %v1039, %v1037
    %s1042 = scalar_lea.vmem %s0, 365
    %v1043 = vld [vmem:[%s1042] sm:$0x8]
    %vm1044 = vcmask 1043459
    %v1045 = vsel %vm1044, %v1043, %v1041
    %1046 = vrot.lane.b32.xlu0 %v1045, 80
    %v1047 = vpop.permute.xlu0 %1046
    %vm1048 = vcmask 679552
    %s1049 = scalar_lea.vmem [#allocation0], 40
    %1050 = vst.msk [vmem:[%s1049] sm:$0x3] %vm1048, %v1047
    %s1051 = scalar_lea.vmem [#allocation0], 14
    %1052 = vst.msk [vmem:[%s1051] sm:$0xc] %vm1048, %v1047
    %s1053 = scalar_lea.vmem %s0, 197
    %v1054 = vld [vmem:[%s1053] sm:$0x1]
    %s1055 = scalar_lea.vmem %s0, 452
    %v1056 = vld [vmem:[%s1055] sm:$0x2]
    %vm1057 = vcmask 1041409
    %v1058 = vsel %vm1057, %v1056, %v1054
    %s1059 = scalar_lea.vmem %s0, 67
    %v1060 = vld [vmem:[%s1059] sm:$0x4]
    %vm1061 = vcmask 1042434
    %v1062 = vsel %vm1061, %v1060, %v1058
    %s1063 = scalar_lea.vmem %s0, 322
    %v1064 = vld [vmem:[%s1063] sm:$0x8]
    %vm1065 = vcmask 1043459
    %v1066 = vsel %vm1065, %v1064, %v1062
    %1067 = vrot.lane.b32.xlu0 %v1066, 79
    %v1068 = vpop.permute.xlu0 %1067
    %vm1069 = vcmask 671352
    %s1070 = scalar_lea.vmem [#allocation0], 32
    %1071 = vst.msk [vmem:[%s1070] sm:$0x3] %vm1069, %v1068
    %s1072 = scalar_lea.vmem [#allocation0], 6
    %1073 = vst.msk [vmem:[%s1072] sm:$0xc] %vm1069, %v1068
    %s1074 = scalar_lea.vmem %s0, 26
    %v1075 = vld [vmem:[%s1074] sm:$0x1]
    %s1076 = scalar_lea.vmem %s0, 281
    %v1077 = vld [vmem:[%s1076] sm:$0x2]
    %vm1078 = vcmask 1041409
    %v1079 = vsel %vm1078, %v1077, %v1075
    %s1080 = scalar_lea.vmem %s0, 152
    %v1081 = vld [vmem:[%s1080] sm:$0x4]
    %vm1082 = vcmask 1042434
    %v1083 = vsel %vm1082, %v1081, %v1079
    %s1084 = scalar_lea.vmem %s0, 407
    %v1085 = vld [vmem:[%s1084] sm:$0x8]
    %vm1086 = vcmask 1043459
    %v1087 = vsel %vm1086, %v1085, %v1083
    %1088 = vrot.lane.b32.xlu0 %v1087, 78
    %v1089 = vpop.permute.xlu0 %1088
    %vm1090 = vcmask 663152
    %1091 = vst.msk [vmem:[#allocation0] sm:$0x3] %vm1090, %v1089
    %s1092 = scalar_lea.vmem [#allocation0], 22
    %1093 = vst.msk [vmem:[%s1092] sm:$0xc] %vm1090, %v1089
    %s1094 = scalar_lea.vmem %s0, 239
    %v1095 = vld [vmem:[%s1094] sm:$0x1]
    %s1096 = scalar_lea.vmem %s0, 494
    %v1097 = vld [vmem:[%s1096] sm:$0x2]
    %vm1098 = vcmask 1041409
    %v1099 = vsel %vm1098, %v1097, %v1095
    %s1100 = scalar_lea.vmem %s0, 109
    %v1101 = vld [vmem:[%s1100] sm:$0x4]
    %vm1102 = vcmask 1042434
    %v1103 = vsel %vm1102, %v1101, %v1099
    %s1104 = scalar_lea.vmem %s0, 364
    %v1105 = vld [vmem:[%s1104] sm:$0x8]
    %vm1106 = vcmask 1043459
    %v1107 = vsel %vm1106, %v1105, %v1103
    %1108 = vrot.lane.b32.xlu0 %v1107, 77
    %v1109 = vpop.permute.xlu0 %1108
    %vm1110 = vcmask 654952
    %s1111 = scalar_lea.vmem [#allocation0], 40
    %1112 = vst.msk [vmem:[%s1111] sm:$0x3] %vm1110, %v1109
    %s1113 = scalar_lea.vmem [#allocation0], 14
    %1114 = vst.msk [vmem:[%s1113] sm:$0xc] %vm1110, %v1109
    %s1115 = scalar_lea.vmem %s0, 196
    %v1116 = vld [vmem:[%s1115] sm:$0x1]
    %s1117 = scalar_lea.vmem %s0, 451
    %v1118 = vld [vmem:[%s1117] sm:$0x2]
    %vm1119 = vcmask 1041409
    %v1120 = vsel %vm1119, %v1118, %v1116
    %s1121 = scalar_lea.vmem %s0, 66
    %v1122 = vld [vmem:[%s1121] sm:$0x4]
    %vm1123 = vcmask 1042434
    %v1124 = vsel %vm1123, %v1122, %v1120
    %s1125 = scalar_lea.vmem %s0, 321
    %v1126 = vld [vmem:[%s1125] sm:$0x8]
    %vm1127 = vcmask 1043459
    %v1128 = vsel %vm1127, %v1126, %v1124
    %1129 = vrot.lane.b32.xlu0 %v1128, 76
    %v1130 = vpop.permute.xlu0 %1129
    %vm1131 = vcmask 646752
    %s1132 = scalar_lea.vmem [#allocation0], 32
    %1133 = vst.msk [vmem:[%s1132] sm:$0x3] %vm1131, %v1130
    %s1134 = scalar_lea.vmem [#allocation0], 6
    %1135 = vst.msk [vmem:[%s1134] sm:$0xc] %vm1131, %v1130
    %s1136 = scalar_lea.vmem %s0, 25
    %v1137 = vld [vmem:[%s1136] sm:$0x1]
    %s1138 = scalar_lea.vmem %s0, 280
    %v1139 = vld [vmem:[%s1138] sm:$0x2]
    %vm1140 = vcmask 1041409
    %v1141 = vsel %vm1140, %v1139, %v1137
    %s1142 = scalar_lea.vmem %s0, 151
    %v1143 = vld [vmem:[%s1142] sm:$0x4]
    %vm1144 = vcmask 1042434
    %v1145 = vsel %vm1144, %v1143, %v1141
    %s1146 = scalar_lea.vmem %s0, 406
    %v1147 = vld [vmem:[%s1146] sm:$0x8]
    %vm1148 = vcmask 1043459
    %v1149 = vsel %vm1148, %v1147, %v1145
    %1150 = vrot.lane.b32.xlu0 %v1149, 75
    %v1151 = vpop.permute.xlu0 %1150
    %vm1152 = vcmask 638552
    %1153 = vst.msk [vmem:[#allocation0] sm:$0x3] %vm1152, %v1151
    %s1154 = scalar_lea.vmem [#allocation0], 22
    %1155 = vst.msk [vmem:[%s1154] sm:$0xc] %vm1152, %v1151
    %s1156 = scalar_lea.vmem %s0, 238
    %v1157 = vld [vmem:[%s1156] sm:$0x1]
    %s1158 = scalar_lea.vmem %s0, 493
    %v1159 = vld [vmem:[%s1158] sm:$0x2]
    %vm1160 = vcmask 1041409
    %v1161 = vsel %vm1160, %v1159, %v1157
    %s1162 = scalar_lea.vmem %s0, 108
    %v1163 = vld [vmem:[%s1162] sm:$0x4]
    %vm1164 = vcmask 1042434
    %v1165 = vsel %vm1164, %v1163, %v1161
    %s1166 = scalar_lea.vmem %s0, 363
    %v1167 = vld [vmem:[%s1166] sm:$0x8]
    %vm1168 = vcmask 1043459
    %v1169 = vsel %vm1168, %v1167, %v1165
    %1170 = vrot.lane.b32.xlu0 %v1169, 74
    %v1171 = vpop.permute.xlu0 %1170
    %vm1172 = vcmask 630352
    %s1173 = scalar_lea.vmem [#allocation0], 40
    %1174 = vst.msk [vmem:[%s1173] sm:$0x3] %vm1172, %v1171
    %s1175 = scalar_lea.vmem [#allocation0], 14
    %1176 = vst.msk [vmem:[%s1175] sm:$0xc] %vm1172, %v1171
    %s1177 = scalar_lea.vmem %s0, 195
    %v1178 = vld [vmem:[%s1177] sm:$0x1]
    %s1179 = scalar_lea.vmem %s0, 450
    %v1180 = vld [vmem:[%s1179] sm:$0x2]
    %vm1181 = vcmask 1041409
    %v1182 = vsel %vm1181, %v1180, %v1178
    %s1183 = scalar_lea.vmem %s0, 65
    %v1184 = vld [vmem:[%s1183] sm:$0x4]
    %vm1185 = vcmask 1042434
    %v1186 = vsel %vm1185, %v1184, %v1182
    %s1187 = scalar_lea.vmem %s0, 320
    %v1188 = vld [vmem:[%s1187] sm:$0x8]
    %vm1189 = vcmask 1043459
    %v1190 = vsel %vm1189, %v1188, %v1186
    %1191 = vrot.lane.b32.xlu0 %v1190, 73
    %v1192 = vpop.permute.xlu0 %1191
    %vm1193 = vcmask 622152
    %s1194 = scalar_lea.vmem [#allocation0], 32
    %1195 = vst.msk [vmem:[%s1194] sm:$0x3] %vm1193, %v1192
    %s1196 = scalar_lea.vmem [#allocation0], 6
    %1197 = vst.msk [vmem:[%s1196] sm:$0xc] %vm1193, %v1192
    %s1198 = scalar_lea.vmem %s0, 24
    %v1199 = vld [vmem:[%s1198] sm:$0x1]
    %s1200 = scalar_lea.vmem %s0, 279
    %v1201 = vld [vmem:[%s1200] sm:$0x2]
    %vm1202 = vcmask 1041409
    %v1203 = vsel %vm1202, %v1201, %v1199
    %s1204 = scalar_lea.vmem %s0, 150
    %v1205 = vld [vmem:[%s1204] sm:$0x4]
    %vm1206 = vcmask 1042434
    %v1207 = vsel %vm1206, %v1205, %v1203
    %s1208 = scalar_lea.vmem %s0, 405
    %v1209 = vld [vmem:[%s1208] sm:$0x8]
    %vm1210 = vcmask 1043459
    %v1211 = vsel %vm1210, %v1209, %v1207
    %1212 = vrot.lane.b32.xlu0 %v1211, 72
    %v1213 = vpop.permute.xlu0 %1212
    %vm1214 = vcmask 613952
    %1215 = vst.msk [vmem:[#allocation0] sm:$0x3] %vm1214, %v1213
    %s1216 = scalar_lea.vmem [#allocation0], 22
    %1217 = vst.msk [vmem:[%s1216] sm:$0xc] %vm1214, %v1213
    %s1218 = scalar_lea.vmem %s0, 237
    %v1219 = vld [vmem:[%s1218] sm:$0x1]
    %s1220 = scalar_lea.vmem %s0, 492
    %v1221 = vld [vmem:[%s1220] sm:$0x2]
    %vm1222 = vcmask 1041409
    %v1223 = vsel %vm1222, %v1221, %v1219
    %s1224 = scalar_lea.vmem %s0, 107
    %v1225 = vld [vmem:[%s1224] sm:$0x4]
    %vm1226 = vcmask 1042434
    %v1227 = vsel %vm1226, %v1225, %v1223
    %s1228 = scalar_lea.vmem %s0, 362
    %v1229 = vld [vmem:[%s1228] sm:$0x8]
    %vm1230 = vcmask 1043459
    %v1231 = vsel %vm1230, %v1229, %v1227
    %1232 = vrot.lane.b32.xlu0 %v1231, 71
    %v1233 = vpop.permute.xlu0 %1232
    %vm1234 = vcmask 605752
    %s1235 = scalar_lea.vmem [#allocation0], 40
    %1236 = vst.msk [vmem:[%s1235] sm:$0x3] %vm1234, %v1233
    %s1237 = scalar_lea.vmem [#allocation0], 14
    %1238 = vst.msk [vmem:[%s1237] sm:$0xc] %vm1234, %v1233
    %s1239 = scalar_lea.vmem %s0, 194
    %v1240 = vld [vmem:[%s1239] sm:$0x1]
    %s1241 = scalar_lea.vmem %s0, 449
    %v1242 = vld [vmem:[%s1241] sm:$0x2]
    %vm1243 = vcmask 1041409
    %v1244 = vsel %vm1243, %v1242, %v1240
    %s1245 = scalar_lea.vmem %s0, 64
    %v1246 = vld [vmem:[%s1245] sm:$0x4]
    %vm1247 = vcmask 1042434
    %v1248 = vsel %vm1247, %v1246, %v1244
    %s1249 = scalar_lea.vmem %s0, 319
    %v1250 = vld [vmem:[%s1249] sm:$0x8]
    %vm1251 = vcmask 1043459
    %v1252 = vsel %vm1251, %v1250, %v1248
    %1253 = vrot.lane.b32.xlu0 %v1252, 70
    %v1254 = vpop.permute.xlu0 %1253
    %vm1255 = vcmask 597552
    %s1256 = scalar_lea.vmem [#allocation0], 32
    %1257 = vst.msk [vmem:[%s1256] sm:$0x3] %vm1255, %v1254
    %s1258 = scalar_lea.vmem [#allocation0], 6
    %1259 = vst.msk [vmem:[%s1258] sm:$0xc] %vm1255, %v1254
    %s1260 = scalar_lea.vmem %s0, 23
    %v1261 = vld [vmem:[%s1260] sm:$0x1]
    %s1262 = scalar_lea.vmem %s0, 278
    %v1263 = vld [vmem:[%s1262] sm:$0x2]
    %vm1264 = vcmask 1041409
    %v1265 = vsel %vm1264, %v1263, %v1261
    %s1266 = scalar_lea.vmem %s0, 149
    %v1267 = vld [vmem:[%s1266] sm:$0x4]
    %vm1268 = vcmask 1042434
    %v1269 = vsel %vm1268, %v1267, %v1265
    %s1270 = scalar_lea.vmem %s0, 404
    %v1271 = vld [vmem:[%s1270] sm:$0x8]
    %vm1272 = vcmask 1043459
    %v1273 = vsel %vm1272, %v1271, %v1269
    %1274 = vrot.lane.b32.xlu0 %v1273, 69
    %v1275 = vpop.permute.xlu0 %1274
    %vm1276 = vcmask 589352
    %1277 = vst.msk [vmem:[#allocation0] sm:$0x3] %vm1276, %v1275
    %s1278 = scalar_lea.vmem [#allocation0], 22
    %1279 = vst.msk [vmem:[%s1278] sm:$0xc] %vm1276, %v1275
    %s1280 = scalar_lea.vmem %s0, 236
    %v1281 = vld [vmem:[%s1280] sm:$0x1]
    %s1282 = scalar_lea.vmem %s0, 491
    %v1283 = vld [vmem:[%s1282] sm:$0x2]
    %vm1284 = vcmask 1041409
    %v1285 = vsel %vm1284, %v1283, %v1281
    %s1286 = scalar_lea.vmem %s0, 106
    %v1287 = vld [vmem:[%s1286] sm:$0x4]
    %vm1288 = vcmask 1042434
    %v1289 = vsel %vm1288, %v1287, %v1285
    %s1290 = scalar_lea.vmem %s0, 361
    %v1291 = vld [vmem:[%s1290] sm:$0x8]
    %vm1292 = vcmask 1043459
    %v1293 = vsel %vm1292, %v1291, %v1289
    %1294 = vrot.lane.b32.xlu0 %v1293, 68
    %v1295 = vpop.permute.xlu0 %1294
    %vm1296 = vcmask 581152
    %s1297 = scalar_lea.vmem [#allocation0], 40
    %1298 = vst.msk [vmem:[%s1297] sm:$0x3] %vm1296, %v1295
    %s1299 = scalar_lea.vmem [#allocation0], 14
    %1300 = vst.msk [vmem:[%s1299] sm:$0xc] %vm1296, %v1295
    %s1301 = scalar_lea.vmem %s0, 193
    %v1302 = vld [vmem:[%s1301] sm:$0x1]
    %s1303 = scalar_lea.vmem %s0, 448
    %v1304 = vld [vmem:[%s1303] sm:$0x2]
    %vm1305 = vcmask 1041409
    %v1306 = vsel %vm1305, %v1304, %v1302
    %s1307 = scalar_lea.vmem %s0, 63
    %v1308 = vld [vmem:[%s1307] sm:$0x4]
    %vm1309 = vcmask 1042434
    %v1310 = vsel %vm1309, %v1308, %v1306
    %s1311 = scalar_lea.vmem %s0, 318
    %v1312 = vld [vmem:[%s1311] sm:$0x8]
    %vm1313 = vcmask 1043459
    %v1314 = vsel %vm1313, %v1312, %v1310
    %1315 = vrot.lane.b32.xlu0 %v1314, 67
    %v1316 = vpop.permute.xlu0 %1315
    %vm1317 = vcmask 572952
    %s1318 = scalar_lea.vmem [#allocation0], 32
    %1319 = vst.msk [vmem:[%s1318] sm:$0x3] %vm1317, %v1316
    %s1320 = scalar_lea.vmem [#allocation0], 6
    %1321 = vst.msk [vmem:[%s1320] sm:$0xc] %vm1317, %v1316
    %s1322 = scalar_lea.vmem %s0, 22
    %v1323 = vld [vmem:[%s1322] sm:$0x1]
    %s1324 = scalar_lea.vmem %s0, 277
    %v1325 = vld [vmem:[%s1324] sm:$0x2]
    %vm1326 = vcmask 1041409
    %v1327 = vsel %vm1326, %v1325, %v1323
    %s1328 = scalar_lea.vmem %s0, 148
    %v1329 = vld [vmem:[%s1328] sm:$0x4]
    %vm1330 = vcmask 1042434
    %v1331 = vsel %vm1330, %v1329, %v1327
    %s1332 = scalar_lea.vmem %s0, 403
    %v1333 = vld [vmem:[%s1332] sm:$0x8]
    %vm1334 = vcmask 1043459
    %v1335 = vsel %vm1334, %v1333, %v1331
    %1336 = vrot.lane.b32.xlu0 %v1335, 66
    %v1337 = vpop.permute.xlu0 %1336
    %vm1338 = vcmask 564752
    %1339 = vst.msk [vmem:[#allocation0] sm:$0x3] %vm1338, %v1337
    %s1340 = scalar_lea.vmem [#allocation0], 22
    %1341 = vst.msk [vmem:[%s1340] sm:$0xc] %vm1338, %v1337
    %s1342 = scalar_lea.vmem %s0, 235
    %v1343 = vld [vmem:[%s1342] sm:$0x1]
    %s1344 = scalar_lea.vmem %s0, 490
    %v1345 = vld [vmem:[%s1344] sm:$0x2]
    %vm1346 = vcmask 1041409
    %v1347 = vsel %vm1346, %v1345, %v1343
    %s1348 = scalar_lea.vmem %s0, 105
    %v1349 = vld [vmem:[%s1348] sm:$0x4]
    %vm1350 = vcmask 1042434
    %v1351 = vsel %vm1350, %v1349, %v1347
    %s1352 = scalar_lea.vmem %s0, 360
    %v1353 = vld [vmem:[%s1352] sm:$0x8]
    %vm1354 = vcmask 1043459
    %v1355 = vsel %vm1354, %v1353, %v1351
    %1356 = vrot.lane.b32.xlu0 %v1355, 65
    %v1357 = vpop.permute.xlu0 %1356
    %vm1358 = vcmask 556552
    %s1359 = scalar_lea.vmem [#allocation0], 40
    %1360 = vst.msk [vmem:[%s1359] sm:$0x3] %vm1358, %v1357
    %s1361 = scalar_lea.vmem [#allocation0], 14
    %1362 = vst.msk [vmem:[%s1361] sm:$0xc] %vm1358, %v1357
    %s1363 = scalar_lea.vmem %s0, 192
    %v1364 = vld [vmem:[%s1363] sm:$0x1]
    %s1365 = scalar_lea.vmem %s0, 447
    %v1366 = vld [vmem:[%s1365] sm:$0x2]
    %vm1367 = vcmask 1041409
    %v1368 = vsel %vm1367, %v1366, %v1364
    %s1369 = scalar_lea.vmem %s0, 62
    %v1370 = vld [vmem:[%s1369] sm:$0x4]
    %vm1371 = vcmask 1042434
    %v1372 = vsel %vm1371, %v1370, %v1368
    %s1373 = scalar_lea.vmem %s0, 317
    %v1374 = vld [vmem:[%s1373] sm:$0x8]
    %vm1375 = vcmask 1043459
    %v1376 = vsel %vm1375, %v1374, %v1372
    %1377 = vrot.lane.b32.xlu0 %v1376, 64
    %v1378 = vpop.permute.xlu0 %1377
    %vm1379 = vcmask 548352
    %s1380 = scalar_lea.vmem [#allocation0], 32
    %1381 = vst.msk [vmem:[%s1380] sm:$0x3] %vm1379, %v1378
    %s1382 = scalar_lea.vmem [#allocation0], 6
    %1383 = vst.msk [vmem:[%s1382] sm:$0xc] %vm1379, %v1378
    %s1384 = scalar_lea.vmem %s0, 21
    %v1385 = vld [vmem:[%s1384] sm:$0x1]
    %s1386 = scalar_lea.vmem %s0, 276
    %v1387 = vld [vmem:[%s1386] sm:$0x2]
    %vm1388 = vcmask 1041409
    %v1389 = vsel %vm1388, %v1387, %v1385
    %s1390 = scalar_lea.vmem %s0, 147
    %v1391 = vld [vmem:[%s1390] sm:$0x4]
    %vm1392 = vcmask 1042434
    %v1393 = vsel %vm1392, %v1391, %v1389
    %s1394 = scalar_lea.vmem %s0, 402
    %v1395 = vld [vmem:[%s1394] sm:$0x8]
    %vm1396 = vcmask 1043459
    %v1397 = vsel %vm1396, %v1395, %v1393
    %1398 = vrot.lane.b32.xlu0 %v1397, 63
    %v1399 = vpop.permute.xlu0 %1398
    %vm1400 = vcmask 540152
    %1401 = vst.msk [vmem:[#allocation0] sm:$0x3] %vm1400, %v1399
    %s1402 = scalar_lea.vmem [#allocation0], 22
    %1403 = vst.msk [vmem:[%s1402] sm:$0xc] %vm1400, %v1399
    %s1404 = scalar_lea.vmem %s0, 234
    %v1405 = vld [vmem:[%s1404] sm:$0x1]
    %s1406 = scalar_lea.vmem %s0, 489
    %v1407 = vld [vmem:[%s1406] sm:$0x2]
    %vm1408 = vcmask 1041409
    %v1409 = vsel %vm1408, %v1407, %v1405
    %s1410 = scalar_lea.vmem %s0, 104
    %v1411 = vld [vmem:[%s1410] sm:$0x4]
    %vm1412 = vcmask 1042434
    %v1413 = vsel %vm1412, %v1411, %v1409
    %s1414 = scalar_lea.vmem %s0, 359
    %v1415 = vld [vmem:[%s1414] sm:$0x8]
    %vm1416 = vcmask 1043459
    %v1417 = vsel %vm1416, %v1415, %v1413
    %1418 = vrot.lane.b32.xlu0 %v1417, 62
    %v1419 = vpop.permute.xlu0 %1418
    %vm1420 = vcmask 531952
    %s1421 = scalar_lea.vmem [#allocation0], 40
    %1422 = vst.msk [vmem:[%s1421] sm:$0x3] %vm1420, %v1419
    %s1423 = scalar_lea.vmem [#allocation0], 14
    %1424 = vst.msk [vmem:[%s1423] sm:$0xc] %vm1420, %v1419
    %s1425 = scalar_lea.vmem %s0, 191
    %v1426 = vld [vmem:[%s1425] sm:$0x1]
    %s1427 = scalar_lea.vmem %s0, 446
    %v1428 = vld [vmem:[%s1427] sm:$0x2]
    %vm1429 = vcmask 1041409
    %v1430 = vsel %vm1429, %v1428, %v1426
    %s1431 = scalar_lea.vmem %s0, 61
    %v1432 = vld [vmem:[%s1431] sm:$0x4]
    %vm1433 = vcmask 1042434
    %v1434 = vsel %vm1433, %v1432, %v1430
    %s1435 = scalar_lea.vmem %s0, 316
    %v1436 = vld [vmem:[%s1435] sm:$0x8]
    %vm1437 = vcmask 1043459
    %v1438 = vsel %vm1437, %v1436, %v1434
    %1439 = vrot.lane.b32.xlu0 %v1438, 61
    %v1440 = vpop.permute.xlu0 %1439
    %vm1441 = vcmask 523752
    %s1442 = scalar_lea.vmem [#allocation0], 32
    %1443 = vst.msk [vmem:[%s1442] sm:$0x3] %vm1441, %v1440
    %s1444 = scalar_lea.vmem [#allocation0], 6
    %1445 = vst.msk [vmem:[%s1444] sm:$0xc] %vm1441, %v1440
    %s1446 = scalar_lea.vmem %s0, 20
    %v1447 = vld [vmem:[%s1446] sm:$0x1]
    %s1448 = scalar_lea.vmem %s0, 275
    %v1449 = vld [vmem:[%s1448] sm:$0x2]
    %vm1450 = vcmask 1041409
    %v1451 = vsel %vm1450, %v1449, %v1447
    %s1452 = scalar_lea.vmem %s0, 146
    %v1453 = vld [vmem:[%s1452] sm:$0x4]
    %vm1454 = vcmask 1042434
    %v1455 = vsel %vm1454, %v1453, %v1451
    %s1456 = scalar_lea.vmem %s0, 401
    %v1457 = vld [vmem:[%s1456] sm:$0x8]
    %vm1458 = vcmask 1043459
    %v1459 = vsel %vm1458, %v1457, %v1455
    %1460 = vrot.lane.b32.xlu0 %v1459, 60
    %v1461 = vpop.permute.xlu0 %1460
    %vm1462 = vcmask 515552
    %1463 = vst.msk [vmem:[#allocation0] sm:$0x3] %vm1462, %v1461
    %s1464 = scalar_lea.vmem [#allocation0], 22
    %1465 = vst.msk [vmem:[%s1464] sm:$0xc] %vm1462, %v1461
    %s1466 = scalar_lea.vmem %s0, 233
    %v1467 = vld [vmem:[%s1466] sm:$0x1]
    %s1468 = scalar_lea.vmem %s0, 488
    %v1469 = vld [vmem:[%s1468] sm:$0x2]
    %vm1470 = vcmask 1041409
    %v1471 = vsel %vm1470, %v1469, %v1467
    %s1472 = scalar_lea.vmem %s0, 103
    %v1473 = vld [vmem:[%s1472] sm:$0x4]
    %vm1474 = vcmask 1042434
    %v1475 = vsel %vm1474, %v1473, %v1471
    %s1476 = scalar_lea.vmem %s0, 358
    %v1477 = vld [vmem:[%s1476] sm:$0x8]
    %vm1478 = vcmask 1043459
    %v1479 = vsel %vm1478, %v1477, %v1475
    %1480 = vrot.lane.b32.xlu0 %v1479, 59
    %v1481 = vpop.permute.xlu0 %1480
    %vm1482 = vcmask 507352
    %s1483 = scalar_lea.vmem [#allocation0], 40
    %1484 = vst.msk [vmem:[%s1483] sm:$0x3] %vm1482, %v1481
    %s1485 = scalar_lea.vmem [#allocation0], 14
    %1486 = vst.msk [vmem:[%s1485] sm:$0xc] %vm1482, %v1481
    %s1487 = scalar_lea.vmem %s0, 190
    %v1488 = vld [vmem:[%s1487] sm:$0x1]
    %s1489 = scalar_lea.vmem %s0, 445
    %v1490 = vld [vmem:[%s1489] sm:$0x2]
    %vm1491 = vcmask 1041409
    %v1492 = vsel %vm1491, %v1490, %v1488
    %s1493 = scalar_lea.vmem %s0, 60
    %v1494 = vld [vmem:[%s1493] sm:$0x4]
    %vm1495 = vcmask 1042434
    %v1496 = vsel %vm1495, %v1494, %v1492
    %s1497 = scalar_lea.vmem %s0, 315
    %v1498 = vld [vmem:[%s1497] sm:$0x8]
    %vm1499 = vcmask 1043459
    %v1500 = vsel %vm1499, %v1498, %v1496
    %1501 = vrot.lane.b32.xlu0 %v1500, 58
    %v1502 = vpop.permute.xlu0 %1501
    %vm1503 = vcmask 499152
    %s1504 = scalar_lea.vmem [#allocation0], 32
    %1505 = vst.msk [vmem:[%s1504] sm:$0x3] %vm1503, %v1502
    %s1506 = scalar_lea.vmem [#allocation0], 6
    %1507 = vst.msk [vmem:[%s1506] sm:$0xc] %vm1503, %v1502
    %s1508 = scalar_lea.vmem %s0, 19
    %v1509 = vld [vmem:[%s1508] sm:$0x1]
    %s1510 = scalar_lea.vmem %s0, 274
    %v1511 = vld [vmem:[%s1510] sm:$0x2]
    %vm1512 = vcmask 1041409
    %v1513 = vsel %vm1512, %v1511, %v1509
    %s1514 = scalar_lea.vmem %s0, 145
    %v1515 = vld [vmem:[%s1514] sm:$0x4]
    %vm1516 = vcmask 1042434
    %v1517 = vsel %vm1516, %v1515, %v1513
    %s1518 = scalar_lea.vmem %s0, 400
    %v1519 = vld [vmem:[%s1518] sm:$0x8]
    %vm1520 = vcmask 1043459
    %v1521 = vsel %vm1520, %v1519, %v1517
    %1522 = vrot.lane.b32.xlu0 %v1521, 57
    %v1523 = vpop.permute.xlu0 %1522
    %vm1524 = vcmask 490952
    %1525 = vst.msk [vmem:[#allocation0] sm:$0x3] %vm1524, %v1523
    %s1526 = scalar_lea.vmem [#allocation0], 22
    %1527 = vst.msk [vmem:[%s1526] sm:$0xc] %vm1524, %v1523
    %s1528 = scalar_lea.vmem %s0, 232
    %v1529 = vld [vmem:[%s1528] sm:$0x1]
    %s1530 = scalar_lea.vmem %s0, 487
    %v1531 = vld [vmem:[%s1530] sm:$0x2]
    %vm1532 = vcmask 1041409
    %v1533 = vsel %vm1532, %v1531, %v1529
    %s1534 = scalar_lea.vmem %s0, 102
    %v1535 = vld [vmem:[%s1534] sm:$0x4]
    %vm1536 = vcmask 1042434
    %v1537 = vsel %vm1536, %v1535, %v1533
    %s1538 = scalar_lea.vmem %s0, 357
    %v1539 = vld [vmem:[%s1538] sm:$0x8]
    %vm1540 = vcmask 1043459
    %v1541 = vsel %vm1540, %v1539, %v1537
    %1542 = vrot.lane.b32.xlu0 %v1541, 56
    %v1543 = vpop.permute.xlu0 %1542
    %vm1544 = vcmask 482752
    %s1545 = scalar_lea.vmem [#allocation0], 40
    %1546 = vst.msk [vmem:[%s1545] sm:$0x3] %vm1544, %v1543
    %s1547 = scalar_lea.vmem [#allocation0], 14
    %1548 = vst.msk [vmem:[%s1547] sm:$0xc] %vm1544, %v1543
    %s1549 = scalar_lea.vmem %s0, 189
    %v1550 = vld [vmem:[%s1549] sm:$0x1]
    %s1551 = scalar_lea.vmem %s0, 444
    %v1552 = vld [vmem:[%s1551] sm:$0x2]
    %vm1553 = vcmask 1041409
    %v1554 = vsel %vm1553, %v1552, %v1550
    %s1555 = scalar_lea.vmem %s0, 59
    %v1556 = vld [vmem:[%s1555] sm:$0x4]
    %vm1557 = vcmask 1042434
    %v1558 = vsel %vm1557, %v1556, %v1554
    %s1559 = scalar_lea.vmem %s0, 314
    %v1560 = vld [vmem:[%s1559] sm:$0x8]
    %vm1561 = vcmask 1043459
    %v1562 = vsel %vm1561, %v1560, %v1558
    %1563 = vrot.lane.b32.xlu0 %v1562, 55
    %v1564 = vpop.permute.xlu0 %1563
    %vm1565 = vcmask 474552
    %s1566 = scalar_lea.vmem [#allocation0], 32
    %1567 = vst.msk [vmem:[%s1566] sm:$0x3] %vm1565, %v1564
    %s1568 = scalar_lea.vmem [#allocation0], 6
    %1569 = vst.msk [vmem:[%s1568] sm:$0xc] %vm1565, %v1564
    %s1570 = scalar_lea.vmem %s0, 18
    %v1571 = vld [vmem:[%s1570] sm:$0x1]
    %s1572 = scalar_lea.vmem %s0, 273
    %v1573 = vld [vmem:[%s1572] sm:$0x2]
    %vm1574 = vcmask 1041409
    %v1575 = vsel %vm1574, %v1573, %v1571
    %s1576 = scalar_lea.vmem %s0, 144
    %v1577 = vld [vmem:[%s1576] sm:$0x4]
    %vm1578 = vcmask 1042434
    %v1579 = vsel %vm1578, %v1577, %v1575
    %s1580 = scalar_lea.vmem %s0, 399
    %v1581 = vld [vmem:[%s1580] sm:$0x8]
    %vm1582 = vcmask 1043459
    %v1583 = vsel %vm1582, %v1581, %v1579
    %1584 = vrot.lane.b32.xlu0 %v1583, 54
    %v1585 = vpop.permute.xlu0 %1584
    %vm1586 = vcmask 466352
    %1587 = vst.msk [vmem:[#allocation0] sm:$0x3] %vm1586, %v1585
    %s1588 = scalar_lea.vmem [#allocation0], 22
    %1589 = vst.msk [vmem:[%s1588] sm:$0xc] %vm1586, %v1585
    %s1590 = scalar_lea.vmem %s0, 231
    %v1591 = vld [vmem:[%s1590] sm:$0x1]
    %s1592 = scalar_lea.vmem %s0, 486
    %v1593 = vld [vmem:[%s1592] sm:$0x2]
    %vm1594 = vcmask 1041409
    %v1595 = vsel %vm1594, %v1593, %v1591
    %s1596 = scalar_lea.vmem %s0, 101
    %v1597 = vld [vmem:[%s1596] sm:$0x4]
    %vm1598 = vcmask 1042434
    %v1599 = vsel %vm1598, %v1597, %v1595
    %s1600 = scalar_lea.vmem %s0, 356
    %v1601 = vld [vmem:[%s1600] sm:$0x8]
    %vm1602 = vcmask 1043459
    %v1603 = vsel %vm1602, %v1601, %v1599
    %1604 = vrot.lane.b32.xlu0 %v1603, 53
    %v1605 = vpop.permute.xlu0 %1604
    %vm1606 = vcmask 458152
    %s1607 = scalar_lea.vmem [#allocation0], 40
    %1608 = vst.msk [vmem:[%s1607] sm:$0x3] %vm1606, %v1605
    %s1609 = scalar_lea.vmem [#allocation0], 14
    %1610 = vst.msk [vmem:[%s1609] sm:$0xc] %vm1606, %v1605
    %s1611 = scalar_lea.vmem %s0, 188
    %v1612 = vld [vmem:[%s1611] sm:$0x1]
    %s1613 = scalar_lea.vmem %s0, 443
    %v1614 = vld [vmem:[%s1613] sm:$0x2]
    %vm1615 = vcmask 1041409
    %v1616 = vsel %vm1615, %v1614, %v1612
    %s1617 = scalar_lea.vmem %s0, 58
    %v1618 = vld [vmem:[%s1617] sm:$0x4]
    %vm1619 = vcmask 1042434
    %v1620 = vsel %vm1619, %v1618, %v1616
    %s1621 = scalar_lea.vmem %s0, 313
    %v1622 = vld [vmem:[%s1621] sm:$0x8]
    %vm1623 = vcmask 1043459
    %v1624 = vsel %vm1623, %v1622, %v1620
    %1625 = vrot.lane.b32.xlu0 %v1624, 52
    %v1626 = vpop.permute.xlu0 %1625
    %vm1627 = vcmask 449952
    %s1628 = scalar_lea.vmem [#allocation0], 32
    %1629 = vst.msk [vmem:[%s1628] sm:$0x3] %vm1627, %v1626
    %s1630 = scalar_lea.vmem [#allocation0], 6
    %1631 = vst.msk [vmem:[%s1630] sm:$0xc] %vm1627, %v1626
    %s1632 = scalar_lea.vmem %s0, 17
    %v1633 = vld [vmem:[%s1632] sm:$0x1]
    %s1634 = scalar_lea.vmem %s0, 272
    %v1635 = vld [vmem:[%s1634] sm:$0x2]
    %vm1636 = vcmask 1041409
    %v1637 = vsel %vm1636, %v1635, %v1633
    %s1638 = scalar_lea.vmem %s0, 143
    %v1639 = vld [vmem:[%s1638] sm:$0x4]
    %vm1640 = vcmask 1042434
    %v1641 = vsel %vm1640, %v1639, %v1637
    %s1642 = scalar_lea.vmem %s0, 398
    %v1643 = vld [vmem:[%s1642] sm:$0x8]
    %vm1644 = vcmask 1043459
    %v1645 = vsel %vm1644, %v1643, %v1641
    %1646 = vrot.lane.b32.xlu0 %v1645, 51
    %v1647 = vpop.permute.xlu0 %1646
    %vm1648 = vcmask 441752
    %1649 = vst.msk [vmem:[#allocation0] sm:$0x3] %vm1648, %v1647
    %s1650 = scalar_lea.vmem [#allocation0], 22
    %1651 = vst.msk [vmem:[%s1650] sm:$0xc] %vm1648, %v1647
    %s1652 = scalar_lea.vmem %s0, 230
    %v1653 = vld [vmem:[%s1652] sm:$0x1]
    %s1654 = scalar_lea.vmem %s0, 485
    %v1655 = vld [vmem:[%s1654] sm:$0x2]
    %vm1656 = vcmask 1041409
    %v1657 = vsel %vm1656, %v1655, %v1653
    %s1658 = scalar_lea.vmem %s0, 100
    %v1659 = vld [vmem:[%s1658] sm:$0x4]
    %vm1660 = vcmask 1042434
    %v1661 = vsel %vm1660, %v1659, %v1657
    %s1662 = scalar_lea.vmem %s0, 355
    %v1663 = vld [vmem:[%s1662] sm:$0x8]
    %vm1664 = vcmask 1043459
    %v1665 = vsel %vm1664, %v1663, %v1661
    %1666 = vrot.lane.b32.xlu0 %v1665, 50
    %v1667 = vpop.permute.xlu0 %1666
    %vm1668 = vcmask 433552
    %s1669 = scalar_lea.vmem [#allocation0], 40
    %1670 = vst.msk [vmem:[%s1669] sm:$0x3] %vm1668, %v1667
    %s1671 = scalar_lea.vmem [#allocation0], 14
    %1672 = vst.msk [vmem:[%s1671] sm:$0xc] %vm1668, %v1667
    %s1673 = scalar_lea.vmem %s0, 187
    %v1674 = vld [vmem:[%s1673] sm:$0x1]
    %s1675 = scalar_lea.vmem %s0, 442
    %v1676 = vld [vmem:[%s1675] sm:$0x2]
    %vm1677 = vcmask 1041409
    %v1678 = vsel %vm1677, %v1676, %v1674
    %s1679 = scalar_lea.vmem %s0, 57
    %v1680 = vld [vmem:[%s1679] sm:$0x4]
    %vm1681 = vcmask 1042434
    %v1682 = vsel %vm1681, %v1680, %v1678
    %s1683 = scalar_lea.vmem %s0, 312
    %v1684 = vld [vmem:[%s1683] sm:$0x8]
    %vm1685 = vcmask 1043459
    %v1686 = vsel %vm1685, %v1684, %v1682
    %1687 = vrot.lane.b32.xlu0 %v1686, 49
    %v1688 = vpop.permute.xlu0 %1687
    %vm1689 = vcmask 425352
    %s1690 = scalar_lea.vmem [#allocation0], 32
    %1691 = vst.msk [vmem:[%s1690] sm:$0x3] %vm1689, %v1688
    %s1692 = scalar_lea.vmem [#allocation0], 6
    %1693 = vst.msk [vmem:[%s1692] sm:$0xc] %vm1689, %v1688
    %s1694 = scalar_lea.vmem %s0, 16
    %v1695 = vld [vmem:[%s1694] sm:$0x1]
    %s1696 = scalar_lea.vmem %s0, 271
    %v1697 = vld [vmem:[%s1696] sm:$0x2]
    %vm1698 = vcmask 1041409
    %v1699 = vsel %vm1698, %v1697, %v1695
    %s1700 = scalar_lea.vmem %s0, 142
    %v1701 = vld [vmem:[%s1700] sm:$0x4]
    %vm1702 = vcmask 1042434
    %v1703 = vsel %vm1702, %v1701, %v1699
    %s1704 = scalar_lea.vmem %s0, 397
    %v1705 = vld [vmem:[%s1704] sm:$0x8]
    %vm1706 = vcmask 1043459
    %v1707 = vsel %vm1706, %v1705, %v1703
    %1708 = vrot.lane.b32.xlu0 %v1707, 48
    %v1709 = vpop.permute.xlu0 %1708
    %vm1710 = vcmask 417152
    %1711 = vst.msk [vmem:[#allocation0] sm:$0x3] %vm1710, %v1709
    %s1712 = scalar_lea.vmem [#allocation0], 22
    %1713 = vst.msk [vmem:[%s1712] sm:$0xc] %vm1710, %v1709
    %s1714 = scalar_lea.vmem %s0, 229
    %v1715 = vld [vmem:[%s1714] sm:$0x1]
    %s1716 = scalar_lea.vmem %s0, 484
    %v1717 = vld [vmem:[%s1716] sm:$0x2]
    %vm1718 = vcmask 1041409
    %v1719 = vsel %vm1718, %v1717, %v1715
    %s1720 = scalar_lea.vmem %s0, 99
    %v1721 = vld [vmem:[%s1720] sm:$0x4]
    %vm1722 = vcmask 1042434
    %v1723 = vsel %vm1722, %v1721, %v1719
    %s1724 = scalar_lea.vmem %s0, 354
    %v1725 = vld [vmem:[%s1724] sm:$0x8]
    %vm1726 = vcmask 1043459
    %v1727 = vsel %vm1726, %v1725, %v1723
    %1728 = vrot.lane.b32.xlu0 %v1727, 47
    %v1729 = vpop.permute.xlu0 %1728
    %vm1730 = vcmask 408952
    %s1731 = scalar_lea.vmem [#allocation0], 40
    %1732 = vst.msk [vmem:[%s1731] sm:$0x3] %vm1730, %v1729
    %s1733 = scalar_lea.vmem [#allocation0], 14
    %1734 = vst.msk [vmem:[%s1733] sm:$0xc] %vm1730, %v1729
    %s1735 = scalar_lea.vmem %s0, 186
    %v1736 = vld [vmem:[%s1735] sm:$0x1]
    %s1737 = scalar_lea.vmem %s0, 441
    %v1738 = vld [vmem:[%s1737] sm:$0x2]
    %vm1739 = vcmask 1041409
    %v1740 = vsel %vm1739, %v1738, %v1736
    %s1741 = scalar_lea.vmem %s0, 56
    %v1742 = vld [vmem:[%s1741] sm:$0x4]
    %vm1743 = vcmask 1042434
    %v1744 = vsel %vm1743, %v1742, %v1740
    %s1745 = scalar_lea.vmem %s0, 311
    %v1746 = vld [vmem:[%s1745] sm:$0x8]
    %vm1747 = vcmask 1043459
    %v1748 = vsel %vm1747, %v1746, %v1744
    %1749 = vrot.lane.b32.xlu0 %v1748, 46
    %v1750 = vpop.permute.xlu0 %1749
    %vm1751 = vcmask 400752
    %s1752 = scalar_lea.vmem [#allocation0], 32
    %1753 = vst.msk [vmem:[%s1752] sm:$0x3] %vm1751, %v1750
    %s1754 = scalar_lea.vmem [#allocation0], 6
    %1755 = vst.msk [vmem:[%s1754] sm:$0xc] %vm1751, %v1750
    %s1756 = scalar_lea.vmem %s0, 15
    %v1757 = vld [vmem:[%s1756] sm:$0x1]
    %s1758 = scalar_lea.vmem %s0, 270
    %v1759 = vld [vmem:[%s1758] sm:$0x2]
    %vm1760 = vcmask 1041409
    %v1761 = vsel %vm1760, %v1759, %v1757
    %s1762 = scalar_lea.vmem %s0, 141
    %v1763 = vld [vmem:[%s1762] sm:$0x4]
    %vm1764 = vcmask 1042434
    %v1765 = vsel %vm1764, %v1763, %v1761
    %s1766 = scalar_lea.vmem %s0, 396
    %v1767 = vld [vmem:[%s1766] sm:$0x8]
    %vm1768 = vcmask 1043459
    %v1769 = vsel %vm1768, %v1767, %v1765
    %1770 = vrot.lane.b32.xlu0 %v1769, 45
    %v1771 = vpop.permute.xlu0 %1770
    %vm1772 = vcmask 392552
    %1773 = vst.msk [vmem:[#allocation0] sm:$0x3] %vm1772, %v1771
    %s1774 = scalar_lea.vmem [#allocation0], 22
    %1775 = vst.msk [vmem:[%s1774] sm:$0xc] %vm1772, %v1771
    %s1776 = scalar_lea.vmem %s0, 228
    %v1777 = vld [vmem:[%s1776] sm:$0x1]
    %s1778 = scalar_lea.vmem %s0, 483
    %v1779 = vld [vmem:[%s1778] sm:$0x2]
    %vm1780 = vcmask 1041409
    %v1781 = vsel %vm1780, %v1779, %v1777
    %s1782 = scalar_lea.vmem %s0, 98
    %v1783 = vld [vmem:[%s1782] sm:$0x4]
    %vm1784 = vcmask 1042434
    %v1785 = vsel %vm1784, %v1783, %v1781
    %s1786 = scalar_lea.vmem %s0, 353
    %v1787 = vld [vmem:[%s1786] sm:$0x8]
    %vm1788 = vcmask 1043459
    %v1789 = vsel %vm1788, %v1787, %v1785
    %1790 = vrot.lane.b32.xlu0 %v1789, 44
    %v1791 = vpop.permute.xlu0 %1790
    %vm1792 = vcmask 384352
    %s1793 = scalar_lea.vmem [#allocation0], 40
    %1794 = vst.msk [vmem:[%s1793] sm:$0x3] %vm1792, %v1791
    %s1795 = scalar_lea.vmem [#allocation0], 14
    %1796 = vst.msk [vmem:[%s1795] sm:$0xc] %vm1792, %v1791
    %s1797 = scalar_lea.vmem %s0, 185
    %v1798 = vld [vmem:[%s1797] sm:$0x1]
    %s1799 = scalar_lea.vmem %s0, 440
    %v1800 = vld [vmem:[%s1799] sm:$0x2]
    %vm1801 = vcmask 1041409
    %v1802 = vsel %vm1801, %v1800, %v1798
    %s1803 = scalar_lea.vmem %s0, 55
    %v1804 = vld [vmem:[%s1803] sm:$0x4]
    %vm1805 = vcmask 1042434
    %v1806 = vsel %vm1805, %v1804, %v1802
    %s1807 = scalar_lea.vmem %s0, 310
    %v1808 = vld [vmem:[%s1807] sm:$0x8]
    %vm1809 = vcmask 1043459
    %v1810 = vsel %vm1809, %v1808, %v1806
    %1811 = vrot.lane.b32.xlu0 %v1810, 43
    %v1812 = vpop.permute.xlu0 %1811
    %vm1813 = vcmask 376152
    %s1814 = scalar_lea.vmem [#allocation0], 32
    %1815 = vst.msk [vmem:[%s1814] sm:$0x3] %vm1813, %v1812
    %s1816 = scalar_lea.vmem [#allocation0], 6
    %1817 = vst.msk [vmem:[%s1816] sm:$0xc] %vm1813, %v1812
    %s1818 = scalar_lea.vmem %s0, 14
    %v1819 = vld [vmem:[%s1818] sm:$0x1]
    %s1820 = scalar_lea.vmem %s0, 269
    %v1821 = vld [vmem:[%s1820] sm:$0x2]
    %vm1822 = vcmask 1041409
    %v1823 = vsel %vm1822, %v1821, %v1819
    %s1824 = scalar_lea.vmem %s0, 140
    %v1825 = vld [vmem:[%s1824] sm:$0x4]
    %vm1826 = vcmask 1042434
    %v1827 = vsel %vm1826, %v1825, %v1823
    %s1828 = scalar_lea.vmem %s0, 395
    %v1829 = vld [vmem:[%s1828] sm:$0x8]
    %vm1830 = vcmask 1043459
    %v1831 = vsel %vm1830, %v1829, %v1827
    %1832 = vrot.lane.b32.xlu0 %v1831, 42
    %v1833 = vpop.permute.xlu0 %1832
    %vm1834 = vcmask 367952
    %1835 = vst.msk [vmem:[#allocation0] sm:$0x3] %vm1834, %v1833
    %s1836 = scalar_lea.vmem [#allocation0], 22
    %1837 = vst.msk [vmem:[%s1836] sm:$0xc] %vm1834, %v1833
    %s1838 = scalar_lea.vmem %s0, 227
    %v1839 = vld [vmem:[%s1838] sm:$0x1]
    %s1840 = scalar_lea.vmem %s0, 482
    %v1841 = vld [vmem:[%s1840] sm:$0x2]
    %vm1842 = vcmask 1041409
    %v1843 = vsel %vm1842, %v1841, %v1839
    %s1844 = scalar_lea.vmem %s0, 97
    %v1845 = vld [vmem:[%s1844] sm:$0x4]
    %vm1846 = vcmask 1042434
    %v1847 = vsel %vm1846, %v1845, %v1843
    %s1848 = scalar_lea.vmem %s0, 352
    %v1849 = vld [vmem:[%s1848] sm:$0x8]
    %vm1850 = vcmask 1043459
    %v1851 = vsel %vm1850, %v1849, %v1847
    %1852 = vrot.lane.b32.xlu0 %v1851, 41
    %v1853 = vpop.permute.xlu0 %1852
    %vm1854 = vcmask 359752
    %s1855 = scalar_lea.vmem [#allocation0], 40
    %1856 = vst.msk [vmem:[%s1855] sm:$0x3] %vm1854, %v1853
    %s1857 = scalar_lea.vmem [#allocation0], 14
    %1858 = vst.msk [vmem:[%s1857] sm:$0xc] %vm1854, %v1853
    %s1859 = scalar_lea.vmem %s0, 184
    %v1860 = vld [vmem:[%s1859] sm:$0x1]
    %s1861 = scalar_lea.vmem %s0, 439
    %v1862 = vld [vmem:[%s1861] sm:$0x2]
    %vm1863 = vcmask 1041409
    %v1864 = vsel %vm1863, %v1862, %v1860
    %s1865 = scalar_lea.vmem %s0, 54
    %v1866 = vld [vmem:[%s1865] sm:$0x4]
    %vm1867 = vcmask 1042434
    %v1868 = vsel %vm1867, %v1866, %v1864
    %s1869 = scalar_lea.vmem %s0, 309
    %v1870 = vld [vmem:[%s1869] sm:$0x8]
    %vm1871 = vcmask 1043459
    %v1872 = vsel %vm1871, %v1870, %v1868
    %1873 = vrot.lane.b32.xlu0 %v1872, 40
    %v1874 = vpop.permute.xlu0 %1873
    %vm1875 = vcmask 351552
    %s1876 = scalar_lea.vmem [#allocation0], 32
    %1877 = vst.msk [vmem:[%s1876] sm:$0x3] %vm1875, %v1874
    %s1878 = scalar_lea.vmem [#allocation0], 6
    %1879 = vst.msk [vmem:[%s1878] sm:$0xc] %vm1875, %v1874
    %s1880 = scalar_lea.vmem %s0, 13
    %v1881 = vld [vmem:[%s1880] sm:$0x1]
    %s1882 = scalar_lea.vmem %s0, 268
    %v1883 = vld [vmem:[%s1882] sm:$0x2]
    %vm1884 = vcmask 1041409
    %v1885 = vsel %vm1884, %v1883, %v1881
    %s1886 = scalar_lea.vmem %s0, 139
    %v1887 = vld [vmem:[%s1886] sm:$0x4]
    %vm1888 = vcmask 1042434
    %v1889 = vsel %vm1888, %v1887, %v1885
    %s1890 = scalar_lea.vmem %s0, 394
    %v1891 = vld [vmem:[%s1890] sm:$0x8]
    %vm1892 = vcmask 1043459
    %v1893 = vsel %vm1892, %v1891, %v1889
    %1894 = vrot.lane.b32.xlu0 %v1893, 39
    %v1895 = vpop.permute.xlu0 %1894
    %vm1896 = vcmask 343352
    %1897 = vst.msk [vmem:[#allocation0] sm:$0x3] %vm1896, %v1895
    %s1898 = scalar_lea.vmem [#allocation0], 22
    %1899 = vst.msk [vmem:[%s1898] sm:$0xc] %vm1896, %v1895
    %s1900 = scalar_lea.vmem %s0, 226
    %v1901 = vld [vmem:[%s1900] sm:$0x1]
    %s1902 = scalar_lea.vmem %s0, 481
    %v1903 = vld [vmem:[%s1902] sm:$0x2]
    %vm1904 = vcmask 1041409
    %v1905 = vsel %vm1904, %v1903, %v1901
    %s1906 = scalar_lea.vmem %s0, 96
    %v1907 = vld [vmem:[%s1906] sm:$0x4]
    %vm1908 = vcmask 1042434
    %v1909 = vsel %vm1908, %v1907, %v1905
    %s1910 = scalar_lea.vmem %s0, 351
    %v1911 = vld [vmem:[%s1910] sm:$0x8]
    %vm1912 = vcmask 1043459
    %v1913 = vsel %vm1912, %v1911, %v1909
    %1914 = vrot.lane.b32.xlu0 %v1913, 38
    %v1915 = vpop.permute.xlu0 %1914
    %vm1916 = vcmask 335152
    %s1917 = scalar_lea.vmem [#allocation0], 40
    %1918 = vst.msk [vmem:[%s1917] sm:$0x3] %vm1916, %v1915
    %s1919 = scalar_lea.vmem [#allocation0], 14
    %1920 = vst.msk [vmem:[%s1919] sm:$0xc] %vm1916, %v1915
    %s1921 = scalar_lea.vmem %s0, 183
    %v1922 = vld [vmem:[%s1921] sm:$0x1]
    %s1923 = scalar_lea.vmem %s0, 438
    %v1924 = vld [vmem:[%s1923] sm:$0x2]
    %vm1925 = vcmask 1041409
    %v1926 = vsel %vm1925, %v1924, %v1922
    %s1927 = scalar_lea.vmem %s0, 53
    %v1928 = vld [vmem:[%s1927] sm:$0x4]
    %vm1929 = vcmask 1042434
    %v1930 = vsel %vm1929, %v1928, %v1926
    %s1931 = scalar_lea.vmem %s0, 308
    %v1932 = vld [vmem:[%s1931] sm:$0x8]
    %vm1933 = vcmask 1043459
    %v1934 = vsel %vm1933, %v1932, %v1930
    %1935 = vrot.lane.b32.xlu0 %v1934, 37
    %v1936 = vpop.permute.xlu0 %1935
    %vm1937 = vcmask 326952
    %s1938 = scalar_lea.vmem [#allocation0], 32
    %1939 = vst.msk [vmem:[%s1938] sm:$0x3] %vm1937, %v1936
    %s1940 = scalar_lea.vmem [#allocation0], 6
    %1941 = vst.msk [vmem:[%s1940] sm:$0xc] %vm1937, %v1936
    %s1942 = scalar_lea.vmem %s0, 12
    %v1943 = vld [vmem:[%s1942] sm:$0x1]
    %s1944 = scalar_lea.vmem %s0, 267
    %v1945 = vld [vmem:[%s1944] sm:$0x2]
    %vm1946 = vcmask 1041409
    %v1947 = vsel %vm1946, %v1945, %v1943
    %s1948 = scalar_lea.vmem %s0, 138
    %v1949 = vld [vmem:[%s1948] sm:$0x4]
    %vm1950 = vcmask 1042434
    %v1951 = vsel %vm1950, %v1949, %v1947
    %s1952 = scalar_lea.vmem %s0, 393
    %v1953 = vld [vmem:[%s1952] sm:$0x8]
    %vm1954 = vcmask 1043459
    %v1955 = vsel %vm1954, %v1953, %v1951
    %1956 = vrot.lane.b32.xlu0 %v1955, 36
    %v1957 = vpop.permute.xlu0 %1956
    %vm1958 = vcmask 318752
    %1959 = vst.msk [vmem:[#allocation0] sm:$0x3] %vm1958, %v1957
    %s1960 = scalar_lea.vmem [#allocation0], 22
    %1961 = vst.msk [vmem:[%s1960] sm:$0xc] %vm1958, %v1957
    %s1962 = scalar_lea.vmem %s0, 225
    %v1963 = vld [vmem:[%s1962] sm:$0x1]
    %s1964 = scalar_lea.vmem %s0, 480
    %v1965 = vld [vmem:[%s1964] sm:$0x2]
    %vm1966 = vcmask 1041409
    %v1967 = vsel %vm1966, %v1965, %v1963
    %s1968 = scalar_lea.vmem %s0, 95
    %v1969 = vld [vmem:[%s1968] sm:$0x4]
    %vm1970 = vcmask 1042434
    %v1971 = vsel %vm1970, %v1969, %v1967
    %s1972 = scalar_lea.vmem %s0, 350
    %v1973 = vld [vmem:[%s1972] sm:$0x8]
    %vm1974 = vcmask 1043459
    %v1975 = vsel %vm1974, %v1973, %v1971
    %1976 = vrot.lane.b32.xlu0 %v1975, 35
    %v1977 = vpop.permute.xlu0 %1976
    %vm1978 = vcmask 310552
    %s1979 = scalar_lea.vmem [#allocation0], 40
    %1980 = vst.msk [vmem:[%s1979] sm:$0x3] %vm1978, %v1977
    %s1981 = scalar_lea.vmem [#allocation0], 14
    %1982 = vst.msk [vmem:[%s1981] sm:$0xc] %vm1978, %v1977
    %s1983 = scalar_lea.vmem %s0, 182
    %v1984 = vld [vmem:[%s1983] sm:$0x1]
    %s1985 = scalar_lea.vmem %s0, 437
    %v1986 = vld [vmem:[%s1985] sm:$0x2]
    %vm1987 = vcmask 1041409
    %v1988 = vsel %vm1987, %v1986, %v1984
    %s1989 = scalar_lea.vmem %s0, 52
    %v1990 = vld [vmem:[%s1989] sm:$0x4]
    %vm1991 = vcmask 1042434
    %v1992 = vsel %vm1991, %v1990, %v1988
    %s1993 = scalar_lea.vmem %s0, 307
    %v1994 = vld [vmem:[%s1993] sm:$0x8]
    %vm1995 = vcmask 1043459
    %v1996 = vsel %vm1995, %v1994, %v1992
    %1997 = vrot.lane.b32.xlu0 %v1996, 34
    %v1998 = vpop.permute.xlu0 %1997
    %vm1999 = vcmask 302352
    %s2000 = scalar_lea.vmem [#allocation0], 32
    %2001 = vst.msk [vmem:[%s2000] sm:$0x3] %vm1999, %v1998
    %s2002 = scalar_lea.vmem [#allocation0], 6
    %2003 = vst.msk [vmem:[%s2002] sm:$0xc] %vm1999, %v1998
    %s2004 = scalar_lea.vmem %s0, 11
    %v2005 = vld [vmem:[%s2004] sm:$0x1]
    %s2006 = scalar_lea.vmem %s0, 266
    %v2007 = vld [vmem:[%s2006] sm:$0x2]
    %vm2008 = vcmask 1041409
    %v2009 = vsel %vm2008, %v2007, %v2005
    %s2010 = scalar_lea.vmem %s0, 137
    %v2011 = vld [vmem:[%s2010] sm:$0x4]
    %vm2012 = vcmask 1042434
    %v2013 = vsel %vm2012, %v2011, %v2009
    %s2014 = scalar_lea.vmem %s0, 392
    %v2015 = vld [vmem:[%s2014] sm:$0x8]
    %vm2016 = vcmask 1043459
    %v2017 = vsel %vm2016, %v2015, %v2013
    %2018 = vrot.lane.b32.xlu0 %v2017, 33
    %v2019 = vpop.permute.xlu0 %2018
    %vm2020 = vcmask 294152
    %2021 = vst.msk [vmem:[#allocation0] sm:$0x3] %vm2020, %v2019
    %s2022 = scalar_lea.vmem [#allocation0], 22
    %2023 = vst.msk [vmem:[%s2022] sm:$0xc] %vm2020, %v2019
    %s2024 = scalar_lea.vmem %s0, 224
    %v2025 = vld [vmem:[%s2024] sm:$0x1]
    %s2026 = scalar_lea.vmem %s0, 479
    %v2027 = vld [vmem:[%s2026] sm:$0x2]
    %vm2028 = vcmask 1041409
    %v2029 = vsel %vm2028, %v2027, %v2025
    %s2030 = scalar_lea.vmem %s0, 94
    %v2031 = vld [vmem:[%s2030] sm:$0x4]
    %vm2032 = vcmask 1042434
    %v2033 = vsel %vm2032, %v2031, %v2029
    %s2034 = scalar_lea.vmem %s0, 349
    %v2035 = vld [vmem:[%s2034] sm:$0x8]
    %vm2036 = vcmask 1043459
    %v2037 = vsel %vm2036, %v2035, %v2033
    %2038 = vrot.lane.b32.xlu0 %v2037, 32
    %v2039 = vpop.permute.xlu0 %2038
    %vm2040 = vcmask 285952
    %s2041 = scalar_lea.vmem [#allocation0], 40
    %2042 = vst.msk [vmem:[%s2041] sm:$0x3] %vm2040, %v2039
    %s2043 = scalar_lea.vmem [#allocation0], 14
    %2044 = vst.msk [vmem:[%s2043] sm:$0xc] %vm2040, %v2039
    %s2045 = scalar_lea.vmem %s0, 181
    %v2046 = vld [vmem:[%s2045] sm:$0x1]
    %s2047 = scalar_lea.vmem %s0, 436
    %v2048 = vld [vmem:[%s2047] sm:$0x2]
    %vm2049 = vcmask 1041409
    %v2050 = vsel %vm2049, %v2048, %v2046
    %s2051 = scalar_lea.vmem %s0, 51
    %v2052 = vld [vmem:[%s2051] sm:$0x4]
    %vm2053 = vcmask 1042434
    %v2054 = vsel %vm2053, %v2052, %v2050
    %s2055 = scalar_lea.vmem %s0, 306
    %v2056 = vld [vmem:[%s2055] sm:$0x8]
    %vm2057 = vcmask 1043459
    %v2058 = vsel %vm2057, %v2056, %v2054
    %2059 = vrot.lane.b32.xlu0 %v2058, 31
    %v2060 = vpop.permute.xlu0 %2059
    %vm2061 = vcmask 277752
    %s2062 = scalar_lea.vmem [#allocation0], 32
    %2063 = vst.msk [vmem:[%s2062] sm:$0x3] %vm2061, %v2060
    %s2064 = scalar_lea.vmem [#allocation0], 6
    %2065 = vst.msk [vmem:[%s2064] sm:$0xc] %vm2061, %v2060
    %s2066 = scalar_lea.vmem %s0, 10
    %v2067 = vld [vmem:[%s2066] sm:$0x1]
    %s2068 = scalar_lea.vmem %s0, 265
    %v2069 = vld [vmem:[%s2068] sm:$0x2]
    %vm2070 = vcmask 1041409
    %v2071 = vsel %vm2070, %v2069, %v2067
    %s2072 = scalar_lea.vmem %s0, 136
    %v2073 = vld [vmem:[%s2072] sm:$0x4]
    %vm2074 = vcmask 1042434
    %v2075 = vsel %vm2074, %v2073, %v2071
    %s2076 = scalar_lea.vmem %s0, 391
    %v2077 = vld [vmem:[%s2076] sm:$0x8]
    %vm2078 = vcmask 1043459
    %v2079 = vsel %vm2078, %v2077, %v2075
    %2080 = vrot.lane.b32.xlu0 %v2079, 30
    %v2081 = vpop.permute.xlu0 %2080
    %vm2082 = vcmask 269552
    %2083 = vst.msk [vmem:[#allocation0] sm:$0x3] %vm2082, %v2081
    %s2084 = scalar_lea.vmem [#allocation0], 22
    %2085 = vst.msk [vmem:[%s2084] sm:$0xc] %vm2082, %v2081
    %s2086 = scalar_lea.vmem %s0, 223
    %v2087 = vld [vmem:[%s2086] sm:$0x1]
    %s2088 = scalar_lea.vmem %s0, 478
    %v2089 = vld [vmem:[%s2088] sm:$0x2]
    %vm2090 = vcmask 1041409
    %v2091 = vsel %vm2090, %v2089, %v2087
    %s2092 = scalar_lea.vmem %s0, 93
    %v2093 = vld [vmem:[%s2092] sm:$0x4]
    %vm2094 = vcmask 1042434
    %v2095 = vsel %vm2094, %v2093, %v2091
    %s2096 = scalar_lea.vmem %s0, 348
    %v2097 = vld [vmem:[%s2096] sm:$0x8]
    %vm2098 = vcmask 1043459
    %v2099 = vsel %vm2098, %v2097, %v2095
    %2100 = vrot.lane.b32.xlu0 %v2099, 29
    %v2101 = vpop.permute.xlu0 %2100
    %vm2102 = vcmask 261352
    %s2103 = scalar_lea.vmem [#allocation0], 40
    %2104 = vst.msk [vmem:[%s2103] sm:$0x3] %vm2102, %v2101
    %s2105 = scalar_lea.vmem [#allocation0], 14
    %2106 = vst.msk [vmem:[%s2105] sm:$0xc] %vm2102, %v2101
    %s2107 = scalar_lea.vmem %s0, 180
    %v2108 = vld [vmem:[%s2107] sm:$0x1]
    %s2109 = scalar_lea.vmem %s0, 435
    %v2110 = vld [vmem:[%s2109] sm:$0x2]
    %vm2111 = vcmask 1041409
    %v2112 = vsel %vm2111, %v2110, %v2108
    %s2113 = scalar_lea.vmem %s0, 50
    %v2114 = vld [vmem:[%s2113] sm:$0x4]
    %vm2115 = vcmask 1042434
    %v2116 = vsel %vm2115, %v2114, %v2112
    %s2117 = scalar_lea.vmem %s0, 305
    %v2118 = vld [vmem:[%s2117] sm:$0x8]
    %vm2119 = vcmask 1043459
    %v2120 = vsel %vm2119, %v2118, %v2116
    %2121 = vrot.lane.b32.xlu0 %v2120, 28
    %v2122 = vpop.permute.xlu0 %2121
    %vm2123 = vcmask 253152
    %s2124 = scalar_lea.vmem [#allocation0], 32
    %2125 = vst.msk [vmem:[%s2124] sm:$0x3] %vm2123, %v2122
    %s2126 = scalar_lea.vmem [#allocation0], 6
    %2127 = vst.msk [vmem:[%s2126] sm:$0xc] %vm2123, %v2122
    %s2128 = scalar_lea.vmem %s0, 9
    %v2129 = vld [vmem:[%s2128] sm:$0x1]
    %s2130 = scalar_lea.vmem %s0, 264
    %v2131 = vld [vmem:[%s2130] sm:$0x2]
    %vm2132 = vcmask 1041409
    %v2133 = vsel %vm2132, %v2131, %v2129
    %s2134 = scalar_lea.vmem %s0, 135
    %v2135 = vld [vmem:[%s2134] sm:$0x4]
    %vm2136 = vcmask 1042434
    %v2137 = vsel %vm2136, %v2135, %v2133
    %s2138 = scalar_lea.vmem %s0, 390
    %v2139 = vld [vmem:[%s2138] sm:$0x8]
    %vm2140 = vcmask 1043459
    %v2141 = vsel %vm2140, %v2139, %v2137
    %2142 = vrot.lane.b32.xlu0 %v2141, 27
    %v2143 = vpop.permute.xlu0 %2142
    %vm2144 = vcmask 244952
    %2145 = vst.msk [vmem:[#allocation0] sm:$0x3] %vm2144, %v2143
    %s2146 = scalar_lea.vmem [#allocation0], 22
    %2147 = vst.msk [vmem:[%s2146] sm:$0xc] %vm2144, %v2143
    %s2148 = scalar_lea.vmem %s0, 222
    %v2149 = vld [vmem:[%s2148] sm:$0x1]
    %s2150 = scalar_lea.vmem %s0, 477
    %v2151 = vld [vmem:[%s2150] sm:$0x2]
    %vm2152 = vcmask 1041409
    %v2153 = vsel %vm2152, %v2151, %v2149
    %s2154 = scalar_lea.vmem %s0, 92
    %v2155 = vld [vmem:[%s2154] sm:$0x4]
    %vm2156 = vcmask 1042434
    %v2157 = vsel %vm2156, %v2155, %v2153
    %s2158 = scalar_lea.vmem %s0, 347
    %v2159 = vld [vmem:[%s2158] sm:$0x8]
    %vm2160 = vcmask 1043459
    %v2161 = vsel %vm2160, %v2159, %v2157
    %2162 = vrot.lane.b32.xlu0 %v2161, 26
    %v2163 = vpop.permute.xlu0 %2162
    %vm2164 = vcmask 236752
    %s2165 = scalar_lea.vmem [#allocation0], 40
    %2166 = vst.msk [vmem:[%s2165] sm:$0x3] %vm2164, %v2163
    %s2167 = scalar_lea.vmem [#allocation0], 14
    %2168 = vst.msk [vmem:[%s2167] sm:$0xc] %vm2164, %v2163
    %s2169 = scalar_lea.vmem %s0, 179
    %v2170 = vld [vmem:[%s2169] sm:$0x1]
    %s2171 = scalar_lea.vmem %s0, 434
    %v2172 = vld [vmem:[%s2171] sm:$0x2]
    %vm2173 = vcmask 1041409
    %v2174 = vsel %vm2173, %v2172, %v2170
    %s2175 = scalar_lea.vmem %s0, 49
    %v2176 = vld [vmem:[%s2175] sm:$0x4]
    %vm2177 = vcmask 1042434
    %v2178 = vsel %vm2177, %v2176, %v2174
    %s2179 = scalar_lea.vmem %s0, 304
    %v2180 = vld [vmem:[%s2179] sm:$0x8]
    %vm2181 = vcmask 1043459
    %v2182 = vsel %vm2181, %v2180, %v2178
    %2183 = vrot.lane.b32.xlu0 %v2182, 25
    %v2184 = vpop.permute.xlu0 %2183
    %vm2185 = vcmask 228552
    %s2186 = scalar_lea.vmem [#allocation0], 32
    %2187 = vst.msk [vmem:[%s2186] sm:$0x3] %vm2185, %v2184
    %s2188 = scalar_lea.vmem [#allocation0], 6
    %2189 = vst.msk [vmem:[%s2188] sm:$0xc] %vm2185, %v2184
    %s2190 = scalar_lea.vmem %s0, 8
    %v2191 = vld [vmem:[%s2190] sm:$0x1]
    %s2192 = scalar_lea.vmem %s0, 263
    %v2193 = vld [vmem:[%s2192] sm:$0x2]
    %vm2194 = vcmask 1041409
    %v2195 = vsel %vm2194, %v2193, %v2191
    %s2196 = scalar_lea.vmem %s0, 134
    %v2197 = vld [vmem:[%s2196] sm:$0x4]
    %vm2198 = vcmask 1042434
    %v2199 = vsel %vm2198, %v2197, %v2195
    %s2200 = scalar_lea.vmem %s0, 389
    %v2201 = vld [vmem:[%s2200] sm:$0x8]
    %vm2202 = vcmask 1043459
    %v2203 = vsel %vm2202, %v2201, %v2199
    %2204 = vrot.lane.b32.xlu0 %v2203, 24
    %v2205 = vpop.permute.xlu0 %2204
    %vm2206 = vcmask 220352
    %2207 = vst.msk [vmem:[#allocation0] sm:$0x3] %vm2206, %v2205
    %s2208 = scalar_lea.vmem [#allocation0], 22
    %2209 = vst.msk [vmem:[%s2208] sm:$0xc] %vm2206, %v2205
    %s2210 = scalar_lea.vmem %s0, 221
    %v2211 = vld [vmem:[%s2210] sm:$0x1]
    %s2212 = scalar_lea.vmem %s0, 476
    %v2213 = vld [vmem:[%s2212] sm:$0x2]
    %vm2214 = vcmask 1041409
    %v2215 = vsel %vm2214, %v2213, %v2211
    %s2216 = scalar_lea.vmem %s0, 91
    %v2217 = vld [vmem:[%s2216] sm:$0x4]
    %vm2218 = vcmask 1042434
    %v2219 = vsel %vm2218, %v2217, %v2215
    %s2220 = scalar_lea.vmem %s0, 346
    %v2221 = vld [vmem:[%s2220] sm:$0x8]
    %vm2222 = vcmask 1043459
    %v2223 = vsel %vm2222, %v2221, %v2219
    %2224 = vrot.lane.b32.xlu0 %v2223, 23
    %v2225 = vpop.permute.xlu0 %2224
    %vm2226 = vcmask 212152
    %s2227 = scalar_lea.vmem [#allocation0], 40
    %2228 = vst.msk [vmem:[%s2227] sm:$0x3] %vm2226, %v2225
    %s2229 = scalar_lea.vmem [#allocation0], 14
    %2230 = vst.msk [vmem:[%s2229] sm:$0xc] %vm2226, %v2225
    %s2231 = scalar_lea.vmem %s0, 178
    %v2232 = vld [vmem:[%s2231] sm:$0x1]
    %s2233 = scalar_lea.vmem %s0, 433
    %v2234 = vld [vmem:[%s2233] sm:$0x2]
    %vm2235 = vcmask 1041409
    %v2236 = vsel %vm2235, %v2234, %v2232
    %s2237 = scalar_lea.vmem %s0, 48
    %v2238 = vld [vmem:[%s2237] sm:$0x4]
    %vm2239 = vcmask 1042434
    %v2240 = vsel %vm2239, %v2238, %v2236
    %s2241 = scalar_lea.vmem %s0, 303
    %v2242 = vld [vmem:[%s2241] sm:$0x8]
    %vm2243 = vcmask 1043459
    %v2244 = vsel %vm2243, %v2242, %v2240
    %2245 = vrot.lane.b32.xlu0 %v2244, 22
    %v2246 = vpop.permute.xlu0 %2245
    %vm2247 = vcmask 203952
    %s2248 = scalar_lea.vmem [#allocation0], 32
    %2249 = vst.msk [vmem:[%s2248] sm:$0x3] %vm2247, %v2246
    %s2250 = scalar_lea.vmem [#allocation0], 6
    %2251 = vst.msk [vmem:[%s2250] sm:$0xc] %vm2247, %v2246
    %s2252 = scalar_lea.vmem %s0, 7
    %v2253 = vld [vmem:[%s2252] sm:$0x1]
    %s2254 = scalar_lea.vmem %s0, 262
    %v2255 = vld [vmem:[%s2254] sm:$0x2]
    %vm2256 = vcmask 1041409
    %v2257 = vsel %vm2256, %v2255, %v2253
    %s2258 = scalar_lea.vmem %s0, 133
    %v2259 = vld [vmem:[%s2258] sm:$0x4]
    %vm2260 = vcmask 1042434
    %v2261 = vsel %vm2260, %v2259, %v2257
    %s2262 = scalar_lea.vmem %s0, 388
    %v2263 = vld [vmem:[%s2262] sm:$0x8]
    %vm2264 = vcmask 1043459
    %v2265 = vsel %vm2264, %v2263, %v2261
    %2266 = vrot.lane.b32.xlu0 %v2265, 21
    %v2267 = vpop.permute.xlu0 %2266
    %vm2268 = vcmask 195752
    %2269 = vst.msk [vmem:[#allocation0] sm:$0x3] %vm2268, %v2267
    %s2270 = scalar_lea.vmem [#allocation0], 22
    %2271 = vst.msk [vmem:[%s2270] sm:$0xc] %vm2268, %v2267
    %s2272 = scalar_lea.vmem %s0, 220
    %v2273 = vld [vmem:[%s2272] sm:$0x1]
    %s2274 = scalar_lea.vmem %s0, 475
    %v2275 = vld [vmem:[%s2274] sm:$0x2]
    %vm2276 = vcmask 1041409
    %v2277 = vsel %vm2276, %v2275, %v2273
    %s2278 = scalar_lea.vmem %s0, 90
    %v2279 = vld [vmem:[%s2278] sm:$0x4]
    %vm2280 = vcmask 1042434
    %v2281 = vsel %vm2280, %v2279, %v2277
    %s2282 = scalar_lea.vmem %s0, 345
    %v2283 = vld [vmem:[%s2282] sm:$0x8]
    %vm2284 = vcmask 1043459
    %v2285 = vsel %vm2284, %v2283, %v2281
    %2286 = vrot.lane.b32.xlu0 %v2285, 20
    %v2287 = vpop.permute.xlu0 %2286
    %vm2288 = vcmask 187552
    %s2289 = scalar_lea.vmem [#allocation0], 40
    %2290 = vst.msk [vmem:[%s2289] sm:$0x3] %vm2288, %v2287
    %s2291 = scalar_lea.vmem [#allocation0], 14
    %2292 = vst.msk [vmem:[%s2291] sm:$0xc] %vm2288, %v2287
    %s2293 = scalar_lea.vmem %s0, 177
    %v2294 = vld [vmem:[%s2293] sm:$0x1]
    %s2295 = scalar_lea.vmem %s0, 432
    %v2296 = vld [vmem:[%s2295] sm:$0x2]
    %vm2297 = vcmask 1041409
    %v2298 = vsel %vm2297, %v2296, %v2294
    %s2299 = scalar_lea.vmem %s0, 47
    %v2300 = vld [vmem:[%s2299] sm:$0x4]
    %vm2301 = vcmask 1042434
    %v2302 = vsel %vm2301, %v2300, %v2298
    %s2303 = scalar_lea.vmem %s0, 302
    %v2304 = vld [vmem:[%s2303] sm:$0x8]
    %vm2305 = vcmask 1043459
    %v2306 = vsel %vm2305, %v2304, %v2302
    %2307 = vrot.lane.b32.xlu0 %v2306, 19
    %v2308 = vpop.permute.xlu0 %2307
    %vm2309 = vcmask 179352
    %s2310 = scalar_lea.vmem [#allocation0], 32
    %2311 = vst.msk [vmem:[%s2310] sm:$0x3] %vm2309, %v2308
    %s2312 = scalar_lea.vmem [#allocation0], 6
    %2313 = vst.msk [vmem:[%s2312] sm:$0xc] %vm2309, %v2308
    %s2314 = scalar_lea.vmem %s0, 6
    %v2315 = vld [vmem:[%s2314] sm:$0x1]
    %s2316 = scalar_lea.vmem %s0, 261
    %v2317 = vld [vmem:[%s2316] sm:$0x2]
    %vm2318 = vcmask 1041409
    %v2319 = vsel %vm2318, %v2317, %v2315
    %s2320 = scalar_lea.vmem %s0, 132
    %v2321 = vld [vmem:[%s2320] sm:$0x4]
    %vm2322 = vcmask 1042434
    %v2323 = vsel %vm2322, %v2321, %v2319
    %s2324 = scalar_lea.vmem %s0, 387
    %v2325 = vld [vmem:[%s2324] sm:$0x8]
    %vm2326 = vcmask 1043459
    %v2327 = vsel %vm2326, %v2325, %v2323
    %2328 = vrot.lane.b32.xlu0 %v2327, 18
    %v2329 = vpop.permute.xlu0 %2328
    %vm2330 = vcmask 171152
    %2331 = vst.msk [vmem:[#allocation0] sm:$0x3] %vm2330, %v2329
    %s2332 = scalar_lea.vmem [#allocation0], 22
    %2333 = vst.msk [vmem:[%s2332] sm:$0xc] %vm2330, %v2329
    %s2334 = scalar_lea.vmem %s0, 219
    %v2335 = vld [vmem:[%s2334] sm:$0x1]
    %s2336 = scalar_lea.vmem %s0, 474
    %v2337 = vld [vmem:[%s2336] sm:$0x2]
    %vm2338 = vcmask 1041409
    %v2339 = vsel %vm2338, %v2337, %v2335
    %s2340 = scalar_lea.vmem %s0, 89
    %v2341 = vld [vmem:[%s2340] sm:$0x4]
    %vm2342 = vcmask 1042434
    %v2343 = vsel %vm2342, %v2341, %v2339
    %s2344 = scalar_lea.vmem %s0, 344
    %v2345 = vld [vmem:[%s2344] sm:$0x8]
    %vm2346 = vcmask 1043459
    %v2347 = vsel %vm2346, %v2345, %v2343
    %2348 = vrot.lane.b32.xlu0 %v2347, 17
    %v2349 = vpop.permute.xlu0 %2348
    %vm2350 = vcmask 162952
    %s2351 = scalar_lea.vmem [#allocation0], 40
    %2352 = vst.msk [vmem:[%s2351] sm:$0x3] %vm2350, %v2349
    %s2353 = scalar_lea.vmem [#allocation0], 14
    %2354 = vst.msk [vmem:[%s2353] sm:$0xc] %vm2350, %v2349
    %s2355 = scalar_lea.vmem %s0, 176
    %v2356 = vld [vmem:[%s2355] sm:$0x1]
    %s2357 = scalar_lea.vmem %s0, 431
    %v2358 = vld [vmem:[%s2357] sm:$0x2]
    %vm2359 = vcmask 1041409
    %v2360 = vsel %vm2359, %v2358, %v2356
    %s2361 = scalar_lea.vmem %s0, 46
    %v2362 = vld [vmem:[%s2361] sm:$0x4]
    %vm2363 = vcmask 1042434
    %v2364 = vsel %vm2363, %v2362, %v2360
    %s2365 = scalar_lea.vmem %s0, 301
    %v2366 = vld [vmem:[%s2365] sm:$0x8]
    %vm2367 = vcmask 1043459
    %v2368 = vsel %vm2367, %v2366, %v2364
    %2369 = vrot.lane.b32.xlu0 %v2368, 16
    %v2370 = vpop.permute.xlu0 %2369
    %vm2371 = vcmask 154752
    %s2372 = scalar_lea.vmem [#allocation0], 32
    %2373 = vst.msk [vmem:[%s2372] sm:$0x3] %vm2371, %v2370
    %s2374 = scalar_lea.vmem [#allocation0], 6
    %2375 = vst.msk [vmem:[%s2374] sm:$0xc] %vm2371, %v2370
    %s2376 = scalar_lea.vmem %s0, 5
    %v2377 = vld [vmem:[%s2376] sm:$0x1]
    %s2378 = scalar_lea.vmem %s0, 260
    %v2379 = vld [vmem:[%s2378] sm:$0x2]
    %vm2380 = vcmask 1041409
    %v2381 = vsel %vm2380, %v2379, %v2377
    %s2382 = scalar_lea.vmem %s0, 131
    %v2383 = vld [vmem:[%s2382] sm:$0x4]
    %vm2384 = vcmask 1042434
    %v2385 = vsel %vm2384, %v2383, %v2381
    %s2386 = scalar_lea.vmem %s0, 386
    %v2387 = vld [vmem:[%s2386] sm:$0x8]
    %vm2388 = vcmask 1043459
    %v2389 = vsel %vm2388, %v2387, %v2385
    %2390 = vrot.lane.b32.xlu0 %v2389, 15
    %v2391 = vpop.permute.xlu0 %2390
    %vm2392 = vcmask 146552
    %2393 = vst.msk [vmem:[#allocation0] sm:$0x3] %vm2392, %v2391
    %s2394 = scalar_lea.vmem [#allocation0], 22
    %2395 = vst.msk [vmem:[%s2394] sm:$0xc] %vm2392, %v2391
    %s2396 = scalar_lea.vmem %s0, 218
    %v2397 = vld [vmem:[%s2396] sm:$0x1]
    %s2398 = scalar_lea.vmem %s0, 473
    %v2399 = vld [vmem:[%s2398] sm:$0x2]
    %vm2400 = vcmask 1041409
    %v2401 = vsel %vm2400, %v2399, %v2397
    %s2402 = scalar_lea.vmem %s0, 88
    %v2403 = vld [vmem:[%s2402] sm:$0x4]
    %vm2404 = vcmask 1042434
    %v2405 = vsel %vm2404, %v2403, %v2401
    %s2406 = scalar_lea.vmem %s0, 343
    %v2407 = vld [vmem:[%s2406] sm:$0x8]
    %vm2408 = vcmask 1043459
    %v2409 = vsel %vm2408, %v2407, %v2405
    %2410 = vrot.lane.b32.xlu0 %v2409, 14
    %v2411 = vpop.permute.xlu0 %2410
    %vm2412 = vcmask 138352
    %s2413 = scalar_lea.vmem [#allocation0], 40
    %2414 = vst.msk [vmem:[%s2413] sm:$0x3] %vm2412, %v2411
    %s2415 = scalar_lea.vmem [#allocation0], 14
    %2416 = vst.msk [vmem:[%s2415] sm:$0xc] %vm2412, %v2411
    %s2417 = scalar_lea.vmem %s0, 175
    %v2418 = vld [vmem:[%s2417] sm:$0x1]
    %s2419 = scalar_lea.vmem %s0, 430
    %v2420 = vld [vmem:[%s2419] sm:$0x2]
    %vm2421 = vcmask 1041409
    %v2422 = vsel %vm2421, %v2420, %v2418
    %s2423 = scalar_lea.vmem %s0, 45
    %v2424 = vld [vmem:[%s2423] sm:$0x4]
    %vm2425 = vcmask 1042434
    %v2426 = vsel %vm2425, %v2424, %v2422
    %s2427 = scalar_lea.vmem %s0, 300
    %v2428 = vld [vmem:[%s2427] sm:$0x8]
    %vm2429 = vcmask 1043459
    %v2430 = vsel %vm2429, %v2428, %v2426
    %2431 = vrot.lane.b32.xlu0 %v2430, 13
    %v2432 = vpop.permute.xlu0 %2431
    %vm2433 = vcmask 130152
    %s2434 = scalar_lea.vmem [#allocation0], 32
    %2435 = vst.msk [vmem:[%s2434] sm:$0x3] %vm2433, %v2432
    %s2436 = scalar_lea.vmem [#allocation0], 6
    %2437 = vst.msk [vmem:[%s2436] sm:$0xc] %vm2433, %v2432
    %s2438 = scalar_lea.vmem %s0, 4
    %v2439 = vld [vmem:[%s2438] sm:$0x1]
    %s2440 = scalar_lea.vmem %s0, 259
    %v2441 = vld [vmem:[%s2440] sm:$0x2]
    %vm2442 = vcmask 1041409
    %v2443 = vsel %vm2442, %v2441, %v2439
    %s2444 = scalar_lea.vmem %s0, 130
    %v2445 = vld [vmem:[%s2444] sm:$0x4]
    %vm2446 = vcmask 1042434
    %v2447 = vsel %vm2446, %v2445, %v2443
    %s2448 = scalar_lea.vmem %s0, 385
    %v2449 = vld [vmem:[%s2448] sm:$0x8]
    %vm2450 = vcmask 1043459
    %v2451 = vsel %vm2450, %v2449, %v2447
    %2452 = vrot.lane.b32.xlu0 %v2451, 12
    %v2453 = vpop.permute.xlu0 %2452
    %vm2454 = vcmask 121952
    %2455 = vst.msk [vmem:[#allocation0] sm:$0x3] %vm2454, %v2453
    %s2456 = scalar_lea.vmem [#allocation0], 22
    %2457 = vst.msk [vmem:[%s2456] sm:$0xc] %vm2454, %v2453
    %s2458 = scalar_lea.vmem %s0, 217
    %v2459 = vld [vmem:[%s2458] sm:$0x1]
    %s2460 = scalar_lea.vmem %s0, 472
    %v2461 = vld [vmem:[%s2460] sm:$0x2]
    %vm2462 = vcmask 1041409
    %v2463 = vsel %vm2462, %v2461, %v2459
    %s2464 = scalar_lea.vmem %s0, 87
    %v2465 = vld [vmem:[%s2464] sm:$0x4]
    %vm2466 = vcmask 1042434
    %v2467 = vsel %vm2466, %v2465, %v2463
    %s2468 = scalar_lea.vmem %s0, 342
    %v2469 = vld [vmem:[%s2468] sm:$0x8]
    %vm2470 = vcmask 1043459
    %v2471 = vsel %vm2470, %v2469, %v2467
    %2472 = vrot.lane.b32.xlu0 %v2471, 11
    %v2473 = vpop.permute.xlu0 %2472
    %vm2474 = vcmask 113752
    %s2475 = scalar_lea.vmem [#allocation0], 40
    %2476 = vst.msk [vmem:[%s2475] sm:$0x3] %vm2474, %v2473
    %s2477 = scalar_lea.vmem [#allocation0], 14
    %2478 = vst.msk [vmem:[%s2477] sm:$0xc] %vm2474, %v2473
    %s2479 = scalar_lea.vmem %s0, 174
    %v2480 = vld [vmem:[%s2479] sm:$0x1]
    %s2481 = scalar_lea.vmem %s0, 429
    %v2482 = vld [vmem:[%s2481] sm:$0x2]
    %vm2483 = vcmask 1041409
    %v2484 = vsel %vm2483, %v2482, %v2480
    %s2485 = scalar_lea.vmem %s0, 44
    %v2486 = vld [vmem:[%s2485] sm:$0x4]
    %vm2487 = vcmask 1042434
    %v2488 = vsel %vm2487, %v2486, %v2484
    %s2489 = scalar_lea.vmem %s0, 299
    %v2490 = vld [vmem:[%s2489] sm:$0x8]
    %vm2491 = vcmask 1043459
    %v2492 = vsel %vm2491, %v2490, %v2488
    %2493 = vrot.lane.b32.xlu0 %v2492, 10
    %v2494 = vpop.permute.xlu0 %2493
    %vm2495 = vcmask 105552
    %s2496 = scalar_lea.vmem [#allocation0], 32
    %2497 = vst.msk [vmem:[%s2496] sm:$0x3] %vm2495, %v2494
    %s2498 = scalar_lea.vmem [#allocation0], 6
    %2499 = vst.msk [vmem:[%s2498] sm:$0xc] %vm2495, %v2494
    %s2500 = scalar_lea.vmem %s0, 3
    %v2501 = vld [vmem:[%s2500] sm:$0x1]
    %s2502 = scalar_lea.vmem %s0, 258
    %v2503 = vld [vmem:[%s2502] sm:$0x2]
    %vm2504 = vcmask 1041409
    %v2505 = vsel %vm2504, %v2503, %v2501
    %s2506 = scalar_lea.vmem %s0, 129
    %v2507 = vld [vmem:[%s2506] sm:$0x4]
    %vm2508 = vcmask 1042434
    %v2509 = vsel %vm2508, %v2507, %v2505
    %s2510 = scalar_lea.vmem %s0, 384
    %v2511 = vld [vmem:[%s2510] sm:$0x8]
    %vm2512 = vcmask 1043459
    %v2513 = vsel %vm2512, %v2511, %v2509
    %2514 = vrot.lane.b32.xlu0 %v2513, 9
    %v2515 = vpop.permute.xlu0 %2514
    %vm2516 = vcmask 97352
    %2517 = vst.msk [vmem:[#allocation0] sm:$0x3] %vm2516, %v2515
    %s2518 = scalar_lea.vmem [#allocation0], 22
    %2519 = vst.msk [vmem:[%s2518] sm:$0xc] %vm2516, %v2515
    %s2520 = scalar_lea.vmem %s0, 216
    %v2521 = vld [vmem:[%s2520] sm:$0x1]
    %s2522 = scalar_lea.vmem %s0, 471
    %v2523 = vld [vmem:[%s2522] sm:$0x2]
    %vm2524 = vcmask 1041409
    %v2525 = vsel %vm2524, %v2523, %v2521
    %s2526 = scalar_lea.vmem %s0, 86
    %v2527 = vld [vmem:[%s2526] sm:$0x4]
    %vm2528 = vcmask 1042434
    %v2529 = vsel %vm2528, %v2527, %v2525
    %s2530 = scalar_lea.vmem %s0, 341
    %v2531 = vld [vmem:[%s2530] sm:$0x8]
    %vm2532 = vcmask 1043459
    %v2533 = vsel %vm2532, %v2531, %v2529
    %2534 = vrot.lane.b32.xlu0 %v2533, 8
    %v2535 = vpop.permute.xlu0 %2534
    %vm2536 = vcmask 89152
    %s2537 = scalar_lea.vmem [#allocation0], 40
    %2538 = vst.msk [vmem:[%s2537] sm:$0x3] %vm2536, %v2535
    %s2539 = scalar_lea.vmem [#allocation0], 14
    %2540 = vst.msk [vmem:[%s2539] sm:$0xc] %vm2536, %v2535
    %s2541 = scalar_lea.vmem %s0, 173
    %v2542 = vld [vmem:[%s2541] sm:$0x1]
    %s2543 = scalar_lea.vmem %s0, 428
    %v2544 = vld [vmem:[%s2543] sm:$0x2]
    %vm2545 = vcmask 1041409
    %v2546 = vsel %vm2545, %v2544, %v2542
    %s2547 = scalar_lea.vmem %s0, 43
    %v2548 = vld [vmem:[%s2547] sm:$0x4]
    %vm2549 = vcmask 1042434
    %v2550 = vsel %vm2549, %v2548, %v2546
    %s2551 = scalar_lea.vmem %s0, 298
    %v2552 = vld [vmem:[%s2551] sm:$0x8]
    %vm2553 = vcmask 1043459
    %v2554 = vsel %vm2553, %v2552, %v2550
    %2555 = vrot.lane.b32.xlu0 %v2554, 7
    %v2556 = vpop.permute.xlu0 %2555
    %vm2557 = vcmask 80952
    %s2558 = scalar_lea.vmem [#allocation0], 32
    %2559 = vst.msk [vmem:[%s2558] sm:$0x3] %vm2557, %v2556
    %s2560 = scalar_lea.vmem [#allocation0], 6
    %2561 = vst.msk [vmem:[%s2560] sm:$0xc] %vm2557, %v2556
    %s2562 = scalar_lea.vmem %s0, 2
    %v2563 = vld [vmem:[%s2562] sm:$0x1]
    %s2564 = scalar_lea.vmem %s0, 257
    %v2565 = vld [vmem:[%s2564] sm:$0x2]
    %vm2566 = vcmask 1041409
    %v2567 = vsel %vm2566, %v2565, %v2563
    %s2568 = scalar_lea.vmem %s0, 128
    %v2569 = vld [vmem:[%s2568] sm:$0x4]
    %vm2570 = vcmask 1042434
    %v2571 = vsel %vm2570, %v2569, %v2567
    %s2572 = scalar_lea.vmem %s0, 383
    %v2573 = vld [vmem:[%s2572] sm:$0x8]
    %vm2574 = vcmask 1043459
    %v2575 = vsel %vm2574, %v2573, %v2571
    %2576 = vrot.lane.b32.xlu0 %v2575, 6
    %v2577 = vpop.permute.xlu0 %2576
    %vm2578 = vcmask 72752
    %2579 = vst.msk [vmem:[#allocation0] sm:$0x3] %vm2578, %v2577
    %s2580 = scalar_lea.vmem [#allocation0], 22
    %2581 = vst.msk [vmem:[%s2580] sm:$0xc] %vm2578, %v2577
    %s2582 = scalar_lea.vmem %s0, 215
    %v2583 = vld [vmem:[%s2582] sm:$0x1]
    %s2584 = scalar_lea.vmem %s0, 470
    %v2585 = vld [vmem:[%s2584] sm:$0x2]
    %vm2586 = vcmask 1041409
    %v2587 = vsel %vm2586, %v2585, %v2583
    %s2588 = scalar_lea.vmem %s0, 85
    %v2589 = vld [vmem:[%s2588] sm:$0x4]
    %vm2590 = vcmask 1042434
    %v2591 = vsel %vm2590, %v2589, %v2587
    %s2592 = scalar_lea.vmem %s0, 340
    %v2593 = vld [vmem:[%s2592] sm:$0x8]
    %vm2594 = vcmask 1043459
    %v2595 = vsel %vm2594, %v2593, %v2591
    %2596 = vrot.lane.b32.xlu0 %v2595, 5
    %v2597 = vpop.permute.xlu0 %2596
    %vm2598 = vcmask 64552
    %s2599 = scalar_lea.vmem [#allocation0], 40
    %2600 = vst.msk [vmem:[%s2599] sm:$0x3] %vm2598, %v2597
    %s2601 = scalar_lea.vmem [#allocation0], 14
    %2602 = vst.msk [vmem:[%s2601] sm:$0xc] %vm2598, %v2597
    %s2603 = scalar_lea.vmem %s0, 172
    %v2604 = vld [vmem:[%s2603] sm:$0x1]
    %s2605 = scalar_lea.vmem %s0, 427
    %v2606 = vld [vmem:[%s2605] sm:$0x2]
    %vm2607 = vcmask 1041409
    %v2608 = vsel %vm2607, %v2606, %v2604
    %s2609 = scalar_lea.vmem %s0, 42
    %v2610 = vld [vmem:[%s2609] sm:$0x4]
    %vm2611 = vcmask 1042434
    %v2612 = vsel %vm2611, %v2610, %v2608
    %s2613 = scalar_lea.vmem %s0, 297
    %v2614 = vld [vmem:[%s2613] sm:$0x8]
    %vm2615 = vcmask 1043459
    %v2616 = vsel %vm2615, %v2614, %v2612
    %2617 = vrot.lane.b32.xlu0 %v2616, 4
    %v2618 = vpop.permute.xlu0 %2617
    %vm2619 = vcmask 56352
    %s2620 = scalar_lea.vmem [#allocation0], 32
    %2621 = vst.msk [vmem:[%s2620] sm:$0x3] %vm2619, %v2618
    %s2622 = scalar_lea.vmem [#allocation0], 6
    %2623 = vst.msk [vmem:[%s2622] sm:$0xc] %vm2619, %v2618
    %s2624 = scalar_lea.vmem %s0, 1
    %v2625 = vld [vmem:[%s2624] sm:$0x1]
    %s2626 = scalar_lea.vmem %s0, 256
    %v2627 = vld [vmem:[%s2626] sm:$0x2]
    %vm2628 = vcmask 1041409
    %v2629 = vsel %vm2628, %v2627, %v2625
    %s2630 = scalar_lea.vmem %s0, 127
    %v2631 = vld [vmem:[%s2630] sm:$0x4]
    %vm2632 = vcmask 1042434
    %v2633 = vsel %vm2632, %v2631, %v2629
    %s2634 = scalar_lea.vmem %s0, 382
    %v2635 = vld [vmem:[%s2634] sm:$0x8]
    %vm2636 = vcmask 1043459
    %v2637 = vsel %vm2636, %v2635, %v2633
    %2638 = vrot.lane.b32.xlu0 %v2637, 3
    %v2639 = vpop.permute.xlu0 %2638
    %vm2640 = vcmask 48152
    %2641 = vst.msk [vmem:[#allocation0] sm:$0x3] %vm2640, %v2639
    %s2642 = scalar_lea.vmem [#allocation0], 22
    %2643 = vst.msk [vmem:[%s2642] sm:$0xc] %vm2640, %v2639
    %s2644 = scalar_lea.vmem %s0, 214
    %v2645 = vld [vmem:[%s2644] sm:$0x1]
    %s2646 = scalar_lea.vmem %s0, 469
    %v2647 = vld [vmem:[%s2646] sm:$0x2]
    %vm2648 = vcmask 1041409
    %v2649 = vsel %vm2648, %v2647, %v2645
    %s2650 = scalar_lea.vmem %s0, 84
    %v2651 = vld [vmem:[%s2650] sm:$0x4]
    %vm2652 = vcmask 1042434
    %v2653 = vsel %vm2652, %v2651, %v2649
    %s2654 = scalar_lea.vmem %s0, 339
    %v2655 = vld [vmem:[%s2654] sm:$0x8]
    %vm2656 = vcmask 1043459
    %v2657 = vsel %vm2656, %v2655, %v2653
    %2658 = vrot.lane.b32.xlu0 %v2657, 2
    %v2659 = vpop.permute.xlu0 %2658
    %vm2660 = vcmask 39952
    %s2661 = scalar_lea.vmem [#allocation0], 40
    %2662 = vst.msk [vmem:[%s2661] sm:$0x3] %vm2660, %v2659
    %s2663 = scalar_lea.vmem [#allocation0], 14
    %2664 = vst.msk [vmem:[%s2663] sm:$0xc] %vm2660, %v2659
    %s2665 = scalar_lea.vmem %s0, 171
    %v2666 = vld [vmem:[%s2665] sm:$0x1]
    %s2667 = scalar_lea.vmem %s0, 426
    %v2668 = vld [vmem:[%s2667] sm:$0x2]
    %vm2669 = vcmask 1041409
    %v2670 = vsel %vm2669, %v2668, %v2666
    %s2671 = scalar_lea.vmem %s0, 41
    %v2672 = vld [vmem:[%s2671] sm:$0x4]
    %vm2673 = vcmask 1042434
    %v2674 = vsel %vm2673, %v2672, %v2670
    %s2675 = scalar_lea.vmem %s0, 296
    %v2676 = vld [vmem:[%s2675] sm:$0x8]
    %vm2677 = vcmask 1043459
    %v2678 = vsel %vm2677, %v2676, %v2674
    %2679 = vrot.lane.b32.xlu0 %v2678, 1
    %v2680 = vpop.permute.xlu0 %2679
    %vm2681 = vcmask 31752
    %s2682 = scalar_lea.vmem [#allocation0], 32
    %2683 = vst.msk [vmem:[%s2682] sm:$0x3] %vm2681, %v2680
    %s2684 = scalar_lea.vmem [#allocation0], 6
    %2685 = vst.msk [vmem:[%s2684] sm:$0xc] %vm2681, %v2680
    %s2687 = sshll.u32 1, 2
    %s2688 = ssub.s32 %s2687, 1
    %v2690 = vld [vmem:[#allocation0] sm:%s2688]
    %s2691 = sshll.u32 1, 2
    %s2692 = ssub.s32 %s2691, 1
    %2693 = vst [vmem:[%s1] sm:%s2692] %v2690
    %s2694 = scalar_lea.vmem [#allocation0], 8
    %v2695 = vld [vmem:[%s2694] sm:%s2688]
    %s2696 = sshll.u32 1, 2
    %s2697 = ssub.s32 %s2696, 1
    %s2698 = scalar_lea.vmem %s1, 2
    %2699 = vst [vmem:[%s2698] sm:%s2697] %v2695
    %s2700 = scalar_lea.vmem [#allocation0], 16
    %v2701 = vld [vmem:[%s2700] sm:%s2688]
    %s2702 = sshll.u32 1, 2
    %s2703 = ssub.s32 %s2702, 1
    %s2704 = smul.addr 2, 2
    %s2705 = scalar_lea.vmem %s1, %s2704
    %2706 = vst [vmem:[%s2705] sm:%s2703] %v2701
    %s2707 = scalar_lea.vmem [#allocation0], 24
    %v2708 = vld [vmem:[%s2707] sm:%s2688]
    %s2709 = sshll.u32 1, 2
    %s2710 = ssub.s32 %s2709, 1
    %s2711 = smul.addr 2, 3
    %s2712 = scalar_lea.vmem %s1, %s2711
    %2713 = vst [vmem:[%s2712] sm:%s2710] %v2708
    %s2714 = scalar_lea.vmem [#allocation0], 32
    %v2715 = vld [vmem:[%s2714] sm:%s2688]
    %s2716 = sshll.u32 1, 2
    %s2717 = ssub.s32 %s2716, 1
    %s2718 = smul.addr 2, 4
    %s2719 = scalar_lea.vmem %s1, %s2718
    %2720 = vst [vmem:[%s2719] sm:%s2717] %v2715
    %s2721 = scalar_lea.vmem [#allocation0], 40
    %v2722 = vld [vmem:[%s2721] sm:%s2688]
    %s2723 = sshll.u32 1, 2
    %s2724 = ssub.s32 %s2723, 1
    %s2725 = smul.addr 2, 5
    %s2726 = scalar_lea.vmem %s1, %s2725
    %2727 = vst [vmem:[%s2726] sm:%s2724] %v2722

// kernel: network_forward.4
$region0: #{network_forward.4}
  #allocation0 [shape = 'u32[]', space=smem, size = 0x4, offset = 0x4, fixed_abs, tag = 'smem constant byte address 0x4 - core index']
  #allocation1 [shape = 'u32[144,128]{1,0:T(1,128)}', space=vmem, size = 0x12000, scoped, tag = 'internal scratch']
  %s0 = inlined_call_operand.vmem [shape: f32[128,3], index: 0, kind: input, shape index: {}]
  %s1 = inlined_call_operand.vmem [shape: f32[2,128], index: 1, kind: input, shape index: {}]
  %s2 = inlined_call_operand.vmem [shape: f32[3,512], index: 2, kind: input, shape index: {}]
  %s3 = inlined_call_operand.hbm [shape: f32[1,512], index: 3, kind: input, shape index: {}]
  %s4 = inlined_call_operand.vmem [shape: f32[512,256], index: 4, kind: input, shape index: {}]
  %s5 = inlined_call_operand.hbm [shape: f32[1,256], index: 5, kind: input, shape index: {}]
  %s6 = inlined_call_operand.vmem [shape: f32[256,128], index: 6, kind: input, shape index: {}]
  %s7 = inlined_call_operand.hbm [shape: f32[1,128], index: 7, kind: input, shape index: {}]
  %s8 = inlined_call_operand.hbm [shape: f32[1,128], index: 8, kind: input, shape index: {}]
  %s9 = inlined_call_operand.hbm [shape: f32[1,128], index: 9, kind: input, shape index: {}]
  %s10 = inlined_call_operand.vmem [shape: f32[2,128], index: 10, kind: output, shape index: {}]
  %s11 = sld [smem:[#allocation0]]
  $region70: #{network_forward.4} parent=0
    _
  %s13 = ssub.s32 1, %s11
  %s14 = scalar_select 0, %s13, %s11
  $region1: #{network_forward.4} parent=0
    #allocation2 [shape = 'u8[2048]{0}', space=vmem, size = 0x800, scoped, tag = 'input window, operand 3, single buffered']
    #allocation3 [shape = 's32[1]{0}', space=sflag, size = 0x4, scoped, tag = 'scoped memory for network_forward.4']
    #allocation4 [shape = 'u8[1024]{0}', space=vmem, size = 0x400, scoped, tag = 'input window, operand 5, single buffered']
    #allocation5 [shape = 's32[1]{0}', space=sflag, size = 0x4, scoped, tag = 'scoped memory for network_forward.4']
    #allocation6 [shape = 'u8[512]{0}', space=vmem, size = 0x400, scoped, tag = 'input window, operand 7, single buffered']
    #allocation7 [shape = 'u8[512]{0}', space=vmem, size = 0x400, scoped, tag = 'input window, operand 8, single buffered']
    #allocation8 [shape = 's32[1]{0}', space=sflag, size = 0x4, scoped, tag = 'scoped memory for network_forward.4']
    #allocation9 [shape = 'u8[512]{0}', space=vmem, size = 0x400, scoped, tag = 'input window, operand 9, single buffered']
    %15 = vsyncpa [#allocation3], 0
    %16 = vsyncpa [#allocation5], 0
    %17 = vsyncpa [#allocation8], 0
    // Predicated region
    $region2: #{network_forward.4} parent=1 // pred_check
      _
    $region3: #{network_forward.4} parent=1 // pred_check_branch
      %19 = sbr.rel (0) target = $region5
    $region4: #{network_forward.4} parent=1 // pred_region
      _
    $region5: #{network_forward.4} parent=1 // pred_fallthru
      _
    // Predicated region
    $region6: #{network_forward.4} parent=1 // pred_check
      _
    $region7: #{network_forward.4} parent=1 // pred_check_branch
      %21 = sbr.rel (0) target = $region9
    $region8: #{network_forward.4} parent=1 // pred_region
      _
    $region9: #{network_forward.4} parent=1 // pred_fallthru
      _
    // Predicated region
    $region10: #{network_forward.4} parent=1 // pred_check
      _
    $region11: #{network_forward.4} parent=1 // pred_check_branch
      %23 = sbr.rel (0) target = $region13
    $region12: #{network_forward.4} parent=1 // pred_region
      _
    $region13: #{network_forward.4} parent=1 // pred_fallthru
      _
    // Predicated region
    $region14: #{network_forward.4} parent=1 // pred_check
      _
    $region15: #{network_forward.4} parent=1 // pred_check_branch
      %25 = sbr.rel (0) target = $region17
    $region16: #{network_forward.4} parent=1 // pred_region
      %s27 = ssub.s32 64, 64
      %28 = vsyncadd [#allocation3], %s27
      %s30 = sshll.u32 [#allocation2], 4
      %s31 = int_to_ptr.vmem [resolvable:$true] %s30
      %33 = dma.hbm_to_vmem [thread:$0]  %s3, 64, %s31, [#allocation3]
    $region17: #{network_forward.4} parent=1 // pred_fallthru
      _
    // Predicated region
    $region18: #{network_forward.4} parent=1 // pred_check
      _
    $region19: #{network_forward.4} parent=1 // pred_check_branch
      %35 = sbr.rel (0) target = $region21
    $region20: #{network_forward.4} parent=1 // pred_region
      _
    $region21: #{network_forward.4} parent=1 // pred_fallthru
      _
    // Predicated region
    $region22: #{network_forward.4} parent=1 // pred_check
      _
    $region23: #{network_forward.4} parent=1 // pred_check_branch
      %37 = sbr.rel (0) target = $region25
    $region24: #{network_forward.4} parent=1 // pred_region
      %s39 = ssub.s32 32, 32
      %40 = vsyncadd [#allocation5], %s39
      %s42 = sshll.u32 [#allocation4], 4
      %s43 = int_to_ptr.vmem [resolvable:$true] %s42
      %45 = dma.hbm_to_vmem [thread:$0]  %s5, 32, %s43, [#allocation5]
    $region25: #{network_forward.4} parent=1 // pred_fallthru
      _
    // Predicated region
    $region26: #{network_forward.4} parent=1 // pred_check
      _
    $region27: #{network_forward.4} parent=1 // pred_check_branch
      %47 = sbr.rel (0) target = $region29
    $region28: #{network_forward.4} parent=1 // pred_region
      _
    $region29: #{network_forward.4} parent=1 // pred_fallthru
      _
    // Predicated region
    $region30: #{network_forward.4} parent=1 // pred_check
      _
    $region31: #{network_forward.4} parent=1 // pred_check_branch
      %49 = sbr.rel (0) target = $region33
    $region32: #{network_forward.4} parent=1 // pred_region
      %s51 = ssub.s32 16, 16
      %52 = vsyncadd [#allocation5], %s51
      %s54 = sshll.u32 [#allocation6], 4
      %s55 = int_to_ptr.vmem [resolvable:$true] %s54
      %57 = dma.hbm_to_vmem [thread:$0]  %s7, 16, %s55, [#allocation5]
    $region33: #{network_forward.4} parent=1 // pred_fallthru
      _
    // Predicated region
    $region34: #{network_forward.4} parent=1 // pred_check
      _
    $region35: #{network_forward.4} parent=1 // pred_check_branch
      %59 = sbr.rel (0) target = $region37
    $region36: #{network_forward.4} parent=1 // pred_region
      %s61 = ssub.s32 16, 16
      %62 = vsyncadd [#allocation8], %s61
      %s64 = sshll.u32 [#allocation7], 4
      %s65 = int_to_ptr.vmem [resolvable:$true] %s64
      %67 = dma.hbm_to_vmem [thread:$0]  %s8, 16, %s65, [#allocation8]
    $region37: #{network_forward.4} parent=1 // pred_fallthru
      _
    // Predicated region
    $region38: #{network_forward.4} parent=1 // pred_check
      _
    $region39: #{network_forward.4} parent=1 // pred_check_branch
      %69 = sbr.rel (0) target = $region41
    $region40: #{network_forward.4} parent=1 // pred_region
      %s71 = ssub.s32 16, 16
      %72 = vsyncadd [#allocation8], %s71
      %s74 = sshll.u32 [#allocation9], 4
      %s75 = int_to_ptr.vmem [resolvable:$true] %s74
      %77 = dma.hbm_to_vmem [thread:$0]  %s9, 16, %s75, [#allocation8]
    $region41: #{network_forward.4} parent=1 // pred_fallthru
      _
    // Predicated region
    $region42: #{network_forward.4} parent=1 // pred_check
      _
    $region43: #{network_forward.4} parent=1 // pred_check_branch
      %79 = sbr.rel (0) target = $region45
    $region44: #{network_forward.4} parent=1 // pred_region
      %80 = dma.done [#allocation3], 64
    $region45: #{network_forward.4} parent=1 // pred_fallthru
      _
    // Predicated region
    $region46: #{network_forward.4} parent=1 // pred_check
      _
    $region47: #{network_forward.4} parent=1 // pred_check_branch
      %82 = sbr.rel (0) target = $region49
    $region48: #{network_forward.4} parent=1 // pred_region
      %83 = dma.done [#allocation5], 32
    $region49: #{network_forward.4} parent=1 // pred_fallthru
      _
    // Predicated region
    $region50: #{network_forward.4} parent=1 // pred_check
      _
    $region51: #{network_forward.4} parent=1 // pred_check_branch
      %85 = sbr.rel (0) target = $region53
    $region52: #{network_forward.4} parent=1 // pred_region
      %86 = dma.done [#allocation5], 16
    $region53: #{network_forward.4} parent=1 // pred_fallthru
      _
    // Predicated region
    $region54: #{network_forward.4} parent=1 // pred_check
      _
    $region55: #{network_forward.4} parent=1 // pred_check_branch
      %88 = sbr.rel (0) target = $region57
    $region56: #{network_forward.4} parent=1 // pred_region
      %89 = dma.done [#allocation8], 16
    $region57: #{network_forward.4} parent=1 // pred_fallthru
      _
    // Predicated region
    $region58: #{network_forward.4} parent=1 // pred_check
      _
    $region59: #{network_forward.4} parent=1 // pred_check_branch
      %91 = sbr.rel (0) target = $region61
    $region60: #{network_forward.4} parent=1 // pred_region
      %92 = dma.done [#allocation8], 16
    $region61: #{network_forward.4} parent=1 // pred_fallthru
      _
    %v93 = vld [vmem:[%s0] sm:$0xff]
    %v94 = vld [vmem:[%s0 + $0x8] sm:$0xff]
    %v95 = vld [vmem:[%s0 + $0x10] sm:$0xff]
    %v96 = vld [vmem:[%s0 + $0x18] sm:$0xff]
    %v97 = vld [vmem:[%s0 + $0x20] sm:$0xff]
    %v98 = vld [vmem:[%s0 + $0x28] sm:$0xff]
    %v99 = vld [vmem:[%s0 + $0x30] sm:$0xff]
    %v100 = vld [vmem:[%s0 + $0x38] sm:$0xff]
    %v101 = vld [vmem:[%s0 + $0x40] sm:$0xff]
    %v102 = vld [vmem:[%s0 + $0x48] sm:$0xff]
    %v103 = vld [vmem:[%s0 + $0x50] sm:$0xff]
    %v104 = vld [vmem:[%s0 + $0x58] sm:$0xff]
    %v105 = vld [vmem:[%s0 + $0x60] sm:$0xff]
    %v106 = vld [vmem:[%s0 + $0x68] sm:$0xff]
    %v107 = vld [vmem:[%s0 + $0x70] sm:$0xff]
    %v108 = vld [vmem:[%s0 + $0x78] sm:$0xff]
    %v109 = vld [vmem:[%s2] sm:$0x77]
    %v110 = vld [vmem:[%s2 + $0x8] sm:$0x77]
    %v111 = vld [vmem:[#allocation2] sm:$0xf]
    %v113 = vlaneseq
    %v114 = vshrl.u32 %v113, 7
    %v115 = vsub.s32 0, %v114
    %v116 = vrot.slane %v111, %v115
    %v117 = vlaneseq
    %v118 = vshrl.u32 %v117, 7
    %v119 = vsub.s32 1, %v118
    %v120 = vrot.slane %v111, %v119
    %v121 = vlaneseq
    %v122 = vshrl.u32 %v121, 7
    %v123 = vsub.s32 2, %v122
    %v124 = vrot.slane %v111, %v123
    %v125 = vlaneseq
    %v126 = vshrl.u32 %v125, 7
    %v127 = vsub.s32 3, %v126
    %v128 = vrot.slane %v111, %v127
    %v135 = vcombine.high %v109, %v109
    %v136 = vcombine.high %v110, %v110
    %vm137 = vcmask 23552
    %v139 = vsel %vm137, %v93, 0
    %v142 = vsel %vm137, %v94, 0
    %v145 = vsel %vm137, %v95, 0
    %v148 = vsel %vm137, %v96, 0
    %v151 = vsel %vm137, %v97, 0
    %v154 = vsel %vm137, %v98, 0
    %v157 = vsel %vm137, %v99, 0
    %v160 = vsel %vm137, %v100, 0
    %v163 = vsel %vm137, %v101, 0
    %v166 = vsel %vm137, %v102, 0
    %v169 = vsel %vm137, %v103, 0
    %v172 = vsel %vm137, %v104, 0
    %v175 = vsel %vm137, %v105, 0
    %v178 = vsel %vm137, %v106, 0
    %v181 = vsel %vm137, %v107, 0
    %v184 = vsel %vm137, %v108, 0
    %vm186 = vcmask 1042432
    %v187 = vsel %vm186, %v109, 0
    %v189 = vsel %vm186, %v135, 0
    %v191 = vsel %vm186, %v110, 0
    %v193 = vsel %vm186, %v136, 0
    %195 = vmatprep.subr.mxu0 0.0
    %196 = vmatpush1.msra.mxu0 0.0
    %197 = vmatprep.subr.mxu0 0.0
    %198 = vmatpush1.msra.mxu0 0.0
    %199 = vmatprep.subr.mxu0 0.0
    %200 = vmatpush1.msra.mxu0 0.0
    %201 = vmatprep.subr.mxu0 0.0
    %202 = vmatpush1.msra.mxu0 0.0
    %203 = vmatprep.subr.mxu0 0.0
    %204 = vmatpush1.msra.mxu0 0.0
    %205 = vmatprep.subr.mxu0 0.0
    %206 = vmatpush1.msra.mxu0 0.0
    %207 = vmatprep.subr.mxu0 0.0
    %208 = vmatpush1.msra.mxu0 0.0
    %209 = vmatprep.subr.mxu0 0.0
    %210 = vmatpush1.msra.mxu0 0.0
    %211 = vmatprep.subr.mxu0 0.0
    %212 = vmatpush1.msra.mxu0 0.0
    %213 = vmatprep.subr.mxu0 0.0
    %214 = vmatpush1.msra.mxu0 0.0
    %215 = vmatprep.subr.mxu0 0.0
    %216 = vmatpush1.msra.mxu0 0.0
    %217 = vmatprep.subr.mxu0 0.0
    %218 = vmatpush1.msra.mxu0 0.0
    %219 = vmatprep.subr.mxu0 0.0
    %220 = vmatpush1.msra.mxu0 0.0
    %221 = vmatprep.subr.mxu0 0.0
    %222 = vmatpush1.msra.mxu0 0.0
    %223 = vmatprep.subr.mxu0 0.0
    %224 = vmatpush1.msra.mxu0 0.0
    %225 = vmatprep.subr.mxu0 %v189
    %226 = vmatpush1.msra.mxu0 %v187
    %227 = vmatprep.subr.mxu0 0.0
    %228 = vmatpush2.msra.mxu0 0.0
    %229 = vmatprep.subr.mxu0 0.0
    %230 = vmatpush2.msra.mxu0 0.0
    %231 = vmatprep.subr.mxu0 0.0
    %232 = vmatpush2.msra.mxu0 0.0
    %233 = vmatprep.subr.mxu0 0.0
    %234 = vmatpush2.msra.mxu0 0.0
    %235 = vmatprep.subr.mxu0 0.0
    %236 = vmatpush2.msra.mxu0 0.0
    %237 = vmatprep.subr.mxu0 0.0
    %238 = vmatpush2.msra.mxu0 0.0
    %239 = vmatprep.subr.mxu0 0.0
    %240 = vmatpush2.msra.mxu0 0.0
    %241 = vmatprep.subr.mxu0 0.0
    %242 = vmatpush2.msra.mxu0 0.0
    %243 = vmatprep.subr.mxu0 0.0
    %244 = vmatpush2.msra.mxu0 0.0
    %245 = vmatprep.subr.mxu0 0.0
    %246 = vmatpush2.msra.mxu0 0.0
    %247 = vmatprep.subr.mxu0 0.0
    %248 = vmatpush2.msra.mxu0 0.0
    %249 = vmatprep.subr.mxu0 0.0
    %250 = vmatpush2.msra.mxu0 0.0
    %251 = vmatprep.subr.mxu0 0.0
    %252 = vmatpush2.msra.mxu0 0.0
    %253 = vmatprep.subr.mxu0 0.0
    %254 = vmatpush2.msra.mxu0 0.0
    %255 = vmatprep.subr.mxu0 0.0
    %256 = vmatpush2.msra.mxu0 0.0
    %257 = vmatprep.subr.mxu0 0.0
    %258 = vmatpush2.msra.mxu0 0.0
    %259 = vmatprep.mubr.f32.mxu0 0.0
    %260 = vmatmul.mubr.f32.gmra.mxu0 %v139
    %v261 = vpop.f32.mrf.mxu0
    %v262 = vadd.f32 %v116, %v261
    %v263 = vpop.f32.mrf.mxu0
    %v264 = vadd.f32 %v120, %v263
    %265 = vmatprep.mubr.f32.mxu0 0.0
    %266 = vmatmul.mubr.f32.gmra.mxu0 %v142
    %v267 = vpop.f32.mrf.mxu0
    %v268 = vadd.f32 %v116, %v267
    %v269 = vpop.f32.mrf.mxu0
    %v270 = vadd.f32 %v120, %v269
    %271 = vmatprep.mubr.f32.mxu0 0.0
    %272 = vmatmul.mubr.f32.gmra.mxu0 %v145
    %v273 = vpop.f32.mrf.mxu0
    %v274 = vadd.f32 %v116, %v273
    %v275 = vpop.f32.mrf.mxu0
    %v276 = vadd.f32 %v120, %v275
    %277 = vmatprep.mubr.f32.mxu0 0.0
    %278 = vmatmul.mubr.f32.gmra.mxu0 %v148
    %v279 = vpop.f32.mrf.mxu0
    %v280 = vadd.f32 %v116, %v279
    %v281 = vpop.f32.mrf.mxu0
    %v282 = vadd.f32 %v120, %v281
    %283 = vmatprep.mubr.f32.mxu0 0.0
    %284 = vmatmul.mubr.f32.gmra.mxu0 %v151
    %v285 = vpop.f32.mrf.mxu0
    %v286 = vadd.f32 %v116, %v285
    %v287 = vpop.f32.mrf.mxu0
    %v288 = vadd.f32 %v120, %v287
    %289 = vmatprep.mubr.f32.mxu0 0.0
    %290 = vmatmul.mubr.f32.gmra.mxu0 %v154
    %v291 = vpop.f32.mrf.mxu0
    %v292 = vadd.f32 %v116, %v291
    %v293 = vpop.f32.mrf.mxu0
    %v294 = vadd.f32 %v120, %v293
    %295 = vmatprep.mubr.f32.mxu0 0.0
    %296 = vmatmul.mubr.f32.gmra.mxu0 %v157
    %v297 = vpop.f32.mrf.mxu0
    %v298 = vadd.f32 %v116, %v297
    %v299 = vpop.f32.mrf.mxu0
    %v300 = vadd.f32 %v120, %v299
    %301 = vmatprep.mubr.f32.mxu0 0.0
    %302 = vmatmul.mubr.f32.gmra.mxu0 %v160
    %v303 = vpop.f32.mrf.mxu0
    %v304 = vadd.f32 %v116, %v303
    %v305 = vpop.f32.mrf.mxu0
    %v306 = vadd.f32 %v120, %v305
    %307 = vmatprep.mubr.f32.mxu0 0.0
    %308 = vmatmul.mubr.f32.gmra.mxu0 %v163
    %v309 = vpop.f32.mrf.mxu0
    %v310 = vadd.f32 %v116, %v309
    %v311 = vpop.f32.mrf.mxu0
    %v312 = vadd.f32 %v120, %v311
    %313 = vmatprep.mubr.f32.mxu0 0.0
    %314 = vmatmul.mubr.f32.gmra.mxu0 %v166
    %v315 = vpop.f32.mrf.mxu0
    %v316 = vadd.f32 %v116, %v315
    %v317 = vpop.f32.mrf.mxu0
    %v318 = vadd.f32 %v120, %v317
    %319 = vmatprep.mubr.f32.mxu0 0.0
    %320 = vmatmul.mubr.f32.gmra.mxu0 %v169
    %v321 = vpop.f32.mrf.mxu0
    %v322 = vadd.f32 %v116, %v321
    %v323 = vpop.f32.mrf.mxu0
    %v324 = vadd.f32 %v120, %v323
    %325 = vmatprep.mubr.f32.mxu0 0.0
    %326 = vmatmul.mubr.f32.gmra.mxu0 %v172
    %v327 = vpop.f32.mrf.mxu0
    %v328 = vadd.f32 %v116, %v327
    %v329 = vpop.f32.mrf.mxu0
    %v330 = vadd.f32 %v120, %v329
    %331 = vmatprep.mubr.f32.mxu0 0.0
    %332 = vmatmul.mubr.f32.gmra.mxu0 %v175
    %v333 = vpop.f32.mrf.mxu0
    %v334 = vadd.f32 %v116, %v333
    %v335 = vpop.f32.mrf.mxu0
    %v336 = vadd.f32 %v120, %v335
    %337 = vmatprep.mubr.f32.mxu0 0.0
    %338 = vmatmul.mubr.f32.gmra.mxu0 %v178
    %v339 = vpop.f32.mrf.mxu0
    %v340 = vadd.f32 %v116, %v339
    %v341 = vpop.f32.mrf.mxu0
    %v342 = vadd.f32 %v120, %v341
    %343 = vmatprep.mubr.f32.mxu0 0.0
    %344 = vmatmul.mubr.f32.gmra.mxu0 %v181
    %v345 = vpop.f32.mrf.mxu0
    %v346 = vadd.f32 %v116, %v345
    %v347 = vpop.f32.mrf.mxu0
    %v348 = vadd.f32 %v120, %v347
    %349 = vmatprep.mubr.f32.mxu0 0.0
    %350 = vmatmul.mubr.f32.gmra.mxu0 %v184
    %v351 = vpop.f32.mrf.mxu0
    %v352 = vadd.f32 %v116, %v351
    %v353 = vpop.f32.mrf.mxu0
    %v354 = vadd.f32 %v120, %v353
    %355 = vdwg.mxu0
    %356 = vmatprep.subr.mxu0 0.0
    %357 = vmatpush1.msra.mxu0 0.0
    %358 = vmatprep.subr.mxu0 0.0
    %359 = vmatpush1.msra.mxu0 0.0
    %360 = vmatprep.subr.mxu0 0.0
    %361 = vmatpush1.msra.mxu0 0.0
    %362 = vmatprep.subr.mxu0 0.0
    %363 = vmatpush1.msra.mxu0 0.0
    %364 = vmatprep.subr.mxu0 0.0
    %365 = vmatpush1.msra.mxu0 0.0
    %366 = vmatprep.subr.mxu0 0.0
    %367 = vmatpush1.msra.mxu0 0.0
    %368 = vmatprep.subr.mxu0 0.0
    %369 = vmatpush1.msra.mxu0 0.0
    %370 = vmatprep.subr.mxu0 0.0
    %371 = vmatpush1.msra.mxu0 0.0
    %372 = vmatprep.subr.mxu0 0.0
    %373 = vmatpush1.msra.mxu0 0.0
    %374 = vmatprep.subr.mxu0 0.0
    %375 = vmatpush1.msra.mxu0 0.0
    %376 = vmatprep.subr.mxu0 0.0
    %377 = vmatpush1.msra.mxu0 0.0
    %378 = vmatprep.subr.mxu0 0.0
    %379 = vmatpush1.msra.mxu0 0.0
    %380 = vmatprep.subr.mxu0 0.0
    %381 = vmatpush1.msra.mxu0 0.0
    %382 = vmatprep.subr.mxu0 0.0
    %383 = vmatpush1.msra.mxu0 0.0
    %384 = vmatprep.subr.mxu0 0.0
    %385 = vmatpush1.msra.mxu0 0.0
    %386 = vmatprep.subr.mxu0 %v193
    %387 = vmatpush1.msra.mxu0 %v191
    %388 = vmatprep.subr.mxu0 0.0
    %389 = vmatpush2.msra.mxu0 0.0
    %390 = vmatprep.subr.mxu0 0.0
    %391 = vmatpush2.msra.mxu0 0.0
    %392 = vmatprep.subr.mxu0 0.0
    %393 = vmatpush2.msra.mxu0 0.0
    %394 = vmatprep.subr.mxu0 0.0
    %395 = vmatpush2.msra.mxu0 0.0
    %396 = vmatprep.subr.mxu0 0.0
    %397 = vmatpush2.msra.mxu0 0.0
    %398 = vmatprep.subr.mxu0 0.0
    %399 = vmatpush2.msra.mxu0 0.0
    %400 = vmatprep.subr.mxu0 0.0
    %401 = vmatpush2.msra.mxu0 0.0
    %402 = vmatprep.subr.mxu0 0.0
    %403 = vmatpush2.msra.mxu0 0.0
    %404 = vmatprep.subr.mxu0 0.0
    %405 = vmatpush2.msra.mxu0 0.0
    %406 = vmatprep.subr.mxu0 0.0
    %407 = vmatpush2.msra.mxu0 0.0
    %408 = vmatprep.subr.mxu0 0.0
    %409 = vmatpush2.msra.mxu0 0.0
    %410 = vmatprep.subr.mxu0 0.0
    %411 = vmatpush2.msra.mxu0 0.0
    %412 = vmatprep.subr.mxu0 0.0
    %413 = vmatpush2.msra.mxu0 0.0
    %414 = vmatprep.subr.mxu0 0.0
    %415 = vmatpush2.msra.mxu0 0.0
    %416 = vmatprep.subr.mxu0 0.0
    %417 = vmatpush2.msra.mxu0 0.0
    %418 = vmatprep.subr.mxu0 0.0
    %419 = vmatpush2.msra.mxu0 0.0
    %420 = vmatprep.mubr.f32.mxu0 0.0
    %421 = vmatmul.mubr.f32.gmra.mxu0 %v139
    %v422 = vpop.f32.mrf.mxu0
    %v423 = vadd.f32 %v124, %v422
    %v424 = vpop.f32.mrf.mxu0
    %v425 = vadd.f32 %v128, %v424
    %426 = vmatprep.mubr.f32.mxu0 0.0
    %427 = vmatmul.mubr.f32.gmra.mxu0 %v142
    %v428 = vpop.f32.mrf.mxu0
    %v429 = vadd.f32 %v124, %v428
    %v430 = vpop.f32.mrf.mxu0
    %v431 = vadd.f32 %v128, %v430
    %432 = vmatprep.mubr.f32.mxu0 0.0
    %433 = vmatmul.mubr.f32.gmra.mxu0 %v145
    %v434 = vpop.f32.mrf.mxu0
    %v435 = vadd.f32 %v124, %v434
    %v436 = vpop.f32.mrf.mxu0
    %v437 = vadd.f32 %v128, %v436
    %438 = vmatprep.mubr.f32.mxu0 0.0
    %439 = vmatmul.mubr.f32.gmra.mxu0 %v148
    %v440 = vpop.f32.mrf.mxu0
    %v441 = vadd.f32 %v124, %v440
    %v442 = vpop.f32.mrf.mxu0
    %v443 = vadd.f32 %v128, %v442
    %444 = vmatprep.mubr.f32.mxu0 0.0
    %445 = vmatmul.mubr.f32.gmra.mxu0 %v151
    %v446 = vpop.f32.mrf.mxu0
    %v447 = vadd.f32 %v124, %v446
    %v448 = vpop.f32.mrf.mxu0
    %v449 = vadd.f32 %v128, %v448
    %450 = vmatprep.mubr.f32.mxu0 0.0
    %451 = vmatmul.mubr.f32.gmra.mxu0 %v154
    %v452 = vpop.f32.mrf.mxu0
    %v453 = vadd.f32 %v124, %v452
    %v454 = vpop.f32.mrf.mxu0
    %v455 = vadd.f32 %v128, %v454
    %456 = vmatprep.mubr.f32.mxu0 0.0
    %457 = vmatmul.mubr.f32.gmra.mxu0 %v157
    %v458 = vpop.f32.mrf.mxu0
    %v459 = vadd.f32 %v124, %v458
    %v460 = vpop.f32.mrf.mxu0
    %v461 = vadd.f32 %v128, %v460
    %462 = vmatprep.mubr.f32.mxu0 0.0
    %463 = vmatmul.mubr.f32.gmra.mxu0 %v160
    %v464 = vpop.f32.mrf.mxu0
    %v465 = vadd.f32 %v124, %v464
    %v466 = vpop.f32.mrf.mxu0
    %v467 = vadd.f32 %v128, %v466
    %468 = vmatprep.mubr.f32.mxu0 0.0
    %469 = vmatmul.mubr.f32.gmra.mxu0 %v163
    %v470 = vpop.f32.mrf.mxu0
    %v471 = vadd.f32 %v124, %v470
    %v472 = vpop.f32.mrf.mxu0
    %v473 = vadd.f32 %v128, %v472
    %474 = vmatprep.mubr.f32.mxu0 0.0
    %475 = vmatmul.mubr.f32.gmra.mxu0 %v166
    %v476 = vpop.f32.mrf.mxu0
    %v477 = vadd.f32 %v124, %v476
    %v478 = vpop.f32.mrf.mxu0
    %v479 = vadd.f32 %v128, %v478
    %480 = vmatprep.mubr.f32.mxu0 0.0
    %481 = vmatmul.mubr.f32.gmra.mxu0 %v169
    %v482 = vpop.f32.mrf.mxu0
    %v483 = vadd.f32 %v124, %v482
    %v484 = vpop.f32.mrf.mxu0
    %v485 = vadd.f32 %v128, %v484
    %486 = vmatprep.mubr.f32.mxu0 0.0
    %487 = vmatmul.mubr.f32.gmra.mxu0 %v172
    %v488 = vpop.f32.mrf.mxu0
    %v489 = vadd.f32 %v124, %v488
    %v490 = vpop.f32.mrf.mxu0
    %v491 = vadd.f32 %v128, %v490
    %492 = vmatprep.mubr.f32.mxu0 0.0
    %493 = vmatmul.mubr.f32.gmra.mxu0 %v175
    %v494 = vpop.f32.mrf.mxu0
    %v495 = vadd.f32 %v124, %v494
    %v496 = vpop.f32.mrf.mxu0
    %v497 = vadd.f32 %v128, %v496
    %498 = vmatprep.mubr.f32.mxu0 0.0
    %499 = vmatmul.mubr.f32.gmra.mxu0 %v178
    %v500 = vpop.f32.mrf.mxu0
    %v501 = vadd.f32 %v124, %v500
    %v502 = vpop.f32.mrf.mxu0
    %v503 = vadd.f32 %v128, %v502
    %504 = vmatprep.mubr.f32.mxu0 0.0
    %505 = vmatmul.mubr.f32.gmra.mxu0 %v181
    %v506 = vpop.f32.mrf.mxu0
    %v507 = vadd.f32 %v124, %v506
    %v508 = vpop.f32.mrf.mxu0
    %v509 = vadd.f32 %v128, %v508
    %510 = vmatprep.mubr.f32.mxu0 0.0
    %511 = vmatmul.mubr.f32.gmra.mxu0 %v184
    %v512 = vpop.f32.mrf.mxu0
    %v513 = vadd.f32 %v124, %v512
    %v514 = vpop.f32.mrf.mxu0
    %v515 = vadd.f32 %v128, %v514
    %516 = vdwg.mxu0
    %v517 = vmax.f32 %v262, 0.0
    %v518 = vmax.f32 %v264, 0.0
    %v519 = vmax.f32 %v423, 0.0
    %v520 = vmax.f32 %v425, 0.0
    %v521 = vmax.f32 %v268, 0.0
    %v522 = vmax.f32 %v270, 0.0
    %v523 = vmax.f32 %v429, 0.0
    %v524 = vmax.f32 %v431, 0.0
    %v525 = vmax.f32 %v274, 0.0
    %v526 = vmax.f32 %v276, 0.0
    %v527 = vmax.f32 %v435, 0.0
    %v528 = vmax.f32 %v437, 0.0
    %v529 = vmax.f32 %v280, 0.0
    %v530 = vmax.f32 %v282, 0.0
    %v531 = vmax.f32 %v441, 0.0
    %v532 = vmax.f32 %v443, 0.0
    %v533 = vmax.f32 %v286, 0.0
    %v534 = vmax.f32 %v288, 0.0
    %v535 = vmax.f32 %v447, 0.0
    %v536 = vmax.f32 %v449, 0.0
    %v537 = vmax.f32 %v292, 0.0
    %v538 = vmax.f32 %v294, 0.0
    %v539 = vmax.f32 %v453, 0.0
    %v540 = vmax.f32 %v455, 0.0
    %v541 = vmax.f32 %v298, 0.0
    %v542 = vmax.f32 %v300, 0.0
    %v543 = vmax.f32 %v459, 0.0
    %v544 = vmax.f32 %v461, 0.0
    %v545 = vmax.f32 %v304, 0.0
    %v546 = vmax.f32 %v306, 0.0
    %v547 = vmax.f32 %v465, 0.0
    %v548 = vmax.f32 %v467, 0.0
    %v549 = vmax.f32 %v310, 0.0
    %v550 = vmax.f32 %v312, 0.0
    %v551 = vmax.f32 %v471, 0.0
    %v552 = vmax.f32 %v473, 0.0
    %v553 = vmax.f32 %v316, 0.0
    %v554 = vmax.f32 %v318, 0.0
    %v555 = vmax.f32 %v477, 0.0
    %v556 = vmax.f32 %v479, 0.0
    %v557 = vmax.f32 %v322, 0.0
    %v558 = vmax.f32 %v324, 0.0
    %v559 = vmax.f32 %v483, 0.0
    %v560 = vmax.f32 %v485, 0.0
    %v561 = vmax.f32 %v328, 0.0
    %v562 = vmax.f32 %v330, 0.0
    %v563 = vmax.f32 %v489, 0.0
    %v564 = vmax.f32 %v491, 0.0
    %v565 = vmax.f32 %v334, 0.0
    %v566 = vmax.f32 %v336, 0.0
    %v567 = vmax.f32 %v495, 0.0
    %v568 = vmax.f32 %v497, 0.0
    %v569 = vmax.f32 %v340, 0.0
    %v570 = vmax.f32 %v342, 0.0
    %v571 = vmax.f32 %v501, 0.0
    %v572 = vmax.f32 %v503, 0.0
    %v573 = vmax.f32 %v346, 0.0
    %v574 = vmax.f32 %v348, 0.0
    %v575 = vmax.f32 %v507, 0.0
    %v576 = vmax.f32 %v509, 0.0
    %v577 = vmax.f32 %v352, 0.0
    %v578 = vmax.f32 %v354, 0.0
    %v579 = vmax.f32 %v513, 0.0
    %v580 = vmax.f32 %v515, 0.0
    %v581 = vld [vmem:[%s1] sm:$0x3]
    %582 = vmatprep.subr.mxu0 %v578
    %583 = vmatpush1.msra.mxu0 %v577
    %584 = vmatprep.subr.mxu0 %v574
    %585 = vmatpush1.msra.mxu0 %v573
    %586 = vmatprep.subr.mxu0 %v570
    %587 = vmatpush1.msra.mxu0 %v569
    %588 = vmatprep.subr.mxu0 %v566
    %589 = vmatpush1.msra.mxu0 %v565
    %590 = vmatprep.subr.mxu0 %v562
    %591 = vmatpush1.msra.mxu0 %v561
    %592 = vmatprep.subr.mxu0 %v558
    %593 = vmatpush1.msra.mxu0 %v557
    %594 = vmatprep.subr.mxu0 %v554
    %595 = vmatpush1.msra.mxu0 %v553
    %596 = vmatprep.subr.mxu0 %v550
    %597 = vmatpush1.msra.mxu0 %v549
    %598 = vmatprep.subr.mxu0 %v546
    %599 = vmatpush1.msra.mxu0 %v545
    %600 = vmatprep.subr.mxu0 %v542
    %601 = vmatpush1.msra.mxu0 %v541
    %602 = vmatprep.subr.mxu0 %v538
    %603 = vmatpush1.msra.mxu0 %v537
    %604 = vmatprep.subr.mxu0 %v534
    %605 = vmatpush1.msra.mxu0 %v533
    %606 = vmatprep.subr.mxu0 %v530
    %607 = vmatpush1.msra.mxu0 %v529
    %608 = vmatprep.subr.mxu0 %v526
    %609 = vmatpush1.msra.mxu0 %v525
    %610 = vmatprep.subr.mxu0 %v522
    %611 = vmatpush1.msra.mxu0 %v521
    %612 = vmatprep.subr.mxu0 %v518
    %613 = vmatpush1.msra.mxu0 %v517
    %614 = vmatprep.subr.mxu0 0.0
    %615 = vmatpush2.msra.mxu0 0.0
    %616 = vmatprep.subr.mxu0 0.0
    %617 = vmatpush2.msra.mxu0 0.0
    %618 = vmatprep.subr.mxu0 0.0
    %619 = vmatpush2.msra.mxu0 0.0
    %620 = vmatprep.subr.mxu0 0.0
    %621 = vmatpush2.msra.mxu0 0.0
    %622 = vmatprep.subr.mxu0 0.0
    %623 = vmatpush2.msra.mxu0 0.0
    %624 = vmatprep.subr.mxu0 0.0
    %625 = vmatpush2.msra.mxu0 0.0
    %626 = vmatprep.subr.mxu0 0.0
    %627 = vmatpush2.msra.mxu0 0.0
    %628 = vmatprep.subr.mxu0 0.0
    %629 = vmatpush2.msra.mxu0 0.0
    %630 = vmatprep.subr.mxu0 0.0
    %631 = vmatpush2.msra.mxu0 0.0
    %632 = vmatprep.subr.mxu0 0.0
    %633 = vmatpush2.msra.mxu0 0.0
    %634 = vmatprep.subr.mxu0 0.0
    %635 = vmatpush2.msra.mxu0 0.0
    %636 = vmatprep.subr.mxu0 0.0
    %637 = vmatpush2.msra.mxu0 0.0
    %638 = vmatprep.subr.mxu0 0.0
    %639 = vmatpush2.msra.mxu0 0.0
    %640 = vmatprep.subr.mxu0 0.0
    %641 = vmatpush2.msra.mxu0 0.0
    %642 = vmatprep.subr.mxu0 0.0
    %643 = vmatpush2.msra.mxu0 0.0
    %644 = vmatprep.subr.mxu0 0.0
    %645 = vmatpush2.msra.mxu0 0.0
    %646 = vmatprep.mubr.f32.mxu0 0.0
    %647 = vmatmul.mubr.f32.gmra.mxu0 %v581
    %v648 = vpop.f32.mrf.mxu0
    %v649 = vadd.f32 0.0, %v648
    %v650 = vpop.f32.mrf.mxu0
    %v651 = vadd.f32 0.0, %v650
    %652 = vdwg.mxu0
    %653 = vmatprep.subr.mxu0 %v580
    %654 = vmatpush1.msra.mxu0 %v579
    %655 = vmatprep.subr.mxu0 %v576
    %656 = vmatpush1.msra.mxu0 %v575
    %657 = vmatprep.subr.mxu0 %v572
    %658 = vmatpush1.msra.mxu0 %v571
    %659 = vmatprep.subr.mxu0 %v568
    %660 = vmatpush1.msra.mxu0 %v567
    %661 = vmatprep.subr.mxu0 %v564
    %662 = vmatpush1.msra.mxu0 %v563
    %663 = vmatprep.subr.mxu0 %v560
    %664 = vmatpush1.msra.mxu0 %v559
    %665 = vmatprep.subr.mxu0 %v556
    %666 = vmatpush1.msra.mxu0 %v555
    %667 = vmatprep.subr.mxu0 %v552
    %668 = vmatpush1.msra.mxu0 %v551
    %669 = vmatprep.subr.mxu0 %v548
    %670 = vmatpush1.msra.mxu0 %v547
    %671 = vmatprep.subr.mxu0 %v544
    %672 = vmatpush1.msra.mxu0 %v543
    %673 = vmatprep.subr.mxu0 %v540
    %674 = vmatpush1.msra.mxu0 %v539
    %675 = vmatprep.subr.mxu0 %v536
    %676 = vmatpush1.msra.mxu0 %v535
    %677 = vmatprep.subr.mxu0 %v532
    %678 = vmatpush1.msra.mxu0 %v531
    %679 = vmatprep.subr.mxu0 %v528
    %680 = vmatpush1.msra.mxu0 %v527
    %681 = vmatprep.subr.mxu0 %v524
    %682 = vmatpush1.msra.mxu0 %v523
    %683 = vmatprep.subr.mxu0 %v520
    %684 = vmatpush1.msra.mxu0 %v519
    %685 = vmatprep.subr.mxu0 0.0
    %686 = vmatpush2.msra.mxu0 0.0
    %687 = vmatprep.subr.mxu0 0.0
    %688 = vmatpush2.msra.mxu0 0.0
    %689 = vmatprep.subr.mxu0 0.0
    %690 = vmatpush2.msra.mxu0 0.0
    %691 = vmatprep.subr.mxu0 0.0
    %692 = vmatpush2.msra.mxu0 0.0
    %693 = vmatprep.subr.mxu0 0.0
    %694 = vmatpush2.msra.mxu0 0.0
    %695 = vmatprep.subr.mxu0 0.0
    %696 = vmatpush2.msra.mxu0 0.0
    %697 = vmatprep.subr.mxu0 0.0
    %698 = vmatpush2.msra.mxu0 0.0
    %699 = vmatprep.subr.mxu0 0.0
    %700 = vmatpush2.msra.mxu0 0.0
    %701 = vmatprep.subr.mxu0 0.0
    %702 = vmatpush2.msra.mxu0 0.0
    %703 = vmatprep.subr.mxu0 0.0
    %704 = vmatpush2.msra.mxu0 0.0
    %705 = vmatprep.subr.mxu0 0.0
    %706 = vmatpush2.msra.mxu0 0.0
    %707 = vmatprep.subr.mxu0 0.0
    %708 = vmatpush2.msra.mxu0 0.0
    %709 = vmatprep.subr.mxu0 0.0
    %710 = vmatpush2.msra.mxu0 0.0
    %711 = vmatprep.subr.mxu0 0.0
    %712 = vmatpush2.msra.mxu0 0.0
    %713 = vmatprep.subr.mxu0 0.0
    %714 = vmatpush2.msra.mxu0 0.0
    %715 = vmatprep.subr.mxu0 0.0
    %716 = vmatpush2.msra.mxu0 0.0
    %717 = vmatprep.mubr.f32.mxu0 0.0
    %718 = vmatmul.mubr.f32.gmra.mxu0 %v581
    %v719 = vpop.f32.mrf.mxu0
    %v720 = vadd.f32 0.0, %v719
    %v721 = vpop.f32.mrf.mxu0
    %v722 = vadd.f32 0.0, %v721
    %723 = vdwg.mxu0
    %v724 = vld [vmem:[%s4] sm:$0xff]
    %v725 = vld [vmem:[%s4 + $0x8] sm:$0xff]
    %v726 = vld [vmem:[%s4 + $0x10] sm:$0xff]
    %v727 = vld [vmem:[%s4 + $0x18] sm:$0xff]
    %v728 = vld [vmem:[%s4 + $0x20] sm:$0xff]
    %v729 = vld [vmem:[%s4 + $0x28] sm:$0xff]
    %v730 = vld [vmem:[%s4 + $0x30] sm:$0xff]
    %v731 = vld [vmem:[%s4 + $0x38] sm:$0xff]
    %v732 = vld [vmem:[%s4 + $0x40] sm:$0xff]
    %v733 = vld [vmem:[%s4 + $0x48] sm:$0xff]
    %v734 = vld [vmem:[%s4 + $0x50] sm:$0xff]
    %v735 = vld [vmem:[%s4 + $0x58] sm:$0xff]
    %v736 = vld [vmem:[%s4 + $0x60] sm:$0xff]
    %v737 = vld [vmem:[%s4 + $0x68] sm:$0xff]
    %v738 = vld [vmem:[%s4 + $0x70] sm:$0xff]
    %v739 = vld [vmem:[%s4 + $0x78] sm:$0xff]
    %v740 = vld [vmem:[%s4 + $0x80] sm:$0xff]
    %v741 = vld [vmem:[%s4 + $0x88] sm:$0xff]
    %v742 = vld [vmem:[%s4 + $0x90] sm:$0xff]
    %v743 = vld [vmem:[%s4 + $0x98] sm:$0xff]
    %v744 = vld [vmem:[%s4 + $0xa0] sm:$0xff]
    %v745 = vld [vmem:[%s4 + $0xa8] sm:$0xff]
    %v746 = vld [vmem:[%s4 + $0xb0] sm:$0xff]
    %v747 = vld [vmem:[%s4 + $0xb8] sm:$0xff]
    %v748 = vld [vmem:[%s4 + $0xc0] sm:$0xff]
    %v749 = vld [vmem:[%s4 + $0xc8] sm:$0xff]
    %v750 = vld [vmem:[%s4 + $0xd0] sm:$0xff]
    %v751 = vld [vmem:[%s4 + $0xd8] sm:$0xff]
    %v752 = vld [vmem:[%s4 + $0xe0] sm:$0xff]
    %v753 = vld [vmem:[%s4 + $0xe8] sm:$0xff]
    %v754 = vld [vmem:[%s4 + $0xf0] sm:$0xff]
    %v755 = vld [vmem:[%s4 + $0xf8] sm:$0xff]
    %v756 = vld [vmem:[%s4 + $0x100] sm:$0xff]
    %v757 = vld [vmem:[%s4 + $0x108] sm:$0xff]
    %v758 = vld [vmem:[%s4 + $0x110] sm:$0xff]
    %v759 = vld [vmem:[%s4 + $0x118] sm:$0xff]
    %v760 = vld [vmem:[%s4 + $0x120] sm:$0xff]
    %v761 = vld [vmem:[%s4 + $0x128] sm:$0xff]
    %v762 = vld [vmem:[%s4 + $0x130] sm:$0xff]
    %v763 = vld [vmem:[%s4 + $0x138] sm:$0xff]
    %v764 = vld [vmem:[%s4 + $0x140] sm:$0xff]
    %v765 = vld [vmem:[%s4 + $0x148] sm:$0xff]
    %v766 = vld [vmem:[%s4 + $0x150] sm:$0xff]
    %v767 = vld [vmem:[%s4 + $0x158] sm:$0xff]
    %v768 = vld [vmem:[%s4 + $0x160] sm:$0xff]
    %v769 = vld [vmem:[%s4 + $0x168] sm:$0xff]
    %v770 = vld [vmem:[%s4 + $0x170] sm:$0xff]
    %v771 = vld [vmem:[%s4 + $0x178] sm:$0xff]
    %v772 = vld [vmem:[%s4 + $0x180] sm:$0xff]
    %v773 = vld [vmem:[%s4 + $0x188] sm:$0xff]
    %v774 = vld [vmem:[%s4 + $0x190] sm:$0xff]
    %v775 = vld [vmem:[%s4 + $0x198] sm:$0xff]
    %v776 = vld [vmem:[%s4 + $0x1a0] sm:$0xff]
    %v777 = vld [vmem:[%s4 + $0x1a8] sm:$0xff]
    %v778 = vld [vmem:[%s4 + $0x1b0] sm:$0xff]
    %v779 = vld [vmem:[%s4 + $0x1b8] sm:$0xff]
    %v780 = vld [vmem:[%s4 + $0x1c0] sm:$0xff]
    %v781 = vld [vmem:[%s4 + $0x1c8] sm:$0xff]
    %v782 = vld [vmem:[%s4 + $0x1d0] sm:$0xff]
    %v783 = vld [vmem:[%s4 + $0x1d8] sm:$0xff]
    %v784 = vld [vmem:[%s4 + $0x1e0] sm:$0xff]
    %v785 = vld [vmem:[%s4 + $0x1e8] sm:$0xff]
    %v786 = vld [vmem:[%s4 + $0x1f0] sm:$0xff]
    %v787 = vld [vmem:[%s4 + $0x1f8] sm:$0xff]
    %v788 = vld [vmem:[%s4 + $0x200] sm:$0xff]
    %v789 = vld [vmem:[%s4 + $0x208] sm:$0xff]
    %v790 = vld [vmem:[%s4 + $0x210] sm:$0xff]
    %v791 = vld [vmem:[%s4 + $0x218] sm:$0xff]
    %v792 = vld [vmem:[%s4 + $0x220] sm:$0xff]
    %v793 = vld [vmem:[%s4 + $0x228] sm:$0xff]
    %v794 = vld [vmem:[%s4 + $0x230] sm:$0xff]
    %v795 = vld [vmem:[%s4 + $0x238] sm:$0xff]
    %v796 = vld [vmem:[%s4 + $0x240] sm:$0xff]
    %v797 = vld [vmem:[%s4 + $0x248] sm:$0xff]
    %v798 = vld [vmem:[%s4 + $0x250] sm:$0xff]
    %v799 = vld [vmem:[%s4 + $0x258] sm:$0xff]
    %v800 = vld [vmem:[%s4 + $0x260] sm:$0xff]
    %v801 = vld [vmem:[%s4 + $0x268] sm:$0xff]
    %v802 = vld [vmem:[%s4 + $0x270] sm:$0xff]
    %v803 = vld [vmem:[%s4 + $0x278] sm:$0xff]
    %v804 = vld [vmem:[%s4 + $0x280] sm:$0xff]
    %v805 = vld [vmem:[%s4 + $0x288] sm:$0xff]
    %v806 = vld [vmem:[%s4 + $0x290] sm:$0xff]
    %v807 = vld [vmem:[%s4 + $0x298] sm:$0xff]
    %v808 = vld [vmem:[%s4 + $0x2a0] sm:$0xff]
    %v809 = vld [vmem:[%s4 + $0x2a8] sm:$0xff]
    %v810 = vld [vmem:[%s4 + $0x2b0] sm:$0xff]
    %v811 = vld [vmem:[%s4 + $0x2b8] sm:$0xff]
    %v812 = vld [vmem:[%s4 + $0x2c0] sm:$0xff]
    %v813 = vld [vmem:[%s4 + $0x2c8] sm:$0xff]
    %v814 = vld [vmem:[%s4 + $0x2d0] sm:$0xff]
    %v815 = vld [vmem:[%s4 + $0x2d8] sm:$0xff]
    %v816 = vld [vmem:[%s4 + $0x2e0] sm:$0xff]
    %v817 = vld [vmem:[%s4 + $0x2e8] sm:$0xff]
    %v818 = vld [vmem:[%s4 + $0x2f0] sm:$0xff]
    %v819 = vld [vmem:[%s4 + $0x2f8] sm:$0xff]
    %v820 = vld [vmem:[%s4 + $0x300] sm:$0xff]
    %v821 = vld [vmem:[%s4 + $0x308] sm:$0xff]
    %v822 = vld [vmem:[%s4 + $0x310] sm:$0xff]
    %v823 = vld [vmem:[%s4 + $0x318] sm:$0xff]
    %v824 = vld [vmem:[%s4 + $0x320] sm:$0xff]
    %v825 = vld [vmem:[%s4 + $0x328] sm:$0xff]
    %v826 = vld [vmem:[%s4 + $0x330] sm:$0xff]
    %v827 = vld [vmem:[%s4 + $0x338] sm:$0xff]
    %v828 = vld [vmem:[%s4 + $0x340] sm:$0xff]
    %v829 = vld [vmem:[%s4 + $0x348] sm:$0xff]
    %v830 = vld [vmem:[%s4 + $0x350] sm:$0xff]
    %v831 = vld [vmem:[%s4 + $0x358] sm:$0xff]
    %v832 = vld [vmem:[%s4 + $0x360] sm:$0xff]
    %v833 = vld [vmem:[%s4 + $0x368] sm:$0xff]
    %v834 = vld [vmem:[%s4 + $0x370] sm:$0xff]
    %v835 = vld [vmem:[%s4 + $0x378] sm:$0xff]
    %v836 = vld [vmem:[%s4 + $0x380] sm:$0xff]
    %v837 = vld [vmem:[%s4 + $0x388] sm:$0xff]
    %v838 = vld [vmem:[%s4 + $0x390] sm:$0xff]
    %v839 = vld [vmem:[%s4 + $0x398] sm:$0xff]
    %v840 = vld [vmem:[%s4 + $0x3a0] sm:$0xff]
    %v841 = vld [vmem:[%s4 + $0x3a8] sm:$0xff]
    %v842 = vld [vmem:[%s4 + $0x3b0] sm:$0xff]
    %v843 = vld [vmem:[%s4 + $0x3b8] sm:$0xff]
    %v844 = vld [vmem:[%s4 + $0x3c0] sm:$0xff]
    %v845 = vld [vmem:[%s4 + $0x3c8] sm:$0xff]
    %v846 = vld [vmem:[%s4 + $0x3d0] sm:$0xff]
    %v847 = vld [vmem:[%s4 + $0x3d8] sm:$0xff]
    %v848 = vld [vmem:[%s4 + $0x3e0] sm:$0xff]
    %v849 = vld [vmem:[%s4 + $0x3e8] sm:$0xff]
    %v850 = vld [vmem:[%s4 + $0x3f0] sm:$0xff]
    %v851 = vld [vmem:[%s4 + $0x3f8] sm:$0xff]
    %v852 = vld [vmem:[#allocation4] sm:$0x3]
    %v854 = vlaneseq
    %v855 = vshrl.u32 %v854, 7
    %v856 = vsub.s32 0, %v855
    %v857 = vrot.slane %v852, %v856
    %v858 = vlaneseq
    %v859 = vshrl.u32 %v858, 7
    %v860 = vsub.s32 1, %v859
    %v861 = vrot.slane %v852, %v860
    %864 = vmatprep.subr.mxu0 %v755
    %865 = vmatpush1.msra.mxu0 %v754
    %866 = vmatprep.subr.mxu0 %v753
    %867 = vmatpush1.msra.mxu0 %v752
    %868 = vmatprep.subr.mxu0 %v751
    %869 = vmatpush1.msra.mxu0 %v750
    %870 = vmatprep.subr.mxu0 %v749
    %871 = vmatpush1.msra.mxu0 %v748
    %872 = vmatprep.subr.mxu0 %v747
    %873 = vmatpush1.msra.mxu0 %v746
    %874 = vmatprep.subr.mxu0 %v745
    %875 = vmatpush1.msra.mxu0 %v744
    %876 = vmatprep.subr.mxu0 %v743
    %877 = vmatpush1.msra.mxu0 %v742
    %878 = vmatprep.subr.mxu0 %v741
    %879 = vmatpush1.msra.mxu0 %v740
    %880 = vmatprep.subr.mxu0 %v739
    %881 = vmatpush1.msra.mxu0 %v738
    %882 = vmatprep.subr.mxu0 %v737
    %883 = vmatpush1.msra.mxu0 %v736
    %884 = vmatprep.subr.mxu0 %v735
    %885 = vmatpush1.msra.mxu0 %v734
    %886 = vmatprep.subr.mxu0 %v733
    %887 = vmatpush1.msra.mxu0 %v732
    %888 = vmatprep.subr.mxu0 %v731
    %889 = vmatpush1.msra.mxu0 %v730
    %890 = vmatprep.subr.mxu0 %v729
    %891 = vmatpush1.msra.mxu0 %v728
    %892 = vmatprep.subr.mxu0 %v727
    %893 = vmatpush1.msra.mxu0 %v726
    %894 = vmatprep.subr.mxu0 %v725
    %895 = vmatpush1.msra.mxu0 %v724
    %896 = vmatprep.subr.mxu0 %v787
    %897 = vmatpush2.msra.mxu0 %v786
    %898 = vmatprep.subr.mxu0 %v785
    %899 = vmatpush2.msra.mxu0 %v784
    %900 = vmatprep.subr.mxu0 %v783
    %901 = vmatpush2.msra.mxu0 %v782
    %902 = vmatprep.subr.mxu0 %v781
    %903 = vmatpush2.msra.mxu0 %v780
    %904 = vmatprep.subr.mxu0 %v779
    %905 = vmatpush2.msra.mxu0 %v778
    %906 = vmatprep.subr.mxu0 %v777
    %907 = vmatpush2.msra.mxu0 %v776
    %908 = vmatprep.subr.mxu0 %v775
    %909 = vmatpush2.msra.mxu0 %v774
    %910 = vmatprep.subr.mxu0 %v773
    %911 = vmatpush2.msra.mxu0 %v772
    %912 = vmatprep.subr.mxu0 %v771
    %913 = vmatpush2.msra.mxu0 %v770
    %914 = vmatprep.subr.mxu0 %v769
    %915 = vmatpush2.msra.mxu0 %v768
    %916 = vmatprep.subr.mxu0 %v767
    %917 = vmatpush2.msra.mxu0 %v766
    %918 = vmatprep.subr.mxu0 %v765
    %919 = vmatpush2.msra.mxu0 %v764
    %920 = vmatprep.subr.mxu0 %v763
    %921 = vmatpush2.msra.mxu0 %v762
    %922 = vmatprep.subr.mxu0 %v761
    %923 = vmatpush2.msra.mxu0 %v760
    %924 = vmatprep.subr.mxu0 %v759
    %925 = vmatpush2.msra.mxu0 %v758
    %926 = vmatprep.subr.mxu0 %v757
    %927 = vmatpush2.msra.mxu0 %v756
    %928 = vmatprep.mubr.f32.mxu0 %v651
    %929 = vmatmul.mubr.f32.gmra.mxu0 %v649
    %v930 = vpop.f32.mrf.mxu0
    %v931 = vadd.f32 %v857, %v930
    %v932 = vpop.f32.mrf.mxu0
    %v933 = vadd.f32 %v861, %v932
    %934 = vdwg.mxu0
    %935 = vmatprep.subr.mxu0 %v819
    %936 = vmatpush1.msra.mxu0 %v818
    %937 = vmatprep.subr.mxu0 %v817
    %938 = vmatpush1.msra.mxu0 %v816
    %939 = vmatprep.subr.mxu0 %v815
    %940 = vmatpush1.msra.mxu0 %v814
    %941 = vmatprep.subr.mxu0 %v813
    %942 = vmatpush1.msra.mxu0 %v812
    %943 = vmatprep.subr.mxu0 %v811
    %944 = vmatpush1.msra.mxu0 %v810
    %945 = vmatprep.subr.mxu0 %v809
    %946 = vmatpush1.msra.mxu0 %v808
    %947 = vmatprep.subr.mxu0 %v807
    %948 = vmatpush1.msra.mxu0 %v806
    %949 = vmatprep.subr.mxu0 %v805
    %950 = vmatpush1.msra.mxu0 %v804
    %951 = vmatprep.subr.mxu0 %v803
    %952 = vmatpush1.msra.mxu0 %v802
    %953 = vmatprep.subr.mxu0 %v801
    %954 = vmatpush1.msra.mxu0 %v800
    %955 = vmatprep.subr.mxu0 %v799
    %956 = vmatpush1.msra.mxu0 %v798
    %957 = vmatprep.subr.mxu0 %v797
    %958 = vmatpush1.msra.mxu0 %v796
    %959 = vmatprep.subr.mxu0 %v795
    %960 = vmatpush1.msra.mxu0 %v794
    %961 = vmatprep.subr.mxu0 %v793
    %962 = vmatpush1.msra.mxu0 %v792
    %963 = vmatprep.subr.mxu0 %v791
    %964 = vmatpush1.msra.mxu0 %v790
    %965 = vmatprep.subr.mxu0 %v789
    %966 = vmatpush1.msra.mxu0 %v788
    %967 = vmatprep.subr.mxu0 %v851
    %968 = vmatpush2.msra.mxu0 %v850
    %969 = vmatprep.subr.mxu0 %v849
    %970 = vmatpush2.msra.mxu0 %v848
    %971 = vmatprep.subr.mxu0 %v847
    %972 = vmatpush2.msra.mxu0 %v846
    %973 = vmatprep.subr.mxu0 %v845
    %974 = vmatpush2.msra.mxu0 %v844
    %975 = vmatprep.subr.mxu0 %v843
    %976 = vmatpush2.msra.mxu0 %v842
    %977 = vmatprep.subr.mxu0 %v841
    %978 = vmatpush2.msra.mxu0 %v840
    %979 = vmatprep.subr.mxu0 %v839
    %980 = vmatpush2.msra.mxu0 %v838
    %981 = vmatprep.subr.mxu0 %v837
    %982 = vmatpush2.msra.mxu0 %v836
    %983 = vmatprep.subr.mxu0 %v835
    %984 = vmatpush2.msra.mxu0 %v834
    %985 = vmatprep.subr.mxu0 %v833
    %986 = vmatpush2.msra.mxu0 %v832
    %987 = vmatprep.subr.mxu0 %v831
    %988 = vmatpush2.msra.mxu0 %v830
    %989 = vmatprep.subr.mxu0 %v829
    %990 = vmatpush2.msra.mxu0 %v828
    %991 = vmatprep.subr.mxu0 %v827
    %992 = vmatpush2.msra.mxu0 %v826
    %993 = vmatprep.subr.mxu0 %v825
    %994 = vmatpush2.msra.mxu0 %v824
    %995 = vmatprep.subr.mxu0 %v823
    %996 = vmatpush2.msra.mxu0 %v822
    %997 = vmatprep.subr.mxu0 %v821
    %998 = vmatpush2.msra.mxu0 %v820
    %999 = vmatprep.mubr.f32.mxu0 %v722
    %1000 = vmatmul.mubr.f32.gmra.mxu0 %v720
    %v1001 = vpop.f32.mrf.mxu0
    %v1002 = vadd.f32 %v931, %v1001
    %v1003 = vpop.f32.mrf.mxu0
    %v1004 = vadd.f32 %v933, %v1003
    %1005 = vdwg.mxu0
    %v1006 = vmax.f32 %v1002, 0.0
    %v1007 = vmax.f32 %v1004, 0.0
    %v1008 = vld [vmem:[%s6] sm:$0xff]
    %v1009 = vld [vmem:[%s6 + $0x8] sm:$0xff]
    %v1010 = vld [vmem:[%s6 + $0x10] sm:$0xff]
    %v1011 = vld [vmem:[%s6 + $0x18] sm:$0xff]
    %v1012 = vld [vmem:[%s6 + $0x20] sm:$0xff]
    %v1013 = vld [vmem:[%s6 + $0x28] sm:$0xff]
    %v1014 = vld [vmem:[%s6 + $0x30] sm:$0xff]
    %v1015 = vld [vmem:[%s6 + $0x38] sm:$0xff]
    %v1016 = vld [vmem:[%s6 + $0x40] sm:$0xff]
    %v1017 = vld [vmem:[%s6 + $0x48] sm:$0xff]
    %v1018 = vld [vmem:[%s6 + $0x50] sm:$0xff]
    %v1019 = vld [vmem:[%s6 + $0x58] sm:$0xff]
    %v1020 = vld [vmem:[%s6 + $0x60] sm:$0xff]
    %v1021 = vld [vmem:[%s6 + $0x68] sm:$0xff]
    %v1022 = vld [vmem:[%s6 + $0x70] sm:$0xff]
    %v1023 = vld [vmem:[%s6 + $0x78] sm:$0xff]
    %v1024 = vld [vmem:[%s6 + $0x80] sm:$0xff]
    %v1025 = vld [vmem:[%s6 + $0x88] sm:$0xff]
    %v1026 = vld [vmem:[%s6 + $0x90] sm:$0xff]
    %v1027 = vld [vmem:[%s6 + $0x98] sm:$0xff]
    %v1028 = vld [vmem:[%s6 + $0xa0] sm:$0xff]
    %v1029 = vld [vmem:[%s6 + $0xa8] sm:$0xff]
    %v1030 = vld [vmem:[%s6 + $0xb0] sm:$0xff]
    %v1031 = vld [vmem:[%s6 + $0xb8] sm:$0xff]
    %v1032 = vld [vmem:[%s6 + $0xc0] sm:$0xff]
    %v1033 = vld [vmem:[%s6 + $0xc8] sm:$0xff]
    %v1034 = vld [vmem:[%s6 + $0xd0] sm:$0xff]
    %v1035 = vld [vmem:[%s6 + $0xd8] sm:$0xff]
    %v1036 = vld [vmem:[%s6 + $0xe0] sm:$0xff]
    %v1037 = vld [vmem:[%s6 + $0xe8] sm:$0xff]
    %v1038 = vld [vmem:[%s6 + $0xf0] sm:$0xff]
    %v1039 = vld [vmem:[%s6 + $0xf8] sm:$0xff]
    %v1040 = vld [vmem:[#allocation6] sm:$0x1]
    %v1042 = vlaneseq
    %v1043 = vshrl.u32 %v1042, 7
    %v1044 = vsub.s32 0, %v1043
    %v1045 = vrot.slane %v1040, %v1044
    %1047 = vmatprep.subr.mxu0 0.0
    %1048 = vmatpush1.msra.mxu0 %v1023
    %1049 = vmatprep.subr.mxu0 0.0
    %1050 = vmatpush1.msra.mxu0 %v1022
    %1051 = vmatprep.subr.mxu0 0.0
    %1052 = vmatpush1.msra.mxu0 %v1021
    %1053 = vmatprep.subr.mxu0 0.0
    %1054 = vmatpush1.msra.mxu0 %v1020
    %1055 = vmatprep.subr.mxu0 0.0
    %1056 = vmatpush1.msra.mxu0 %v1019
    %1057 = vmatprep.subr.mxu0 0.0
    %1058 = vmatpush1.msra.mxu0 %v1018
    %1059 = vmatprep.subr.mxu0 0.0
    %1060 = vmatpush1.msra.mxu0 %v1017
    %1061 = vmatprep.subr.mxu0 0.0
    %1062 = vmatpush1.msra.mxu0 %v1016
    %1063 = vmatprep.subr.mxu0 0.0
    %1064 = vmatpush1.msra.mxu0 %v1015
    %1065 = vmatprep.subr.mxu0 0.0
    %1066 = vmatpush1.msra.mxu0 %v1014
    %1067 = vmatprep.subr.mxu0 0.0
    %1068 = vmatpush1.msra.mxu0 %v1013
    %1069 = vmatprep.subr.mxu0 0.0
    %1070 = vmatpush1.msra.mxu0 %v1012
    %1071 = vmatprep.subr.mxu0 0.0
    %1072 = vmatpush1.msra.mxu0 %v1011
    %1073 = vmatprep.subr.mxu0 0.0
    %1074 = vmatpush1.msra.mxu0 %v1010
    %1075 = vmatprep.subr.mxu0 0.0
    %1076 = vmatpush1.msra.mxu0 %v1009
    %1077 = vmatprep.subr.mxu0 0.0
    %1078 = vmatpush1.msra.mxu0 %v1008
    %1079 = vmatprep.subr.mxu0 0.0
    %1080 = vmatpush2.msra.mxu0 %v1039
    %1081 = vmatprep.subr.mxu0 0.0
    %1082 = vmatpush2.msra.mxu0 %v1038
    %1083 = vmatprep.subr.mxu0 0.0
    %1084 = vmatpush2.msra.mxu0 %v1037
    %1085 = vmatprep.subr.mxu0 0.0
    %1086 = vmatpush2.msra.mxu0 %v1036
    %1087 = vmatprep.subr.mxu0 0.0
    %1088 = vmatpush2.msra.mxu0 %v1035
    %1089 = vmatprep.subr.mxu0 0.0
    %1090 = vmatpush2.msra.mxu0 %v1034
    %1091 = vmatprep.subr.mxu0 0.0
    %1092 = vmatpush2.msra.mxu0 %v1033
    %1093 = vmatprep.subr.mxu0 0.0
    %1094 = vmatpush2.msra.mxu0 %v1032
    %1095 = vmatprep.subr.mxu0 0.0
    %1096 = vmatpush2.msra.mxu0 %v1031
    %1097 = vmatprep.subr.mxu0 0.0
    %1098 = vmatpush2.msra.mxu0 %v1030
    %1099 = vmatprep.subr.mxu0 0.0
    %1100 = vmatpush2.msra.mxu0 %v1029
    %1101 = vmatprep.subr.mxu0 0.0
    %1102 = vmatpush2.msra.mxu0 %v1028
    %1103 = vmatprep.subr.mxu0 0.0
    %1104 = vmatpush2.msra.mxu0 %v1027
    %1105 = vmatprep.subr.mxu0 0.0
    %1106 = vmatpush2.msra.mxu0 %v1026
    %1107 = vmatprep.subr.mxu0 0.0
    %1108 = vmatpush2.msra.mxu0 %v1025
    %1109 = vmatprep.subr.mxu0 0.0
    %1110 = vmatpush2.msra.mxu0 %v1024
    %1111 = vmatprep.mubr.f32.mxu0 %v1007
    %1112 = vmatmul.mubr.f32.gmra.mxu0 %v1006
    %v1113 = vpop.f32.mrf.mxu0
    %v1114 = vadd.f32 %v1045, %v1113
    %v1115 = vpop.f32.mrf.mxu0
    %1116 = vdwg.mxu0
    %vm1117 = vcmask 1041408
    %v1118 = vsel %vm1117, %v1114, 0.0
    %v1119 = vrot.slane %v1118, 4
    %v1120 = vadd.f32 %v1118, %v1119
    %v1121 = vrot.slane %v1120, 2
    %v1122 = vadd.f32 %v1120, %v1121
    %v1123 = vrot.slane %v1122, 1
    %v1124 = vadd.f32 %v1122, %v1123
    %v1125 = vrcp.pop 2.0
    %v1126 = vmul.f32 %v1124, %v1125
    %v1127 = vsub.f32 %v1114, %v1126
    %v1128 = vmul.f32 %v1127, %v1127
    %v1129 = vsel %vm1117, %v1128, 0.0
    %v1130 = vrot.slane %v1129, 4
    %v1131 = vadd.f32 %v1129, %v1130
    %v1132 = vrot.slane %v1131, 2
    %v1133 = vadd.f32 %v1131, %v1132
    %v1134 = vrot.slane %v1133, 1
    %v1135 = vadd.f32 %v1133, %v1134
    %v1136 = vmul.f32 %v1135, %v1125
    %v1137 = vadd.f32 %v1136, 1e-05
    %v1138 = vrsqrt.pop %v1137
    %v1139 = vmul.f32 %v1127, %v1138
    %v1140 = vld [vmem:[#allocation7] sm:$0x1]
    %v1142 = vlaneseq
    %v1143 = vshrl.u32 %v1142, 7
    %v1144 = vsub.s32 0, %v1143
    %v1145 = vrot.slane %v1140, %v1144
    %v1147 = vmul.f32 %v1139, %v1145
    %v1148 = vld [vmem:[#allocation9] sm:$0x1]
    %v1150 = vlaneseq
    %v1151 = vshrl.u32 %v1150, 7
    %v1152 = vsub.s32 0, %v1151
    %v1153 = vrot.slane %v1148, %v1152
    %v1155 = vadd.f32 %v1147, %v1153
    %v1156 = vmax.f32 %v1155, 0.0
    %1157 = vst [vmem:[%s10] sm:$0x3] %v1156
    // Predicated region
    $region62: #{network_forward.4} parent=1 // pred_check
      _
    $region63: #{network_forward.4} parent=1 // pred_check_branch
      %1159 = sbr.rel (0) target = $region65
    $region64: #{network_forward.4} parent=1 // pred_region
      _
    $region65: #{network_forward.4} parent=1 // pred_fallthru
      _
    // Predicated region
    $region66: #{network_forward.4} parent=1 // pred_check
      _
    $region67: #{network_forward.4} parent=1 // pred_check_branch
      %1161 = sbr.rel (0) target = $region69
    $region68: #{network_forward.4} parent=1 // pred_region
      _
    $region69: #{network_forward.4} parent=1 // pred_fallthru
      _
    %1162 = vsyncpa [#allocation3], 1
    %1163 = vsyncpa [#allocation5], 1
    %1164 = vsyncpa [#allocation8], 1

// kernel: network_forward.5
$region0: #{network_forward.5}
  #allocation0 [shape = 'u32[]', space=smem, size = 0x4, offset = 0x4, fixed_abs, tag = 'smem constant byte address 0x4 - core index']
  #allocation1 [shape = 'u32[144,128]{1,0:T(1,128)}', space=vmem, size = 0x12000, scoped, tag = 'internal scratch']
  %s0 = inlined_call_operand.smem [shape: u32[42], index: -1, kind: input, shape index: {}]
  %s1 = sld [smem:[%s0]]
  %s2 = scalar_lea.smem %s0, 1
  %s3 = sld [smem:[%s2]]
  %s4 = scalar_lea.smem %s0, 2
  %s5 = sld [smem:[%s4]]
  %s6 = scalar_lea.smem %s0, 3
  %s7 = sld [smem:[%s6]]
  %s8 = scalar_lea.smem %s0, 4
  %s9 = sld [smem:[%s8]]
  %s10 = scalar_lea.smem %s0, 5
  %s11 = sld [smem:[%s10]]
  %s12 = scalar_lea.smem %s0, 6
  %s13 = sld [smem:[%s12]]
  %s14 = scalar_lea.smem %s0, 7
  %s15 = sld [smem:[%s14]]
  %s16 = scalar_lea.smem %s0, 8
  %s17 = sld [smem:[%s16]]
  %s18 = scalar_lea.smem %s0, 9
  %s19 = sld [smem:[%s18]]
  %s20 = scalar_lea.smem %s0, 10
  %s21 = sld [smem:[%s20]]
  %s22 = scalar_lea.smem %s0, 11
  %s23 = sld [smem:[%s22]]
  %s24 = scalar_lea.smem %s0, 12
  %s25 = sld [smem:[%s24]]
  %s26 = scalar_lea.smem %s0, 13
  %s27 = sld [smem:[%s26]]
  %s28 = scalar_lea.smem %s0, 14
  %s29 = sld [smem:[%s28]]
  %s30 = scalar_lea.smem %s0, 15
  %s31 = sld [smem:[%s30]]
  %s32 = scalar_lea.smem %s0, 16
  %s33 = sld [smem:[%s32]]
  %s34 = scalar_lea.smem %s0, 17
  %s35 = sld [smem:[%s34]]
  %s36 = scalar_lea.smem %s0, 18
  %s37 = sld [smem:[%s36]]
  %s38 = scalar_lea.smem %s0, 19
  %s39 = sld [smem:[%s38]]
  %s40 = scalar_lea.smem %s0, 20
  %s41 = sld [smem:[%s40]]
  %s42 = scalar_lea.smem %s0, 21
  %s43 = sld [smem:[%s42]]
  %s44 = scalar_lea.smem %s0, 22
  %s45 = sld [smem:[%s44]]
  %s46 = scalar_lea.smem %s0, 23
  %s47 = sld [smem:[%s46]]
  %s48 = scalar_lea.smem %s0, 24
  %s49 = sld [smem:[%s48]]
  %s50 = scalar_lea.smem %s0, 25
  %s51 = sld [smem:[%s50]]
  %s52 = scalar_lea.smem %s0, 26
  %s53 = sld [smem:[%s52]]
  %s54 = scalar_lea.smem %s0, 27
  %s55 = sld [smem:[%s54]]
  %s56 = scalar_lea.smem %s0, 28
  %s57 = sld [smem:[%s56]]
  %s58 = scalar_lea.smem %s0, 29
  %s59 = sld [smem:[%s58]]
  %s60 = scalar_lea.smem %s0, 30
  %s61 = sld [smem:[%s60]]
  %s62 = scalar_lea.smem %s0, 31
  %s63 = sld [smem:[%s62]]
  %s64 = scalar_lea.smem %s0, 32
  %s65 = sld [smem:[%s64]]
  %s66 = scalar_lea.smem %s0, 33
  %s67 = sld [smem:[%s66]]
  %s68 = scalar_lea.smem %s0, 34
  %s69 = sld [smem:[%s68]]
  %s70 = scalar_lea.smem %s0, 35
  %s71 = sld [smem:[%s70]]
  %s72 = scalar_lea.smem %s0, 36
  %s73 = sld [smem:[%s72]]
  %s74 = scalar_lea.smem %s0, 37
  %s75 = sld [smem:[%s74]]
  %s76 = scalar_lea.smem %s0, 38
  %s77 = sld [smem:[%s76]]
  %s78 = scalar_lea.smem %s0, 39
  %s79 = sld [smem:[%s78]]
  %s80 = scalar_lea.smem %s0, 40
  %s81 = sld [smem:[%s80]]
  %s82 = scalar_lea.smem %s0, 41
  %s83 = sld [smem:[%s82]]
  %84 = xla_tuple %s77, %s79, %s81, %s83
  %s85 = sld [smem:[#allocation0]]
  $region254: #{network_forward.5} parent=0
    _
  %s87 = ssub.s32 1, %s85
  %s88 = scalar_select 0, %s87, %s85
  $region1: #{network_forward.5} parent=0
    #allocation2 [shape = 'u8[2048]{0}', space=vmem, size = 0x800, scoped, tag = 'input window, operand 6, single buffered']
    #allocation3 [shape = 's32[1]{0}', space=sflag, size = 0x4, scoped, tag = 'scoped memory for network_forward.5']
    #allocation4 [shape = 'u8[512]{0}', space=vmem, size = 0x400, scoped, tag = 'input window, operand 7, single buffered']
    #allocation5 [shape = 's32[1]{0}', space=sflag, size = 0x4, scoped, tag = 'scoped memory for network_forward.5']
    #allocation6 [shape = 'u8[512]{0}', space=vmem, size = 0x400, scoped, tag = 'input window, operand 9, single buffered']
    #allocation7 [shape = 'u8[512]{0}', space=vmem, size = 0x400, scoped, tag = 'input window, operand 11, single buffered']
    #allocation8 [shape = 's32[1]{0}', space=sflag, size = 0x4, scoped, tag = 'scoped memory for network_forward.5']
    #allocation9 [shape = 'u8[512]{0}', space=vmem, size = 0x400, scoped, tag = 'input window, operand 13, single buffered']
    #allocation10 [shape = 'u8[512]{0}', space=vmem, size = 0x400, scoped, tag = 'input window, operand 15, single buffered']
    #allocation11 [shape = 's32[1]{0}', space=sflag, size = 0x4, scoped, tag = 'scoped memory for network_forward.5']
    #allocation12 [shape = 'u8[512]{0}', space=vmem, size = 0x400, scoped, tag = 'input window, operand 17, single buffered']
    #allocation13 [shape = 'u8[512]{0}', space=vmem, size = 0x400, scoped, tag = 'input window, operand 19, single buffered']
    #allocation14 [shape = 's32[1]{0}', space=sflag, size = 0x4, scoped, tag = 'scoped memory for network_forward.5']
    #allocation15 [shape = 'u8[409600]{0}', space=vmem, size = 0x64000, scoped, tag = 'input window, operand 20, single buffered']
    #allocation16 [shape = 'u8[512]{0}', space=vmem, size = 0x400, scoped, tag = 'input window, operand 21, single buffered']
    #allocation17 [shape = 's32[1]{0}', space=sflag, size = 0x4, scoped, tag = 'scoped memory for network_forward.5']
    #allocation18 [shape = 'u8[512]{0}', space=vmem, size = 0x400, scoped, tag = 'input window, operand 23, single buffered']
    #allocation19 [shape = 'u8[512]{0}', space=vmem, size = 0x400, scoped, tag = 'input window, operand 25, single buffered']
    #allocation20 [shape = 's32[1]{0}', space=sflag, size = 0x4, scoped, tag = 'scoped memory for network_forward.5']
    #allocation21 [shape = 'u8[512]{0}', space=vmem, size = 0x400, scoped, tag = 'input window, operand 27, single buffered']
    #allocation22 [shape = 'u8[512]{0}', space=vmem, size = 0x400, scoped, tag = 'input window, operand 29, single buffered']
    #allocation23 [shape = 's32[1]{0}', space=sflag, size = 0x4, scoped, tag = 'scoped memory for network_forward.5']
    #allocation24 [shape = 'u8[512]{0}', space=vmem, size = 0x400, scoped, tag = 'input window, operand 31, single buffered']
    #allocation25 [shape = 'u8[512]{0}', space=vmem, size = 0x400, scoped, tag = 'input window, operand 33, single buffered']
    #allocation26 [shape = 's32[1]{0}', space=sflag, size = 0x4, scoped, tag = 'scoped memory for network_forward.5']
    #allocation27 [shape = 'u8[512]{0}', space=vmem, size = 0x400, scoped, tag = 'input window, operand 35, single buffered']
    %89 = vsyncpa [#allocation3], 0
    %90 = vsyncpa [#allocation5], 0
    %91 = vsyncpa [#allocation8], 0
    %92 = vsyncpa [#allocation11], 0
    %93 = vsyncpa [#allocation14], 0
    %94 = vsyncpa [#allocation17], 0
    %95 = vsyncpa [#allocation20], 0
    %96 = vsyncpa [#allocation23], 0
    %97 = vsyncpa [#allocation26], 0
    // Predicated region
    $region2: #{network_forward.5} parent=1 // pred_check
      _
    $region3: #{network_forward.5} parent=1 // pred_check_branch
      %99 = sbr.rel (0) target = $region5
    $region4: #{network_forward.5} parent=1 // pred_region
      _
    $region5: #{network_forward.5} parent=1 // pred_fallthru
      _
    // Predicated region
    $region6: #{network_forward.5} parent=1 // pred_check
      _
    $region7: #{network_forward.5} parent=1 // pred_check_branch
      %101 = sbr.rel (0) target = $region9
    $region8: #{network_forward.5} parent=1 // pred_region
      _
    $region9: #{network_forward.5} parent=1 // pred_fallthru
      _
    // Predicated region
    $region10: #{network_forward.5} parent=1 // pred_check
      _
    $region11: #{network_forward.5} parent=1 // pred_check_branch
      %103 = sbr.rel (0) target = $region13
    $region12: #{network_forward.5} parent=1 // pred_region
      _
    $region13: #{network_forward.5} parent=1 // pred_fallthru
      _
    // Predicated region
    $region14: #{network_forward.5} parent=1 // pred_check
      _
    $region15: #{network_forward.5} parent=1 // pred_check_branch
      %105 = sbr.rel (0) target = $region17
    $region16: #{network_forward.5} parent=1 // pred_region
      _
    $region17: #{network_forward.5} parent=1 // pred_fallthru
      _
    // Predicated region
    $region18: #{network_forward.5} parent=1 // pred_check
      _
    $region19: #{network_forward.5} parent=1 // pred_check_branch
      %107 = sbr.rel (0) target = $region21
    $region20: #{network_forward.5} parent=1 // pred_region
      _
    $region21: #{network_forward.5} parent=1 // pred_fallthru
      _
    // Predicated region
    $region22: #{network_forward.5} parent=1 // pred_check
      _
    $region23: #{network_forward.5} parent=1 // pred_check_branch
      %109 = sbr.rel (0) target = $region25
    $region24: #{network_forward.5} parent=1 // pred_region
      _
    $region25: #{network_forward.5} parent=1 // pred_fallthru
      _
    // Predicated region
    $region26: #{network_forward.5} parent=1 // pred_check
      _
    $region27: #{network_forward.5} parent=1 // pred_check_branch
      %111 = sbr.rel (0) target = $region29
    $region28: #{network_forward.5} parent=1 // pred_region
      %s113 = ssub.s32 64, 64
      %114 = vsyncadd [#allocation3], %s113
      %s116 = sshll.u32 [#allocation2], 4
      %s117 = int_to_ptr.vmem [resolvable:$true] %s116
      %119 = dma.hbm_to_vmem [thread:$0]  %s13, 64, %s117, [#allocation3]
    $region29: #{network_forward.5} parent=1 // pred_fallthru
      _
    // Predicated region
    $region30: #{network_forward.5} parent=1 // pred_check
      _
    $region31: #{network_forward.5} parent=1 // pred_check_branch
      %121 = sbr.rel (0) target = $region33
    $region32: #{network_forward.5} parent=1 // pred_region
      %s123 = ssub.s32 16, 16
      %124 = vsyncadd [#allocation5], %s123
      %s126 = sshll.u32 [#allocation4], 4
      %s127 = int_to_ptr.vmem [resolvable:$true] %s126
      %129 = dma.hbm_to_vmem [thread:$0]  %s15, 16, %s127, [#allocation5]
    $region33: #{network_forward.5} parent=1 // pred_fallthru
      _
    // Predicated region
    $region34: #{network_forward.5} parent=1 // pred_check
      _
    $region35: #{network_forward.5} parent=1 // pred_check_branch
      %131 = sbr.rel (0) target = $region37
    $region36: #{network_forward.5} parent=1 // pred_region
      _
    $region37: #{network_forward.5} parent=1 // pred_fallthru
      _
    // Predicated region
    $region38: #{network_forward.5} parent=1 // pred_check
      _
    $region39: #{network_forward.5} parent=1 // pred_check_branch
      %133 = sbr.rel (0) target = $region41
    $region40: #{network_forward.5} parent=1 // pred_region
      %s135 = ssub.s32 16, 16
      %136 = vsyncadd [#allocation5], %s135
      %s138 = sshll.u32 [#allocation6], 4
      %s139 = int_to_ptr.vmem [resolvable:$true] %s138
      %141 = dma.hbm_to_vmem [thread:$0]  %s19, 16, %s139, [#allocation5]
    $region41: #{network_forward.5} parent=1 // pred_fallthru
      _
    // Predicated region
    $region42: #{network_forward.5} parent=1 // pred_check
      _
    $region43: #{network_forward.5} parent=1 // pred_check_branch
      %143 = sbr.rel (0) target = $region45
    $region44: #{network_forward.5} parent=1 // pred_region
      _
    $region45: #{network_forward.5} parent=1 // pred_fallthru
      _
    // Predicated region
    $region46: #{network_forward.5} parent=1 // pred_check
      _
    $region47: #{network_forward.5} parent=1 // pred_check_branch
      %145 = sbr.rel (0) target = $region49
    $region48: #{network_forward.5} parent=1 // pred_region
      %s147 = ssub.s32 16, 16
      %148 = vsyncadd [#allocation8], %s147
      %s150 = sshll.u32 [#allocation7], 4
      %s151 = int_to_ptr.vmem [resolvable:$true] %s150
      %153 = dma.hbm_to_vmem [thread:$0]  %s23, 16, %s151, [#allocation8]
    $region49: #{network_forward.5} parent=1 // pred_fallthru
      _
    // Predicated region
    $region50: #{network_forward.5} parent=1 // pred_check
      _
    $region51: #{network_forward.5} parent=1 // pred_check_branch
      %155 = sbr.rel (0) target = $region53
    $region52: #{network_forward.5} parent=1 // pred_region
      _
    $region53: #{network_forward.5} parent=1 // pred_fallthru
      _
    // Predicated region
    $region54: #{network_forward.5} parent=1 // pred_check
      _
    $region55: #{network_forward.5} parent=1 // pred_check_branch
      %157 = sbr.rel (0) target = $region57
    $region56: #{network_forward.5} parent=1 // pred_region
      %s159 = ssub.s32 16, 16
      %160 = vsyncadd [#allocation8], %s159
      %s162 = sshll.u32 [#allocation9], 4
      %s163 = int_to_ptr.vmem [resolvable:$true] %s162
      %165 = dma.hbm_to_vmem [thread:$0]  %s27, 16, %s163, [#allocation8]
    $region57: #{network_forward.5} parent=1 // pred_fallthru
      _
    // Predicated region
    $region58: #{network_forward.5} parent=1 // pred_check
      _
    $region59: #{network_forward.5} parent=1 // pred_check_branch
      %167 = sbr.rel (0) target = $region61
    $region60: #{network_forward.5} parent=1 // pred_region
      _
    $region61: #{network_forward.5} parent=1 // pred_fallthru
      _
    // Predicated region
    $region62: #{network_forward.5} parent=1 // pred_check
      _
    $region63: #{network_forward.5} parent=1 // pred_check_branch
      %169 = sbr.rel (0) target = $region65
    $region64: #{network_forward.5} parent=1 // pred_region
      %s171 = ssub.s32 16, 16
      %172 = vsyncadd [#allocation11], %s171
      %s174 = sshll.u32 [#allocation10], 4
      %s175 = int_to_ptr.vmem [resolvable:$true] %s174
      %177 = dma.hbm_to_vmem [thread:$0]  %s31, 16, %s175, [#allocation11]
    $region65: #{network_forward.5} parent=1 // pred_fallthru
      _
    // Predicated region
    $region66: #{network_forward.5} parent=1 // pred_check
      _
    $region67: #{network_forward.5} parent=1 // pred_check_branch
      %179 = sbr.rel (0) target = $region69
    $region68: #{network_forward.5} parent=1 // pred_region
      _
    $region69: #{network_forward.5} parent=1 // pred_fallthru
      _
    // Predicated region
    $region70: #{network_forward.5} parent=1 // pred_check
      _
    $region71: #{network_forward.5} parent=1 // pred_check_branch
      %181 = sbr.rel (0) target = $region73
    $region72: #{network_forward.5} parent=1 // pred_region
      %s183 = ssub.s32 16, 16
      %184 = vsyncadd [#allocation11], %s183
      %s186 = sshll.u32 [#allocation12], 4
      %s187 = int_to_ptr.vmem [resolvable:$true] %s186
      %189 = dma.hbm_to_vmem [thread:$0]  %s35, 16, %s187, [#allocation11]
    $region73: #{network_forward.5} parent=1 // pred_fallthru
      _
    // Predicated region
    $region74: #{network_forward.5} parent=1 // pred_check
      _
    $region75: #{network_forward.5} parent=1 // pred_check_branch
      %191 = sbr.rel (0) target = $region77
    $region76: #{network_forward.5} parent=1 // pred_region
      _
    $region77: #{network_forward.5} parent=1 // pred_fallthru
      _
    // Predicated region
    $region78: #{network_forward.5} parent=1 // pred_check
      _
    $region79: #{network_forward.5} parent=1 // pred_check_branch
      %193 = sbr.rel (0) target = $region81
    $region80: #{network_forward.5} parent=1 // pred_region
      %s195 = ssub.s32 16, 16
      %196 = vsyncadd [#allocation14], %s195
      %s198 = sshll.u32 [#allocation13], 4
      %s199 = int_to_ptr.vmem [resolvable:$true] %s198
      %201 = dma.hbm_to_vmem [thread:$0]  %s39, 16, %s199, [#allocation14]
    $region81: #{network_forward.5} parent=1 // pred_fallthru
      _
    // Predicated region
    $region82: #{network_forward.5} parent=1 // pred_check
      _
    $region83: #{network_forward.5} parent=1 // pred_check_branch
      %203 = sbr.rel (0) target = $region85
    $region84: #{network_forward.5} parent=1 // pred_region
      %s205 = ssub.s32 12800, 12800
      %206 = vsyncadd [#allocation14], %s205
      %s207 = sshll.u32 [#allocation15], 4
      %s208 = int_to_ptr.vmem [resolvable:$true] %s207
      %213 = dma.hbm_to_vmem [thread:$0]  %s41, 12800, %s208, [#allocation14], 128, 128, 8
    $region85: #{network_forward.5} parent=1 // pred_fallthru
      _
    // Predicated region
    $region86: #{network_forward.5} parent=1 // pred_check
      _
    $region87: #{network_forward.5} parent=1 // pred_check_branch
      %215 = sbr.rel (0) target = $region89
    $region88: #{network_forward.5} parent=1 // pred_region
      %s217 = ssub.s32 16, 16
      %218 = vsyncadd [#allocation17], %s217
      %s220 = sshll.u32 [#allocation16], 4
      %s221 = int_to_ptr.vmem [resolvable:$true] %s220
      %223 = dma.hbm_to_vmem [thread:$0]  %s43, 16, %s221, [#allocation17]
    $region89: #{network_forward.5} parent=1 // pred_fallthru
      _
    // Predicated region
    $region90: #{network_forward.5} parent=1 // pred_check
      _
    $region91: #{network_forward.5} parent=1 // pred_check_branch
      %225 = sbr.rel (0) target = $region93
    $region92: #{network_forward.5} parent=1 // pred_region
      _
    $region93: #{network_forward.5} parent=1 // pred_fallthru
      _
    // Predicated region
    $region94: #{network_forward.5} parent=1 // pred_check
      _
    $region95: #{network_forward.5} parent=1 // pred_check_branch
      %227 = sbr.rel (0) target = $region97
    $region96: #{network_forward.5} parent=1 // pred_region
      %s229 = ssub.s32 16, 16
      %230 = vsyncadd [#allocation17], %s229
      %s232 = sshll.u32 [#allocation18], 4
      %s233 = int_to_ptr.vmem [resolvable:$true] %s232
      %235 = dma.hbm_to_vmem [thread:$0]  %s47, 16, %s233, [#allocation17]
    $region97: #{network_forward.5} parent=1 // pred_fallthru
      _
    // Predicated region
    $region98: #{network_forward.5} parent=1 // pred_check
      _
    $region99: #{network_forward.5} parent=1 // pred_check_branch
      %237 = sbr.rel (0) target = $region101
    $region100: #{network_forward.5} parent=1 // pred_region
      _
    $region101: #{network_forward.5} parent=1 // pred_fallthru
      _
    // Predicated region
    $region102: #{network_forward.5} parent=1 // pred_check
      _
    $region103: #{network_forward.5} parent=1 // pred_check_branch
      %239 = sbr.rel (0) target = $region105
    $region104: #{network_forward.5} parent=1 // pred_region
      %s241 = ssub.s32 16, 16
      %242 = vsyncadd [#allocation20], %s241
      %s244 = sshll.u32 [#allocation19], 4
      %s245 = int_to_ptr.vmem [resolvable:$true] %s244
      %247 = dma.hbm_to_vmem [thread:$0]  %s51, 16, %s245, [#allocation20]
    $region105: #{network_forward.5} parent=1 // pred_fallthru
      _
    // Predicated region
    $region106: #{network_forward.5} parent=1 // pred_check
      _
    $region107: #{network_forward.5} parent=1 // pred_check_branch
      %249 = sbr.rel (0) target = $region109
    $region108: #{network_forward.5} parent=1 // pred_region
      _
    $region109: #{network_forward.5} parent=1 // pred_fallthru
      _
    // Predicated region
    $region110: #{network_forward.5} parent=1 // pred_check
      _
    $region111: #{network_forward.5} parent=1 // pred_check_branch
      %251 = sbr.rel (0) target = $region113
    $region112: #{network_forward.5} parent=1 // pred_region
      %s253 = ssub.s32 16, 16
      %254 = vsyncadd [#allocation20], %s253
      %s256 = sshll.u32 [#allocation21], 4
      %s257 = int_to_ptr.vmem [resolvable:$true] %s256
      %259 = dma.hbm_to_vmem [thread:$0]  %s55, 16, %s257, [#allocation20]
    $region113: #{network_forward.5} parent=1 // pred_fallthru
      _
    // Predicated region
    $region114: #{network_forward.5} parent=1 // pred_check
      _
    $region115: #{network_forward.5} parent=1 // pred_check_branch
      %261 = sbr.rel (0) target = $region117
    $region116: #{network_forward.5} parent=1 // pred_region
      _
    $region117: #{network_forward.5} parent=1 // pred_fallthru
      _
    // Predicated region
    $region118: #{network_forward.5} parent=1 // pred_check
      _
    $region119: #{network_forward.5} parent=1 // pred_check_branch
      %263 = sbr.rel (0) target = $region121
    $region120: #{network_forward.5} parent=1 // pred_region
      %s265 = ssub.s32 16, 16
      %266 = vsyncadd [#allocation23], %s265
      %s268 = sshll.u32 [#allocation22], 4
      %s269 = int_to_ptr.vmem [resolvable:$true] %s268
      %271 = dma.hbm_to_vmem [thread:$0]  %s59, 16, %s269, [#allocation23]
    $region121: #{network_forward.5} parent=1 // pred_fallthru
      _
    // Predicated region
    $region122: #{network_forward.5} parent=1 // pred_check
      _
    $region123: #{network_forward.5} parent=1 // pred_check_branch
      %273 = sbr.rel (0) target = $region125
    $region124: #{network_forward.5} parent=1 // pred_region
      _
    $region125: #{network_forward.5} parent=1 // pred_fallthru
      _
    // Predicated region
    $region126: #{network_forward.5} parent=1 // pred_check
      _
    $region127: #{network_forward.5} parent=1 // pred_check_branch
      %275 = sbr.rel (0) target = $region129
    $region128: #{network_forward.5} parent=1 // pred_region
      %s277 = ssub.s32 16, 16
      %278 = vsyncadd [#allocation23], %s277
      %s280 = sshll.u32 [#allocation24], 4
      %s281 = int_to_ptr.vmem [resolvable:$true] %s280
      %283 = dma.hbm_to_vmem [thread:$0]  %s63, 16, %s281, [#allocation23]
    $region129: #{network_forward.5} parent=1 // pred_fallthru
      _
    // Predicated region
    $region130: #{network_forward.5} parent=1 // pred_check
      _
    $region131: #{network_forward.5} parent=1 // pred_check_branch
      %285 = sbr.rel (0) target = $region133
    $region132: #{network_forward.5} parent=1 // pred_region
      _
    $region133: #{network_forward.5} parent=1 // pred_fallthru
      _
    // Predicated region
    $region134: #{network_forward.5} parent=1 // pred_check
      _
    $region135: #{network_forward.5} parent=1 // pred_check_branch
      %287 = sbr.rel (0) target = $region137
    $region136: #{network_forward.5} parent=1 // pred_region
      %s289 = ssub.s32 16, 16
      %290 = vsyncadd [#allocation26], %s289
      %s292 = sshll.u32 [#allocation25], 4
      %s293 = int_to_ptr.vmem [resolvable:$true] %s292
      %295 = dma.hbm_to_vmem [thread:$0]  %s67, 16, %s293, [#allocation26]
    $region137: #{network_forward.5} parent=1 // pred_fallthru
      _
    // Predicated region
    $region138: #{network_forward.5} parent=1 // pred_check
      _
    $region139: #{network_forward.5} parent=1 // pred_check_branch
      %297 = sbr.rel (0) target = $region141
    $region140: #{network_forward.5} parent=1 // pred_region
      _
    $region141: #{network_forward.5} parent=1 // pred_fallthru
      _
    // Predicated region
    $region142: #{network_forward.5} parent=1 // pred_check
      _
    $region143: #{network_forward.5} parent=1 // pred_check_branch
      %299 = sbr.rel (0) target = $region145
    $region144: #{network_forward.5} parent=1 // pred_region
      %s301 = ssub.s32 16, 16
      %302 = vsyncadd [#allocation26], %s301
      %s304 = sshll.u32 [#allocation27], 4
      %s305 = int_to_ptr.vmem [resolvable:$true] %s304
      %307 = dma.hbm_to_vmem [thread:$0]  %s71, 16, %s305, [#allocation26]
    $region145: #{network_forward.5} parent=1 // pred_fallthru
      _
    // Predicated region
    $region146: #{network_forward.5} parent=1 // pred_check
      _
    $region147: #{network_forward.5} parent=1 // pred_check_branch
      %309 = sbr.rel (0) target = $region149
    $region148: #{network_forward.5} parent=1 // pred_region
      _
    $region149: #{network_forward.5} parent=1 // pred_fallthru
      _
    // Predicated region
    $region150: #{network_forward.5} parent=1 // pred_check
      _
    $region151: #{network_forward.5} parent=1 // pred_check_branch
      %311 = sbr.rel (0) target = $region153
    $region152: #{network_forward.5} parent=1 // pred_region
      _
    $region153: #{network_forward.5} parent=1 // pred_fallthru
      _
    // Predicated region
    $region154: #{network_forward.5} parent=1 // pred_check
      _
    $region155: #{network_forward.5} parent=1 // pred_check_branch
      %313 = sbr.rel (0) target = $region157
    $region156: #{network_forward.5} parent=1 // pred_region
      %314 = dma.done [#allocation3], 64
    $region157: #{network_forward.5} parent=1 // pred_fallthru
      _
    // Predicated region
    $region158: #{network_forward.5} parent=1 // pred_check
      _
    $region159: #{network_forward.5} parent=1 // pred_check_branch
      %316 = sbr.rel (0) target = $region161
    $region160: #{network_forward.5} parent=1 // pred_region
      %317 = dma.done [#allocation5], 16
    $region161: #{network_forward.5} parent=1 // pred_fallthru
      _
    // Predicated region
    $region162: #{network_forward.5} parent=1 // pred_check
      _
    $region163: #{network_forward.5} parent=1 // pred_check_branch
      %319 = sbr.rel (0) target = $region165
    $region164: #{network_forward.5} parent=1 // pred_region
      %320 = dma.done [#allocation5], 16
    $region165: #{network_forward.5} parent=1 // pred_fallthru
      _
    // Predicated region
    $region166: #{network_forward.5} parent=1 // pred_check
      _
    $region167: #{network_forward.5} parent=1 // pred_check_branch
      %322 = sbr.rel (0) target = $region169
    $region168: #{network_forward.5} parent=1 // pred_region
      %323 = dma.done [#allocation8], 16
    $region169: #{network_forward.5} parent=1 // pred_fallthru
      _
    // Predicated region
    $region170: #{network_forward.5} parent=1 // pred_check
      _
    $region171: #{network_forward.5} parent=1 // pred_check_branch
      %325 = sbr.rel (0) target = $region173
    $region172: #{network_forward.5} parent=1 // pred_region
      %326 = dma.done [#allocation8], 16
    $region173: #{network_forward.5} parent=1 // pred_fallthru
      _
    // Predicated region
    $region174: #{network_forward.5} parent=1 // pred_check
      _
    $region175: #{network_forward.5} parent=1 // pred_check_branch
      %328 = sbr.rel (0) target = $region177
    $region176: #{network_forward.5} parent=1 // pred_region
      %329 = dma.done [#allocation11], 16
    $region177: #{network_forward.5} parent=1 // pred_fallthru
      _
    // Predicated region
    $region178: #{network_forward.5} parent=1 // pred_check
      _
    $region179: #{network_forward.5} parent=1 // pred_check_branch
      %331 = sbr.rel (0) target = $region181
    $region180: #{network_forward.5} parent=1 // pred_region
      %332 = dma.done [#allocation11], 16
    $region181: #{network_forward.5} parent=1 // pred_fallthru
      _
    // Predicated region
    $region182: #{network_forward.5} parent=1 // pred_check
      _
    $region183: #{network_forward.5} parent=1 // pred_check_branch
      %334 = sbr.rel (0) target = $region185
    $region184: #{network_forward.5} parent=1 // pred_region
      %335 = dma.done [#allocation14], 16
    $region185: #{network_forward.5} parent=1 // pred_fallthru
      _
    // Predicated region
    $region186: #{network_forward.5} parent=1 // pred_check
      _
    $region187: #{network_forward.5} parent=1 // pred_check_branch
      %337 = sbr.rel (0) target = $region189
    $region188: #{network_forward.5} parent=1 // pred_region
      %338 = dma.done [#allocation14], 12800
    $region189: #{network_forward.5} parent=1 // pred_fallthru
      _
    // Predicated region
    $region190: #{network_forward.5} parent=1 // pred_check
      _
    $region191: #{network_forward.5} parent=1 // pred_check_branch
      %340 = sbr.rel (0) target = $region193
    $region192: #{network_forward.5} parent=1 // pred_region
      %341 = dma.done [#allocation17], 16
    $region193: #{network_forward.5} parent=1 // pred_fallthru
      _
    // Predicated region
    $region194: #{network_forward.5} parent=1 // pred_check
      _
    $region195: #{network_forward.5} parent=1 // pred_check_branch
      %343 = sbr.rel (0) target = $region197
    $region196: #{network_forward.5} parent=1 // pred_region
      %344 = dma.done [#allocation17], 16
    $region197: #{network_forward.5} parent=1 // pred_fallthru
      _
    // Predicated region
    $region198: #{network_forward.5} parent=1 // pred_check
      _
    $region199: #{network_forward.5} parent=1 // pred_check_branch
      %346 = sbr.rel (0) target = $region201
    $region200: #{network_forward.5} parent=1 // pred_region
      %347 = dma.done [#allocation20], 16
    $region201: #{network_forward.5} parent=1 // pred_fallthru
      _
    // Predicated region
    $region202: #{network_forward.5} parent=1 // pred_check
      _
    $region203: #{network_forward.5} parent=1 // pred_check_branch
      %349 = sbr.rel (0) target = $region205
    $region204: #{network_forward.5} parent=1 // pred_region
      %350 = dma.done [#allocation20], 16
    $region205: #{network_forward.5} parent=1 // pred_fallthru
      _
    // Predicated region
    $region206: #{network_forward.5} parent=1 // pred_check
      _
    $region207: #{network_forward.5} parent=1 // pred_check_branch
      %352 = sbr.rel (0) target = $region209
    $region208: #{network_forward.5} parent=1 // pred_region
      %353 = dma.done [#allocation23], 16
    $region209: #{network_forward.5} parent=1 // pred_fallthru
      _
    // Predicated region
    $region210: #{network_forward.5} parent=1 // pred_check
      _
    $region211: #{network_forward.5} parent=1 // pred_check_branch
      %355 = sbr.rel (0) target = $region213
    $region212: #{network_forward.5} parent=1 // pred_region
      %356 = dma.done [#allocation23], 16
    $region213: #{network_forward.5} parent=1 // pred_fallthru
      _
    // Predicated region
    $region214: #{network_forward.5} parent=1 // pred_check
      _
    $region215: #{network_forward.5} parent=1 // pred_check_branch
      %358 = sbr.rel (0) target = $region217
    $region216: #{network_forward.5} parent=1 // pred_region
      %359 = dma.done [#allocation26], 16
    $region217: #{network_forward.5} parent=1 // pred_fallthru
      _
    // Predicated region
    $region218: #{network_forward.5} parent=1 // pred_check
      _
    $region219: #{network_forward.5} parent=1 // pred_check_branch
      %361 = sbr.rel (0) target = $region221
    $region220: #{network_forward.5} parent=1 // pred_region
      %362 = dma.done [#allocation26], 16
    $region221: #{network_forward.5} parent=1 // pred_fallthru
      _
    %v363 = vld [vmem:[%s1] sm:$0xff]
    %v364 = vld [vmem:[%s1 + $0x8] sm:$0xf]
    %v365 = vld [vmem:[%s3] sm:$0x3]
    %v366 = vld [vmem:[%s5] sm:$0x3]
    %v367 = vld [vmem:[%s7] sm:$0x3]
    %v368 = vld [vmem:[#allocation2] sm:$0x7]
    %v369 = vld [vmem:[#allocation4] sm:$0x1]
    %v371 = vlaneseq
    %v372 = vshrl.u32 %v371, 7
    %v373 = vsub.s32 0, %v372
    %v374 = vrot.slane %v369, %v373
    %vm376 = vcmask 23552
    %v378 = vsel %vm376, %v365, 0
    %vm380 = vcmask 1042432
    %v382 = vsel %vm380, %v368, 0
    %384 = vmatprep.subr.mxu0 0.0
    %385 = vmatpush1.msra.mxu0 0.0
    %386 = vmatprep.subr.mxu0 0.0
    %387 = vmatpush1.msra.mxu0 0.0
    %388 = vmatprep.subr.mxu0 0.0
    %389 = vmatpush1.msra.mxu0 0.0
    %390 = vmatprep.subr.mxu0 0.0
    %391 = vmatpush1.msra.mxu0 0.0
    %392 = vmatprep.subr.mxu0 0.0
    %393 = vmatpush1.msra.mxu0 0.0
    %394 = vmatprep.subr.mxu0 0.0
    %395 = vmatpush1.msra.mxu0 0.0
    %396 = vmatprep.subr.mxu0 0.0
    %397 = vmatpush1.msra.mxu0 0.0
    %398 = vmatprep.subr.mxu0 0.0
    %399 = vmatpush1.msra.mxu0 0.0
    %400 = vmatprep.subr.mxu0 0.0
    %401 = vmatpush1.msra.mxu0 0.0
    %402 = vmatprep.subr.mxu0 0.0
    %403 = vmatpush1.msra.mxu0 0.0
    %404 = vmatprep.subr.mxu0 0.0
    %405 = vmatpush1.msra.mxu0 0.0
    %406 = vmatprep.subr.mxu0 0.0
    %407 = vmatpush1.msra.mxu0 0.0
    %408 = vmatprep.subr.mxu0 0.0
    %409 = vmatpush1.msra.mxu0 0.0
    %410 = vmatprep.subr.mxu0 0.0
    %411 = vmatpush1.msra.mxu0 0.0
    %412 = vmatprep.subr.mxu0 0.0
    %413 = vmatpush1.msra.mxu0 0.0
    %414 = vmatprep.subr.mxu0 0.0
    %415 = vmatpush1.msra.mxu0 %v382
    %416 = vmatprep.subr.mxu0 0.0
    %417 = vmatpush2.msra.mxu0 0.0
    %418 = vmatprep.subr.mxu0 0.0
    %419 = vmatpush2.msra.mxu0 0.0
    %420 = vmatprep.subr.mxu0 0.0
    %421 = vmatpush2.msra.mxu0 0.0
    %422 = vmatprep.subr.mxu0 0.0
    %423 = vmatpush2.msra.mxu0 0.0
    %424 = vmatprep.subr.mxu0 0.0
    %425 = vmatpush2.msra.mxu0 0.0
    %426 = vmatprep.subr.mxu0 0.0
    %427 = vmatpush2.msra.mxu0 0.0
    %428 = vmatprep.subr.mxu0 0.0
    %429 = vmatpush2.msra.mxu0 0.0
    %430 = vmatprep.subr.mxu0 0.0
    %431 = vmatpush2.msra.mxu0 0.0
    %432 = vmatprep.subr.mxu0 0.0
    %433 = vmatpush2.msra.mxu0 0.0
    %434 = vmatprep.subr.mxu0 0.0
    %435 = vmatpush2.msra.mxu0 0.0
    %436 = vmatprep.subr.mxu0 0.0
    %437 = vmatpush2.msra.mxu0 0.0
    %438 = vmatprep.subr.mxu0 0.0
    %439 = vmatpush2.msra.mxu0 0.0
    %440 = vmatprep.subr.mxu0 0.0
    %441 = vmatpush2.msra.mxu0 0.0
    %442 = vmatprep.subr.mxu0 0.0
    %443 = vmatpush2.msra.mxu0 0.0
    %444 = vmatprep.subr.mxu0 0.0
    %445 = vmatpush2.msra.mxu0 0.0
    %446 = vmatprep.subr.mxu0 0.0
    %447 = vmatpush2.msra.mxu0 0.0
    %448 = vmatprep.mubr.f32.mxu0 0.0
    %449 = vmatmul.mubr.f32.gmra.mxu0 %v378
    %v450 = vpop.f32.mrf.mxu0
    %v451 = vadd.f32 %v374, %v450
    %v452 = vpop.f32.mrf.mxu0
    %453 = vdwg.mxu0
    %v454 = vld [vmem:[%s17] sm:$0xff]
    %v455 = vld [vmem:[%s17 + $0x8] sm:$0x1]
    %v456 = vld [vmem:[#allocation6] sm:$0x1]
    %v458 = vlaneseq
    %v459 = vshrl.u32 %v458, 7
    %v460 = vsub.s32 0, %v459
    %v461 = vrot.slane %v456, %v460
    %vm463 = vcmask 72704
    %v465 = vsel %vm463, %v367, 0
    %vm467 = vcmask 1040384
    %v469 = vsel %vm467, %v455, 0
    %471 = vmatprep.subr.mxu0 0.0
    %472 = vmatpush1.msra.mxu0 0.0
    %473 = vmatprep.subr.mxu0 0.0
    %474 = vmatpush1.msra.mxu0 0.0
    %475 = vmatprep.subr.mxu0 0.0
    %476 = vmatpush1.msra.mxu0 0.0
    %477 = vmatprep.subr.mxu0 0.0
    %478 = vmatpush1.msra.mxu0 0.0
    %479 = vmatprep.subr.mxu0 0.0
    %480 = vmatpush1.msra.mxu0 0.0
    %481 = vmatprep.subr.mxu0 0.0
    %482 = vmatpush1.msra.mxu0 0.0
    %483 = vmatprep.subr.mxu0 0.0
    %484 = vmatpush1.msra.mxu0 0.0
    %485 = vmatprep.subr.mxu0 0.0
    %486 = vmatpush1.msra.mxu0 0.0
    %487 = vmatprep.subr.mxu0 0.0
    %488 = vmatpush1.msra.mxu0 0.0
    %489 = vmatprep.subr.mxu0 0.0
    %490 = vmatpush1.msra.mxu0 0.0
    %491 = vmatprep.subr.mxu0 0.0
    %492 = vmatpush1.msra.mxu0 0.0
    %493 = vmatprep.subr.mxu0 0.0
    %494 = vmatpush1.msra.mxu0 0.0
    %495 = vmatprep.subr.mxu0 0.0
    %496 = vmatpush1.msra.mxu0 0.0
    %497 = vmatprep.subr.mxu0 0.0
    %498 = vmatpush1.msra.mxu0 0.0
    %499 = vmatprep.subr.mxu0 0.0
    %500 = vmatpush1.msra.mxu0 %v469
    %501 = vmatprep.subr.mxu0 0.0
    %502 = vmatpush1.msra.mxu0 %v454
    %503 = vmatprep.subr.mxu0 0.0
    %504 = vmatpush2.msra.mxu0 0.0
    %505 = vmatprep.subr.mxu0 0.0
    %506 = vmatpush2.msra.mxu0 0.0
    %507 = vmatprep.subr.mxu0 0.0
    %508 = vmatpush2.msra.mxu0 0.0
    %509 = vmatprep.subr.mxu0 0.0
    %510 = vmatpush2.msra.mxu0 0.0
    %511 = vmatprep.subr.mxu0 0.0
    %512 = vmatpush2.msra.mxu0 0.0
    %513 = vmatprep.subr.mxu0 0.0
    %514 = vmatpush2.msra.mxu0 0.0
    %515 = vmatprep.subr.mxu0 0.0
    %516 = vmatpush2.msra.mxu0 0.0
    %517 = vmatprep.subr.mxu0 0.0
    %518 = vmatpush2.msra.mxu0 0.0
    %519 = vmatprep.subr.mxu0 0.0
    %520 = vmatpush2.msra.mxu0 0.0
    %521 = vmatprep.subr.mxu0 0.0
    %522 = vmatpush2.msra.mxu0 0.0
    %523 = vmatprep.subr.mxu0 0.0
    %524 = vmatpush2.msra.mxu0 0.0
    %525 = vmatprep.subr.mxu0 0.0
    %526 = vmatpush2.msra.mxu0 0.0
    %527 = vmatprep.subr.mxu0 0.0
    %528 = vmatpush2.msra.mxu0 0.0
    %529 = vmatprep.subr.mxu0 0.0
    %530 = vmatpush2.msra.mxu0 0.0
    %531 = vmatprep.subr.mxu0 0.0
    %532 = vmatpush2.msra.mxu0 0.0
    %533 = vmatprep.subr.mxu0 0.0
    %534 = vmatpush2.msra.mxu0 0.0
    %535 = vmatprep.mubr.f32.mxu0 0.0
    %536 = vmatmul.mubr.f32.gmra.mxu0 %v465
    %v537 = vpop.f32.mrf.mxu0
    %v538 = vadd.f32 %v461, %v537
    %v539 = vpop.f32.mrf.mxu0
    %540 = vdwg.mxu0
    %v541 = vld [vmem:[%s21] sm:$0xff]
    %v542 = vld [vmem:[%s21 + $0x8] sm:$0xff]
    %v543 = vld [vmem:[%s21 + $0x10] sm:$0xff]
    %v544 = vld [vmem:[%s21 + $0x18] sm:$0xff]
    %v545 = vld [vmem:[%s21 + $0x20] sm:$0xff]
    %v546 = vld [vmem:[%s21 + $0x28] sm:$0xff]
    %v547 = vld [vmem:[%s21 + $0x30] sm:$0xff]
    %v548 = vld [vmem:[%s21 + $0x38] sm:$0xff]
    %v549 = vld [vmem:[%s21 + $0x40] sm:$0xff]
    %v550 = vld [vmem:[%s21 + $0x48] sm:$0xff]
    %v551 = vld [vmem:[%s21 + $0x50] sm:$0xff]
    %v552 = vld [vmem:[%s21 + $0x58] sm:$0xff]
    %v553 = vld [vmem:[%s21 + $0x60] sm:$0xff]
    %v554 = vld [vmem:[%s21 + $0x68] sm:$0xff]
    %v555 = vld [vmem:[%s21 + $0x70] sm:$0xff]
    %v556 = vld [vmem:[%s21 + $0x78] sm:$0xff]
    %v557 = vld [vmem:[%s21 + $0x80] sm:$0xff]
    %v558 = vld [vmem:[%s21 + $0x88] sm:$0xff]
    %v559 = vld [vmem:[%s21 + $0x90] sm:$0xff]
    %v560 = vld [vmem:[%s21 + $0x98] sm:$0xff]
    %v561 = vld [vmem:[%s21 + $0xa0] sm:$0xff]
    %v562 = vld [vmem:[%s21 + $0xa8] sm:$0xff]
    %v563 = vld [vmem:[%s21 + $0xb0] sm:$0xff]
    %v564 = vld [vmem:[%s21 + $0xb8] sm:$0xff]
    %v565 = vld [vmem:[%s21 + $0xc0] sm:$0xff]
    %v566 = vld [vmem:[%s21 + $0xc8] sm:$0xff]
    %v567 = vld [vmem:[%s21 + $0xd0] sm:$0xff]
    %v568 = vld [vmem:[%s21 + $0xd8] sm:$0xff]
    %v569 = vld [vmem:[%s21 + $0xe0] sm:$0xff]
    %v570 = vld [vmem:[%s21 + $0xe8] sm:$0xff]
    %v571 = vld [vmem:[%s21 + $0xf0] sm:$0xff]
    %v572 = vld [vmem:[%s21 + $0xf8] sm:$0xff]
    %v573 = vld [vmem:[%s21 + $0x100] sm:$0xff]
    %v574 = vld [vmem:[%s21 + $0x108] sm:$0xff]
    %v575 = vld [vmem:[%s21 + $0x110] sm:$0xff]
    %v576 = vld [vmem:[%s21 + $0x118] sm:$0xff]
    %v577 = vld [vmem:[%s21 + $0x120] sm:$0xff]
    %v578 = vld [vmem:[%s21 + $0x128] sm:$0xff]
    %v579 = vld [vmem:[%s21 + $0x130] sm:$0xff]
    %v580 = vld [vmem:[%s21 + $0x138] sm:$0xff]
    %v581 = vld [vmem:[%s21 + $0x140] sm:$0xff]
    %v582 = vld [vmem:[%s21 + $0x148] sm:$0xff]
    %v583 = vld [vmem:[%s21 + $0x150] sm:$0xff]
    %v584 = vld [vmem:[%s21 + $0x158] sm:$0xff]
    %v585 = vld [vmem:[%s21 + $0x160] sm:$0xff]
    %v586 = vld [vmem:[%s21 + $0x168] sm:$0xff]
    %v587 = vld [vmem:[%s21 + $0x170] sm:$0xff]
    %v588 = vld [vmem:[%s21 + $0x178] sm:$0xff]
    %v589 = vld [vmem:[%s21 + $0x180] sm:$0xff]
    %v590 = vld [vmem:[%s21 + $0x188] sm:$0xff]
    %v591 = vld [vmem:[%s21 + $0x190] sm:$0xff]
    %v592 = vld [vmem:[%s21 + $0x198] sm:$0xff]
    %v593 = vld [vmem:[%s21 + $0x1a0] sm:$0xff]
    %v594 = vld [vmem:[%s21 + $0x1a8] sm:$0xff]
    %v595 = vld [vmem:[%s21 + $0x1b0] sm:$0xff]
    %v596 = vld [vmem:[%s21 + $0x1b8] sm:$0xff]
    %v597 = vld [vmem:[%s21 + $0x1c0] sm:$0xff]
    %v598 = vld [vmem:[%s21 + $0x1c8] sm:$0xff]
    %v599 = vld [vmem:[%s21 + $0x1d0] sm:$0xff]
    %v600 = vld [vmem:[%s21 + $0x1d8] sm:$0xff]
    %v601 = vld [vmem:[%s21 + $0x1e0] sm:$0xff]
    %v602 = vld [vmem:[%s21 + $0x1e8] sm:$0xff]
    %v603 = vld [vmem:[%s21 + $0x1f0] sm:$0xff]
    %v604 = vld [vmem:[%s21 + $0x1f8] sm:$0xff]
    %v605 = vld [vmem:[%s21 + $0x200] sm:$0xff]
    %v606 = vld [vmem:[%s21 + $0x208] sm:$0xff]
    %v607 = vld [vmem:[%s21 + $0x210] sm:$0xff]
    %v608 = vld [vmem:[%s21 + $0x218] sm:$0xff]
    %v609 = vld [vmem:[%s21 + $0x220] sm:$0xff]
    %v610 = vld [vmem:[%s21 + $0x228] sm:$0xff]
    %v611 = vld [vmem:[%s21 + $0x230] sm:$0xff]
    %v612 = vld [vmem:[%s21 + $0x238] sm:$0xff]
    %v613 = vld [vmem:[%s21 + $0x240] sm:$0xff]
    %v614 = vld [vmem:[%s21 + $0x248] sm:$0xff]
    %v615 = vld [vmem:[%s21 + $0x250] sm:$0xff]
    %v616 = vld [vmem:[%s21 + $0x258] sm:$0xff]
    %v617 = vld [vmem:[%s21 + $0x260] sm:$0xff]
    %v618 = vld [vmem:[%s21 + $0x268] sm:$0xff]
    %v619 = vld [vmem:[%s21 + $0x270] sm:$0xff]
    %v620 = vld [vmem:[%s21 + $0x278] sm:$0xff]
    %v621 = vld [vmem:[%s21 + $0x280] sm:$0xff]
    %v622 = vld [vmem:[%s21 + $0x288] sm:$0xff]
    %v623 = vld [vmem:[%s21 + $0x290] sm:$0xff]
    %v624 = vld [vmem:[%s21 + $0x298] sm:$0xff]
    %v625 = vld [vmem:[%s21 + $0x2a0] sm:$0xff]
    %v626 = vld [vmem:[%s21 + $0x2a8] sm:$0xff]
    %v627 = vld [vmem:[%s21 + $0x2b0] sm:$0xff]
    %v628 = vld [vmem:[%s21 + $0x2b8] sm:$0xff]
    %v629 = vld [vmem:[%s21 + $0x2c0] sm:$0xff]
    %v630 = vld [vmem:[%s21 + $0x2c8] sm:$0xff]
    %v631 = vld [vmem:[%s21 + $0x2d0] sm:$0xff]
    %v632 = vld [vmem:[%s21 + $0x2d8] sm:$0xff]
    %v633 = vld [vmem:[%s21 + $0x2e0] sm:$0xff]
    %v634 = vld [vmem:[%s21 + $0x2e8] sm:$0xff]
    %v635 = vld [vmem:[%s21 + $0x2f0] sm:$0xff]
    %v636 = vld [vmem:[%s21 + $0x2f8] sm:$0xff]
    %v637 = vld [vmem:[%s21 + $0x300] sm:$0xff]
    %v638 = vld [vmem:[%s21 + $0x308] sm:$0xff]
    %v639 = vld [vmem:[%s21 + $0x310] sm:$0xff]
    %v640 = vld [vmem:[%s21 + $0x318] sm:$0xff]
    %vm641 = vcmask 261120
    %v643 = vsel %vm641, %v451, 0
    %645 = vmatprep.subr.mxu0 0.0
    %646 = vmatpush1.msra.mxu0 0.0
    %647 = vmatprep.subr.mxu0 0.0
    %648 = vmatpush1.msra.mxu0 0.0
    %649 = vmatprep.subr.mxu0 0.0
    %650 = vmatpush1.msra.mxu0 0.0
    %651 = vmatprep.subr.mxu0 0.0
    %652 = vmatpush1.msra.mxu0 0.0
    %653 = vmatprep.subr.mxu0 0.0
    %654 = vmatpush1.msra.mxu0 0.0
    %655 = vmatprep.subr.mxu0 0.0
    %656 = vmatpush1.msra.mxu0 0.0
    %657 = vmatprep.subr.mxu0 0.0
    %658 = vmatpush1.msra.mxu0 0.0
    %659 = vmatprep.subr.mxu0 0.0
    %660 = vmatpush1.msra.mxu0 0.0
    %661 = vmatprep.subr.mxu0 0.0
    %662 = vmatpush1.msra.mxu0 0.0
    %663 = vmatprep.subr.mxu0 0.0
    %664 = vmatpush1.msra.mxu0 0.0
    %665 = vmatprep.subr.mxu0 0.0
    %666 = vmatpush1.msra.mxu0 0.0
    %667 = vmatprep.subr.mxu0 0.0
    %668 = vmatpush1.msra.mxu0 0.0
    %669 = vmatprep.subr.mxu0 0.0
    %670 = vmatpush1.msra.mxu0 %v640
    %671 = vmatprep.subr.mxu0 0.0
    %672 = vmatpush1.msra.mxu0 %v639
    %673 = vmatprep.subr.mxu0 0.0
    %674 = vmatpush1.msra.mxu0 %v638
    %675 = vmatprep.subr.mxu0 0.0
    %676 = vmatpush1.msra.mxu0 %v637
    %677 = vmatprep.subr.mxu0 0.0
    %678 = vmatpush2.msra.mxu0 0.0
    %679 = vmatprep.subr.mxu0 0.0
    %680 = vmatpush2.msra.mxu0 0.0
    %681 = vmatprep.subr.mxu0 0.0
    %682 = vmatpush2.msra.mxu0 0.0
    %683 = vmatprep.subr.mxu0 0.0
    %684 = vmatpush2.msra.mxu0 0.0
    %685 = vmatprep.subr.mxu0 0.0
    %686 = vmatpush2.msra.mxu0 0.0
    %687 = vmatprep.subr.mxu0 0.0
    %688 = vmatpush2.msra.mxu0 0.0
    %689 = vmatprep.subr.mxu0 0.0
    %690 = vmatpush2.msra.mxu0 0.0
    %691 = vmatprep.subr.mxu0 0.0
    %692 = vmatpush2.msra.mxu0 0.0
    %693 = vmatprep.subr.mxu0 0.0
    %694 = vmatpush2.msra.mxu0 0.0
    %695 = vmatprep.subr.mxu0 0.0
    %696 = vmatpush2.msra.mxu0 0.0
    %697 = vmatprep.subr.mxu0 0.0
    %698 = vmatpush2.msra.mxu0 0.0
    %699 = vmatprep.subr.mxu0 0.0
    %700 = vmatpush2.msra.mxu0 0.0
    %701 = vmatprep.subr.mxu0 0.0
    %702 = vmatpush2.msra.mxu0 0.0
    %703 = vmatprep.subr.mxu0 0.0
    %704 = vmatpush2.msra.mxu0 0.0
    %705 = vmatprep.subr.mxu0 0.0
    %706 = vmatpush2.msra.mxu0 0.0
    %707 = vmatprep.subr.mxu0 0.0
    %708 = vmatpush2.msra.mxu0 0.0
    %709 = vmatprep.mubr.f32.mxu0 0.0
    %710 = vmatmul.mubr.f32.gmra.mxu0 %v643
    %v711 = vpop.f32.mrf.mxu0
    %v712 = vadd.f32 0.0, %v711
    %v713 = vpop.f32.mrf.mxu0
    %714 = vdwg.mxu0
    %v717 = vcombine.high %v363, %v363
    %v719 = vunpack.c.l.s4 1983009808
    %v720 = vunpack.c.0.s8 %v719
    %v721 = vlaneseq
    %v722 = vshrl.u32 %v721, 7
    %v723 = vsub.s32 %v720, %v722
    %v724 = vrot.slane %v363, %v723
    %v726 = vunpack.c.l.s4 1983009808
    %v727 = vunpack.c.0.s8 %v726
    %v728 = vlaneseq
    %v729 = vshrl.u32 %v728, 7
    %v730 = vsub.s32 %v727, %v729
    %v731 = vrot.slane %v717, %v730
    %v732 = vcombine.high %v724, %v724
    %v733 = vcombine.high %v731, %v731
    %v735 = vunpack.c.l.s4 1983009808
    %v736 = vunpack.c.0.s8 %v735
    %v737 = vlaneseq
    %v738 = vshrl.u32 %v737, 7
    %v739 = vsub.s32 %v736, %v738
    %v740 = vrot.slane %v364, %v739
    %v741 = vcombine.high %v740, %v740
    %748 = vmatprep.subr.mxu0 0.0
    %749 = vmatpush1.msra.mxu0 %v556
    %750 = vmatprep.subr.mxu0 0.0
    %751 = vmatpush1.msra.mxu0 %v555
    %752 = vmatprep.subr.mxu0 0.0
    %753 = vmatpush1.msra.mxu0 %v554
    %754 = vmatprep.subr.mxu0 0.0
    %755 = vmatpush1.msra.mxu0 %v553
    %756 = vmatprep.subr.mxu0 0.0
    %757 = vmatpush1.msra.mxu0 %v552
    %758 = vmatprep.subr.mxu0 0.0
    %759 = vmatpush1.msra.mxu0 %v551
    %760 = vmatprep.subr.mxu0 0.0
    %761 = vmatpush1.msra.mxu0 %v550
    %762 = vmatprep.subr.mxu0 0.0
    %763 = vmatpush1.msra.mxu0 %v549
    %764 = vmatprep.subr.mxu0 0.0
    %765 = vmatpush1.msra.mxu0 %v548
    %766 = vmatprep.subr.mxu0 0.0
    %767 = vmatpush1.msra.mxu0 %v547
    %768 = vmatprep.subr.mxu0 0.0
    %769 = vmatpush1.msra.mxu0 %v546
    %770 = vmatprep.subr.mxu0 0.0
    %771 = vmatpush1.msra.mxu0 %v545
    %772 = vmatprep.subr.mxu0 0.0
    %773 = vmatpush1.msra.mxu0 %v544
    %774 = vmatprep.subr.mxu0 0.0
    %775 = vmatpush1.msra.mxu0 %v543
    %776 = vmatprep.subr.mxu0 0.0
    %777 = vmatpush1.msra.mxu0 %v542
    %778 = vmatprep.subr.mxu0 0.0
    %779 = vmatpush1.msra.mxu0 %v541
    %780 = vmatprep.subr.mxu0 0.0
    %781 = vmatpush2.msra.mxu0 %v572
    %782 = vmatprep.subr.mxu0 0.0
    %783 = vmatpush2.msra.mxu0 %v571
    %784 = vmatprep.subr.mxu0 0.0
    %785 = vmatpush2.msra.mxu0 %v570
    %786 = vmatprep.subr.mxu0 0.0
    %787 = vmatpush2.msra.mxu0 %v569
    %788 = vmatprep.subr.mxu0 0.0
    %789 = vmatpush2.msra.mxu0 %v568
    %790 = vmatprep.subr.mxu0 0.0
    %791 = vmatpush2.msra.mxu0 %v567
    %792 = vmatprep.subr.mxu0 0.0
    %793 = vmatpush2.msra.mxu0 %v566
    %794 = vmatprep.subr.mxu0 0.0
    %795 = vmatpush2.msra.mxu0 %v565
    %796 = vmatprep.subr.mxu0 0.0
    %797 = vmatpush2.msra.mxu0 %v564
    %798 = vmatprep.subr.mxu0 0.0
    %799 = vmatpush2.msra.mxu0 %v563
    %800 = vmatprep.subr.mxu0 0.0
    %801 = vmatpush2.msra.mxu0 %v562
    %802 = vmatprep.subr.mxu0 0.0
    %803 = vmatpush2.msra.mxu0 %v561
    %804 = vmatprep.subr.mxu0 0.0
    %805 = vmatpush2.msra.mxu0 %v560
    %806 = vmatprep.subr.mxu0 0.0
    %807 = vmatpush2.msra.mxu0 %v559
    %808 = vmatprep.subr.mxu0 0.0
    %809 = vmatpush2.msra.mxu0 %v558
    %810 = vmatprep.subr.mxu0 0.0
    %811 = vmatpush2.msra.mxu0 %v557
    %812 = vmatprep.mubr.f32.mxu0 %v732
    %813 = vmatmul.mubr.f32.gmra.mxu0 %v724
    %v814 = vpop.f32.mrf.mxu0
    %v815 = vadd.f32 %v712, %v814
    %v816 = vpop.f32.mrf.mxu0
    %817 = vdwg.mxu0
    %818 = vmatprep.subr.mxu0 0.0
    %819 = vmatpush1.msra.mxu0 %v588
    %820 = vmatprep.subr.mxu0 0.0
    %821 = vmatpush1.msra.mxu0 %v587
    %822 = vmatprep.subr.mxu0 0.0
    %823 = vmatpush1.msra.mxu0 %v586
    %824 = vmatprep.subr.mxu0 0.0
    %825 = vmatpush1.msra.mxu0 %v585
    %826 = vmatprep.subr.mxu0 0.0
    %827 = vmatpush1.msra.mxu0 %v584
    %828 = vmatprep.subr.mxu0 0.0
    %829 = vmatpush1.msra.mxu0 %v583
    %830 = vmatprep.subr.mxu0 0.0
    %831 = vmatpush1.msra.mxu0 %v582
    %832 = vmatprep.subr.mxu0 0.0
    %833 = vmatpush1.msra.mxu0 %v581
    %834 = vmatprep.subr.mxu0 0.0
    %835 = vmatpush1.msra.mxu0 %v580
    %836 = vmatprep.subr.mxu0 0.0
    %837 = vmatpush1.msra.mxu0 %v579
    %838 = vmatprep.subr.mxu0 0.0
    %839 = vmatpush1.msra.mxu0 %v578
    %840 = vmatprep.subr.mxu0 0.0
    %841 = vmatpush1.msra.mxu0 %v577
    %842 = vmatprep.subr.mxu0 0.0
    %843 = vmatpush1.msra.mxu0 %v576
    %844 = vmatprep.subr.mxu0 0.0
    %845 = vmatpush1.msra.mxu0 %v575
    %846 = vmatprep.subr.mxu0 0.0
    %847 = vmatpush1.msra.mxu0 %v574
    %848 = vmatprep.subr.mxu0 0.0
    %849 = vmatpush1.msra.mxu0 %v573
    %850 = vmatprep.subr.mxu0 0.0
    %851 = vmatpush2.msra.mxu0 %v604
    %852 = vmatprep.subr.mxu0 0.0
    %853 = vmatpush2.msra.mxu0 %v603
    %854 = vmatprep.subr.mxu0 0.0
    %855 = vmatpush2.msra.mxu0 %v602
    %856 = vmatprep.subr.mxu0 0.0
    %857 = vmatpush2.msra.mxu0 %v601
    %858 = vmatprep.subr.mxu0 0.0
    %859 = vmatpush2.msra.mxu0 %v600
    %860 = vmatprep.subr.mxu0 0.0
    %861 = vmatpush2.msra.mxu0 %v599
    %862 = vmatprep.subr.mxu0 0.0
    %863 = vmatpush2.msra.mxu0 %v598
    %864 = vmatprep.subr.mxu0 0.0
    %865 = vmatpush2.msra.mxu0 %v597
    %866 = vmatprep.subr.mxu0 0.0
    %867 = vmatpush2.msra.mxu0 %v596
    %868 = vmatprep.subr.mxu0 0.0
    %869 = vmatpush2.msra.mxu0 %v595
    %870 = vmatprep.subr.mxu0 0.0
    %871 = vmatpush2.msra.mxu0 %v594
    %872 = vmatprep.subr.mxu0 0.0
    %873 = vmatpush2.msra.mxu0 %v593
    %874 = vmatprep.subr.mxu0 0.0
    %875 = vmatpush2.msra.mxu0 %v592
    %876 = vmatprep.subr.mxu0 0.0
    %877 = vmatpush2.msra.mxu0 %v591
    %878 = vmatprep.subr.mxu0 0.0
    %879 = vmatpush2.msra.mxu0 %v590
    %880 = vmatprep.subr.mxu0 0.0
    %881 = vmatpush2.msra.mxu0 %v589
    %882 = vmatprep.mubr.f32.mxu0 %v733
    %883 = vmatmul.mubr.f32.gmra.mxu0 %v731
    %v884 = vpop.f32.mrf.mxu0
    %v885 = vadd.f32 %v815, %v884
    %v886 = vpop.f32.mrf.mxu0
    %887 = vdwg.mxu0
    %888 = vmatprep.subr.mxu0 0.0
    %889 = vmatpush1.msra.mxu0 %v620
    %890 = vmatprep.subr.mxu0 0.0
    %891 = vmatpush1.msra.mxu0 %v619
    %892 = vmatprep.subr.mxu0 0.0
    %893 = vmatpush1.msra.mxu0 %v618
    %894 = vmatprep.subr.mxu0 0.0
    %895 = vmatpush1.msra.mxu0 %v617
    %896 = vmatprep.subr.mxu0 0.0
    %897 = vmatpush1.msra.mxu0 %v616
    %898 = vmatprep.subr.mxu0 0.0
    %899 = vmatpush1.msra.mxu0 %v615
    %900 = vmatprep.subr.mxu0 0.0
    %901 = vmatpush1.msra.mxu0 %v614
    %902 = vmatprep.subr.mxu0 0.0
    %903 = vmatpush1.msra.mxu0 %v613
    %904 = vmatprep.subr.mxu0 0.0
    %905 = vmatpush1.msra.mxu0 %v612
    %906 = vmatprep.subr.mxu0 0.0
    %907 = vmatpush1.msra.mxu0 %v611
    %908 = vmatprep.subr.mxu0 0.0
    %909 = vmatpush1.msra.mxu0 %v610
    %910 = vmatprep.subr.mxu0 0.0
    %911 = vmatpush1.msra.mxu0 %v609
    %912 = vmatprep.subr.mxu0 0.0
    %913 = vmatpush1.msra.mxu0 %v608
    %914 = vmatprep.subr.mxu0 0.0
    %915 = vmatpush1.msra.mxu0 %v607
    %916 = vmatprep.subr.mxu0 0.0
    %917 = vmatpush1.msra.mxu0 %v606
    %918 = vmatprep.subr.mxu0 0.0
    %919 = vmatpush1.msra.mxu0 %v605
    %920 = vmatprep.subr.mxu0 0.0
    %921 = vmatpush2.msra.mxu0 %v636
    %922 = vmatprep.subr.mxu0 0.0
    %923 = vmatpush2.msra.mxu0 %v635
    %924 = vmatprep.subr.mxu0 0.0
    %925 = vmatpush2.msra.mxu0 %v634
    %926 = vmatprep.subr.mxu0 0.0
    %927 = vmatpush2.msra.mxu0 %v633
    %928 = vmatprep.subr.mxu0 0.0
    %929 = vmatpush2.msra.mxu0 %v632
    %930 = vmatprep.subr.mxu0 0.0
    %931 = vmatpush2.msra.mxu0 %v631
    %932 = vmatprep.subr.mxu0 0.0
    %933 = vmatpush2.msra.mxu0 %v630
    %934 = vmatprep.subr.mxu0 0.0
    %935 = vmatpush2.msra.mxu0 %v629
    %936 = vmatprep.subr.mxu0 0.0
    %937 = vmatpush2.msra.mxu0 %v628
    %938 = vmatprep.subr.mxu0 0.0
    %939 = vmatpush2.msra.mxu0 %v627
    %940 = vmatprep.subr.mxu0 0.0
    %941 = vmatpush2.msra.mxu0 %v626
    %942 = vmatprep.subr.mxu0 0.0
    %943 = vmatpush2.msra.mxu0 %v625
    %944 = vmatprep.subr.mxu0 0.0
    %945 = vmatpush2.msra.mxu0 %v624
    %946 = vmatprep.subr.mxu0 0.0
    %947 = vmatpush2.msra.mxu0 %v623
    %948 = vmatprep.subr.mxu0 0.0
    %949 = vmatpush2.msra.mxu0 %v622
    %950 = vmatprep.subr.mxu0 0.0
    %951 = vmatpush2.msra.mxu0 %v621
    %952 = vmatprep.mubr.f32.mxu0 %v741
    %953 = vmatmul.mubr.f32.gmra.mxu0 %v740
    %v954 = vpop.f32.mrf.mxu0
    %v955 = vadd.f32 %v885, %v954
    %v956 = vpop.f32.mrf.mxu0
    %957 = vdwg.mxu0
    %v958 = vld [vmem:[#allocation7] sm:$0x1]
    %v960 = vlaneseq
    %v961 = vshrl.u32 %v960, 7
    %v962 = vsub.s32 0, %v961
    %v963 = vrot.slane %v958, %v962
    %v965 = vadd.f32 %v955, %v963
    %vm966 = vcmp.ge.f32.partialorder %v965, 0.0
    %v967 = vmul.f32 %v965, 0.01
    %v968 = vsel %vm966, %v965, %v967
    %v969 = vld [vmem:[%s25] sm:$0xff]
    %v970 = vld [vmem:[%s25 + $0x8] sm:$0xff]
    %v971 = vld [vmem:[%s25 + $0x10] sm:$0xff]
    %v972 = vld [vmem:[%s25 + $0x18] sm:$0xff]
    %v973 = vld [vmem:[%s25 + $0x20] sm:$0xff]
    %v974 = vld [vmem:[%s25 + $0x28] sm:$0xff]
    %v975 = vld [vmem:[%s25 + $0x30] sm:$0xff]
    %v976 = vld [vmem:[%s25 + $0x38] sm:$0xff]
    %v977 = vld [vmem:[%s25 + $0x40] sm:$0xff]
    %v978 = vld [vmem:[%s25 + $0x48] sm:$0xff]
    %v979 = vld [vmem:[%s25 + $0x50] sm:$0xff]
    %v980 = vld [vmem:[%s25 + $0x58] sm:$0xff]
    %v981 = vld [vmem:[%s25 + $0x60] sm:$0xff]
    %v982 = vld [vmem:[%s25 + $0x68] sm:$0xff]
    %v983 = vld [vmem:[%s25 + $0x70] sm:$0xff]
    %v984 = vld [vmem:[%s25 + $0x78] sm:$0xff]
    %v985 = vld [vmem:[#allocation9] sm:$0x1]
    %v987 = vlaneseq
    %v988 = vshrl.u32 %v987, 7
    %v989 = vsub.s32 0, %v988
    %v990 = vrot.slane %v985, %v989
    %992 = vmatprep.subr.mxu0 0.0
    %993 = vmatpush1.msra.mxu0 %v984
    %994 = vmatprep.subr.mxu0 0.0
    %995 = vmatpush1.msra.mxu0 %v983
    %996 = vmatprep.subr.mxu0 0.0
    %997 = vmatpush1.msra.mxu0 %v982
    %998 = vmatprep.subr.mxu0 0.0
    %999 = vmatpush1.msra.mxu0 %v981
    %1000 = vmatprep.subr.mxu0 0.0
    %1001 = vmatpush1.msra.mxu0 %v980
    %1002 = vmatprep.subr.mxu0 0.0
    %1003 = vmatpush1.msra.mxu0 %v979
    %1004 = vmatprep.subr.mxu0 0.0
    %1005 = vmatpush1.msra.mxu0 %v978
    %1006 = vmatprep.subr.mxu0 0.0
    %1007 = vmatpush1.msra.mxu0 %v977
    %1008 = vmatprep.subr.mxu0 0.0
    %1009 = vmatpush1.msra.mxu0 %v976
    %1010 = vmatprep.subr.mxu0 0.0
    %1011 = vmatpush1.msra.mxu0 %v975
    %1012 = vmatprep.subr.mxu0 0.0
    %1013 = vmatpush1.msra.mxu0 %v974
    %1014 = vmatprep.subr.mxu0 0.0
    %1015 = vmatpush1.msra.mxu0 %v973
    %1016 = vmatprep.subr.mxu0 0.0
    %1017 = vmatpush1.msra.mxu0 %v972
    %1018 = vmatprep.subr.mxu0 0.0
    %1019 = vmatpush1.msra.mxu0 %v971
    %1020 = vmatprep.subr.mxu0 0.0
    %1021 = vmatpush1.msra.mxu0 %v970
    %1022 = vmatprep.subr.mxu0 0.0
    %1023 = vmatpush1.msra.mxu0 %v969
    %1024 = vmatprep.subr.mxu0 0.0
    %1025 = vmatpush2.msra.mxu0 0.0
    %1026 = vmatprep.subr.mxu0 0.0
    %1027 = vmatpush2.msra.mxu0 0.0
    %1028 = vmatprep.subr.mxu0 0.0
    %1029 = vmatpush2.msra.mxu0 0.0
    %1030 = vmatprep.subr.mxu0 0.0
    %1031 = vmatpush2.msra.mxu0 0.0
    %1032 = vmatprep.subr.mxu0 0.0
    %1033 = vmatpush2.msra.mxu0 0.0
    %1034 = vmatprep.subr.mxu0 0.0
    %1035 = vmatpush2.msra.mxu0 0.0
    %1036 = vmatprep.subr.mxu0 0.0
    %1037 = vmatpush2.msra.mxu0 0.0
    %1038 = vmatprep.subr.mxu0 0.0
    %1039 = vmatpush2.msra.mxu0 0.0
    %1040 = vmatprep.subr.mxu0 0.0
    %1041 = vmatpush2.msra.mxu0 0.0
    %1042 = vmatprep.subr.mxu0 0.0
    %1043 = vmatpush2.msra.mxu0 0.0
    %1044 = vmatprep.subr.mxu0 0.0
    %1045 = vmatpush2.msra.mxu0 0.0
    %1046 = vmatprep.subr.mxu0 0.0
    %1047 = vmatpush2.msra.mxu0 0.0
    %1048 = vmatprep.subr.mxu0 0.0
    %1049 = vmatpush2.msra.mxu0 0.0
    %1050 = vmatprep.subr.mxu0 0.0
    %1051 = vmatpush2.msra.mxu0 0.0
    %1052 = vmatprep.subr.mxu0 0.0
    %1053 = vmatpush2.msra.mxu0 0.0
    %1054 = vmatprep.subr.mxu0 0.0
    %1055 = vmatpush2.msra.mxu0 0.0
    %1056 = vmatprep.mubr.f32.mxu0 0.0
    %1057 = vmatmul.mubr.f32.gmra.mxu0 %v968
    %v1058 = vpop.f32.mrf.mxu0
    %v1059 = vadd.f32 %v990, %v1058
    %v1060 = vpop.f32.mrf.mxu0
    %1061 = vdwg.mxu0
    %vm1062 = vcmp.ge.f32.partialorder %v1059, 0.0
    %v1063 = vmul.f32 %v1059, 0.01
    %v1064 = vsel %vm1062, %v1059, %v1063
    %v1065 = vld [vmem:[%s29] sm:$0xff]
    %v1066 = vld [vmem:[%s29 + $0x8] sm:$0xff]
    %v1067 = vld [vmem:[%s29 + $0x10] sm:$0xff]
    %v1068 = vld [vmem:[%s29 + $0x18] sm:$0xff]
    %v1069 = vld [vmem:[#allocation10] sm:$0x1]
    %v1071 = vlaneseq
    %v1072 = vshrl.u32 %v1071, 7
    %v1073 = vsub.s32 0, %v1072
    %v1074 = vrot.slane %v1069, %v1073
    %v1077 = vsel %vm641, %v1064, 0
    %1079 = vmatprep.subr.mxu0 0.0
    %1080 = vmatpush1.msra.mxu0 0.0
    %1081 = vmatprep.subr.mxu0 0.0
    %1082 = vmatpush1.msra.mxu0 0.0
    %1083 = vmatprep.subr.mxu0 0.0
    %1084 = vmatpush1.msra.mxu0 0.0
    %1085 = vmatprep.subr.mxu0 0.0
    %1086 = vmatpush1.msra.mxu0 0.0
    %1087 = vmatprep.subr.mxu0 0.0
    %1088 = vmatpush1.msra.mxu0 0.0
    %1089 = vmatprep.subr.mxu0 0.0
    %1090 = vmatpush1.msra.mxu0 0.0
    %1091 = vmatprep.subr.mxu0 0.0
    %1092 = vmatpush1.msra.mxu0 0.0
    %1093 = vmatprep.subr.mxu0 0.0
    %1094 = vmatpush1.msra.mxu0 0.0
    %1095 = vmatprep.subr.mxu0 0.0
    %1096 = vmatpush1.msra.mxu0 0.0
    %1097 = vmatprep.subr.mxu0 0.0
    %1098 = vmatpush1.msra.mxu0 0.0
    %1099 = vmatprep.subr.mxu0 0.0
    %1100 = vmatpush1.msra.mxu0 0.0
    %1101 = vmatprep.subr.mxu0 0.0
    %1102 = vmatpush1.msra.mxu0 0.0
    %1103 = vmatprep.subr.mxu0 0.0
    %1104 = vmatpush1.msra.mxu0 %v1068
    %1105 = vmatprep.subr.mxu0 0.0
    %1106 = vmatpush1.msra.mxu0 %v1067
    %1107 = vmatprep.subr.mxu0 0.0
    %1108 = vmatpush1.msra.mxu0 %v1066
    %1109 = vmatprep.subr.mxu0 0.0
    %1110 = vmatpush1.msra.mxu0 %v1065
    %1111 = vmatprep.subr.mxu0 0.0
    %1112 = vmatpush2.msra.mxu0 0.0
    %1113 = vmatprep.subr.mxu0 0.0
    %1114 = vmatpush2.msra.mxu0 0.0
    %1115 = vmatprep.subr.mxu0 0.0
    %1116 = vmatpush2.msra.mxu0 0.0
    %1117 = vmatprep.subr.mxu0 0.0
    %1118 = vmatpush2.msra.mxu0 0.0
    %1119 = vmatprep.subr.mxu0 0.0
    %1120 = vmatpush2.msra.mxu0 0.0
    %1121 = vmatprep.subr.mxu0 0.0
    %1122 = vmatpush2.msra.mxu0 0.0
    %1123 = vmatprep.subr.mxu0 0.0
    %1124 = vmatpush2.msra.mxu0 0.0
    %1125 = vmatprep.subr.mxu0 0.0
    %1126 = vmatpush2.msra.mxu0 0.0
    %1127 = vmatprep.subr.mxu0 0.0
    %1128 = vmatpush2.msra.mxu0 0.0
    %1129 = vmatprep.subr.mxu0 0.0
    %1130 = vmatpush2.msra.mxu0 0.0
    %1131 = vmatprep.subr.mxu0 0.0
    %1132 = vmatpush2.msra.mxu0 0.0
    %1133 = vmatprep.subr.mxu0 0.0
    %1134 = vmatpush2.msra.mxu0 0.0
    %1135 = vmatprep.subr.mxu0 0.0
    %1136 = vmatpush2.msra.mxu0 0.0
    %1137 = vmatprep.subr.mxu0 0.0
    %1138 = vmatpush2.msra.mxu0 0.0
    %1139 = vmatprep.subr.mxu0 0.0
    %1140 = vmatpush2.msra.mxu0 0.0
    %1141 = vmatprep.subr.mxu0 0.0
    %1142 = vmatpush2.msra.mxu0 0.0
    %1143 = vmatprep.mubr.f32.mxu0 0.0
    %1144 = vmatmul.mubr.f32.gmra.mxu0 %v1077
    %v1145 = vpop.f32.mrf.mxu0
    %v1146 = vadd.f32 %v1074, %v1145
    %v1147 = vpop.f32.mrf.mxu0
    %1148 = vdwg.mxu0
    %v1149 = vld [vmem:[%s33] sm:$0xff]
    %v1150 = vld [vmem:[%s33 + $0x8] sm:$0xff]
    %v1151 = vld [vmem:[%s33 + $0x10] sm:$0xff]
    %v1152 = vld [vmem:[%s33 + $0x18] sm:$0xff]
    %v1153 = vld [vmem:[#allocation12] sm:$0x1]
    %v1155 = vlaneseq
    %v1156 = vshrl.u32 %v1155, 7
    %v1157 = vsub.s32 0, %v1156
    %v1158 = vrot.slane %v1153, %v1157
    %v1161 = vsel %vm641, %v1146, 0
    %1163 = vmatprep.subr.mxu0 0.0
    %1164 = vmatpush1.msra.mxu0 0.0
    %1165 = vmatprep.subr.mxu0 0.0
    %1166 = vmatpush1.msra.mxu0 0.0
    %1167 = vmatprep.subr.mxu0 0.0
    %1168 = vmatpush1.msra.mxu0 0.0
    %1169 = vmatprep.subr.mxu0 0.0
    %1170 = vmatpush1.msra.mxu0 0.0
    %1171 = vmatprep.subr.mxu0 0.0
    %1172 = vmatpush1.msra.mxu0 0.0
    %1173 = vmatprep.subr.mxu0 0.0
    %1174 = vmatpush1.msra.mxu0 0.0
    %1175 = vmatprep.subr.mxu0 0.0
    %1176 = vmatpush1.msra.mxu0 0.0
    %1177 = vmatprep.subr.mxu0 0.0
    %1178 = vmatpush1.msra.mxu0 0.0
    %1179 = vmatprep.subr.mxu0 0.0
    %1180 = vmatpush1.msra.mxu0 0.0
    %1181 = vmatprep.subr.mxu0 0.0
    %1182 = vmatpush1.msra.mxu0 0.0
    %1183 = vmatprep.subr.mxu0 0.0
    %1184 = vmatpush1.msra.mxu0 0.0
    %1185 = vmatprep.subr.mxu0 0.0
    %1186 = vmatpush1.msra.mxu0 0.0
    %1187 = vmatprep.subr.mxu0 0.0
    %1188 = vmatpush1.msra.mxu0 %v1152
    %1189 = vmatprep.subr.mxu0 0.0
    %1190 = vmatpush1.msra.mxu0 %v1151
    %1191 = vmatprep.subr.mxu0 0.0
    %1192 = vmatpush1.msra.mxu0 %v1150
    %1193 = vmatprep.subr.mxu0 0.0
    %1194 = vmatpush1.msra.mxu0 %v1149
    %1195 = vmatprep.subr.mxu0 0.0
    %1196 = vmatpush2.msra.mxu0 0.0
    %1197 = vmatprep.subr.mxu0 0.0
    %1198 = vmatpush2.msra.mxu0 0.0
    %1199 = vmatprep.subr.mxu0 0.0
    %1200 = vmatpush2.msra.mxu0 0.0
    %1201 = vmatprep.subr.mxu0 0.0
    %1202 = vmatpush2.msra.mxu0 0.0
    %1203 = vmatprep.subr.mxu0 0.0
    %1204 = vmatpush2.msra.mxu0 0.0
    %1205 = vmatprep.subr.mxu0 0.0
    %1206 = vmatpush2.msra.mxu0 0.0
    %1207 = vmatprep.subr.mxu0 0.0
    %1208 = vmatpush2.msra.mxu0 0.0
    %1209 = vmatprep.subr.mxu0 0.0
    %1210 = vmatpush2.msra.mxu0 0.0
    %1211 = vmatprep.subr.mxu0 0.0
    %1212 = vmatpush2.msra.mxu0 0.0
    %1213 = vmatprep.subr.mxu0 0.0
    %1214 = vmatpush2.msra.mxu0 0.0
    %1215 = vmatprep.subr.mxu0 0.0
    %1216 = vmatpush2.msra.mxu0 0.0
    %1217 = vmatprep.subr.mxu0 0.0
    %1218 = vmatpush2.msra.mxu0 0.0
    %1219 = vmatprep.subr.mxu0 0.0
    %1220 = vmatpush2.msra.mxu0 0.0
    %1221 = vmatprep.subr.mxu0 0.0
    %1222 = vmatpush2.msra.mxu0 0.0
    %1223 = vmatprep.subr.mxu0 0.0
    %1224 = vmatpush2.msra.mxu0 0.0
    %1225 = vmatprep.subr.mxu0 0.0
    %1226 = vmatpush2.msra.mxu0 0.0
    %1227 = vmatprep.mubr.f32.mxu0 0.0
    %1228 = vmatmul.mubr.f32.gmra.mxu0 %v1161
    %v1229 = vpop.f32.mrf.mxu0
    %v1230 = vadd.f32 %v1158, %v1229
    %v1231 = vpop.f32.mrf.mxu0
    %1232 = vdwg.mxu0
    %v1233 = vld [vmem:[%s37] sm:$0xff]
    %v1234 = vld [vmem:[%s37 + $0x8] sm:$0xff]
    %v1235 = vld [vmem:[%s37 + $0x10] sm:$0xff]
    %v1236 = vld [vmem:[%s37 + $0x18] sm:$0xff]
    %v1237 = vld [vmem:[#allocation13] sm:$0x1]
    %v1239 = vlaneseq
    %v1240 = vshrl.u32 %v1239, 7
    %v1241 = vsub.s32 0, %v1240
    %v1242 = vrot.slane %v1237, %v1241
    %1244 = vmatprep.subr.mxu0 0.0
    %1245 = vmatpush1.msra.mxu0 0.0
    %1246 = vmatprep.subr.mxu0 0.0
    %1247 = vmatpush1.msra.mxu0 0.0
    %1248 = vmatprep.subr.mxu0 0.0
    %1249 = vmatpush1.msra.mxu0 0.0
    %1250 = vmatprep.subr.mxu0 0.0
    %1251 = vmatpush1.msra.mxu0 0.0
    %1252 = vmatprep.subr.mxu0 0.0
    %1253 = vmatpush1.msra.mxu0 0.0
    %1254 = vmatprep.subr.mxu0 0.0
    %1255 = vmatpush1.msra.mxu0 0.0
    %1256 = vmatprep.subr.mxu0 0.0
    %1257 = vmatpush1.msra.mxu0 0.0
    %1258 = vmatprep.subr.mxu0 0.0
    %1259 = vmatpush1.msra.mxu0 0.0
    %1260 = vmatprep.subr.mxu0 0.0
    %1261 = vmatpush1.msra.mxu0 0.0
    %1262 = vmatprep.subr.mxu0 0.0
    %1263 = vmatpush1.msra.mxu0 0.0
    %1264 = vmatprep.subr.mxu0 0.0
    %1265 = vmatpush1.msra.mxu0 0.0
    %1266 = vmatprep.subr.mxu0 0.0
    %1267 = vmatpush1.msra.mxu0 0.0
    %1268 = vmatprep.subr.mxu0 0.0
    %1269 = vmatpush1.msra.mxu0 %v1236
    %1270 = vmatprep.subr.mxu0 0.0
    %1271 = vmatpush1.msra.mxu0 %v1235
    %1272 = vmatprep.subr.mxu0 0.0
    %1273 = vmatpush1.msra.mxu0 %v1234
    %1274 = vmatprep.subr.mxu0 0.0
    %1275 = vmatpush1.msra.mxu0 %v1233
    %1276 = vmatprep.subr.mxu0 0.0
    %1277 = vmatpush2.msra.mxu0 0.0
    %1278 = vmatprep.subr.mxu0 0.0
    %1279 = vmatpush2.msra.mxu0 0.0
    %1280 = vmatprep.subr.mxu0 0.0
    %1281 = vmatpush2.msra.mxu0 0.0
    %1282 = vmatprep.subr.mxu0 0.0
    %1283 = vmatpush2.msra.mxu0 0.0
    %1284 = vmatprep.subr.mxu0 0.0
    %1285 = vmatpush2.msra.mxu0 0.0
    %1286 = vmatprep.subr.mxu0 0.0
    %1287 = vmatpush2.msra.mxu0 0.0
    %1288 = vmatprep.subr.mxu0 0.0
    %1289 = vmatpush2.msra.mxu0 0.0
    %1290 = vmatprep.subr.mxu0 0.0
    %1291 = vmatpush2.msra.mxu0 0.0
    %1292 = vmatprep.subr.mxu0 0.0
    %1293 = vmatpush2.msra.mxu0 0.0
    %1294 = vmatprep.subr.mxu0 0.0
    %1295 = vmatpush2.msra.mxu0 0.0
    %1296 = vmatprep.subr.mxu0 0.0
    %1297 = vmatpush2.msra.mxu0 0.0
    %1298 = vmatprep.subr.mxu0 0.0
    %1299 = vmatpush2.msra.mxu0 0.0
    %1300 = vmatprep.subr.mxu0 0.0
    %1301 = vmatpush2.msra.mxu0 0.0
    %1302 = vmatprep.subr.mxu0 0.0
    %1303 = vmatpush2.msra.mxu0 0.0
    %1304 = vmatprep.subr.mxu0 0.0
    %1305 = vmatpush2.msra.mxu0 0.0
    %1306 = vmatprep.subr.mxu0 0.0
    %1307 = vmatpush2.msra.mxu0 0.0
    %1308 = vmatprep.mubr.f32.mxu0 0.0
    %1309 = vmatmul.mubr.f32.gmra.mxu0 %v1161
    %v1310 = vpop.f32.mrf.mxu0
    %v1311 = vadd.f32 %v1242, %v1310
    %v1312 = vpop.f32.mrf.mxu0
    %1313 = vdwg.mxu0
    %v1314 = vmul.f32 %v1311, 0.5
    %v1315 = vmul.f32 %v1314, 1.442695
    %v1316 = vpow.pop %v1315
    %v1317 = vld [vmem:[%s9] sm:$0x3]
    %v1318 = vmul.f32 %v1316, %v1317
    %v1319 = vadd.f32 %v1230, %v1318
    %v1320 = vld [vmem:[#allocation15] sm:$0xff]
    %v1321 = vld [vmem:[#allocation15 + $0x8] sm:$0xff]
    %v1322 = vld [vmem:[#allocation15 + $0x10] sm:$0xff]
    %v1323 = vld [vmem:[#allocation15 + $0x18] sm:$0xff]
    %v1324 = vld [vmem:[#allocation15 + $0x20] sm:$0xff]
    %v1325 = vld [vmem:[#allocation15 + $0x28] sm:$0xff]
    %v1326 = vld [vmem:[#allocation15 + $0x30] sm:$0xff]
    %v1327 = vld [vmem:[#allocation15 + $0x38] sm:$0xff]
    %v1328 = vld [vmem:[#allocation15 + $0x40] sm:$0xff]
    %v1329 = vld [vmem:[#allocation15 + $0x48] sm:$0xff]
    %v1330 = vld [vmem:[#allocation15 + $0x50] sm:$0xff]
    %v1331 = vld [vmem:[#allocation15 + $0x58] sm:$0xff]
    %v1332 = vld [vmem:[#allocation15 + $0x60] sm:$0xff]
    %v1333 = vld [vmem:[#allocation15 + $0x68] sm:$0xff]
    %v1334 = vld [vmem:[#allocation15 + $0x70] sm:$0xff]
    %v1335 = vld [vmem:[#allocation15 + $0x78] sm:$0xff]
    %v1336 = vld [vmem:[#allocation15 + $0x80] sm:$0xff]
    %v1337 = vld [vmem:[#allocation15 + $0x88] sm:$0xff]
    %v1338 = vld [vmem:[#allocation15 + $0x90] sm:$0xff]
    %v1339 = vld [vmem:[#allocation15 + $0x98] sm:$0xff]
    %v1340 = vld [vmem:[#allocation15 + $0xa0] sm:$0xff]
    %v1341 = vld [vmem:[#allocation15 + $0xa8] sm:$0xff]
    %v1342 = vld [vmem:[#allocation15 + $0xb0] sm:$0xff]
    %v1343 = vld [vmem:[#allocation15 + $0xb8] sm:$0xff]
    %v1344 = vld [vmem:[#allocation15 + $0xc0] sm:$0xff]
    %v1345 = vld [vmem:[#allocation15 + $0xc8] sm:$0xff]
    %v1346 = vld [vmem:[#allocation15 + $0xd0] sm:$0xff]
    %v1347 = vld [vmem:[#allocation15 + $0xd8] sm:$0xff]
    %v1348 = vld [vmem:[#allocation15 + $0xe0] sm:$0xff]
    %v1349 = vld [vmem:[#allocation15 + $0xe8] sm:$0xff]
    %v1350 = vld [vmem:[#allocation15 + $0xf0] sm:$0xff]
    %v1351 = vld [vmem:[#allocation15 + $0xf8] sm:$0xff]
    %v1352 = vld [vmem:[#allocation15 + $0x100] sm:$0xff]
    %v1353 = vld [vmem:[#allocation15 + $0x108] sm:$0xff]
    %v1354 = vld [vmem:[#allocation15 + $0x110] sm:$0xff]
    %v1355 = vld [vmem:[#allocation15 + $0x118] sm:$0xff]
    %v1356 = vld [vmem:[#allocation15 + $0x120] sm:$0xff]
    %v1357 = vld [vmem:[#allocation15 + $0x128] sm:$0xff]
    %v1358 = vld [vmem:[#allocation15 + $0x130] sm:$0xff]
    %v1359 = vld [vmem:[#allocation15 + $0x138] sm:$0xff]
    %v1360 = vld [vmem:[#allocation15 + $0x140] sm:$0xff]
    %v1361 = vld [vmem:[#allocation15 + $0x148] sm:$0xff]
    %v1362 = vld [vmem:[#allocation15 + $0x150] sm:$0xff]
    %v1363 = vld [vmem:[#allocation15 + $0x158] sm:$0xff]
    %v1364 = vld [vmem:[#allocation15 + $0x160] sm:$0xff]
    %v1365 = vld [vmem:[#allocation15 + $0x168] sm:$0xff]
    %v1366 = vld [vmem:[#allocation15 + $0x170] sm:$0xff]
    %v1367 = vld [vmem:[#allocation15 + $0x178] sm:$0xff]
    %v1368 = vld [vmem:[#allocation15 + $0x180] sm:$0xff]
    %v1369 = vld [vmem:[#allocation15 + $0x188] sm:$0xff]
    %v1370 = vld [vmem:[#allocation15 + $0x190] sm:$0xff]
    %v1371 = vld [vmem:[#allocation15 + $0x198] sm:$0xff]
    %v1372 = vld [vmem:[#allocation15 + $0x1a0] sm:$0xff]
    %v1373 = vld [vmem:[#allocation15 + $0x1a8] sm:$0xff]
    %v1374 = vld [vmem:[#allocation15 + $0x1b0] sm:$0xff]
    %v1375 = vld [vmem:[#allocation15 + $0x1b8] sm:$0xff]
    %v1376 = vld [vmem:[#allocation15 + $0x1c0] sm:$0xff]
    %v1377 = vld [vmem:[#allocation15 + $0x1c8] sm:$0xff]
    %v1378 = vld [vmem:[#allocation15 + $0x1d0] sm:$0xff]
    %v1379 = vld [vmem:[#allocation15 + $0x1d8] sm:$0xff]
    %v1380 = vld [vmem:[#allocation15 + $0x1e0] sm:$0xff]
    %v1381 = vld [vmem:[#allocation15 + $0x1e8] sm:$0xff]
    %v1382 = vld [vmem:[#allocation15 + $0x1f0] sm:$0xff]
    %v1383 = vld [vmem:[#allocation15 + $0x1f8] sm:$0xff]
    %v1384 = vld [vmem:[#allocation15 + $0x200] sm:$0xff]
    %v1385 = vld [vmem:[#allocation15 + $0x208] sm:$0xff]
    %v1386 = vld [vmem:[#allocation15 + $0x210] sm:$0xff]
    %v1387 = vld [vmem:[#allocation15 + $0x218] sm:$0xff]
    %v1388 = vld [vmem:[#allocation15 + $0x220] sm:$0xff]
    %v1389 = vld [vmem:[#allocation15 + $0x228] sm:$0xff]
    %v1390 = vld [vmem:[#allocation15 + $0x230] sm:$0xff]
    %v1391 = vld [vmem:[#allocation15 + $0x238] sm:$0xff]
    %v1392 = vld [vmem:[#allocation15 + $0x240] sm:$0xff]
    %v1393 = vld [vmem:[#allocation15 + $0x248] sm:$0xff]
    %v1394 = vld [vmem:[#allocation15 + $0x250] sm:$0xff]
    %v1395 = vld [vmem:[#allocation15 + $0x258] sm:$0xff]
    %v1396 = vld [vmem:[#allocation15 + $0x260] sm:$0xff]
    %v1397 = vld [vmem:[#allocation15 + $0x268] sm:$0xff]
    %v1398 = vld [vmem:[#allocation15 + $0x270] sm:$0xff]
    %v1399 = vld [vmem:[#allocation15 + $0x278] sm:$0xff]
    %v1400 = vld [vmem:[#allocation15 + $0x280] sm:$0xff]
    %v1401 = vld [vmem:[#allocation15 + $0x288] sm:$0xff]
    %v1402 = vld [vmem:[#allocation15 + $0x290] sm:$0xff]
    %v1403 = vld [vmem:[#allocation15 + $0x298] sm:$0xff]
    %v1404 = vld [vmem:[#allocation15 + $0x2a0] sm:$0xff]
    %v1405 = vld [vmem:[#allocation15 + $0x2a8] sm:$0xff]
    %v1406 = vld [vmem:[#allocation15 + $0x2b0] sm:$0xff]
    %v1407 = vld [vmem:[#allocation15 + $0x2b8] sm:$0xff]
    %v1408 = vld [vmem:[#allocation15 + $0x2c0] sm:$0xff]
    %v1409 = vld [vmem:[#allocation15 + $0x2c8] sm:$0xff]
    %v1410 = vld [vmem:[#allocation15 + $0x2d0] sm:$0xff]
    %v1411 = vld [vmem:[#allocation15 + $0x2d8] sm:$0xff]
    %v1412 = vld [vmem:[#allocation15 + $0x2e0] sm:$0xff]
    %v1413 = vld [vmem:[#allocation15 + $0x2e8] sm:$0xff]
    %v1414 = vld [vmem:[#allocation15 + $0x2f0] sm:$0xff]
    %v1415 = vld [vmem:[#allocation15 + $0x2f8] sm:$0xff]
    %v1416 = vld [vmem:[#allocation15 + $0x300] sm:$0xff]
    %v1417 = vld [vmem:[#allocation15 + $0x308] sm:$0xff]
    %v1418 = vld [vmem:[#allocation15 + $0x310] sm:$0xff]
    %v1419 = vld [vmem:[#allocation15 + $0x318] sm:$0xff]
    %v1421 = vsel %vm641, %v1319, 0
    %1423 = vmatprep.subr.mxu0 0.0
    %1424 = vmatpush1.msra.mxu0 0.0
    %1425 = vmatprep.subr.mxu0 0.0
    %1426 = vmatpush1.msra.mxu0 0.0
    %1427 = vmatprep.subr.mxu0 0.0
    %1428 = vmatpush1.msra.mxu0 0.0
    %1429 = vmatprep.subr.mxu0 0.0
    %1430 = vmatpush1.msra.mxu0 0.0
    %1431 = vmatprep.subr.mxu0 0.0
    %1432 = vmatpush1.msra.mxu0 0.0
    %1433 = vmatprep.subr.mxu0 0.0
    %1434 = vmatpush1.msra.mxu0 0.0
    %1435 = vmatprep.subr.mxu0 0.0
    %1436 = vmatpush1.msra.mxu0 0.0
    %1437 = vmatprep.subr.mxu0 0.0
    %1438 = vmatpush1.msra.mxu0 0.0
    %1439 = vmatprep.subr.mxu0 0.0
    %1440 = vmatpush1.msra.mxu0 0.0
    %1441 = vmatprep.subr.mxu0 0.0
    %1442 = vmatpush1.msra.mxu0 0.0
    %1443 = vmatprep.subr.mxu0 0.0
    %1444 = vmatpush1.msra.mxu0 0.0
    %1445 = vmatprep.subr.mxu0 0.0
    %1446 = vmatpush1.msra.mxu0 0.0
    %1447 = vmatprep.subr.mxu0 0.0
    %1448 = vmatpush1.msra.mxu0 %v1419
    %1449 = vmatprep.subr.mxu0 0.0
    %1450 = vmatpush1.msra.mxu0 %v1418
    %1451 = vmatprep.subr.mxu0 0.0
    %1452 = vmatpush1.msra.mxu0 %v1417
    %1453 = vmatprep.subr.mxu0 0.0
    %1454 = vmatpush1.msra.mxu0 %v1416
    %1455 = vmatprep.subr.mxu0 0.0
    %1456 = vmatpush2.msra.mxu0 0.0
    %1457 = vmatprep.subr.mxu0 0.0
    %1458 = vmatpush2.msra.mxu0 0.0
    %1459 = vmatprep.subr.mxu0 0.0
    %1460 = vmatpush2.msra.mxu0 0.0
    %1461 = vmatprep.subr.mxu0 0.0
    %1462 = vmatpush2.msra.mxu0 0.0
    %1463 = vmatprep.subr.mxu0 0.0
    %1464 = vmatpush2.msra.mxu0 0.0
    %1465 = vmatprep.subr.mxu0 0.0
    %1466 = vmatpush2.msra.mxu0 0.0
    %1467 = vmatprep.subr.mxu0 0.0
    %1468 = vmatpush2.msra.mxu0 0.0
    %1469 = vmatprep.subr.mxu0 0.0
    %1470 = vmatpush2.msra.mxu0 0.0
    %1471 = vmatprep.subr.mxu0 0.0
    %1472 = vmatpush2.msra.mxu0 0.0
    %1473 = vmatprep.subr.mxu0 0.0
    %1474 = vmatpush2.msra.mxu0 0.0
    %1475 = vmatprep.subr.mxu0 0.0
    %1476 = vmatpush2.msra.mxu0 0.0
    %1477 = vmatprep.subr.mxu0 0.0
    %1478 = vmatpush2.msra.mxu0 0.0
    %1479 = vmatprep.subr.mxu0 0.0
    %1480 = vmatpush2.msra.mxu0 0.0
    %1481 = vmatprep.subr.mxu0 0.0
    %1482 = vmatpush2.msra.mxu0 0.0
    %1483 = vmatprep.subr.mxu0 0.0
    %1484 = vmatpush2.msra.mxu0 0.0
    %1485 = vmatprep.subr.mxu0 0.0
    %1486 = vmatpush2.msra.mxu0 0.0
    %1487 = vmatprep.mubr.f32.mxu0 0.0
    %1488 = vmatmul.mubr.f32.gmra.mxu0 %v1421
    %v1489 = vpop.f32.mrf.mxu0
    %v1490 = vadd.f32 0.0, %v1489
    %v1491 = vpop.f32.mrf.mxu0
    %1492 = vdwg.mxu0
    %1493 = vmatprep.subr.mxu0 0.0
    %1494 = vmatpush1.msra.mxu0 %v1335
    %1495 = vmatprep.subr.mxu0 0.0
    %1496 = vmatpush1.msra.mxu0 %v1334
    %1497 = vmatprep.subr.mxu0 0.0
    %1498 = vmatpush1.msra.mxu0 %v1333
    %1499 = vmatprep.subr.mxu0 0.0
    %1500 = vmatpush1.msra.mxu0 %v1332
    %1501 = vmatprep.subr.mxu0 0.0
    %1502 = vmatpush1.msra.mxu0 %v1331
    %1503 = vmatprep.subr.mxu0 0.0
    %1504 = vmatpush1.msra.mxu0 %v1330
    %1505 = vmatprep.subr.mxu0 0.0
    %1506 = vmatpush1.msra.mxu0 %v1329
    %1507 = vmatprep.subr.mxu0 0.0
    %1508 = vmatpush1.msra.mxu0 %v1328
    %1509 = vmatprep.subr.mxu0 0.0
    %1510 = vmatpush1.msra.mxu0 %v1327
    %1511 = vmatprep.subr.mxu0 0.0
    %1512 = vmatpush1.msra.mxu0 %v1326
    %1513 = vmatprep.subr.mxu0 0.0
    %1514 = vmatpush1.msra.mxu0 %v1325
    %1515 = vmatprep.subr.mxu0 0.0
    %1516 = vmatpush1.msra.mxu0 %v1324
    %1517 = vmatprep.subr.mxu0 0.0
    %1518 = vmatpush1.msra.mxu0 %v1323
    %1519 = vmatprep.subr.mxu0 0.0
    %1520 = vmatpush1.msra.mxu0 %v1322
    %1521 = vmatprep.subr.mxu0 0.0
    %1522 = vmatpush1.msra.mxu0 %v1321
    %1523 = vmatprep.subr.mxu0 0.0
    %1524 = vmatpush1.msra.mxu0 %v1320
    %1525 = vmatprep.subr.mxu0 0.0
    %1526 = vmatpush2.msra.mxu0 %v1351
    %1527 = vmatprep.subr.mxu0 0.0
    %1528 = vmatpush2.msra.mxu0 %v1350
    %1529 = vmatprep.subr.mxu0 0.0
    %1530 = vmatpush2.msra.mxu0 %v1349
    %1531 = vmatprep.subr.mxu0 0.0
    %1532 = vmatpush2.msra.mxu0 %v1348
    %1533 = vmatprep.subr.mxu0 0.0
    %1534 = vmatpush2.msra.mxu0 %v1347
    %1535 = vmatprep.subr.mxu0 0.0
    %1536 = vmatpush2.msra.mxu0 %v1346
    %1537 = vmatprep.subr.mxu0 0.0
    %1538 = vmatpush2.msra.mxu0 %v1345
    %1539 = vmatprep.subr.mxu0 0.0
    %1540 = vmatpush2.msra.mxu0 %v1344
    %1541 = vmatprep.subr.mxu0 0.0
    %1542 = vmatpush2.msra.mxu0 %v1343
    %1543 = vmatprep.subr.mxu0 0.0
    %1544 = vmatpush2.msra.mxu0 %v1342
    %1545 = vmatprep.subr.mxu0 0.0
    %1546 = vmatpush2.msra.mxu0 %v1341
    %1547 = vmatprep.subr.mxu0 0.0
    %1548 = vmatpush2.msra.mxu0 %v1340
    %1549 = vmatprep.subr.mxu0 0.0
    %1550 = vmatpush2.msra.mxu0 %v1339
    %1551 = vmatprep.subr.mxu0 0.0
    %1552 = vmatpush2.msra.mxu0 %v1338
    %1553 = vmatprep.subr.mxu0 0.0
    %1554 = vmatpush2.msra.mxu0 %v1337
    %1555 = vmatprep.subr.mxu0 0.0
    %1556 = vmatpush2.msra.mxu0 %v1336
    %1557 = vmatprep.mubr.f32.mxu0 %v732
    %1558 = vmatmul.mubr.f32.gmra.mxu0 %v724
    %v1559 = vpop.f32.mrf.mxu0
    %v1560 = vadd.f32 %v1490, %v1559
    %v1561 = vpop.f32.mrf.mxu0
    %1562 = vdwg.mxu0
    %1563 = vmatprep.subr.mxu0 0.0
    %1564 = vmatpush1.msra.mxu0 %v1367
    %1565 = vmatprep.subr.mxu0 0.0
    %1566 = vmatpush1.msra.mxu0 %v1366
    %1567 = vmatprep.subr.mxu0 0.0
    %1568 = vmatpush1.msra.mxu0 %v1365
    %1569 = vmatprep.subr.mxu0 0.0
    %1570 = vmatpush1.msra.mxu0 %v1364
    %1571 = vmatprep.subr.mxu0 0.0
    %1572 = vmatpush1.msra.mxu0 %v1363
    %1573 = vmatprep.subr.mxu0 0.0
    %1574 = vmatpush1.msra.mxu0 %v1362
    %1575 = vmatprep.subr.mxu0 0.0
    %1576 = vmatpush1.msra.mxu0 %v1361
    %1577 = vmatprep.subr.mxu0 0.0
    %1578 = vmatpush1.msra.mxu0 %v1360
    %1579 = vmatprep.subr.mxu0 0.0
    %1580 = vmatpush1.msra.mxu0 %v1359
    %1581 = vmatprep.subr.mxu0 0.0
    %1582 = vmatpush1.msra.mxu0 %v1358
    %1583 = vmatprep.subr.mxu0 0.0
    %1584 = vmatpush1.msra.mxu0 %v1357
    %1585 = vmatprep.subr.mxu0 0.0
    %1586 = vmatpush1.msra.mxu0 %v1356
    %1587 = vmatprep.subr.mxu0 0.0
    %1588 = vmatpush1.msra.mxu0 %v1355
    %1589 = vmatprep.subr.mxu0 0.0
    %1590 = vmatpush1.msra.mxu0 %v1354
    %1591 = vmatprep.subr.mxu0 0.0
    %1592 = vmatpush1.msra.mxu0 %v1353
    %1593 = vmatprep.subr.mxu0 0.0
    %1594 = vmatpush1.msra.mxu0 %v1352
    %1595 = vmatprep.subr.mxu0 0.0
    %1596 = vmatpush2.msra.mxu0 %v1383
    %1597 = vmatprep.subr.mxu0 0.0
    %1598 = vmatpush2.msra.mxu0 %v1382
    %1599 = vmatprep.subr.mxu0 0.0
    %1600 = vmatpush2.msra.mxu0 %v1381
    %1601 = vmatprep.subr.mxu0 0.0
    %1602 = vmatpush2.msra.mxu0 %v1380
    %1603 = vmatprep.subr.mxu0 0.0
    %1604 = vmatpush2.msra.mxu0 %v1379
    %1605 = vmatprep.subr.mxu0 0.0
    %1606 = vmatpush2.msra.mxu0 %v1378
    %1607 = vmatprep.subr.mxu0 0.0
    %1608 = vmatpush2.msra.mxu0 %v1377
    %1609 = vmatprep.subr.mxu0 0.0
    %1610 = vmatpush2.msra.mxu0 %v1376
    %1611 = vmatprep.subr.mxu0 0.0
    %1612 = vmatpush2.msra.mxu0 %v1375
    %1613 = vmatprep.subr.mxu0 0.0
    %1614 = vmatpush2.msra.mxu0 %v1374
    %1615 = vmatprep.subr.mxu0 0.0
    %1616 = vmatpush2.msra.mxu0 %v1373
    %1617 = vmatprep.subr.mxu0 0.0
    %1618 = vmatpush2.msra.mxu0 %v1372
    %1619 = vmatprep.subr.mxu0 0.0
    %1620 = vmatpush2.msra.mxu0 %v1371
    %1621 = vmatprep.subr.mxu0 0.0
    %1622 = vmatpush2.msra.mxu0 %v1370
    %1623 = vmatprep.subr.mxu0 0.0
    %1624 = vmatpush2.msra.mxu0 %v1369
    %1625 = vmatprep.subr.mxu0 0.0
    %1626 = vmatpush2.msra.mxu0 %v1368
    %1627 = vmatprep.mubr.f32.mxu0 %v733
    %1628 = vmatmul.mubr.f32.gmra.mxu0 %v731
    %v1629 = vpop.f32.mrf.mxu0
    %v1630 = vadd.f32 %v1560, %v1629
    %v1631 = vpop.f32.mrf.mxu0
    %1632 = vdwg.mxu0
    %1633 = vmatprep.subr.mxu0 0.0
    %1634 = vmatpush1.msra.mxu0 %v1399
    %1635 = vmatprep.subr.mxu0 0.0
    %1636 = vmatpush1.msra.mxu0 %v1398
    %1637 = vmatprep.subr.mxu0 0.0
    %1638 = vmatpush1.msra.mxu0 %v1397
    %1639 = vmatprep.subr.mxu0 0.0
    %1640 = vmatpush1.msra.mxu0 %v1396
    %1641 = vmatprep.subr.mxu0 0.0
    %1642 = vmatpush1.msra.mxu0 %v1395
    %1643 = vmatprep.subr.mxu0 0.0
    %1644 = vmatpush1.msra.mxu0 %v1394
    %1645 = vmatprep.subr.mxu0 0.0
    %1646 = vmatpush1.msra.mxu0 %v1393
    %1647 = vmatprep.subr.mxu0 0.0
    %1648 = vmatpush1.msra.mxu0 %v1392
    %1649 = vmatprep.subr.mxu0 0.0
    %1650 = vmatpush1.msra.mxu0 %v1391
    %1651 = vmatprep.subr.mxu0 0.0
    %1652 = vmatpush1.msra.mxu0 %v1390
    %1653 = vmatprep.subr.mxu0 0.0
    %1654 = vmatpush1.msra.mxu0 %v1389
    %1655 = vmatprep.subr.mxu0 0.0
    %1656 = vmatpush1.msra.mxu0 %v1388
    %1657 = vmatprep.subr.mxu0 0.0
    %1658 = vmatpush1.msra.mxu0 %v1387
    %1659 = vmatprep.subr.mxu0 0.0
    %1660 = vmatpush1.msra.mxu0 %v1386
    %1661 = vmatprep.subr.mxu0 0.0
    %1662 = vmatpush1.msra.mxu0 %v1385
    %1663 = vmatprep.subr.mxu0 0.0
    %1664 = vmatpush1.msra.mxu0 %v1384
    %1665 = vmatprep.subr.mxu0 0.0
    %1666 = vmatpush2.msra.mxu0 %v1415
    %1667 = vmatprep.subr.mxu0 0.0
    %1668 = vmatpush2.msra.mxu0 %v1414
    %1669 = vmatprep.subr.mxu0 0.0
    %1670 = vmatpush2.msra.mxu0 %v1413
    %1671 = vmatprep.subr.mxu0 0.0
    %1672 = vmatpush2.msra.mxu0 %v1412
    %1673 = vmatprep.subr.mxu0 0.0
    %1674 = vmatpush2.msra.mxu0 %v1411
    %1675 = vmatprep.subr.mxu0 0.0
    %1676 = vmatpush2.msra.mxu0 %v1410
    %1677 = vmatprep.subr.mxu0 0.0
    %1678 = vmatpush2.msra.mxu0 %v1409
    %1679 = vmatprep.subr.mxu0 0.0
    %1680 = vmatpush2.msra.mxu0 %v1408
    %1681 = vmatprep.subr.mxu0 0.0
    %1682 = vmatpush2.msra.mxu0 %v1407
    %1683 = vmatprep.subr.mxu0 0.0
    %1684 = vmatpush2.msra.mxu0 %v1406
    %1685 = vmatprep.subr.mxu0 0.0
    %1686 = vmatpush2.msra.mxu0 %v1405
    %1687 = vmatprep.subr.mxu0 0.0
    %1688 = vmatpush2.msra.mxu0 %v1404
    %1689 = vmatprep.subr.mxu0 0.0
    %1690 = vmatpush2.msra.mxu0 %v1403
    %1691 = vmatprep.subr.mxu0 0.0
    %1692 = vmatpush2.msra.mxu0 %v1402
    %1693 = vmatprep.subr.mxu0 0.0
    %1694 = vmatpush2.msra.mxu0 %v1401
    %1695 = vmatprep.subr.mxu0 0.0
    %1696 = vmatpush2.msra.mxu0 %v1400
    %1697 = vmatprep.mubr.f32.mxu0 %v741
    %1698 = vmatmul.mubr.f32.gmra.mxu0 %v740
    %v1699 = vpop.f32.mrf.mxu0
    %v1700 = vadd.f32 %v1630, %v1699
    %v1701 = vpop.f32.mrf.mxu0
    %1702 = vdwg.mxu0
    %v1703 = vld [vmem:[#allocation16] sm:$0x1]
    %v1705 = vlaneseq
    %v1706 = vshrl.u32 %v1705, 7
    %v1707 = vsub.s32 0, %v1706
    %v1708 = vrot.slane %v1703, %v1707
    %v1710 = vadd.f32 %v1700, %v1708
    %vm1711 = vcmp.ge.f32.partialorder %v1710, 0.0
    %v1712 = vmul.f32 %v1710, 0.01
    %v1713 = vsel %vm1711, %v1710, %v1712
    %v1714 = vld [vmem:[%s45] sm:$0xff]
    %v1715 = vld [vmem:[%s45 + $0x8] sm:$0xff]
    %v1716 = vld [vmem:[%s45 + $0x10] sm:$0xff]
    %v1717 = vld [vmem:[%s45 + $0x18] sm:$0xff]
    %v1718 = vld [vmem:[%s45 + $0x20] sm:$0xff]
    %v1719 = vld [vmem:[%s45 + $0x28] sm:$0xff]
    %v1720 = vld [vmem:[%s45 + $0x30] sm:$0xff]
    %v1721 = vld [vmem:[%s45 + $0x38] sm:$0xff]
    %v1722 = vld [vmem:[%s45 + $0x40] sm:$0xff]
    %v1723 = vld [vmem:[%s45 + $0x48] sm:$0xff]
    %v1724 = vld [vmem:[%s45 + $0x50] sm:$0xff]
    %v1725 = vld [vmem:[%s45 + $0x58] sm:$0xff]
    %v1726 = vld [vmem:[%s45 + $0x60] sm:$0xff]
    %v1727 = vld [vmem:[%s45 + $0x68] sm:$0xff]
    %v1728 = vld [vmem:[%s45 + $0x70] sm:$0xff]
    %v1729 = vld [vmem:[%s45 + $0x78] sm:$0xff]
    %v1730 = vld [vmem:[#allocation18] sm:$0x1]
    %v1732 = vlaneseq
    %v1733 = vshrl.u32 %v1732, 7
    %v1734 = vsub.s32 0, %v1733
    %v1735 = vrot.slane %v1730, %v1734
    %1737 = vmatprep.subr.mxu0 0.0
    %1738 = vmatpush1.msra.mxu0 %v1729
    %1739 = vmatprep.subr.mxu0 0.0
    %1740 = vmatpush1.msra.mxu0 %v1728
    %1741 = vmatprep.subr.mxu0 0.0
    %1742 = vmatpush1.msra.mxu0 %v1727
    %1743 = vmatprep.subr.mxu0 0.0
    %1744 = vmatpush1.msra.mxu0 %v1726
    %1745 = vmatprep.subr.mxu0 0.0
    %1746 = vmatpush1.msra.mxu0 %v1725
    %1747 = vmatprep.subr.mxu0 0.0
    %1748 = vmatpush1.msra.mxu0 %v1724
    %1749 = vmatprep.subr.mxu0 0.0
    %1750 = vmatpush1.msra.mxu0 %v1723
    %1751 = vmatprep.subr.mxu0 0.0
    %1752 = vmatpush1.msra.mxu0 %v1722
    %1753 = vmatprep.subr.mxu0 0.0
    %1754 = vmatpush1.msra.mxu0 %v1721
    %1755 = vmatprep.subr.mxu0 0.0
    %1756 = vmatpush1.msra.mxu0 %v1720
    %1757 = vmatprep.subr.mxu0 0.0
    %1758 = vmatpush1.msra.mxu0 %v1719
    %1759 = vmatprep.subr.mxu0 0.0
    %1760 = vmatpush1.msra.mxu0 %v1718
    %1761 = vmatprep.subr.mxu0 0.0
    %1762 = vmatpush1.msra.mxu0 %v1717
    %1763 = vmatprep.subr.mxu0 0.0
    %1764 = vmatpush1.msra.mxu0 %v1716
    %1765 = vmatprep.subr.mxu0 0.0
    %1766 = vmatpush1.msra.mxu0 %v1715
    %1767 = vmatprep.subr.mxu0 0.0
    %1768 = vmatpush1.msra.mxu0 %v1714
    %1769 = vmatprep.subr.mxu0 0.0
    %1770 = vmatpush2.msra.mxu0 0.0
    %1771 = vmatprep.subr.mxu0 0.0
    %1772 = vmatpush2.msra.mxu0 0.0
    %1773 = vmatprep.subr.mxu0 0.0
    %1774 = vmatpush2.msra.mxu0 0.0
    %1775 = vmatprep.subr.mxu0 0.0
    %1776 = vmatpush2.msra.mxu0 0.0
    %1777 = vmatprep.subr.mxu0 0.0
    %1778 = vmatpush2.msra.mxu0 0.0
    %1779 = vmatprep.subr.mxu0 0.0
    %1780 = vmatpush2.msra.mxu0 0.0
    %1781 = vmatprep.subr.mxu0 0.0
    %1782 = vmatpush2.msra.mxu0 0.0
    %1783 = vmatprep.subr.mxu0 0.0
    %1784 = vmatpush2.msra.mxu0 0.0
    %1785 = vmatprep.subr.mxu0 0.0
    %1786 = vmatpush2.msra.mxu0 0.0
    %1787 = vmatprep.subr.mxu0 0.0
    %1788 = vmatpush2.msra.mxu0 0.0
    %1789 = vmatprep.subr.mxu0 0.0
    %1790 = vmatpush2.msra.mxu0 0.0
    %1791 = vmatprep.subr.mxu0 0.0
    %1792 = vmatpush2.msra.mxu0 0.0
    %1793 = vmatprep.subr.mxu0 0.0
    %1794 = vmatpush2.msra.mxu0 0.0
    %1795 = vmatprep.subr.mxu0 0.0
    %1796 = vmatpush2.msra.mxu0 0.0
    %1797 = vmatprep.subr.mxu0 0.0
    %1798 = vmatpush2.msra.mxu0 0.0
    %1799 = vmatprep.subr.mxu0 0.0
    %1800 = vmatpush2.msra.mxu0 0.0
    %1801 = vmatprep.mubr.f32.mxu0 0.0
    %1802 = vmatmul.mubr.f32.gmra.mxu0 %v1713
    %v1803 = vpop.f32.mrf.mxu0
    %v1804 = vadd.f32 %v1735, %v1803
    %v1805 = vpop.f32.mrf.mxu0
    %1806 = vdwg.mxu0
    %v1807 = vld [vmem:[%s49] sm:$0xff]
    %v1808 = vld [vmem:[%s49 + $0x8] sm:$0xff]
    %v1809 = vld [vmem:[%s49 + $0x10] sm:$0xff]
    %v1810 = vld [vmem:[%s49 + $0x18] sm:$0xff]
    %v1811 = vld [vmem:[%s49 + $0x20] sm:$0xff]
    %v1812 = vld [vmem:[%s49 + $0x28] sm:$0xff]
    %v1813 = vld [vmem:[%s49 + $0x30] sm:$0xff]
    %v1814 = vld [vmem:[%s49 + $0x38] sm:$0xff]
    %v1815 = vld [vmem:[%s49 + $0x40] sm:$0xff]
    %v1816 = vld [vmem:[%s49 + $0x48] sm:$0xff]
    %v1817 = vld [vmem:[%s49 + $0x50] sm:$0xff]
    %v1818 = vld [vmem:[%s49 + $0x58] sm:$0xff]
    %v1819 = vld [vmem:[%s49 + $0x60] sm:$0xff]
    %v1820 = vld [vmem:[%s49 + $0x68] sm:$0xff]
    %v1821 = vld [vmem:[%s49 + $0x70] sm:$0xff]
    %v1822 = vld [vmem:[%s49 + $0x78] sm:$0xff]
    %v1823 = vld [vmem:[%s49 + $0x80] sm:$0xff]
    %v1824 = vld [vmem:[%s49 + $0x88] sm:$0xff]
    %v1825 = vld [vmem:[%s49 + $0x90] sm:$0xff]
    %v1826 = vld [vmem:[%s49 + $0x98] sm:$0xff]
    %v1827 = vld [vmem:[%s49 + $0xa0] sm:$0xff]
    %v1828 = vld [vmem:[%s49 + $0xa8] sm:$0xff]
    %v1829 = vld [vmem:[%s49 + $0xb0] sm:$0xff]
    %v1830 = vld [vmem:[%s49 + $0xb8] sm:$0xff]
    %v1831 = vld [vmem:[%s49 + $0xc0] sm:$0xff]
    %v1832 = vld [vmem:[%s49 + $0xc8] sm:$0xff]
    %v1833 = vld [vmem:[%s49 + $0xd0] sm:$0xff]
    %v1834 = vld [vmem:[%s49 + $0xd8] sm:$0xff]
    %v1835 = vld [vmem:[%s49 + $0xe0] sm:$0xff]
    %v1836 = vld [vmem:[%s49 + $0xe8] sm:$0xff]
    %v1837 = vld [vmem:[%s49 + $0xf0] sm:$0xff]
    %v1838 = vld [vmem:[%s49 + $0xf8] sm:$0xff]
    %v1839 = vld [vmem:[%s49 + $0x100] sm:$0xff]
    %v1840 = vld [vmem:[%s49 + $0x108] sm:$0xff]
    %v1841 = vld [vmem:[%s49 + $0x110] sm:$0xff]
    %v1842 = vld [vmem:[%s49 + $0x118] sm:$0xff]
    %v1843 = vld [vmem:[%s49 + $0x120] sm:$0xff]
    %v1844 = vld [vmem:[%s49 + $0x128] sm:$0xff]
    %v1845 = vld [vmem:[%s49 + $0x130] sm:$0xff]
    %v1846 = vld [vmem:[%s49 + $0x138] sm:$0xff]
    %v1847 = vld [vmem:[%s49 + $0x140] sm:$0xff]
    %v1848 = vld [vmem:[%s49 + $0x148] sm:$0xff]
    %v1849 = vld [vmem:[%s49 + $0x150] sm:$0xff]
    %v1850 = vld [vmem:[%s49 + $0x158] sm:$0xff]
    %v1851 = vld [vmem:[%s49 + $0x160] sm:$0xff]
    %v1852 = vld [vmem:[%s49 + $0x168] sm:$0xff]
    %v1853 = vld [vmem:[%s49 + $0x170] sm:$0xff]
    %v1854 = vld [vmem:[%s49 + $0x178] sm:$0xff]
    %v1855 = vld [vmem:[%s49 + $0x180] sm:$0xff]
    %v1856 = vld [vmem:[%s49 + $0x188] sm:$0xff]
    %v1857 = vld [vmem:[%s49 + $0x190] sm:$0xff]
    %v1858 = vld [vmem:[%s49 + $0x198] sm:$0xff]
    %v1859 = vld [vmem:[%s49 + $0x1a0] sm:$0xff]
    %v1860 = vld [vmem:[%s49 + $0x1a8] sm:$0xff]
    %v1861 = vld [vmem:[%s49 + $0x1b0] sm:$0xff]
    %v1862 = vld [vmem:[%s49 + $0x1b8] sm:$0xff]
    %v1863 = vld [vmem:[%s49 + $0x1c0] sm:$0xff]
    %v1864 = vld [vmem:[%s49 + $0x1c8] sm:$0xff]
    %v1865 = vld [vmem:[%s49 + $0x1d0] sm:$0xff]
    %v1866 = vld [vmem:[%s49 + $0x1d8] sm:$0xff]
    %v1867 = vld [vmem:[%s49 + $0x1e0] sm:$0xff]
    %v1868 = vld [vmem:[%s49 + $0x1e8] sm:$0xff]
    %v1869 = vld [vmem:[%s49 + $0x1f0] sm:$0xff]
    %v1870 = vld [vmem:[%s49 + $0x1f8] sm:$0xff]
    %v1871 = vld [vmem:[%s49 + $0x200] sm:$0xff]
    %v1872 = vld [vmem:[%s49 + $0x208] sm:$0xff]
    %v1873 = vld [vmem:[%s49 + $0x210] sm:$0xff]
    %v1874 = vld [vmem:[%s49 + $0x218] sm:$0xff]
    %v1875 = vld [vmem:[%s49 + $0x220] sm:$0xff]
    %v1876 = vld [vmem:[%s49 + $0x228] sm:$0xff]
    %v1877 = vld [vmem:[%s49 + $0x230] sm:$0xff]
    %v1878 = vld [vmem:[%s49 + $0x238] sm:$0xff]
    %v1879 = vld [vmem:[%s49 + $0x240] sm:$0xff]
    %v1880 = vld [vmem:[%s49 + $0x248] sm:$0xff]
    %v1881 = vld [vmem:[%s49 + $0x250] sm:$0xff]
    %v1882 = vld [vmem:[%s49 + $0x258] sm:$0xff]
    %v1883 = vld [vmem:[%s49 + $0x260] sm:$0xff]
    %v1884 = vld [vmem:[%s49 + $0x268] sm:$0xff]
    %v1885 = vld [vmem:[%s49 + $0x270] sm:$0xff]
    %v1886 = vld [vmem:[%s49 + $0x278] sm:$0xff]
    %v1887 = vld [vmem:[%s49 + $0x280] sm:$0xff]
    %v1888 = vld [vmem:[%s49 + $0x288] sm:$0xff]
    %v1889 = vld [vmem:[%s49 + $0x290] sm:$0xff]
    %v1890 = vld [vmem:[%s49 + $0x298] sm:$0xff]
    %v1891 = vld [vmem:[%s49 + $0x2a0] sm:$0xff]
    %v1892 = vld [vmem:[%s49 + $0x2a8] sm:$0xff]
    %v1893 = vld [vmem:[%s49 + $0x2b0] sm:$0xff]
    %v1894 = vld [vmem:[%s49 + $0x2b8] sm:$0xff]
    %v1895 = vld [vmem:[%s49 + $0x2c0] sm:$0xff]
    %v1896 = vld [vmem:[%s49 + $0x2c8] sm:$0xff]
    %v1897 = vld [vmem:[%s49 + $0x2d0] sm:$0xff]
    %v1898 = vld [vmem:[%s49 + $0x2d8] sm:$0xff]
    %v1899 = vld [vmem:[%s49 + $0x2e0] sm:$0xff]
    %v1900 = vld [vmem:[%s49 + $0x2e8] sm:$0xff]
    %v1901 = vld [vmem:[%s49 + $0x2f0] sm:$0xff]
    %v1902 = vld [vmem:[%s49 + $0x2f8] sm:$0xff]
    %v1903 = vld [vmem:[%s49 + $0x300] sm:$0xff]
    %v1904 = vld [vmem:[%s49 + $0x308] sm:$0xff]
    %v1905 = vld [vmem:[%s49 + $0x310] sm:$0xff]
    %v1906 = vld [vmem:[%s49 + $0x318] sm:$0xff]
    %1907 = vmatprep.subr.mxu0 0.0
    %1908 = vmatpush1.msra.mxu0 0.0
    %1909 = vmatprep.subr.mxu0 0.0
    %1910 = vmatpush1.msra.mxu0 0.0
    %1911 = vmatprep.subr.mxu0 0.0
    %1912 = vmatpush1.msra.mxu0 0.0
    %1913 = vmatprep.subr.mxu0 0.0
    %1914 = vmatpush1.msra.mxu0 0.0
    %1915 = vmatprep.subr.mxu0 0.0
    %1916 = vmatpush1.msra.mxu0 0.0
    %1917 = vmatprep.subr.mxu0 0.0
    %1918 = vmatpush1.msra.mxu0 0.0
    %1919 = vmatprep.subr.mxu0 0.0
    %1920 = vmatpush1.msra.mxu0 0.0
    %1921 = vmatprep.subr.mxu0 0.0
    %1922 = vmatpush1.msra.mxu0 0.0
    %1923 = vmatprep.subr.mxu0 0.0
    %1924 = vmatpush1.msra.mxu0 0.0
    %1925 = vmatprep.subr.mxu0 0.0
    %1926 = vmatpush1.msra.mxu0 0.0
    %1927 = vmatprep.subr.mxu0 0.0
    %1928 = vmatpush1.msra.mxu0 0.0
    %1929 = vmatprep.subr.mxu0 0.0
    %1930 = vmatpush1.msra.mxu0 0.0
    %1931 = vmatprep.subr.mxu0 0.0
    %1932 = vmatpush1.msra.mxu0 %v1906
    %1933 = vmatprep.subr.mxu0 0.0
    %1934 = vmatpush1.msra.mxu0 %v1905
    %1935 = vmatprep.subr.mxu0 0.0
    %1936 = vmatpush1.msra.mxu0 %v1904
    %1937 = vmatprep.subr.mxu0 0.0
    %1938 = vmatpush1.msra.mxu0 %v1903
    %1939 = vmatprep.subr.mxu0 0.0
    %1940 = vmatpush2.msra.mxu0 0.0
    %1941 = vmatprep.subr.mxu0 0.0
    %1942 = vmatpush2.msra.mxu0 0.0
    %1943 = vmatprep.subr.mxu0 0.0
    %1944 = vmatpush2.msra.mxu0 0.0
    %1945 = vmatprep.subr.mxu0 0.0
    %1946 = vmatpush2.msra.mxu0 0.0
    %1947 = vmatprep.subr.mxu0 0.0
    %1948 = vmatpush2.msra.mxu0 0.0
    %1949 = vmatprep.subr.mxu0 0.0
    %1950 = vmatpush2.msra.mxu0 0.0
    %1951 = vmatprep.subr.mxu0 0.0
    %1952 = vmatpush2.msra.mxu0 0.0
    %1953 = vmatprep.subr.mxu0 0.0
    %1954 = vmatpush2.msra.mxu0 0.0
    %1955 = vmatprep.subr.mxu0 0.0
    %1956 = vmatpush2.msra.mxu0 0.0
    %1957 = vmatprep.subr.mxu0 0.0
    %1958 = vmatpush2.msra.mxu0 0.0
    %1959 = vmatprep.subr.mxu0 0.0
    %1960 = vmatpush2.msra.mxu0 0.0
    %1961 = vmatprep.subr.mxu0 0.0
    %1962 = vmatpush2.msra.mxu0 0.0
    %1963 = vmatprep.subr.mxu0 0.0
    %1964 = vmatpush2.msra.mxu0 0.0
    %1965 = vmatprep.subr.mxu0 0.0
    %1966 = vmatpush2.msra.mxu0 0.0
    %1967 = vmatprep.subr.mxu0 0.0
    %1968 = vmatpush2.msra.mxu0 0.0
    %1969 = vmatprep.subr.mxu0 0.0
    %1970 = vmatpush2.msra.mxu0 0.0
    %1971 = vmatprep.mubr.f32.mxu0 0.0
    %1972 = vmatmul.mubr.f32.gmra.mxu0 %v643
    %v1973 = vpop.f32.mrf.mxu0
    %v1974 = vadd.f32 0.0, %v1973
    %v1975 = vpop.f32.mrf.mxu0
    %1976 = vdwg.mxu0
    %1977 = vmatprep.subr.mxu0 0.0
    %1978 = vmatpush1.msra.mxu0 %v1822
    %1979 = vmatprep.subr.mxu0 0.0
    %1980 = vmatpush1.msra.mxu0 %v1821
    %1981 = vmatprep.subr.mxu0 0.0
    %1982 = vmatpush1.msra.mxu0 %v1820
    %1983 = vmatprep.subr.mxu0 0.0
    %1984 = vmatpush1.msra.mxu0 %v1819
    %1985 = vmatprep.subr.mxu0 0.0
    %1986 = vmatpush1.msra.mxu0 %v1818
    %1987 = vmatprep.subr.mxu0 0.0
    %1988 = vmatpush1.msra.mxu0 %v1817
    %1989 = vmatprep.subr.mxu0 0.0
    %1990 = vmatpush1.msra.mxu0 %v1816
    %1991 = vmatprep.subr.mxu0 0.0
    %1992 = vmatpush1.msra.mxu0 %v1815
    %1993 = vmatprep.subr.mxu0 0.0
    %1994 = vmatpush1.msra.mxu0 %v1814
    %1995 = vmatprep.subr.mxu0 0.0
    %1996 = vmatpush1.msra.mxu0 %v1813
    %1997 = vmatprep.subr.mxu0 0.0
    %1998 = vmatpush1.msra.mxu0 %v1812
    %1999 = vmatprep.subr.mxu0 0.0
    %2000 = vmatpush1.msra.mxu0 %v1811
    %2001 = vmatprep.subr.mxu0 0.0
    %2002 = vmatpush1.msra.mxu0 %v1810
    %2003 = vmatprep.subr.mxu0 0.0
    %2004 = vmatpush1.msra.mxu0 %v1809
    %2005 = vmatprep.subr.mxu0 0.0
    %2006 = vmatpush1.msra.mxu0 %v1808
    %2007 = vmatprep.subr.mxu0 0.0
    %2008 = vmatpush1.msra.mxu0 %v1807
    %2009 = vmatprep.subr.mxu0 0.0
    %2010 = vmatpush2.msra.mxu0 %v1838
    %2011 = vmatprep.subr.mxu0 0.0
    %2012 = vmatpush2.msra.mxu0 %v1837
    %2013 = vmatprep.subr.mxu0 0.0
    %2014 = vmatpush2.msra.mxu0 %v1836
    %2015 = vmatprep.subr.mxu0 0.0
    %2016 = vmatpush2.msra.mxu0 %v1835
    %2017 = vmatprep.subr.mxu0 0.0
    %2018 = vmatpush2.msra.mxu0 %v1834
    %2019 = vmatprep.subr.mxu0 0.0
    %2020 = vmatpush2.msra.mxu0 %v1833
    %2021 = vmatprep.subr.mxu0 0.0
    %2022 = vmatpush2.msra.mxu0 %v1832
    %2023 = vmatprep.subr.mxu0 0.0
    %2024 = vmatpush2.msra.mxu0 %v1831
    %2025 = vmatprep.subr.mxu0 0.0
    %2026 = vmatpush2.msra.mxu0 %v1830
    %2027 = vmatprep.subr.mxu0 0.0
    %2028 = vmatpush2.msra.mxu0 %v1829
    %2029 = vmatprep.subr.mxu0 0.0
    %2030 = vmatpush2.msra.mxu0 %v1828
    %2031 = vmatprep.subr.mxu0 0.0
    %2032 = vmatpush2.msra.mxu0 %v1827
    %2033 = vmatprep.subr.mxu0 0.0
    %2034 = vmatpush2.msra.mxu0 %v1826
    %2035 = vmatprep.subr.mxu0 0.0
    %2036 = vmatpush2.msra.mxu0 %v1825
    %2037 = vmatprep.subr.mxu0 0.0
    %2038 = vmatpush2.msra.mxu0 %v1824
    %2039 = vmatprep.subr.mxu0 0.0
    %2040 = vmatpush2.msra.mxu0 %v1823
    %2041 = vmatprep.mubr.f32.mxu0 %v732
    %2042 = vmatmul.mubr.f32.gmra.mxu0 %v724
    %v2043 = vpop.f32.mrf.mxu0
    %v2044 = vadd.f32 %v1974, %v2043
    %v2045 = vpop.f32.mrf.mxu0
    %2046 = vdwg.mxu0
    %2047 = vmatprep.subr.mxu0 0.0
    %2048 = vmatpush1.msra.mxu0 %v1854
    %2049 = vmatprep.subr.mxu0 0.0
    %2050 = vmatpush1.msra.mxu0 %v1853
    %2051 = vmatprep.subr.mxu0 0.0
    %2052 = vmatpush1.msra.mxu0 %v1852
    %2053 = vmatprep.subr.mxu0 0.0
    %2054 = vmatpush1.msra.mxu0 %v1851
    %2055 = vmatprep.subr.mxu0 0.0
    %2056 = vmatpush1.msra.mxu0 %v1850
    %2057 = vmatprep.subr.mxu0 0.0
    %2058 = vmatpush1.msra.mxu0 %v1849
    %2059 = vmatprep.subr.mxu0 0.0
    %2060 = vmatpush1.msra.mxu0 %v1848
    %2061 = vmatprep.subr.mxu0 0.0
    %2062 = vmatpush1.msra.mxu0 %v1847
    %2063 = vmatprep.subr.mxu0 0.0
    %2064 = vmatpush1.msra.mxu0 %v1846
    %2065 = vmatprep.subr.mxu0 0.0
    %2066 = vmatpush1.msra.mxu0 %v1845
    %2067 = vmatprep.subr.mxu0 0.0
    %2068 = vmatpush1.msra.mxu0 %v1844
    %2069 = vmatprep.subr.mxu0 0.0
    %2070 = vmatpush1.msra.mxu0 %v1843
    %2071 = vmatprep.subr.mxu0 0.0
    %2072 = vmatpush1.msra.mxu0 %v1842
    %2073 = vmatprep.subr.mxu0 0.0
    %2074 = vmatpush1.msra.mxu0 %v1841
    %2075 = vmatprep.subr.mxu0 0.0
    %2076 = vmatpush1.msra.mxu0 %v1840
    %2077 = vmatprep.subr.mxu0 0.0
    %2078 = vmatpush1.msra.mxu0 %v1839
    %2079 = vmatprep.subr.mxu0 0.0
    %2080 = vmatpush2.msra.mxu0 %v1870
    %2081 = vmatprep.subr.mxu0 0.0
    %2082 = vmatpush2.msra.mxu0 %v1869
    %2083 = vmatprep.subr.mxu0 0.0
    %2084 = vmatpush2.msra.mxu0 %v1868
    %2085 = vmatprep.subr.mxu0 0.0
    %2086 = vmatpush2.msra.mxu0 %v1867
    %2087 = vmatprep.subr.mxu0 0.0
    %2088 = vmatpush2.msra.mxu0 %v1866
    %2089 = vmatprep.subr.mxu0 0.0
    %2090 = vmatpush2.msra.mxu0 %v1865
    %2091 = vmatprep.subr.mxu0 0.0
    %2092 = vmatpush2.msra.mxu0 %v1864
    %2093 = vmatprep.subr.mxu0 0.0
    %2094 = vmatpush2.msra.mxu0 %v1863
    %2095 = vmatprep.subr.mxu0 0.0
    %2096 = vmatpush2.msra.mxu0 %v1862
    %2097 = vmatprep.subr.mxu0 0.0
    %2098 = vmatpush2.msra.mxu0 %v1861
    %2099 = vmatprep.subr.mxu0 0.0
    %2100 = vmatpush2.msra.mxu0 %v1860
    %2101 = vmatprep.subr.mxu0 0.0
    %2102 = vmatpush2.msra.mxu0 %v1859
    %2103 = vmatprep.subr.mxu0 0.0
    %2104 = vmatpush2.msra.mxu0 %v1858
    %2105 = vmatprep.subr.mxu0 0.0
    %2106 = vmatpush2.msra.mxu0 %v1857
    %2107 = vmatprep.subr.mxu0 0.0
    %2108 = vmatpush2.msra.mxu0 %v1856
    %2109 = vmatprep.subr.mxu0 0.0
    %2110 = vmatpush2.msra.mxu0 %v1855
    %2111 = vmatprep.mubr.f32.mxu0 %v733
    %2112 = vmatmul.mubr.f32.gmra.mxu0 %v731
    %v2113 = vpop.f32.mrf.mxu0
    %v2114 = vadd.f32 %v2044, %v2113
    %v2115 = vpop.f32.mrf.mxu0
    %2116 = vdwg.mxu0
    %2117 = vmatprep.subr.mxu0 0.0
    %2118 = vmatpush1.msra.mxu0 %v1886
    %2119 = vmatprep.subr.mxu0 0.0
    %2120 = vmatpush1.msra.mxu0 %v1885
    %2121 = vmatprep.subr.mxu0 0.0
    %2122 = vmatpush1.msra.mxu0 %v1884
    %2123 = vmatprep.subr.mxu0 0.0
    %2124 = vmatpush1.msra.mxu0 %v1883
    %2125 = vmatprep.subr.mxu0 0.0
    %2126 = vmatpush1.msra.mxu0 %v1882
    %2127 = vmatprep.subr.mxu0 0.0
    %2128 = vmatpush1.msra.mxu0 %v1881
    %2129 = vmatprep.subr.mxu0 0.0
    %2130 = vmatpush1.msra.mxu0 %v1880
    %2131 = vmatprep.subr.mxu0 0.0
    %2132 = vmatpush1.msra.mxu0 %v1879
    %2133 = vmatprep.subr.mxu0 0.0
    %2134 = vmatpush1.msra.mxu0 %v1878
    %2135 = vmatprep.subr.mxu0 0.0
    %2136 = vmatpush1.msra.mxu0 %v1877
    %2137 = vmatprep.subr.mxu0 0.0
    %2138 = vmatpush1.msra.mxu0 %v1876
    %2139 = vmatprep.subr.mxu0 0.0
    %2140 = vmatpush1.msra.mxu0 %v1875
    %2141 = vmatprep.subr.mxu0 0.0
    %2142 = vmatpush1.msra.mxu0 %v1874
    %2143 = vmatprep.subr.mxu0 0.0
    %2144 = vmatpush1.msra.mxu0 %v1873
    %2145 = vmatprep.subr.mxu0 0.0
    %2146 = vmatpush1.msra.mxu0 %v1872
    %2147 = vmatprep.subr.mxu0 0.0
    %2148 = vmatpush1.msra.mxu0 %v1871
    %2149 = vmatprep.subr.mxu0 0.0
    %2150 = vmatpush2.msra.mxu0 %v1902
    %2151 = vmatprep.subr.mxu0 0.0
    %2152 = vmatpush2.msra.mxu0 %v1901
    %2153 = vmatprep.subr.mxu0 0.0
    %2154 = vmatpush2.msra.mxu0 %v1900
    %2155 = vmatprep.subr.mxu0 0.0
    %2156 = vmatpush2.msra.mxu0 %v1899
    %2157 = vmatprep.subr.mxu0 0.0
    %2158 = vmatpush2.msra.mxu0 %v1898
    %2159 = vmatprep.subr.mxu0 0.0
    %2160 = vmatpush2.msra.mxu0 %v1897
    %2161 = vmatprep.subr.mxu0 0.0
    %2162 = vmatpush2.msra.mxu0 %v1896
    %2163 = vmatprep.subr.mxu0 0.0
    %2164 = vmatpush2.msra.mxu0 %v1895
    %2165 = vmatprep.subr.mxu0 0.0
    %2166 = vmatpush2.msra.mxu0 %v1894
    %2167 = vmatprep.subr.mxu0 0.0
    %2168 = vmatpush2.msra.mxu0 %v1893
    %2169 = vmatprep.subr.mxu0 0.0
    %2170 = vmatpush2.msra.mxu0 %v1892
    %2171 = vmatprep.subr.mxu0 0.0
    %2172 = vmatpush2.msra.mxu0 %v1891
    %2173 = vmatprep.subr.mxu0 0.0
    %2174 = vmatpush2.msra.mxu0 %v1890
    %2175 = vmatprep.subr.mxu0 0.0
    %2176 = vmatpush2.msra.mxu0 %v1889
    %2177 = vmatprep.subr.mxu0 0.0
    %2178 = vmatpush2.msra.mxu0 %v1888
    %2179 = vmatprep.subr.mxu0 0.0
    %2180 = vmatpush2.msra.mxu0 %v1887
    %2181 = vmatprep.mubr.f32.mxu0 %v741
    %2182 = vmatmul.mubr.f32.gmra.mxu0 %v740
    %v2183 = vpop.f32.mrf.mxu0
    %v2184 = vadd.f32 %v2114, %v2183
    %v2185 = vpop.f32.mrf.mxu0
    %2186 = vdwg.mxu0
    %v2187 = vld [vmem:[%s49 + $0x320] sm:$0xff]
    %v2188 = vld [vmem:[%s49 + $0x328] sm:$0xff]
    %v2189 = vld [vmem:[%s49 + $0x330] sm:$0xff]
    %v2190 = vld [vmem:[%s49 + $0x338] sm:$0xff]
    %v2191 = vld [vmem:[%s49 + $0x340] sm:$0xff]
    %v2192 = vld [vmem:[%s49 + $0x348] sm:$0xff]
    %v2193 = vld [vmem:[%s49 + $0x350] sm:$0xff]
    %v2194 = vld [vmem:[%s49 + $0x358] sm:$0xff]
    %v2195 = vld [vmem:[%s49 + $0x360] sm:$0xff]
    %v2196 = vld [vmem:[%s49 + $0x368] sm:$0xff]
    %v2197 = vld [vmem:[%s49 + $0x370] sm:$0xff]
    %v2198 = vld [vmem:[%s49 + $0x378] sm:$0xff]
    %v2199 = vld [vmem:[%s49 + $0x380] sm:$0xff]
    %v2200 = vld [vmem:[%s49 + $0x388] sm:$0xff]
    %v2201 = vld [vmem:[%s49 + $0x390] sm:$0xff]
    %v2202 = vld [vmem:[%s49 + $0x398] sm:$0xff]
    %2203 = vmatprep.subr.mxu0 0.0
    %2204 = vmatpush1.msra.mxu0 %v2202
    %2205 = vmatprep.subr.mxu0 0.0
    %2206 = vmatpush1.msra.mxu0 %v2201
    %2207 = vmatprep.subr.mxu0 0.0
    %2208 = vmatpush1.msra.mxu0 %v2200
    %2209 = vmatprep.subr.mxu0 0.0
    %2210 = vmatpush1.msra.mxu0 %v2199
    %2211 = vmatprep.subr.mxu0 0.0
    %2212 = vmatpush1.msra.mxu0 %v2198
    %2213 = vmatprep.subr.mxu0 0.0
    %2214 = vmatpush1.msra.mxu0 %v2197
    %2215 = vmatprep.subr.mxu0 0.0
    %2216 = vmatpush1.msra.mxu0 %v2196
    %2217 = vmatprep.subr.mxu0 0.0
    %2218 = vmatpush1.msra.mxu0 %v2195
    %2219 = vmatprep.subr.mxu0 0.0
    %2220 = vmatpush1.msra.mxu0 %v2194
    %2221 = vmatprep.subr.mxu0 0.0
    %2222 = vmatpush1.msra.mxu0 %v2193
    %2223 = vmatprep.subr.mxu0 0.0
    %2224 = vmatpush1.msra.mxu0 %v2192
    %2225 = vmatprep.subr.mxu0 0.0
    %2226 = vmatpush1.msra.mxu0 %v2191
    %2227 = vmatprep.subr.mxu0 0.0
    %2228 = vmatpush1.msra.mxu0 %v2190
    %2229 = vmatprep.subr.mxu0 0.0
    %2230 = vmatpush1.msra.mxu0 %v2189
    %2231 = vmatprep.subr.mxu0 0.0
    %2232 = vmatpush1.msra.mxu0 %v2188
    %2233 = vmatprep.subr.mxu0 0.0
    %2234 = vmatpush1.msra.mxu0 %v2187
    %2235 = vmatprep.subr.mxu0 0.0
    %2236 = vmatpush2.msra.mxu0 0.0
    %2237 = vmatprep.subr.mxu0 0.0
    %2238 = vmatpush2.msra.mxu0 0.0
    %2239 = vmatprep.subr.mxu0 0.0
    %2240 = vmatpush2.msra.mxu0 0.0
    %2241 = vmatprep.subr.mxu0 0.0
    %2242 = vmatpush2.msra.mxu0 0.0
    %2243 = vmatprep.subr.mxu0 0.0
    %2244 = vmatpush2.msra.mxu0 0.0
    %2245 = vmatprep.subr.mxu0 0.0
    %2246 = vmatpush2.msra.mxu0 0.0
    %2247 = vmatprep.subr.mxu0 0.0
    %2248 = vmatpush2.msra.mxu0 0.0
    %2249 = vmatprep.subr.mxu0 0.0
    %2250 = vmatpush2.msra.mxu0 0.0
    %2251 = vmatprep.subr.mxu0 0.0
    %2252 = vmatpush2.msra.mxu0 0.0
    %2253 = vmatprep.subr.mxu0 0.0
    %2254 = vmatpush2.msra.mxu0 0.0
    %2255 = vmatprep.subr.mxu0 0.0
    %2256 = vmatpush2.msra.mxu0 0.0
    %2257 = vmatprep.subr.mxu0 0.0
    %2258 = vmatpush2.msra.mxu0 0.0
    %2259 = vmatprep.subr.mxu0 0.0
    %2260 = vmatpush2.msra.mxu0 0.0
    %2261 = vmatprep.subr.mxu0 0.0
    %2262 = vmatpush2.msra.mxu0 0.0
    %2263 = vmatprep.subr.mxu0 0.0
    %2264 = vmatpush2.msra.mxu0 0.0
    %2265 = vmatprep.subr.mxu0 0.0
    %2266 = vmatpush2.msra.mxu0 0.0
    %2267 = vmatprep.mubr.f32.mxu0 0.0
    %2268 = vmatmul.mubr.f32.gmra.mxu0 %v366
    %v2269 = vpop.f32.mrf.mxu0
    %v2270 = vadd.f32 0.0, %v2269
    %v2271 = vpop.f32.mrf.mxu0
    %2272 = vdwg.mxu0
    %v2273 = vadd.f32 %v2184, %v2270
    %v2274 = vld [vmem:[%s49 + $0x3a0] sm:$0xff]
    %v2275 = vld [vmem:[%s49 + $0x3a8] sm:$0xff]
    %v2276 = vld [vmem:[%s49 + $0x3b0] sm:$0xff]
    %v2277 = vld [vmem:[%s49 + $0x3b8] sm:$0xff]
    %v2278 = vld [vmem:[%s49 + $0x3c0] sm:$0xff]
    %v2279 = vld [vmem:[%s49 + $0x3c8] sm:$0xff]
    %v2280 = vld [vmem:[%s49 + $0x3d0] sm:$0xff]
    %v2281 = vld [vmem:[%s49 + $0x3d8] sm:$0xff]
    %vm2282 = vcmask 523264
    %v2284 = vsel %vm2282, %v538, 0
    %2286 = vmatprep.subr.mxu0 0.0
    %2287 = vmatpush1.msra.mxu0 0.0
    %2288 = vmatprep.subr.mxu0 0.0
    %2289 = vmatpush1.msra.mxu0 0.0
    %2290 = vmatprep.subr.mxu0 0.0
    %2291 = vmatpush1.msra.mxu0 0.0
    %2292 = vmatprep.subr.mxu0 0.0
    %2293 = vmatpush1.msra.mxu0 0.0
    %2294 = vmatprep.subr.mxu0 0.0
    %2295 = vmatpush1.msra.mxu0 0.0
    %2296 = vmatprep.subr.mxu0 0.0
    %2297 = vmatpush1.msra.mxu0 0.0
    %2298 = vmatprep.subr.mxu0 0.0
    %2299 = vmatpush1.msra.mxu0 0.0
    %2300 = vmatprep.subr.mxu0 0.0
    %2301 = vmatpush1.msra.mxu0 0.0
    %2302 = vmatprep.subr.mxu0 0.0
    %2303 = vmatpush1.msra.mxu0 %v2281
    %2304 = vmatprep.subr.mxu0 0.0
    %2305 = vmatpush1.msra.mxu0 %v2280
    %2306 = vmatprep.subr.mxu0 0.0
    %2307 = vmatpush1.msra.mxu0 %v2279
    %2308 = vmatprep.subr.mxu0 0.0
    %2309 = vmatpush1.msra.mxu0 %v2278
    %2310 = vmatprep.subr.mxu0 0.0
    %2311 = vmatpush1.msra.mxu0 %v2277
    %2312 = vmatprep.subr.mxu0 0.0
    %2313 = vmatpush1.msra.mxu0 %v2276
    %2314 = vmatprep.subr.mxu0 0.0
    %2315 = vmatpush1.msra.mxu0 %v2275
    %2316 = vmatprep.subr.mxu0 0.0
    %2317 = vmatpush1.msra.mxu0 %v2274
    %2318 = vmatprep.subr.mxu0 0.0
    %2319 = vmatpush2.msra.mxu0 0.0
    %2320 = vmatprep.subr.mxu0 0.0
    %2321 = vmatpush2.msra.mxu0 0.0
    %2322 = vmatprep.subr.mxu0 0.0
    %2323 = vmatpush2.msra.mxu0 0.0
    %2324 = vmatprep.subr.mxu0 0.0
    %2325 = vmatpush2.msra.mxu0 0.0
    %2326 = vmatprep.subr.mxu0 0.0
    %2327 = vmatpush2.msra.mxu0 0.0
    %2328 = vmatprep.subr.mxu0 0.0
    %2329 = vmatpush2.msra.mxu0 0.0
    %2330 = vmatprep.subr.mxu0 0.0
    %2331 = vmatpush2.msra.mxu0 0.0
    %2332 = vmatprep.subr.mxu0 0.0
    %2333 = vmatpush2.msra.mxu0 0.0
    %2334 = vmatprep.subr.mxu0 0.0
    %2335 = vmatpush2.msra.mxu0 0.0
    %2336 = vmatprep.subr.mxu0 0.0
    %2337 = vmatpush2.msra.mxu0 0.0
    %2338 = vmatprep.subr.mxu0 0.0
    %2339 = vmatpush2.msra.mxu0 0.0
    %2340 = vmatprep.subr.mxu0 0.0
    %2341 = vmatpush2.msra.mxu0 0.0
    %2342 = vmatprep.subr.mxu0 0.0
    %2343 = vmatpush2.msra.mxu0 0.0
    %2344 = vmatprep.subr.mxu0 0.0
    %2345 = vmatpush2.msra.mxu0 0.0
    %2346 = vmatprep.subr.mxu0 0.0
    %2347 = vmatpush2.msra.mxu0 0.0
    %2348 = vmatprep.subr.mxu0 0.0
    %2349 = vmatpush2.msra.mxu0 0.0
    %2350 = vmatprep.mubr.f32.mxu0 0.0
    %2351 = vmatmul.mubr.f32.gmra.mxu0 %v2284
    %v2352 = vpop.f32.mrf.mxu0
    %v2353 = vadd.f32 0.0, %v2352
    %v2354 = vpop.f32.mrf.mxu0
    %2355 = vdwg.mxu0
    %v2356 = vadd.f32 %v2273, %v2353
    %v2357 = vld [vmem:[#allocation19] sm:$0x1]
    %v2359 = vlaneseq
    %v2360 = vshrl.u32 %v2359, 7
    %v2361 = vsub.s32 0, %v2360
    %v2362 = vrot.slane %v2357, %v2361
    %v2364 = vadd.f32 %v2356, %v2362
    %vm2365 = vcmp.ge.f32.partialorder %v2364, 0.0
    %v2366 = vmul.f32 %v2364, 0.01
    %v2367 = vsel %vm2365, %v2364, %v2366
    %v2368 = vld [vmem:[%s53] sm:$0xff]
    %v2369 = vld [vmem:[%s53 + $0x8] sm:$0xff]
    %v2370 = vld [vmem:[%s53 + $0x10] sm:$0xff]
    %v2371 = vld [vmem:[%s53 + $0x18] sm:$0xff]
    %v2372 = vld [vmem:[%s53 + $0x20] sm:$0xff]
    %v2373 = vld [vmem:[%s53 + $0x28] sm:$0xff]
    %v2374 = vld [vmem:[%s53 + $0x30] sm:$0xff]
    %v2375 = vld [vmem:[%s53 + $0x38] sm:$0xff]
    %v2376 = vld [vmem:[%s53 + $0x40] sm:$0xff]
    %v2377 = vld [vmem:[%s53 + $0x48] sm:$0xff]
    %v2378 = vld [vmem:[%s53 + $0x50] sm:$0xff]
    %v2379 = vld [vmem:[%s53 + $0x58] sm:$0xff]
    %v2380 = vld [vmem:[%s53 + $0x60] sm:$0xff]
    %v2381 = vld [vmem:[%s53 + $0x68] sm:$0xff]
    %v2382 = vld [vmem:[%s53 + $0x70] sm:$0xff]
    %v2383 = vld [vmem:[%s53 + $0x78] sm:$0xff]
    %v2384 = vld [vmem:[#allocation21] sm:$0x1]
    %v2386 = vlaneseq
    %v2387 = vshrl.u32 %v2386, 7
    %v2388 = vsub.s32 0, %v2387
    %v2389 = vrot.slane %v2384, %v2388
    %2391 = vmatprep.subr.mxu0 0.0
    %2392 = vmatpush1.msra.mxu0 %v2383
    %2393 = vmatprep.subr.mxu0 0.0
    %2394 = vmatpush1.msra.mxu0 %v2382
    %2395 = vmatprep.subr.mxu0 0.0
    %2396 = vmatpush1.msra.mxu0 %v2381
    %2397 = vmatprep.subr.mxu0 0.0
    %2398 = vmatpush1.msra.mxu0 %v2380
    %2399 = vmatprep.subr.mxu0 0.0
    %2400 = vmatpush1.msra.mxu0 %v2379
    %2401 = vmatprep.subr.mxu0 0.0
    %2402 = vmatpush1.msra.mxu0 %v2378
    %2403 = vmatprep.subr.mxu0 0.0
    %2404 = vmatpush1.msra.mxu0 %v2377
    %2405 = vmatprep.subr.mxu0 0.0
    %2406 = vmatpush1.msra.mxu0 %v2376
    %2407 = vmatprep.subr.mxu0 0.0
    %2408 = vmatpush1.msra.mxu0 %v2375
    %2409 = vmatprep.subr.mxu0 0.0
    %2410 = vmatpush1.msra.mxu0 %v2374
    %2411 = vmatprep.subr.mxu0 0.0
    %2412 = vmatpush1.msra.mxu0 %v2373
    %2413 = vmatprep.subr.mxu0 0.0
    %2414 = vmatpush1.msra.mxu0 %v2372
    %2415 = vmatprep.subr.mxu0 0.0
    %2416 = vmatpush1.msra.mxu0 %v2371
    %2417 = vmatprep.subr.mxu0 0.0
    %2418 = vmatpush1.msra.mxu0 %v2370
    %2419 = vmatprep.subr.mxu0 0.0
    %2420 = vmatpush1.msra.mxu0 %v2369
    %2421 = vmatprep.subr.mxu0 0.0
    %2422 = vmatpush1.msra.mxu0 %v2368
    %2423 = vmatprep.subr.mxu0 0.0
    %2424 = vmatpush2.msra.mxu0 0.0
    %2425 = vmatprep.subr.mxu0 0.0
    %2426 = vmatpush2.msra.mxu0 0.0
    %2427 = vmatprep.subr.mxu0 0.0
    %2428 = vmatpush2.msra.mxu0 0.0
    %2429 = vmatprep.subr.mxu0 0.0
    %2430 = vmatpush2.msra.mxu0 0.0
    %2431 = vmatprep.subr.mxu0 0.0
    %2432 = vmatpush2.msra.mxu0 0.0
    %2433 = vmatprep.subr.mxu0 0.0
    %2434 = vmatpush2.msra.mxu0 0.0
    %2435 = vmatprep.subr.mxu0 0.0
    %2436 = vmatpush2.msra.mxu0 0.0
    %2437 = vmatprep.subr.mxu0 0.0
    %2438 = vmatpush2.msra.mxu0 0.0
    %2439 = vmatprep.subr.mxu0 0.0
    %2440 = vmatpush2.msra.mxu0 0.0
    %2441 = vmatprep.subr.mxu0 0.0
    %2442 = vmatpush2.msra.mxu0 0.0
    %2443 = vmatprep.subr.mxu0 0.0
    %2444 = vmatpush2.msra.mxu0 0.0
    %2445 = vmatprep.subr.mxu0 0.0
    %2446 = vmatpush2.msra.mxu0 0.0
    %2447 = vmatprep.subr.mxu0 0.0
    %2448 = vmatpush2.msra.mxu0 0.0
    %2449 = vmatprep.subr.mxu0 0.0
    %2450 = vmatpush2.msra.mxu0 0.0
    %2451 = vmatprep.subr.mxu0 0.0
    %2452 = vmatpush2.msra.mxu0 0.0
    %2453 = vmatprep.subr.mxu0 0.0
    %2454 = vmatpush2.msra.mxu0 0.0
    %2455 = vmatprep.mubr.f32.mxu0 0.0
    %2456 = vmatmul.mubr.f32.gmra.mxu0 %v2367
    %v2457 = vpop.f32.mrf.mxu0
    %v2458 = vadd.f32 %v2389, %v2457
    %v2459 = vpop.f32.mrf.mxu0
    %2460 = vdwg.mxu0
    %vm2461 = vcmp.ge.f32.partialorder %v2458, 0.0
    %v2462 = vmul.f32 %v2458, 0.01
    %v2463 = vsel %vm2461, %v2458, %v2462
    %v2464 = vld [vmem:[%s57] sm:$0xff]
    %v2465 = vld [vmem:[%s57 + $0x8] sm:$0xff]
    %v2466 = vld [vmem:[%s57 + $0x10] sm:$0xff]
    %v2467 = vld [vmem:[%s57 + $0x18] sm:$0xff]
    %v2468 = vld [vmem:[#allocation22] sm:$0x1]
    %v2470 = vlaneseq
    %v2471 = vshrl.u32 %v2470, 7
    %v2472 = vsub.s32 0, %v2471
    %v2473 = vrot.slane %v2468, %v2472
    %v2476 = vsel %vm641, %v2463, 0
    %2478 = vmatprep.subr.mxu0 0.0
    %2479 = vmatpush1.msra.mxu0 0.0
    %2480 = vmatprep.subr.mxu0 0.0
    %2481 = vmatpush1.msra.mxu0 0.0
    %2482 = vmatprep.subr.mxu0 0.0
    %2483 = vmatpush1.msra.mxu0 0.0
    %2484 = vmatprep.subr.mxu0 0.0
    %2485 = vmatpush1.msra.mxu0 0.0
    %2486 = vmatprep.subr.mxu0 0.0
    %2487 = vmatpush1.msra.mxu0 0.0
    %2488 = vmatprep.subr.mxu0 0.0
    %2489 = vmatpush1.msra.mxu0 0.0
    %2490 = vmatprep.subr.mxu0 0.0
    %2491 = vmatpush1.msra.mxu0 0.0
    %2492 = vmatprep.subr.mxu0 0.0
    %2493 = vmatpush1.msra.mxu0 0.0
    %2494 = vmatprep.subr.mxu0 0.0
    %2495 = vmatpush1.msra.mxu0 0.0
    %2496 = vmatprep.subr.mxu0 0.0
    %2497 = vmatpush1.msra.mxu0 0.0
    %2498 = vmatprep.subr.mxu0 0.0
    %2499 = vmatpush1.msra.mxu0 0.0
    %2500 = vmatprep.subr.mxu0 0.0
    %2501 = vmatpush1.msra.mxu0 0.0
    %2502 = vmatprep.subr.mxu0 0.0
    %2503 = vmatpush1.msra.mxu0 %v2467
    %2504 = vmatprep.subr.mxu0 0.0
    %2505 = vmatpush1.msra.mxu0 %v2466
    %2506 = vmatprep.subr.mxu0 0.0
    %2507 = vmatpush1.msra.mxu0 %v2465
    %2508 = vmatprep.subr.mxu0 0.0
    %2509 = vmatpush1.msra.mxu0 %v2464
    %2510 = vmatprep.subr.mxu0 0.0
    %2511 = vmatpush2.msra.mxu0 0.0
    %2512 = vmatprep.subr.mxu0 0.0
    %2513 = vmatpush2.msra.mxu0 0.0
    %2514 = vmatprep.subr.mxu0 0.0
    %2515 = vmatpush2.msra.mxu0 0.0
    %2516 = vmatprep.subr.mxu0 0.0
    %2517 = vmatpush2.msra.mxu0 0.0
    %2518 = vmatprep.subr.mxu0 0.0
    %2519 = vmatpush2.msra.mxu0 0.0
    %2520 = vmatprep.subr.mxu0 0.0
    %2521 = vmatpush2.msra.mxu0 0.0
    %2522 = vmatprep.subr.mxu0 0.0
    %2523 = vmatpush2.msra.mxu0 0.0
    %2524 = vmatprep.subr.mxu0 0.0
    %2525 = vmatpush2.msra.mxu0 0.0
    %2526 = vmatprep.subr.mxu0 0.0
    %2527 = vmatpush2.msra.mxu0 0.0
    %2528 = vmatprep.subr.mxu0 0.0
    %2529 = vmatpush2.msra.mxu0 0.0
    %2530 = vmatprep.subr.mxu0 0.0
    %2531 = vmatpush2.msra.mxu0 0.0
    %2532 = vmatprep.subr.mxu0 0.0
    %2533 = vmatpush2.msra.mxu0 0.0
    %2534 = vmatprep.subr.mxu0 0.0
    %2535 = vmatpush2.msra.mxu0 0.0
    %2536 = vmatprep.subr.mxu0 0.0
    %2537 = vmatpush2.msra.mxu0 0.0
    %2538 = vmatprep.subr.mxu0 0.0
    %2539 = vmatpush2.msra.mxu0 0.0
    %2540 = vmatprep.subr.mxu0 0.0
    %2541 = vmatpush2.msra.mxu0 0.0
    %2542 = vmatprep.mubr.f32.mxu0 0.0
    %2543 = vmatmul.mubr.f32.gmra.mxu0 %v2476
    %v2544 = vpop.f32.mrf.mxu0
    %v2545 = vadd.f32 %v2473, %v2544
    %v2546 = vpop.f32.mrf.mxu0
    %2547 = vdwg.mxu0
    %v2548 = vld [vmem:[%s61] sm:$0xff]
    %v2549 = vld [vmem:[%s61 + $0x8] sm:$0xff]
    %v2550 = vld [vmem:[%s61 + $0x10] sm:$0xff]
    %v2551 = vld [vmem:[%s61 + $0x18] sm:$0xff]
    %v2552 = vld [vmem:[#allocation24] sm:$0x1]
    %v2554 = vlaneseq
    %v2555 = vshrl.u32 %v2554, 7
    %v2556 = vsub.s32 0, %v2555
    %v2557 = vrot.slane %v2552, %v2556
    %v2560 = vsel %vm641, %v2545, 0
    %2562 = vmatprep.subr.mxu0 0.0
    %2563 = vmatpush1.msra.mxu0 0.0
    %2564 = vmatprep.subr.mxu0 0.0
    %2565 = vmatpush1.msra.mxu0 0.0
    %2566 = vmatprep.subr.mxu0 0.0
    %2567 = vmatpush1.msra.mxu0 0.0
    %2568 = vmatprep.subr.mxu0 0.0
    %2569 = vmatpush1.msra.mxu0 0.0
    %2570 = vmatprep.subr.mxu0 0.0
    %2571 = vmatpush1.msra.mxu0 0.0
    %2572 = vmatprep.subr.mxu0 0.0
    %2573 = vmatpush1.msra.mxu0 0.0
    %2574 = vmatprep.subr.mxu0 0.0
    %2575 = vmatpush1.msra.mxu0 0.0
    %2576 = vmatprep.subr.mxu0 0.0
    %2577 = vmatpush1.msra.mxu0 0.0
    %2578 = vmatprep.subr.mxu0 0.0
    %2579 = vmatpush1.msra.mxu0 0.0
    %2580 = vmatprep.subr.mxu0 0.0
    %2581 = vmatpush1.msra.mxu0 0.0
    %2582 = vmatprep.subr.mxu0 0.0
    %2583 = vmatpush1.msra.mxu0 0.0
    %2584 = vmatprep.subr.mxu0 0.0
    %2585 = vmatpush1.msra.mxu0 0.0
    %2586 = vmatprep.subr.mxu0 0.0
    %2587 = vmatpush1.msra.mxu0 %v2551
    %2588 = vmatprep.subr.mxu0 0.0
    %2589 = vmatpush1.msra.mxu0 %v2550
    %2590 = vmatprep.subr.mxu0 0.0
    %2591 = vmatpush1.msra.mxu0 %v2549
    %2592 = vmatprep.subr.mxu0 0.0
    %2593 = vmatpush1.msra.mxu0 %v2548
    %2594 = vmatprep.subr.mxu0 0.0
    %2595 = vmatpush2.msra.mxu0 0.0
    %2596 = vmatprep.subr.mxu0 0.0
    %2597 = vmatpush2.msra.mxu0 0.0
    %2598 = vmatprep.subr.mxu0 0.0
    %2599 = vmatpush2.msra.mxu0 0.0
    %2600 = vmatprep.subr.mxu0 0.0
    %2601 = vmatpush2.msra.mxu0 0.0
    %2602 = vmatprep.subr.mxu0 0.0
    %2603 = vmatpush2.msra.mxu0 0.0
    %2604 = vmatprep.subr.mxu0 0.0
    %2605 = vmatpush2.msra.mxu0 0.0
    %2606 = vmatprep.subr.mxu0 0.0
    %2607 = vmatpush2.msra.mxu0 0.0
    %2608 = vmatprep.subr.mxu0 0.0
    %2609 = vmatpush2.msra.mxu0 0.0
    %2610 = vmatprep.subr.mxu0 0.0
    %2611 = vmatpush2.msra.mxu0 0.0
    %2612 = vmatprep.subr.mxu0 0.0
    %2613 = vmatpush2.msra.mxu0 0.0
    %2614 = vmatprep.subr.mxu0 0.0
    %2615 = vmatpush2.msra.mxu0 0.0
    %2616 = vmatprep.subr.mxu0 0.0
    %2617 = vmatpush2.msra.mxu0 0.0
    %2618 = vmatprep.subr.mxu0 0.0
    %2619 = vmatpush2.msra.mxu0 0.0
    %2620 = vmatprep.subr.mxu0 0.0
    %2621 = vmatpush2.msra.mxu0 0.0
    %2622 = vmatprep.subr.mxu0 0.0
    %2623 = vmatpush2.msra.mxu0 0.0
    %2624 = vmatprep.subr.mxu0 0.0
    %2625 = vmatpush2.msra.mxu0 0.0
    %2626 = vmatprep.mubr.f32.mxu0 0.0
    %2627 = vmatmul.mubr.f32.gmra.mxu0 %v2560
    %v2628 = vpop.f32.mrf.mxu0
    %v2629 = vadd.f32 %v2557, %v2628
    %v2630 = vpop.f32.mrf.mxu0
    %2631 = vdwg.mxu0
    %v2632 = vld [vmem:[%s65] sm:$0xff]
    %v2633 = vld [vmem:[%s65 + $0x8] sm:$0xff]
    %v2634 = vld [vmem:[%s65 + $0x10] sm:$0xff]
    %v2635 = vld [vmem:[%s65 + $0x18] sm:$0xff]
    %v2636 = vld [vmem:[#allocation25] sm:$0x1]
    %v2638 = vlaneseq
    %v2639 = vshrl.u32 %v2638, 7
    %v2640 = vsub.s32 0, %v2639
    %v2641 = vrot.slane %v2636, %v2640
    %2643 = vmatprep.subr.mxu0 0.0
    %2644 = vmatpush1.msra.mxu0 0.0
    %2645 = vmatprep.subr.mxu0 0.0
    %2646 = vmatpush1.msra.mxu0 0.0
    %2647 = vmatprep.subr.mxu0 0.0
    %2648 = vmatpush1.msra.mxu0 0.0
    %2649 = vmatprep.subr.mxu0 0.0
    %2650 = vmatpush1.msra.mxu0 0.0
    %2651 = vmatprep.subr.mxu0 0.0
    %2652 = vmatpush1.msra.mxu0 0.0
    %2653 = vmatprep.subr.mxu0 0.0
    %2654 = vmatpush1.msra.mxu0 0.0
    %2655 = vmatprep.subr.mxu0 0.0
    %2656 = vmatpush1.msra.mxu0 0.0
    %2657 = vmatprep.subr.mxu0 0.0
    %2658 = vmatpush1.msra.mxu0 0.0
    %2659 = vmatprep.subr.mxu0 0.0
    %2660 = vmatpush1.msra.mxu0 0.0
    %2661 = vmatprep.subr.mxu0 0.0
    %2662 = vmatpush1.msra.mxu0 0.0
    %2663 = vmatprep.subr.mxu0 0.0
    %2664 = vmatpush1.msra.mxu0 0.0
    %2665 = vmatprep.subr.mxu0 0.0
    %2666 = vmatpush1.msra.mxu0 0.0
    %2667 = vmatprep.subr.mxu0 0.0
    %2668 = vmatpush1.msra.mxu0 %v2635
    %2669 = vmatprep.subr.mxu0 0.0
    %2670 = vmatpush1.msra.mxu0 %v2634
    %2671 = vmatprep.subr.mxu0 0.0
    %2672 = vmatpush1.msra.mxu0 %v2633
    %2673 = vmatprep.subr.mxu0 0.0
    %2674 = vmatpush1.msra.mxu0 %v2632
    %2675 = vmatprep.subr.mxu0 0.0
    %2676 = vmatpush2.msra.mxu0 0.0
    %2677 = vmatprep.subr.mxu0 0.0
    %2678 = vmatpush2.msra.mxu0 0.0
    %2679 = vmatprep.subr.mxu0 0.0
    %2680 = vmatpush2.msra.mxu0 0.0
    %2681 = vmatprep.subr.mxu0 0.0
    %2682 = vmatpush2.msra.mxu0 0.0
    %2683 = vmatprep.subr.mxu0 0.0
    %2684 = vmatpush2.msra.mxu0 0.0
    %2685 = vmatprep.subr.mxu0 0.0
    %2686 = vmatpush2.msra.mxu0 0.0
    %2687 = vmatprep.subr.mxu0 0.0
    %2688 = vmatpush2.msra.mxu0 0.0
    %2689 = vmatprep.subr.mxu0 0.0
    %2690 = vmatpush2.msra.mxu0 0.0
    %2691 = vmatprep.subr.mxu0 0.0
    %2692 = vmatpush2.msra.mxu0 0.0
    %2693 = vmatprep.subr.mxu0 0.0
    %2694 = vmatpush2.msra.mxu0 0.0
    %2695 = vmatprep.subr.mxu0 0.0
    %2696 = vmatpush2.msra.mxu0 0.0
    %2697 = vmatprep.subr.mxu0 0.0
    %2698 = vmatpush2.msra.mxu0 0.0
    %2699 = vmatprep.subr.mxu0 0.0
    %2700 = vmatpush2.msra.mxu0 0.0
    %2701 = vmatprep.subr.mxu0 0.0
    %2702 = vmatpush2.msra.mxu0 0.0
    %2703 = vmatprep.subr.mxu0 0.0
    %2704 = vmatpush2.msra.mxu0 0.0
    %2705 = vmatprep.subr.mxu0 0.0
    %2706 = vmatpush2.msra.mxu0 0.0
    %2707 = vmatprep.mubr.f32.mxu0 0.0
    %2708 = vmatmul.mubr.f32.gmra.mxu0 %v2560
    %v2709 = vpop.f32.mrf.mxu0
    %v2710 = vadd.f32 %v2641, %v2709
    %v2711 = vpop.f32.mrf.mxu0
    %2712 = vdwg.mxu0
    %v2713 = vmul.f32 %v2710, 0.5
    %v2714 = vmul.f32 %v2713, 1.442695
    %v2715 = vpow.pop %v2714
    %v2716 = vld [vmem:[%s11] sm:$0x3]
    %v2717 = vmul.f32 %v2715, %v2716
    %v2718 = vadd.f32 %v2629, %v2717
    %v2719 = vld [vmem:[%s69] sm:$0xff]
    %v2720 = vld [vmem:[%s69 + $0x8] sm:$0xff]
    %v2721 = vld [vmem:[%s69 + $0x10] sm:$0xff]
    %v2722 = vld [vmem:[%s69 + $0x18] sm:$0xff]
    %v2723 = vld [vmem:[%s69 + $0x20] sm:$0xff]
    %v2724 = vld [vmem:[%s69 + $0x28] sm:$0xff]
    %v2725 = vld [vmem:[%s69 + $0x30] sm:$0xff]
    %v2726 = vld [vmem:[%s69 + $0x38] sm:$0xff]
    %v2727 = vld [vmem:[%s69 + $0x40] sm:$0xff]
    %v2728 = vld [vmem:[%s69 + $0x48] sm:$0xff]
    %v2729 = vld [vmem:[%s69 + $0x50] sm:$0xff]
    %v2730 = vld [vmem:[%s69 + $0x58] sm:$0xff]
    %v2731 = vld [vmem:[%s69 + $0x60] sm:$0xff]
    %v2732 = vld [vmem:[%s69 + $0x68] sm:$0xff]
    %v2733 = vld [vmem:[%s69 + $0x70] sm:$0xff]
    %v2734 = vld [vmem:[%s69 + $0x78] sm:$0xff]
    %v2735 = vld [vmem:[%s69 + $0x80] sm:$0xff]
    %v2736 = vld [vmem:[%s69 + $0x88] sm:$0xff]
    %v2737 = vld [vmem:[%s69 + $0x90] sm:$0xff]
    %v2738 = vld [vmem:[%s69 + $0x98] sm:$0xff]
    %v2739 = vld [vmem:[%s69 + $0xa0] sm:$0xff]
    %v2740 = vld [vmem:[%s69 + $0xa8] sm:$0xff]
    %v2741 = vld [vmem:[%s69 + $0xb0] sm:$0xff]
    %v2742 = vld [vmem:[%s69 + $0xb8] sm:$0xff]
    %v2743 = vld [vmem:[%s69 + $0xc0] sm:$0xff]
    %v2744 = vld [vmem:[%s69 + $0xc8] sm:$0xff]
    %v2745 = vld [vmem:[%s69 + $0xd0] sm:$0xff]
    %v2746 = vld [vmem:[%s69 + $0xd8] sm:$0xff]
    %v2747 = vld [vmem:[%s69 + $0xe0] sm:$0xff]
    %v2748 = vld [vmem:[%s69 + $0xe8] sm:$0xff]
    %v2749 = vld [vmem:[%s69 + $0xf0] sm:$0xff]
    %v2750 = vld [vmem:[%s69 + $0xf8] sm:$0xff]
    %v2751 = vld [vmem:[%s69 + $0x100] sm:$0xff]
    %v2752 = vld [vmem:[%s69 + $0x108] sm:$0xff]
    %v2753 = vld [vmem:[%s69 + $0x110] sm:$0xff]
    %v2754 = vld [vmem:[%s69 + $0x118] sm:$0xff]
    %v2755 = vld [vmem:[%s69 + $0x120] sm:$0xff]
    %v2756 = vld [vmem:[%s69 + $0x128] sm:$0xff]
    %v2757 = vld [vmem:[%s69 + $0x130] sm:$0xff]
    %v2758 = vld [vmem:[%s69 + $0x138] sm:$0xff]
    %v2759 = vld [vmem:[%s69 + $0x140] sm:$0xff]
    %v2760 = vld [vmem:[%s69 + $0x148] sm:$0xff]
    %v2761 = vld [vmem:[%s69 + $0x150] sm:$0xff]
    %v2762 = vld [vmem:[%s69 + $0x158] sm:$0xff]
    %v2763 = vld [vmem:[%s69 + $0x160] sm:$0xff]
    %v2764 = vld [vmem:[%s69 + $0x168] sm:$0xff]
    %v2765 = vld [vmem:[%s69 + $0x170] sm:$0xff]
    %v2766 = vld [vmem:[%s69 + $0x178] sm:$0xff]
    %v2767 = vld [vmem:[%s69 + $0x180] sm:$0xff]
    %v2768 = vld [vmem:[%s69 + $0x188] sm:$0xff]
    %v2769 = vld [vmem:[%s69 + $0x190] sm:$0xff]
    %v2770 = vld [vmem:[%s69 + $0x198] sm:$0xff]
    %v2771 = vld [vmem:[%s69 + $0x1a0] sm:$0xff]
    %v2772 = vld [vmem:[%s69 + $0x1a8] sm:$0xff]
    %v2773 = vld [vmem:[%s69 + $0x1b0] sm:$0xff]
    %v2774 = vld [vmem:[%s69 + $0x1b8] sm:$0xff]
    %v2775 = vld [vmem:[%s69 + $0x1c0] sm:$0xff]
    %v2776 = vld [vmem:[%s69 + $0x1c8] sm:$0xff]
    %v2777 = vld [vmem:[%s69 + $0x1d0] sm:$0xff]
    %v2778 = vld [vmem:[%s69 + $0x1d8] sm:$0xff]
    %v2779 = vld [vmem:[%s69 + $0x1e0] sm:$0xff]
    %v2780 = vld [vmem:[%s69 + $0x1e8] sm:$0xff]
    %v2781 = vld [vmem:[%s69 + $0x1f0] sm:$0xff]
    %v2782 = vld [vmem:[%s69 + $0x1f8] sm:$0xff]
    %v2783 = vld [vmem:[%s69 + $0x200] sm:$0xff]
    %v2784 = vld [vmem:[%s69 + $0x208] sm:$0xff]
    %v2785 = vld [vmem:[%s69 + $0x210] sm:$0xff]
    %v2786 = vld [vmem:[%s69 + $0x218] sm:$0xff]
    %v2787 = vld [vmem:[%s69 + $0x220] sm:$0xff]
    %v2788 = vld [vmem:[%s69 + $0x228] sm:$0xff]
    %v2789 = vld [vmem:[%s69 + $0x230] sm:$0xff]
    %v2790 = vld [vmem:[%s69 + $0x238] sm:$0xff]
    %v2791 = vld [vmem:[%s69 + $0x240] sm:$0xff]
    %v2792 = vld [vmem:[%s69 + $0x248] sm:$0xff]
    %v2793 = vld [vmem:[%s69 + $0x250] sm:$0xff]
    %v2794 = vld [vmem:[%s69 + $0x258] sm:$0xff]
    %v2795 = vld [vmem:[%s69 + $0x260] sm:$0xff]
    %v2796 = vld [vmem:[%s69 + $0x268] sm:$0xff]
    %v2797 = vld [vmem:[%s69 + $0x270] sm:$0xff]
    %v2798 = vld [vmem:[%s69 + $0x278] sm:$0xff]
    %v2799 = vld [vmem:[%s69 + $0x280] sm:$0xff]
    %v2800 = vld [vmem:[%s69 + $0x288] sm:$0xff]
    %v2801 = vld [vmem:[%s69 + $0x290] sm:$0xff]
    %v2802 = vld [vmem:[%s69 + $0x298] sm:$0xff]
    %v2803 = vld [vmem:[%s69 + $0x2a0] sm:$0xff]
    %v2804 = vld [vmem:[%s69 + $0x2a8] sm:$0xff]
    %v2805 = vld [vmem:[%s69 + $0x2b0] sm:$0xff]
    %v2806 = vld [vmem:[%s69 + $0x2b8] sm:$0xff]
    %v2807 = vld [vmem:[%s69 + $0x2c0] sm:$0xff]
    %v2808 = vld [vmem:[%s69 + $0x2c8] sm:$0xff]
    %v2809 = vld [vmem:[%s69 + $0x2d0] sm:$0xff]
    %v2810 = vld [vmem:[%s69 + $0x2d8] sm:$0xff]
    %v2811 = vld [vmem:[%s69 + $0x2e0] sm:$0xff]
    %v2812 = vld [vmem:[%s69 + $0x2e8] sm:$0xff]
    %v2813 = vld [vmem:[%s69 + $0x2f0] sm:$0xff]
    %v2814 = vld [vmem:[%s69 + $0x2f8] sm:$0xff]
    %v2815 = vld [vmem:[%s69 + $0x300] sm:$0xff]
    %v2816 = vld [vmem:[%s69 + $0x308] sm:$0xff]
    %v2817 = vld [vmem:[%s69 + $0x310] sm:$0xff]
    %v2818 = vld [vmem:[%s69 + $0x318] sm:$0xff]
    %2819 = vmatprep.subr.mxu0 0.0
    %2820 = vmatpush1.msra.mxu0 0.0
    %2821 = vmatprep.subr.mxu0 0.0
    %2822 = vmatpush1.msra.mxu0 0.0
    %2823 = vmatprep.subr.mxu0 0.0
    %2824 = vmatpush1.msra.mxu0 0.0
    %2825 = vmatprep.subr.mxu0 0.0
    %2826 = vmatpush1.msra.mxu0 0.0
    %2827 = vmatprep.subr.mxu0 0.0
    %2828 = vmatpush1.msra.mxu0 0.0
    %2829 = vmatprep.subr.mxu0 0.0
    %2830 = vmatpush1.msra.mxu0 0.0
    %2831 = vmatprep.subr.mxu0 0.0
    %2832 = vmatpush1.msra.mxu0 0.0
    %2833 = vmatprep.subr.mxu0 0.0
    %2834 = vmatpush1.msra.mxu0 0.0
    %2835 = vmatprep.subr.mxu0 0.0
    %2836 = vmatpush1.msra.mxu0 0.0
    %2837 = vmatprep.subr.mxu0 0.0
    %2838 = vmatpush1.msra.mxu0 0.0
    %2839 = vmatprep.subr.mxu0 0.0
    %2840 = vmatpush1.msra.mxu0 0.0
    %2841 = vmatprep.subr.mxu0 0.0
    %2842 = vmatpush1.msra.mxu0 0.0
    %2843 = vmatprep.subr.mxu0 0.0
    %2844 = vmatpush1.msra.mxu0 %v2818
    %2845 = vmatprep.subr.mxu0 0.0
    %2846 = vmatpush1.msra.mxu0 %v2817
    %2847 = vmatprep.subr.mxu0 0.0
    %2848 = vmatpush1.msra.mxu0 %v2816
    %2849 = vmatprep.subr.mxu0 0.0
    %2850 = vmatpush1.msra.mxu0 %v2815
    %2851 = vmatprep.subr.mxu0 0.0
    %2852 = vmatpush2.msra.mxu0 0.0
    %2853 = vmatprep.subr.mxu0 0.0
    %2854 = vmatpush2.msra.mxu0 0.0
    %2855 = vmatprep.subr.mxu0 0.0
    %2856 = vmatpush2.msra.mxu0 0.0
    %2857 = vmatprep.subr.mxu0 0.0
    %2858 = vmatpush2.msra.mxu0 0.0
    %2859 = vmatprep.subr.mxu0 0.0
    %2860 = vmatpush2.msra.mxu0 0.0
    %2861 = vmatprep.subr.mxu0 0.0
    %2862 = vmatpush2.msra.mxu0 0.0
    %2863 = vmatprep.subr.mxu0 0.0
    %2864 = vmatpush2.msra.mxu0 0.0
    %2865 = vmatprep.subr.mxu0 0.0
    %2866 = vmatpush2.msra.mxu0 0.0
    %2867 = vmatprep.subr.mxu0 0.0
    %2868 = vmatpush2.msra.mxu0 0.0
    %2869 = vmatprep.subr.mxu0 0.0
    %2870 = vmatpush2.msra.mxu0 0.0
    %2871 = vmatprep.subr.mxu0 0.0
    %2872 = vmatpush2.msra.mxu0 0.0
    %2873 = vmatprep.subr.mxu0 0.0
    %2874 = vmatpush2.msra.mxu0 0.0
    %2875 = vmatprep.subr.mxu0 0.0
    %2876 = vmatpush2.msra.mxu0 0.0
    %2877 = vmatprep.subr.mxu0 0.0
    %2878 = vmatpush2.msra.mxu0 0.0
    %2879 = vmatprep.subr.mxu0 0.0
    %2880 = vmatpush2.msra.mxu0 0.0
    %2881 = vmatprep.subr.mxu0 0.0
    %2882 = vmatpush2.msra.mxu0 0.0
    %2883 = vmatprep.mubr.f32.mxu0 0.0
    %2884 = vmatmul.mubr.f32.gmra.mxu0 %v643
    %v2885 = vpop.f32.mrf.mxu0
    %v2886 = vadd.f32 0.0, %v2885
    %v2887 = vpop.f32.mrf.mxu0
    %2888 = vdwg.mxu0
    %2889 = vmatprep.subr.mxu0 0.0
    %2890 = vmatpush1.msra.mxu0 %v2734
    %2891 = vmatprep.subr.mxu0 0.0
    %2892 = vmatpush1.msra.mxu0 %v2733
    %2893 = vmatprep.subr.mxu0 0.0
    %2894 = vmatpush1.msra.mxu0 %v2732
    %2895 = vmatprep.subr.mxu0 0.0
    %2896 = vmatpush1.msra.mxu0 %v2731
    %2897 = vmatprep.subr.mxu0 0.0
    %2898 = vmatpush1.msra.mxu0 %v2730
    %2899 = vmatprep.subr.mxu0 0.0
    %2900 = vmatpush1.msra.mxu0 %v2729
    %2901 = vmatprep.subr.mxu0 0.0
    %2902 = vmatpush1.msra.mxu0 %v2728
    %2903 = vmatprep.subr.mxu0 0.0
    %2904 = vmatpush1.msra.mxu0 %v2727
    %2905 = vmatprep.subr.mxu0 0.0
    %2906 = vmatpush1.msra.mxu0 %v2726
    %2907 = vmatprep.subr.mxu0 0.0
    %2908 = vmatpush1.msra.mxu0 %v2725
    %2909 = vmatprep.subr.mxu0 0.0
    %2910 = vmatpush1.msra.mxu0 %v2724
    %2911 = vmatprep.subr.mxu0 0.0
    %2912 = vmatpush1.msra.mxu0 %v2723
    %2913 = vmatprep.subr.mxu0 0.0
    %2914 = vmatpush1.msra.mxu0 %v2722
    %2915 = vmatprep.subr.mxu0 0.0
    %2916 = vmatpush1.msra.mxu0 %v2721
    %2917 = vmatprep.subr.mxu0 0.0
    %2918 = vmatpush1.msra.mxu0 %v2720
    %2919 = vmatprep.subr.mxu0 0.0
    %2920 = vmatpush1.msra.mxu0 %v2719
    %2921 = vmatprep.subr.mxu0 0.0
    %2922 = vmatpush2.msra.mxu0 %v2750
    %2923 = vmatprep.subr.mxu0 0.0
    %2924 = vmatpush2.msra.mxu0 %v2749
    %2925 = vmatprep.subr.mxu0 0.0
    %2926 = vmatpush2.msra.mxu0 %v2748
    %2927 = vmatprep.subr.mxu0 0.0
    %2928 = vmatpush2.msra.mxu0 %v2747
    %2929 = vmatprep.subr.mxu0 0.0
    %2930 = vmatpush2.msra.mxu0 %v2746
    %2931 = vmatprep.subr.mxu0 0.0
    %2932 = vmatpush2.msra.mxu0 %v2745
    %2933 = vmatprep.subr.mxu0 0.0
    %2934 = vmatpush2.msra.mxu0 %v2744
    %2935 = vmatprep.subr.mxu0 0.0
    %2936 = vmatpush2.msra.mxu0 %v2743
    %2937 = vmatprep.subr.mxu0 0.0
    %2938 = vmatpush2.msra.mxu0 %v2742
    %2939 = vmatprep.subr.mxu0 0.0
    %2940 = vmatpush2.msra.mxu0 %v2741
    %2941 = vmatprep.subr.mxu0 0.0
    %2942 = vmatpush2.msra.mxu0 %v2740
    %2943 = vmatprep.subr.mxu0 0.0
    %2944 = vmatpush2.msra.mxu0 %v2739
    %2945 = vmatprep.subr.mxu0 0.0
    %2946 = vmatpush2.msra.mxu0 %v2738
    %2947 = vmatprep.subr.mxu0 0.0
    %2948 = vmatpush2.msra.mxu0 %v2737
    %2949 = vmatprep.subr.mxu0 0.0
    %2950 = vmatpush2.msra.mxu0 %v2736
    %2951 = vmatprep.subr.mxu0 0.0
    %2952 = vmatpush2.msra.mxu0 %v2735
    %2953 = vmatprep.mubr.f32.mxu0 %v732
    %2954 = vmatmul.mubr.f32.gmra.mxu0 %v724
    %v2955 = vpop.f32.mrf.mxu0
    %v2956 = vadd.f32 %v2886, %v2955
    %v2957 = vpop.f32.mrf.mxu0
    %2958 = vdwg.mxu0
    %2959 = vmatprep.subr.mxu0 0.0
    %2960 = vmatpush1.msra.mxu0 %v2766
    %2961 = vmatprep.subr.mxu0 0.0
    %2962 = vmatpush1.msra.mxu0 %v2765
    %2963 = vmatprep.subr.mxu0 0.0
    %2964 = vmatpush1.msra.mxu0 %v2764
    %2965 = vmatprep.subr.mxu0 0.0
    %2966 = vmatpush1.msra.mxu0 %v2763
    %2967 = vmatprep.subr.mxu0 0.0
    %2968 = vmatpush1.msra.mxu0 %v2762
    %2969 = vmatprep.subr.mxu0 0.0
    %2970 = vmatpush1.msra.mxu0 %v2761
    %2971 = vmatprep.subr.mxu0 0.0
    %2972 = vmatpush1.msra.mxu0 %v2760
    %2973 = vmatprep.subr.mxu0 0.0
    %2974 = vmatpush1.msra.mxu0 %v2759
    %2975 = vmatprep.subr.mxu0 0.0
    %2976 = vmatpush1.msra.mxu0 %v2758
    %2977 = vmatprep.subr.mxu0 0.0
    %2978 = vmatpush1.msra.mxu0 %v2757
    %2979 = vmatprep.subr.mxu0 0.0
    %2980 = vmatpush1.msra.mxu0 %v2756
    %2981 = vmatprep.subr.mxu0 0.0
    %2982 = vmatpush1.msra.mxu0 %v2755
    %2983 = vmatprep.subr.mxu0 0.0
    %2984 = vmatpush1.msra.mxu0 %v2754
    %2985 = vmatprep.subr.mxu0 0.0
    %2986 = vmatpush1.msra.mxu0 %v2753
    %2987 = vmatprep.subr.mxu0 0.0
    %2988 = vmatpush1.msra.mxu0 %v2752
    %2989 = vmatprep.subr.mxu0 0.0
    %2990 = vmatpush1.msra.mxu0 %v2751
    %2991 = vmatprep.subr.mxu0 0.0
    %2992 = vmatpush2.msra.mxu0 %v2782
    %2993 = vmatprep.subr.mxu0 0.0
    %2994 = vmatpush2.msra.mxu0 %v2781
    %2995 = vmatprep.subr.mxu0 0.0
    %2996 = vmatpush2.msra.mxu0 %v2780
    %2997 = vmatprep.subr.mxu0 0.0
    %2998 = vmatpush2.msra.mxu0 %v2779
    %2999 = vmatprep.subr.mxu0 0.0
    %3000 = vmatpush2.msra.mxu0 %v2778
    %3001 = vmatprep.subr.mxu0 0.0
    %3002 = vmatpush2.msra.mxu0 %v2777
    %3003 = vmatprep.subr.mxu0 0.0
    %3004 = vmatpush2.msra.mxu0 %v2776
    %3005 = vmatprep.subr.mxu0 0.0
    %3006 = vmatpush2.msra.mxu0 %v2775
    %3007 = vmatprep.subr.mxu0 0.0
    %3008 = vmatpush2.msra.mxu0 %v2774
    %3009 = vmatprep.subr.mxu0 0.0
    %3010 = vmatpush2.msra.mxu0 %v2773
    %3011 = vmatprep.subr.mxu0 0.0
    %3012 = vmatpush2.msra.mxu0 %v2772
    %3013 = vmatprep.subr.mxu0 0.0
    %3014 = vmatpush2.msra.mxu0 %v2771
    %3015 = vmatprep.subr.mxu0 0.0
    %3016 = vmatpush2.msra.mxu0 %v2770
    %3017 = vmatprep.subr.mxu0 0.0
    %3018 = vmatpush2.msra.mxu0 %v2769
    %3019 = vmatprep.subr.mxu0 0.0
    %3020 = vmatpush2.msra.mxu0 %v2768
    %3021 = vmatprep.subr.mxu0 0.0
    %3022 = vmatpush2.msra.mxu0 %v2767
    %3023 = vmatprep.mubr.f32.mxu0 %v733
    %3024 = vmatmul.mubr.f32.gmra.mxu0 %v731
    %v3025 = vpop.f32.mrf.mxu0
    %v3026 = vadd.f32 %v2956, %v3025
    %v3027 = vpop.f32.mrf.mxu0
    %3028 = vdwg.mxu0
    %3029 = vmatprep.subr.mxu0 0.0
    %3030 = vmatpush1.msra.mxu0 %v2798
    %3031 = vmatprep.subr.mxu0 0.0
    %3032 = vmatpush1.msra.mxu0 %v2797
    %3033 = vmatprep.subr.mxu0 0.0
    %3034 = vmatpush1.msra.mxu0 %v2796
    %3035 = vmatprep.subr.mxu0 0.0
    %3036 = vmatpush1.msra.mxu0 %v2795
    %3037 = vmatprep.subr.mxu0 0.0
    %3038 = vmatpush1.msra.mxu0 %v2794
    %3039 = vmatprep.subr.mxu0 0.0
    %3040 = vmatpush1.msra.mxu0 %v2793
    %3041 = vmatprep.subr.mxu0 0.0
    %3042 = vmatpush1.msra.mxu0 %v2792
    %3043 = vmatprep.subr.mxu0 0.0
    %3044 = vmatpush1.msra.mxu0 %v2791
    %3045 = vmatprep.subr.mxu0 0.0
    %3046 = vmatpush1.msra.mxu0 %v2790
    %3047 = vmatprep.subr.mxu0 0.0
    %3048 = vmatpush1.msra.mxu0 %v2789
    %3049 = vmatprep.subr.mxu0 0.0
    %3050 = vmatpush1.msra.mxu0 %v2788
    %3051 = vmatprep.subr.mxu0 0.0
    %3052 = vmatpush1.msra.mxu0 %v2787
    %3053 = vmatprep.subr.mxu0 0.0
    %3054 = vmatpush1.msra.mxu0 %v2786
    %3055 = vmatprep.subr.mxu0 0.0
    %3056 = vmatpush1.msra.mxu0 %v2785
    %3057 = vmatprep.subr.mxu0 0.0
    %3058 = vmatpush1.msra.mxu0 %v2784
    %3059 = vmatprep.subr.mxu0 0.0
    %3060 = vmatpush1.msra.mxu0 %v2783
    %3061 = vmatprep.subr.mxu0 0.0
    %3062 = vmatpush2.msra.mxu0 %v2814
    %3063 = vmatprep.subr.mxu0 0.0
    %3064 = vmatpush2.msra.mxu0 %v2813
    %3065 = vmatprep.subr.mxu0 0.0
    %3066 = vmatpush2.msra.mxu0 %v2812
    %3067 = vmatprep.subr.mxu0 0.0
    %3068 = vmatpush2.msra.mxu0 %v2811
    %3069 = vmatprep.subr.mxu0 0.0
    %3070 = vmatpush2.msra.mxu0 %v2810
    %3071 = vmatprep.subr.mxu0 0.0
    %3072 = vmatpush2.msra.mxu0 %v2809
    %3073 = vmatprep.subr.mxu0 0.0
    %3074 = vmatpush2.msra.mxu0 %v2808
    %3075 = vmatprep.subr.mxu0 0.0
    %3076 = vmatpush2.msra.mxu0 %v2807
    %3077 = vmatprep.subr.mxu0 0.0
    %3078 = vmatpush2.msra.mxu0 %v2806
    %3079 = vmatprep.subr.mxu0 0.0
    %3080 = vmatpush2.msra.mxu0 %v2805
    %3081 = vmatprep.subr.mxu0 0.0
    %3082 = vmatpush2.msra.mxu0 %v2804
    %3083 = vmatprep.subr.mxu0 0.0
    %3084 = vmatpush2.msra.mxu0 %v2803
    %3085 = vmatprep.subr.mxu0 0.0
    %3086 = vmatpush2.msra.mxu0 %v2802
    %3087 = vmatprep.subr.mxu0 0.0
    %3088 = vmatpush2.msra.mxu0 %v2801
    %3089 = vmatprep.subr.mxu0 0.0
    %3090 = vmatpush2.msra.mxu0 %v2800
    %3091 = vmatprep.subr.mxu0 0.0
    %3092 = vmatpush2.msra.mxu0 %v2799
    %3093 = vmatprep.mubr.f32.mxu0 %v741
    %3094 = vmatmul.mubr.f32.gmra.mxu0 %v740
    %v3095 = vpop.f32.mrf.mxu0
    %v3096 = vadd.f32 %v3026, %v3095
    %v3097 = vpop.f32.mrf.mxu0
    %3098 = vdwg.mxu0
    %v3099 = vld [vmem:[%s69 + $0x320] sm:$0xff]
    %v3100 = vld [vmem:[%s69 + $0x328] sm:$0xff]
    %v3101 = vld [vmem:[%s69 + $0x330] sm:$0xff]
    %v3102 = vld [vmem:[%s69 + $0x338] sm:$0xff]
    %v3103 = vld [vmem:[%s69 + $0x340] sm:$0xff]
    %v3104 = vld [vmem:[%s69 + $0x348] sm:$0xff]
    %v3105 = vld [vmem:[%s69 + $0x350] sm:$0xff]
    %v3106 = vld [vmem:[%s69 + $0x358] sm:$0xff]
    %v3107 = vld [vmem:[%s69 + $0x360] sm:$0xff]
    %v3108 = vld [vmem:[%s69 + $0x368] sm:$0xff]
    %v3109 = vld [vmem:[%s69 + $0x370] sm:$0xff]
    %v3110 = vld [vmem:[%s69 + $0x378] sm:$0xff]
    %v3111 = vld [vmem:[%s69 + $0x380] sm:$0xff]
    %v3112 = vld [vmem:[%s69 + $0x388] sm:$0xff]
    %v3113 = vld [vmem:[%s69 + $0x390] sm:$0xff]
    %v3114 = vld [vmem:[%s69 + $0x398] sm:$0xff]
    %3115 = vmatprep.subr.mxu0 0.0
    %3116 = vmatpush1.msra.mxu0 %v3114
    %3117 = vmatprep.subr.mxu0 0.0
    %3118 = vmatpush1.msra.mxu0 %v3113
    %3119 = vmatprep.subr.mxu0 0.0
    %3120 = vmatpush1.msra.mxu0 %v3112
    %3121 = vmatprep.subr.mxu0 0.0
    %3122 = vmatpush1.msra.mxu0 %v3111
    %3123 = vmatprep.subr.mxu0 0.0
    %3124 = vmatpush1.msra.mxu0 %v3110
    %3125 = vmatprep.subr.mxu0 0.0
    %3126 = vmatpush1.msra.mxu0 %v3109
    %3127 = vmatprep.subr.mxu0 0.0
    %3128 = vmatpush1.msra.mxu0 %v3108
    %3129 = vmatprep.subr.mxu0 0.0
    %3130 = vmatpush1.msra.mxu0 %v3107
    %3131 = vmatprep.subr.mxu0 0.0
    %3132 = vmatpush1.msra.mxu0 %v3106
    %3133 = vmatprep.subr.mxu0 0.0
    %3134 = vmatpush1.msra.mxu0 %v3105
    %3135 = vmatprep.subr.mxu0 0.0
    %3136 = vmatpush1.msra.mxu0 %v3104
    %3137 = vmatprep.subr.mxu0 0.0
    %3138 = vmatpush1.msra.mxu0 %v3103
    %3139 = vmatprep.subr.mxu0 0.0
    %3140 = vmatpush1.msra.mxu0 %v3102
    %3141 = vmatprep.subr.mxu0 0.0
    %3142 = vmatpush1.msra.mxu0 %v3101
    %3143 = vmatprep.subr.mxu0 0.0
    %3144 = vmatpush1.msra.mxu0 %v3100
    %3145 = vmatprep.subr.mxu0 0.0
    %3146 = vmatpush1.msra.mxu0 %v3099
    %3147 = vmatprep.subr.mxu0 0.0
    %3148 = vmatpush2.msra.mxu0 0.0
    %3149 = vmatprep.subr.mxu0 0.0
    %3150 = vmatpush2.msra.mxu0 0.0
    %3151 = vmatprep.subr.mxu0 0.0
    %3152 = vmatpush2.msra.mxu0 0.0
    %3153 = vmatprep.subr.mxu0 0.0
    %3154 = vmatpush2.msra.mxu0 0.0
    %3155 = vmatprep.subr.mxu0 0.0
    %3156 = vmatpush2.msra.mxu0 0.0
    %3157 = vmatprep.subr.mxu0 0.0
    %3158 = vmatpush2.msra.mxu0 0.0
    %3159 = vmatprep.subr.mxu0 0.0
    %3160 = vmatpush2.msra.mxu0 0.0
    %3161 = vmatprep.subr.mxu0 0.0
    %3162 = vmatpush2.msra.mxu0 0.0
    %3163 = vmatprep.subr.mxu0 0.0
    %3164 = vmatpush2.msra.mxu0 0.0
    %3165 = vmatprep.subr.mxu0 0.0
    %3166 = vmatpush2.msra.mxu0 0.0
    %3167 = vmatprep.subr.mxu0 0.0
    %3168 = vmatpush2.msra.mxu0 0.0
    %3169 = vmatprep.subr.mxu0 0.0
    %3170 = vmatpush2.msra.mxu0 0.0
    %3171 = vmatprep.subr.mxu0 0.0
    %3172 = vmatpush2.msra.mxu0 0.0
    %3173 = vmatprep.subr.mxu0 0.0
    %3174 = vmatpush2.msra.mxu0 0.0
    %3175 = vmatprep.subr.mxu0 0.0
    %3176 = vmatpush2.msra.mxu0 0.0
    %3177 = vmatprep.subr.mxu0 0.0
    %3178 = vmatpush2.msra.mxu0 0.0
    %3179 = vmatprep.mubr.f32.mxu0 0.0
    %3180 = vmatmul.mubr.f32.gmra.mxu0 %v366
    %v3181 = vpop.f32.mrf.mxu0
    %v3182 = vadd.f32 0.0, %v3181
    %v3183 = vpop.f32.mrf.mxu0
    %3184 = vdwg.mxu0
    %v3185 = vadd.f32 %v3096, %v3182
    %v3186 = vld [vmem:[%s69 + $0x3a0] sm:$0xff]
    %v3187 = vld [vmem:[%s69 + $0x3a8] sm:$0xff]
    %v3188 = vld [vmem:[%s69 + $0x3b0] sm:$0xff]
    %v3189 = vld [vmem:[%s69 + $0x3b8] sm:$0xff]
    %v3191 = vsel %vm641, %v2718, 0
    %3193 = vmatprep.subr.mxu0 0.0
    %3194 = vmatpush1.msra.mxu0 0.0
    %3195 = vmatprep.subr.mxu0 0.0
    %3196 = vmatpush1.msra.mxu0 0.0
    %3197 = vmatprep.subr.mxu0 0.0
    %3198 = vmatpush1.msra.mxu0 0.0
    %3199 = vmatprep.subr.mxu0 0.0
    %3200 = vmatpush1.msra.mxu0 0.0
    %3201 = vmatprep.subr.mxu0 0.0
    %3202 = vmatpush1.msra.mxu0 0.0
    %3203 = vmatprep.subr.mxu0 0.0
    %3204 = vmatpush1.msra.mxu0 0.0
    %3205 = vmatprep.subr.mxu0 0.0
    %3206 = vmatpush1.msra.mxu0 0.0
    %3207 = vmatprep.subr.mxu0 0.0
    %3208 = vmatpush1.msra.mxu0 0.0
    %3209 = vmatprep.subr.mxu0 0.0
    %3210 = vmatpush1.msra.mxu0 0.0
    %3211 = vmatprep.subr.mxu0 0.0
    %3212 = vmatpush1.msra.mxu0 0.0
    %3213 = vmatprep.subr.mxu0 0.0
    %3214 = vmatpush1.msra.mxu0 0.0
    %3215 = vmatprep.subr.mxu0 0.0
    %3216 = vmatpush1.msra.mxu0 0.0
    %3217 = vmatprep.subr.mxu0 0.0
    %3218 = vmatpush1.msra.mxu0 %v3189
    %3219 = vmatprep.subr.mxu0 0.0
    %3220 = vmatpush1.msra.mxu0 %v3188
    %3221 = vmatprep.subr.mxu0 0.0
    %3222 = vmatpush1.msra.mxu0 %v3187
    %3223 = vmatprep.subr.mxu0 0.0
    %3224 = vmatpush1.msra.mxu0 %v3186
    %3225 = vmatprep.subr.mxu0 0.0
    %3226 = vmatpush2.msra.mxu0 0.0
    %3227 = vmatprep.subr.mxu0 0.0
    %3228 = vmatpush2.msra.mxu0 0.0
    %3229 = vmatprep.subr.mxu0 0.0
    %3230 = vmatpush2.msra.mxu0 0.0
    %3231 = vmatprep.subr.mxu0 0.0
    %3232 = vmatpush2.msra.mxu0 0.0
    %3233 = vmatprep.subr.mxu0 0.0
    %3234 = vmatpush2.msra.mxu0 0.0
    %3235 = vmatprep.subr.mxu0 0.0
    %3236 = vmatpush2.msra.mxu0 0.0
    %3237 = vmatprep.subr.mxu0 0.0
    %3238 = vmatpush2.msra.mxu0 0.0
    %3239 = vmatprep.subr.mxu0 0.0
    %3240 = vmatpush2.msra.mxu0 0.0
    %3241 = vmatprep.subr.mxu0 0.0
    %3242 = vmatpush2.msra.mxu0 0.0
    %3243 = vmatprep.subr.mxu0 0.0
    %3244 = vmatpush2.msra.mxu0 0.0
    %3245 = vmatprep.subr.mxu0 0.0
    %3246 = vmatpush2.msra.mxu0 0.0
    %3247 = vmatprep.subr.mxu0 0.0
    %3248 = vmatpush2.msra.mxu0 0.0
    %3249 = vmatprep.subr.mxu0 0.0
    %3250 = vmatpush2.msra.mxu0 0.0
    %3251 = vmatprep.subr.mxu0 0.0
    %3252 = vmatpush2.msra.mxu0 0.0
    %3253 = vmatprep.subr.mxu0 0.0
    %3254 = vmatpush2.msra.mxu0 0.0
    %3255 = vmatprep.subr.mxu0 0.0
    %3256 = vmatpush2.msra.mxu0 0.0
    %3257 = vmatprep.mubr.f32.mxu0 0.0
    %3258 = vmatmul.mubr.f32.gmra.mxu0 %v3191
    %v3259 = vpop.f32.mrf.mxu0
    %v3260 = vadd.f32 0.0, %v3259
    %v3261 = vpop.f32.mrf.mxu0
    %3262 = vdwg.mxu0
    %v3263 = vadd.f32 %v3185, %v3260
    %v3264 = vld [vmem:[#allocation27] sm:$0x1]
    %v3266 = vlaneseq
    %v3267 = vshrl.u32 %v3266, 7
    %v3268 = vsub.s32 0, %v3267
    %v3269 = vrot.slane %v3264, %v3268
    %v3271 = vadd.f32 %v3263, %v3269
    %vm3272 = vcmp.ge.f32.partialorder %v3271, 0.0
    %v3273 = vmul.f32 %v3271, 0.01
    %v3274 = vsel %vm3272, %v3271, %v3273
    %v3275 = vld [vmem:[%s73] sm:$0xff]
    %v3276 = vld [vmem:[%s73 + $0x8] sm:$0xff]
    %v3277 = vld [vmem:[%s73 + $0x10] sm:$0xff]
    %v3278 = vld [vmem:[%s73 + $0x18] sm:$0xff]
    %v3279 = vld [vmem:[%s73 + $0x20] sm:$0xff]
    %v3280 = vld [vmem:[%s73 + $0x28] sm:$0xff]
    %v3281 = vld [vmem:[%s73 + $0x30] sm:$0xff]
    %v3282 = vld [vmem:[%s73 + $0x38] sm:$0xff]
    %v3283 = vld [vmem:[%s73 + $0x40] sm:$0xff]
    %v3284 = vld [vmem:[%s73 + $0x48] sm:$0xff]
    %v3285 = vld [vmem:[%s73 + $0x50] sm:$0xff]
    %v3286 = vld [vmem:[%s73 + $0x58] sm:$0xff]
    %v3287 = vld [vmem:[%s73 + $0x60] sm:$0xff]
    %v3288 = vld [vmem:[%s73 + $0x68] sm:$0xff]
    %v3289 = vld [vmem:[%s73 + $0x70] sm:$0xff]
    %v3290 = vld [vmem:[%s73 + $0x78] sm:$0xff]
    %v3291 = vld [vmem:[%s75] sm:$0x1]
    %v3293 = vlaneseq
    %v3294 = vshrl.u32 %v3293, 7
    %v3295 = vsub.s32 0, %v3294
    %v3296 = vrot.slane %v3291, %v3295
    %3298 = vmatprep.subr.mxu0 0.0
    %3299 = vmatpush1.msra.mxu0 %v3290
    %3300 = vmatprep.subr.mxu0 0.0
    %3301 = vmatpush1.msra.mxu0 %v3289
    %3302 = vmatprep.subr.mxu0 0.0
    %3303 = vmatpush1.msra.mxu0 %v3288
    %3304 = vmatprep.subr.mxu0 0.0
    %3305 = vmatpush1.msra.mxu0 %v3287
    %3306 = vmatprep.subr.mxu0 0.0
    %3307 = vmatpush1.msra.mxu0 %v3286
    %3308 = vmatprep.subr.mxu0 0.0
    %3309 = vmatpush1.msra.mxu0 %v3285
    %3310 = vmatprep.subr.mxu0 0.0
    %3311 = vmatpush1.msra.mxu0 %v3284
    %3312 = vmatprep.subr.mxu0 0.0
    %3313 = vmatpush1.msra.mxu0 %v3283
    %3314 = vmatprep.subr.mxu0 0.0
    %3315 = vmatpush1.msra.mxu0 %v3282
    %3316 = vmatprep.subr.mxu0 0.0
    %3317 = vmatpush1.msra.mxu0 %v3281
    %3318 = vmatprep.subr.mxu0 0.0
    %3319 = vmatpush1.msra.mxu0 %v3280
    %3320 = vmatprep.subr.mxu0 0.0
    %3321 = vmatpush1.msra.mxu0 %v3279
    %3322 = vmatprep.subr.mxu0 0.0
    %3323 = vmatpush1.msra.mxu0 %v3278
    %3324 = vmatprep.subr.mxu0 0.0
    %3325 = vmatpush1.msra.mxu0 %v3277
    %3326 = vmatprep.subr.mxu0 0.0
    %3327 = vmatpush1.msra.mxu0 %v3276
    %3328 = vmatprep.subr.mxu0 0.0
    %3329 = vmatpush1.msra.mxu0 %v3275
    %3330 = vmatprep.subr.mxu0 0.0
    %3331 = vmatpush2.msra.mxu0 0.0
    %3332 = vmatprep.subr.mxu0 0.0
    %3333 = vmatpush2.msra.mxu0 0.0
    %3334 = vmatprep.subr.mxu0 0.0
    %3335 = vmatpush2.msra.mxu0 0.0
    %3336 = vmatprep.subr.mxu0 0.0
    %3337 = vmatpush2.msra.mxu0 0.0
    %3338 = vmatprep.subr.mxu0 0.0
    %3339 = vmatpush2.msra.mxu0 0.0
    %3340 = vmatprep.subr.mxu0 0.0
    %3341 = vmatpush2.msra.mxu0 0.0
    %3342 = vmatprep.subr.mxu0 0.0
    %3343 = vmatpush2.msra.mxu0 0.0
    %3344 = vmatprep.subr.mxu0 0.0
    %3345 = vmatpush2.msra.mxu0 0.0
    %3346 = vmatprep.subr.mxu0 0.0
    %3347 = vmatpush2.msra.mxu0 0.0
    %3348 = vmatprep.subr.mxu0 0.0
    %3349 = vmatpush2.msra.mxu0 0.0
    %3350 = vmatprep.subr.mxu0 0.0
    %3351 = vmatpush2.msra.mxu0 0.0
    %3352 = vmatprep.subr.mxu0 0.0
    %3353 = vmatpush2.msra.mxu0 0.0
    %3354 = vmatprep.subr.mxu0 0.0
    %3355 = vmatpush2.msra.mxu0 0.0
    %3356 = vmatprep.subr.mxu0 0.0
    %3357 = vmatpush2.msra.mxu0 0.0
    %3358 = vmatprep.subr.mxu0 0.0
    %3359 = vmatpush2.msra.mxu0 0.0
    %3360 = vmatprep.subr.mxu0 0.0
    %3361 = vmatpush2.msra.mxu0 0.0
    %3362 = vmatprep.mubr.f32.mxu0 0.0
    %3363 = vmatmul.mubr.f32.gmra.mxu0 %v3274
    %v3364 = vpop.f32.mrf.mxu0
    %v3365 = vadd.f32 %v3296, %v3364
    %v3366 = vpop.f32.mrf.mxu0
    %3367 = vdwg.mxu0
    %3368 = vst [vmem:[%s77] sm:$0x3] %v3365
    %v3369 = vmul.f32 %v1230, %v1230
    %v3370 = vmul.f32 %v1311, 1.442695
    %v3371 = vpow.pop %v3370
    %v3372 = vadd.f32 %v3369, %v3371
    %v3373 = vsub.f32 %v3372, 1.0
    %v3374 = vsub.f32 %v3373, %v1311
    %vm3375 = vcmask 254976
    %v3376 = vsel %vm3375, %v3374, 0.0
    %3377 = vadd.xlane.f32.xlu0 %v3376
    %v3378 = vpop.xlane.xlu0 %3377
    %v3379 = vmul.f32 %v3378, 0.5
    %vm3380 = vcmask 1041408
    %v3381 = vsel %vm3380, %v3379, 0.0
    %v3382 = vrot.slane %v3381, 4
    %v3383 = vadd.f32 %v3381, %v3382
    %v3384 = vrot.slane %v3383, 2
    %v3385 = vadd.f32 %v3383, %v3384
    %v3386 = vrot.slane %v3385, 1
    %v3387 = vadd.f32 %v3385, %v3386
    %v3388 = vrcp.pop 2.0
    %v3389 = vmul.f32 %v3387, %v3388
    %3390 = vst [vmem:[%s81] sm:$0x1] %v3389
    %v3391 = vmul.f32 %v2629, %v2629
    %v3392 = vmul.f32 %v2710, 1.442695
    %v3393 = vpow.pop %v3392
    %v3394 = vadd.f32 %v3391, %v3393
    %v3395 = vsub.f32 %v3394, 1.0
    %v3396 = vsub.f32 %v3395, %v2710
    %v3397 = vsel %vm3375, %v3396, 0.0
    %3398 = vadd.xlane.f32.xlu0 %v3397
    %v3399 = vpop.xlane.xlu0 %3398
    %v3400 = vmul.f32 %v3399, 0.5
    %v3401 = vsel %vm3380, %v3400, 0.0
    %v3402 = vrot.slane %v3401, 4
    %v3403 = vadd.f32 %v3401, %v3402
    %v3404 = vrot.slane %v3403, 2
    %v3405 = vadd.f32 %v3403, %v3404
    %v3406 = vrot.slane %v3405, 1
    %v3407 = vadd.f32 %v3405, %v3406
    %v3408 = vmul.f32 %v3407, %v3388
    %3409 = vst [vmem:[%s83] sm:$0x1] %v3408
    %v3410 = vmul.f32 %v1804, %v365
    %vm3411 = vcmask 17408
    %v3412 = vsel %vm3411, %v3410, 0.0
    %3413 = vadd.xlane.f32.xlu0 %v3412
    %v3414 = vpop.xlane.xlu0 %3413
    %v3415 = vmul.f32 %v1804, %v1804
    %v3416 = vsel %vm3411, %v3415, 0.0
    %3417 = vadd.xlane.f32.xlu0 %v3416
    %v3418 = vpop.xlane.xlu0 %3417
    %v3419 = vrsqrt.pop %v3418
    %v3420 = vmul.f32 %v3418, %v3419
    %vm3421 = vcmp.eq.f32.partialorder %v3418, inf
    %v3422 = vsel %vm3421, %v3418, %v3420
    %vm3423 = vcmp.eq.f32.partialorder %v3418, 0.0
    %v3424 = vand.u32 %v3418, 2147483648
    %v3425 = vsel %vm3423, %v3424, %v3422
    %v3426 = vmul.f32 %v365, %v365
    %v3427 = vsel %vm3411, %v3426, 0.0
    %3428 = vadd.xlane.f32.xlu0 %v3427
    %v3429 = vpop.xlane.xlu0 %3428
    %v3430 = vrsqrt.pop %v3429
    %v3431 = vmul.f32 %v3429, %v3430
    %vm3432 = vcmp.eq.f32.partialorder %v3429, inf
    %v3433 = vsel %vm3432, %v3429, %v3431
    %vm3434 = vcmp.eq.f32.partialorder %v3429, 0.0
    %v3435 = vand.u32 %v3429, 2147483648
    %v3436 = vsel %vm3434, %v3435, %v3433
    %v3437 = vmul.f32 %v3425, %v3436
    %v3438 = vmax.f32 %v3437, 1e-08
    %v3439 = vrcp.pop %v3438
    %v3440 = vmul.f32 %v3414, %v3439
    %v3441 = vsub.f32 1.0, %v3440
    %v3442 = vsel %vm3380, %v3441, 0.0
    %v3443 = vrot.slane %v3442, 4
    %v3444 = vadd.f32 %v3442, %v3443
    %v3445 = vrot.slane %v3444, 2
    %v3446 = vadd.f32 %v3444, %v3445
    %v3447 = vrot.slane %v3446, 1
    %v3448 = vadd.f32 %v3446, %v3447
    %v3449 = vmul.f32 %v3448, %v3388
    %3450 = vst [vmem:[%s79] sm:$0x1] %v3449
    // Predicated region
    $region222: #{network_forward.5} parent=1 // pred_check
      _
    $region223: #{network_forward.5} parent=1 // pred_check_branch
      %3452 = sbr.rel (0) target = $region225
    $region224: #{network_forward.5} parent=1 // pred_region
      _
    $region225: #{network_forward.5} parent=1 // pred_fallthru
      _
    // Predicated region
    $region226: #{network_forward.5} parent=1 // pred_check
      _
    $region227: #{network_forward.5} parent=1 // pred_check_branch
      %3454 = sbr.rel (0) target = $region229
    $region228: #{network_forward.5} parent=1 // pred_region
      _
    $region229: #{network_forward.5} parent=1 // pred_fallthru
      _
    // Predicated region
    $region230: #{network_forward.5} parent=1 // pred_check
      _
    $region231: #{network_forward.5} parent=1 // pred_check_branch
      %3456 = sbr.rel (0) target = $region233
    $region232: #{network_forward.5} parent=1 // pred_region
      _
    $region233: #{network_forward.5} parent=1 // pred_fallthru
      _
    // Predicated region
    $region234: #{network_forward.5} parent=1 // pred_check
      _
    $region235: #{network_forward.5} parent=1 // pred_check_branch
      %3458 = sbr.rel (0) target = $region237
    $region236: #{network_forward.5} parent=1 // pred_region
      _
    $region237: #{network_forward.5} parent=1 // pred_fallthru
      _
    // Predicated region
    $region238: #{network_forward.5} parent=1 // pred_check
      _
    $region239: #{network_forward.5} parent=1 // pred_check_branch
      %3460 = sbr.rel (0) target = $region241
    $region240: #{network_forward.5} parent=1 // pred_region
      _
    $region241: #{network_forward.5} parent=1 // pred_fallthru
      _
    // Predicated region
    $region242: #{network_forward.5} parent=1 // pred_check
      _
    $region243: #{network_forward.5} parent=1 // pred_check_branch
      %3462 = sbr.rel (0) target = $region245
    $region244: #{network_forward.5} parent=1 // pred_region
      _
    $region245: #{network_forward.5} parent=1 // pred_fallthru
      _
    // Predicated region
    $region246: #{network_forward.5} parent=1 // pred_check
      _
    $region247: #{network_forward.5} parent=1 // pred_check_branch
      %3464 = sbr.rel (0) target = $region249
    $region248: #{network_forward.5} parent=1 // pred_region
      _
    $region249: #{network_forward.5} parent=1 // pred_fallthru
      _
    // Predicated region
    $region250: #{network_forward.5} parent=1 // pred_check
      _
    $region251: #{network_forward.5} parent=1 // pred_check_branch
      %3466 = sbr.rel (0) target = $region253
    $region252: #{network_forward.5} parent=1 // pred_region
      _
    $region253: #{network_forward.5} parent=1 // pred_fallthru
      _
    %3467 = vsyncpa [#allocation3], 1
    %3468 = vsyncpa [#allocation5], 1
    %3469 = vsyncpa [#allocation8], 1
    %3470 = vsyncpa [#allocation11], 1
    %3471 = vsyncpa [#allocation14], 1
    %3472 = vsyncpa [#allocation17], 1
    %3473 = vsyncpa [#allocation20], 1
    %3474 = vsyncpa [#allocation23], 1
    %3475 = vsyncpa [#allocation26], 1

</llo_original>
